<compile_context>
chip_gen: v6e
topology: v6e:2x2x1
jax: 0.10.0
libtpu: 0.0.40
codegen_flags: <defaults>
</compile_context>

<pallas_src>
import functools

import jax
import jax.numpy as jnp
from jax.experimental import pallas as pl
from jax.experimental.pallas import tpu as pltpu


def _round_up(n, m):
    return ((n + m - 1) // m) * m


def _embednet_kernel(x_ref, w1_ref, b1_ref, w2_ref, s2_ref, w3_ref, b3_ref, o_ref):
    # --- fc + ReLU ---  (bf16 operands, f32 accumulation on the MXU)
    h = jnp.dot(x_ref[...], w1_ref[...], preferred_element_type=jnp.float32)
    h = jnp.maximum(h + b1_ref[...], 0.0).astype(jnp.bfloat16)

    # --- classifier block: Linear (+BN folded into w2'/shift) + ReLU, Dropout=id ---
    h = jnp.dot(h, w2_ref[...], preferred_element_type=jnp.float32)
    h = jnp.maximum(h + s2_ref[...], 0.0).astype(jnp.bfloat16)
    # TODO(synk): training-mode dropout / batch-stat BN not implemented (eval semantics only).

    # --- fc2 ---
    o_ref[...] = (jnp.dot(h, w3_ref[...], preferred_element_type=jnp.float32)
                  + b3_ref[...]).astype(o_ref.dtype)


def _fold_params(params):
    """Fold eval-mode BatchNorm1d (+ b2) into w2'/shift and cast weights to bf16."""
    eps = 1e-5
    H0 = params["w1"].shape[1]
    H1 = params["w2"].shape[1]
    E = params["w3"].shape[1]
    inv_std = jax.lax.rsqrt(params["bn_var"] + eps)
    scale = params["bn_gamma"] * inv_std                           # [H1]
    w2f = params["w2"] * scale[None, :]                            # fold scale into columns
    shift = params["b2"] * scale + params["bn_beta"] - params["bn_mean"] * scale
    return {
        "w1": params["w1"].astype(jnp.bfloat16),
        "b1": params["b1"].reshape(1, H0).astype(jnp.float32),
        "w2": w2f.astype(jnp.bfloat16),
        "s2": shift.reshape(1, H1).astype(jnp.float32),
        "w3": params["w3"].astype(jnp.bfloat16),
        "b3": params["b3"].reshape(1, E).astype(jnp.float32),
    }


@functools.partial(jax.jit, static_argnames=("block_b",))
def embednet_forward(x, params, block_b=None):
    """x: [B, fc_in_dim] float32. params: dict of weights (see init_params)."""
    B, D_in = x.shape
    H0 = params["w1"].shape[1]
    H1 = params["w2"].shape[1]
    E = params["w3"].shape[1]

    # Large batch tile (multiple of 16 for bf16 sublane packing), capped at 256
    # so realistic batches still give >= 2 grid steps (both TCs busy on v7x).
    if block_b is None:
        block_b = min(256, _round_up(B, 16))
    B_pad = _round_up(B, block_b)
    if B_pad != B:
        x = jnp.pad(x, ((0, B_pad - B), (0, 0)))

    prep = _fold_params(params)
    x_bf16 = x.astype(jnp.bfloat16)

    # Whole-weight VMEM residency (default pipeline double-buffers each input).
    # For very large gene-expression D_in a K-tiled first matmul (reduction grid
    # axis + f32 accumulator, "arbitrary" last) would be needed, especially on
    # v7x's 64 MiB VMEM.  Not required at these sizes.
    weight_vmem = 2 * 2 * (D_in * H0 + H0 * H1 + H1 * E)           # 2 bufs x bf16
    act_vmem = 2 * (block_b * D_in * 2 + block_b * E * 4)
    assert weight_vmem + act_vmem < 24 * 1024 * 1024, "re-tile: VMEM budget exceeded"

    cost = pl.CostEstimate(
        flops=2 * B_pad * (D_in * H0 + H0 * H1 + H1 * E),
        transcendentals=0,
        bytes_accessed=(B_pad * D_in * 2                           # x (bf16)
                        + 2 * (D_in * H0 + H0 * H1 + H1 * E)       # weights (bf16)
                        + 4 * (H0 + H1 + E)                        # biases/shift (f32)
                        + B_pad * E * 4),                          # output (f32)
    )

    out = pl.pallas_call(
        _embednet_kernel,
        out_shape=jax.ShapeDtypeStruct((B_pad, E), jnp.float32),
        grid=(B_pad // block_b,),
        in_specs=[
            pl.BlockSpec((block_b, D_in), lambda i: (i, 0)),   # x tile
            pl.BlockSpec((D_in, H0), lambda i: (0, 0)),        # w1
            pl.BlockSpec((1, H0), lambda i: (0, 0)),           # b1
            pl.BlockSpec((H0, H1), lambda i: (0, 0)),          # w2' (BN-folded)
            pl.BlockSpec((1, H1), lambda i: (0, 0)),           # shift (b2*scale + beta - mean*scale)
            pl.BlockSpec((H1, E), lambda i: (0, 0)),           # w3
            pl.BlockSpec((1, E), lambda i: (0, 0)),            # b3
        ],
        out_specs=pl.BlockSpec((block_b, E), lambda i: (i, 0)),
        compiler_params=pltpu.CompilerParams(
            dimension_semantics=("parallel",),
            vmem_limit_bytes=32 * 1024 * 1024,
        ),
        cost_estimate=cost,
    )(x_bf16, prep["w1"], prep["b1"], prep["w2"], prep["s2"], prep["w3"], prep["b3"])

    return out[:B]


def init_params(key, fc_in_dim, fc_hid_dim, embed_dim):
    """Deterministic synthetic parameters matching EmbedNet's shapes.

    Weights stored as [in, out] (transpose of PyTorch nn.Linear.weight)."""
    assert len(fc_hid_dim) == 2, "kernel implements the default 2-entry fc_hid_dim"
    H0, H1 = fc_hid_dim
    ks = jax.random.split(key, 10)

    def xavier(k, fan_in, fan_out):
        limit = jnp.sqrt(6.0 / (fan_in + fan_out))
        return jax.random.uniform(k, (fan_in, fan_out), jnp.float32, -limit, limit)

    return {
        "w1": xavier(ks[0], fc_in_dim, H0),
        "b1": jax.random.normal(ks[1], (H0,), jnp.float32) * 0.01,
        "w2": xavier(ks[2], H0, H1),             # classifier Linear (xavier_uniform in torch)
        "b2": jax.random.normal(ks[3], (H1,), jnp.float32) * 0.01,
        "bn_gamma": 1.0 + 0.1 * jax.random.normal(ks[4], (H1,), jnp.float32),
        "bn_beta": 0.1 * jax.random.normal(ks[5], (H1,), jnp.float32),
        "bn_mean": 0.1 * jax.random.normal(ks[6], (H1,), jnp.float32),
        "bn_var": 1.0 + 0.1 * jax.random.uniform(ks[7], (H1,), jnp.float32),
        "w3": xavier(ks[8], H1, embed_dim),
        "b3": jax.random.normal(ks[9], (embed_dim,), jnp.float32) * 0.01,
    }


def embednet_reference_bf16(x, params):
    """Plain-JAX path using exactly the kernel's folded bf16 operands (tight check)."""
    p = _fold_params(params)
    h = x.astype(jnp.bfloat16)
    h = jnp.maximum(jnp.dot(h, p["w1"], preferred_element_type=jnp.float32) + p["b1"], 0.0)
    h = h.astype(jnp.bfloat16)
    h = jnp.maximum(jnp.dot(h, p["w2"], preferred_element_type=jnp.float32) + p["s2"], 0.0)
    h = h.astype(jnp.bfloat16)
    return jnp.dot(h, p["w3"], preferred_element_type=jnp.float32) + p["b3"]


def embednet_reference_f32(x, params):
    """Full-precision, un-folded reference (semantic check; looser tolerance vs bf16 kernel)."""
    eps = 1e-5
    h = jnp.maximum(x @ params["w1"] + params["b1"], 0.0)
    h = h @ params["w2"] + params["b2"]
    h = ((h - params["bn_mean"]) * jax.lax.rsqrt(params["bn_var"] + eps)
         * params["bn_gamma"] + params["bn_beta"])
    h = jnp.maximum(h, 0.0)
    return h @ params["w3"] + params["b3"]


if __name__ == "__main__":
    key = jax.random.PRNGKey(0)
    k_x, k_p = jax.random.split(key)

    # Module-default widths (lane-dense multiples of 256); batch sized so the
    # grid has 2 steps of block_b=256.
    B, fc_in_dim, fc_hid_dim, embed_dim = 512, 1024, [512, 512], 512
    x = jax.random.normal(k_x, (B, fc_in_dim), jnp.float32)
    params = init_params(k_p, fc_in_dim, fc_hid_dim, embed_dim)

    out = embednet_forward(x, params)
    jax.block_until_ready(out)
    assert out.shape == (B, embed_dim)
    assert out.dtype == jnp.float32

    # Tight check: kernel vs plain-JAX using the same bf16 operands.
    ref_bf16 = embednet_reference_bf16(x, params)
    assert jnp.allclose(out, ref_bf16, atol=1e-2, rtol=1e-2), "mismatch vs bf16 reference"

    # Semantic check vs the full-f32 un-folded reference (bf16 weights => loose tol).
    ref_f32 = embednet_reference_f32(x, params)
    max_err = float(jnp.max(jnp.abs(out - ref_f32)))
    assert max_err < 0.25, f"max |err| vs f32 reference = {max_err}"

    print("KERNEL_OK")
</pallas_src>

<mosaic_0001>
module attributes {stable_mosaic.version = 11 : i64} {
  func.func @_embednet_kernel(%arg0: i32, %arg1: memref<256x1024xbf16, #tpu.memory_space<vmem>>, %arg2: memref<1024x512xbf16, #tpu.memory_space<vmem>>, %arg3: memref<1x512xf32, #tpu.memory_space<vmem>>, %arg4: memref<512x512xbf16, #tpu.memory_space<vmem>>, %arg5: memref<1x512xf32, #tpu.memory_space<vmem>>, %arg6: memref<512x512xbf16, #tpu.memory_space<vmem>>, %arg7: memref<1x512xf32, #tpu.memory_space<vmem>>, %arg8: memref<256x512xf32, #tpu.memory_space<vmem>>) attributes {dimension_semantics = [#tpu.dimension_semantics<parallel>], iteration_bounds = array<i64: 2>, scalar_prefetch = 0 : i64, scratch_operands = 0 : i64, tpu.core_type = #tpu.core_type<tc>, window_params = [{transform_indices = @transform_0, window_bounds = array<i64: 256, 1024>}, {pipeline_mode = #tpu.pipeline_mode<synchronous>, transform_indices = @transform_1, window_bounds = array<i64: 1024, 512>}, {pipeline_mode = #tpu.pipeline_mode<synchronous>, transform_indices = @transform_2, window_bounds = array<i64: 1, 512>}, {pipeline_mode = #tpu.pipeline_mode<synchronous>, transform_indices = @transform_3, window_bounds = array<i64: 512, 512>}, {pipeline_mode = #tpu.pipeline_mode<synchronous>, transform_indices = @transform_4, window_bounds = array<i64: 1, 512>}, {pipeline_mode = #tpu.pipeline_mode<synchronous>, transform_indices = @transform_5, window_bounds = array<i64: 512, 512>}, {pipeline_mode = #tpu.pipeline_mode<synchronous>, transform_indices = @transform_6, window_bounds = array<i64: 1, 512>}, {transform_indices = @transform_7, window_bounds = array<i64: 256, 512>}]} {
    %c0 = arith.constant 0 : index
    %c0_0 = arith.constant 0 : index
    %0 = vector.load %arg1[%c0, %c0_0] : memref<256x1024xbf16, #tpu.memory_space<vmem>>, vector<256x1024xbf16>
    %c0_1 = arith.constant 0 : index
    %c0_2 = arith.constant 0 : index
    %1 = vector.load %arg2[%c0_1, %c0_2] : memref<1024x512xbf16, #tpu.memory_space<vmem>>, vector<1024x512xbf16>
    %cst = arith.constant dense<0.000000e+00> : vector<256x512xf32>
    %2 = tpu.matmul %0, %1, %cst {dimension_numbers = #tpu.dot_dimension_numbers<[1], [0], [0], [1], [0, 0, 1, 1], [], []>} : vector<256x1024xbf16>, vector<1024x512xbf16>, vector<256x512xf32> -> vector<256x512xf32>
    %c0_3 = arith.constant 0 : index
    %c0_4 = arith.constant 0 : index
    %3 = vector.load %arg3[%c0_3, %c0_4] : memref<1x512xf32, #tpu.memory_space<vmem>>, vector<1x512xf32>
    %4 = vector.broadcast %3 : vector<1x512xf32> to vector<256x512xf32>
    %5 = arith.addf %2, %4 : vector<256x512xf32>
    %cst_5 = arith.constant 0.000000e+00 : f32
    %6 = vector.broadcast %cst_5 : f32 to vector<256x512xf32>
    %7 = arith.maximumf %5, %6 : vector<256x512xf32>
    %8 = arith.truncf %7 : vector<256x512xf32> to vector<256x512xbf16>
    %c0_6 = arith.constant 0 : index
    %c0_7 = arith.constant 0 : index
    %9 = vector.load %arg4[%c0_6, %c0_7] : memref<512x512xbf16, #tpu.memory_space<vmem>>, vector<512x512xbf16>
    %cst_8 = arith.constant dense<0.000000e+00> : vector<256x512xf32>
    %10 = tpu.matmul %8, %9, %cst_8 {dimension_numbers = #tpu.dot_dimension_numbers<[1], [0], [0], [1], [0, 0, 1, 1], [], []>} : vector<256x512xbf16>, vector<512x512xbf16>, vector<256x512xf32> -> vector<256x512xf32>
    %c0_9 = arith.constant 0 : index
    %c0_10 = arith.constant 0 : index
    %11 = vector.load %arg5[%c0_9, %c0_10] : memref<1x512xf32, #tpu.memory_space<vmem>>, vector<1x512xf32>
    %12 = vector.broadcast %11 : vector<1x512xf32> to vector<256x512xf32>
    %13 = arith.addf %10, %12 : vector<256x512xf32>
    %cst_11 = arith.constant 0.000000e+00 : f32
    %14 = vector.broadcast %cst_11 : f32 to vector<256x512xf32>
    %15 = arith.maximumf %13, %14 : vector<256x512xf32>
    %16 = arith.truncf %15 : vector<256x512xf32> to vector<256x512xbf16>
    %c0_12 = arith.constant 0 : index
    %c0_13 = arith.constant 0 : index
    %17 = vector.load %arg6[%c0_12, %c0_13] : memref<512x512xbf16, #tpu.memory_space<vmem>>, vector<512x512xbf16>
    %cst_14 = arith.constant dense<0.000000e+00> : vector<256x512xf32>
    %18 = tpu.matmul %16, %17, %cst_14 {dimension_numbers = #tpu.dot_dimension_numbers<[1], [0], [0], [1], [0, 0, 1, 1], [], []>} : vector<256x512xbf16>, vector<512x512xbf16>, vector<256x512xf32> -> vector<256x512xf32>
    %c0_15 = arith.constant 0 : index
    %c0_16 = arith.constant 0 : index
    %19 = vector.load %arg7[%c0_15, %c0_16] : memref<1x512xf32, #tpu.memory_space<vmem>>, vector<1x512xf32>
    %20 = vector.broadcast %19 : vector<1x512xf32> to vector<256x512xf32>
    %21 = arith.addf %18, %20 : vector<256x512xf32>
    %c0_17 = arith.constant 0 : index
    %c0_18 = arith.constant 0 : index
    %22 = vector.load %arg8[%c0_17, %c0_18] : memref<256x512xf32, #tpu.memory_space<vmem>>, vector<256x512xf32>
    tpu.vector_store %arg8[%c0_17, %c0_18], %21 {strides = array<i32>} : memref<256x512xf32, #tpu.memory_space<vmem>>, vector<256x512xf32>,
    return
  }
  func.func @transform_0(%arg0: i32) -> (i32, i32) {
    %c0_i32 = arith.constant 0 : i32
    %c0_i32_0 = arith.constant 0 : i32
    return %arg0, %c0_i32 : i32, i32
  }
  func.func @transform_1(%arg0: i32) -> (i32, i32) {
    %c0_i32 = arith.constant 0 : i32
    %c0_i32_0 = arith.constant 0 : i32
    %c0_i32_1 = arith.constant 0 : i32
    return %c0_i32, %c0_i32_0 : i32, i32
  }
  func.func @transform_2(%arg0: i32) -> (i32, i32) {
    %c0_i32 = arith.constant 0 : i32
    %c0_i32_0 = arith.constant 0 : i32
    %c0_i32_1 = arith.constant 0 : i32
    return %c0_i32, %c0_i32_0 : i32, i32
  }
  func.func @transform_3(%arg0: i32) -> (i32, i32) {
    %c0_i32 = arith.constant 0 : i32
    %c0_i32_0 = arith.constant 0 : i32
    %c0_i32_1 = arith.constant 0 : i32
    return %c0_i32, %c0_i32_0 : i32, i32
  }
  func.func @transform_4(%arg0: i32) -> (i32, i32) {
    %c0_i32 = arith.constant 0 : i32
    %c0_i32_0 = arith.constant 0 : i32
    %c0_i32_1 = arith.constant 0 : i32
    return %c0_i32, %c0_i32_0 : i32, i32
  }
  func.func @transform_5(%arg0: i32) -> (i32, i32) {
    %c0_i32 = arith.constant 0 : i32
    %c0_i32_0 = arith.constant 0 : i32
    %c0_i32_1 = arith.constant 0 : i32
    return %c0_i32, %c0_i32_0 : i32, i32
  }
  func.func @transform_6(%arg0: i32) -> (i32, i32) {
    %c0_i32 = arith.constant 0 : i32
    %c0_i32_0 = arith.constant 0 : i32
    %c0_i32_1 = arith.constant 0 : i32
    return %c0_i32, %c0_i32_0 : i32, i32
  }
  func.func @transform_7(%arg0: i32) -> (i32, i32) {
    %c0_i32 = arith.constant 0 : i32
    %c0_i32_0 = arith.constant 0 : i32
    return %arg0, %c0_i32 : i32, i32
  }
}

</mosaic_0001>

<llo_original>
// kernel: embednet_forward.1
$region0: #{embednet_forward.1}
  #allocation0 [shape = 'u32[]', space=smem, size = 0x4, offset = 0x4, fixed_abs, tag = 'smem constant byte address 0x4 - core index']
  #allocation1 [shape = 'u32[144,128]{1,0:T(1,128)}', space=vmem, size = 0x12000, scoped, tag = 'internal scratch']
  %s0 = inlined_call_operand.vmem [shape: bf16[512,1024], index: 0, kind: input, shape index: {}]
  %s1 = inlined_call_operand.vmem [shape: bf16[1024,512], index: 1, kind: input, shape index: {}]
  %s2 = inlined_call_operand.vmem [shape: f32[1,512], index: 2, kind: input, shape index: {}]
  %s3 = inlined_call_operand.vmem [shape: bf16[512,512], index: 3, kind: input, shape index: {}]
  %s4 = inlined_call_operand.vmem [shape: f32[1,512], index: 4, kind: input, shape index: {}]
  %s5 = inlined_call_operand.vmem [shape: bf16[512,512], index: 5, kind: input, shape index: {}]
  %s6 = inlined_call_operand.vmem [shape: f32[1,512], index: 6, kind: input, shape index: {}]
  %s7 = inlined_call_operand.hbm [shape: f32[512,512], index: 7, kind: output, shape index: {}]
  %s8 = sld [smem:[#allocation0]]
  $region61: #{embednet_forward.1} parent=0
    _
  %s10 = ssub.s32 1, %s8
  %s11 = scalar_select 0, %s10, %s8
  $region1: #{embednet_forward.1} parent=0
    #allocation2 [shape = 'u8[1048576]{0}', space=vmem, size = 0x100000, scoped, tag = 'output window, operand 0']
    #allocation3 [shape = 's32[2]{0}', space=sflag, size = 0x8, scoped, tag = 'scoped memory for embednet_forward.1']
    %12 = vsyncpa [#allocation3], 0
    %s13 = scalar_lea.sflag [#allocation3], 1
    %14 = vsyncpa %s13, 0
    loop: start=0, step=1, limit=4
    $region2: #{embednet_forward.1} parent=1 // loop_pre_header
      _
    $region3: #{embednet_forward.1} parent=1 // loop_header
      %s16 = sphi 0, %s20
      %p17 = scmp.ge.s32.totalorder %s16, 4
      %s26 = sphi 0, %s28
      %s29 = sphi 0, %s26
      %s30 = sphi 0, %s29
      %s46 = sphi 0, %s30
      %s50 = sphi 0, %s50
      %s52 = sphi 0, %s50
      %s53 = sphi 0, %s52
      %s67 = sphi 0, %s53
      %s71 = sphi 0, %s71
      %s73 = sphi 0, %s71
      %s74 = sphi 0, %s73
      %s88 = sphi 0, %s74
      %s92 = sphi 0, %s92
      %s94 = sphi 0, %s92
      %s95 = sphi 0, %s94
      %s109 = sphi 0, %s95
      %s113 = sphi 0, %s113
      %s115 = sphi 0, %s113
      %s116 = sphi 0, %s115
      %s130 = sphi 0, %s116
      %s134 = sphi 0, %s134
      %s136 = sphi 0, %s134
      %s137 = sphi 0, %s136
      %s151 = sphi 0, %s137
      %s155 = sphi 0, %s155
      %s157 = sphi 0, %s155
      %s158 = sphi 0, %s157
      %s172 = sphi 0, %s158
      %s178 = sphi 0, %s180
      %s181 = sphi 0, %s178
      %s182 = sphi 0, %s181
      %s198 = sphi 0, %s182
    $region4: #{embednet_forward.1} parent=1 // loop_header_branch
      %19 = sbr.rel (%p17) target = $region8
    $region5: #{embednet_forward.1} parent=1 // loop_body
      %s21 = ssub.s32 %s16, 1
      %s22 = ssub.s32 %s16, 2
      %s23 = sadd.s32 %s16, 1
      %s24 = ssub.s32 %s16, %s23
      %p25 = scmp.eq.s32.totalorder %s24, 0
      %s27 = sadd.s32 %s26, 1
      %s28 = scalar_select %p25, %s26, %s27
      %p31 = pneg %p25
      %p32 = scmp.eq.s32.totalorder %s16, 1
      %p33 = por %p31, %p32
      %p34 = scmp.ne.s32.totalorder %s26, %s29
      %p35 = scmp.eq.s32.totalorder %s16, 0
      %p36 = por %p34, %p35
      %p37 = scmp.ne.s32.totalorder %s26, %s29
      %p38 = scmp.eq.s32.totalorder %s21, 1
      %p39 = por %p37, %p38
      %p40 = scmp.ne.s32.totalorder %s29, %s30
      %p41 = scmp.eq.s32.totalorder %s21, 0
      %p42 = por %p40, %p41
      %p43 = scmp.ne.s32.totalorder %s29, %s30
      %p44 = scmp.eq.s32.totalorder %s22, 1
      %p45 = por %p43, %p44
      %p47 = scmp.ne.s32.totalorder %s30, %s46
      %p48 = scmp.eq.s32.totalorder %s22, 0
      %p49 = por %p47, %p48
      %s51 = sadd.s32 %s50, 1
      %p54 = scmp.eq.s32.totalorder %s16, 1
      %p55 = scmp.ne.s32.totalorder %s50, %s52
      %p56 = scmp.eq.s32.totalorder %s16, 0
      %p57 = por %p55, %p56
      %p58 = scmp.ne.s32.totalorder %s50, %s52
      %p59 = scmp.eq.s32.totalorder %s21, 1
      %p60 = por %p58, %p59
      %p61 = scmp.ne.s32.totalorder %s52, %s53
      %p62 = scmp.eq.s32.totalorder %s21, 0
      %p63 = por %p61, %p62
      %p64 = scmp.ne.s32.totalorder %s52, %s53
      %p65 = scmp.eq.s32.totalorder %s22, 1
      %p66 = por %p64, %p65
      %p68 = scmp.ne.s32.totalorder %s53, %s67
      %p69 = scmp.eq.s32.totalorder %s22, 0
      %p70 = por %p68, %p69
      %s72 = sadd.s32 %s71, 1
      %p75 = scmp.eq.s32.totalorder %s16, 1
      %p76 = scmp.ne.s32.totalorder %s71, %s73
      %p77 = scmp.eq.s32.totalorder %s16, 0
      %p78 = por %p76, %p77
      %p79 = scmp.ne.s32.totalorder %s71, %s73
      %p80 = scmp.eq.s32.totalorder %s21, 1
      %p81 = por %p79, %p80
      %p82 = scmp.ne.s32.totalorder %s73, %s74
      %p83 = scmp.eq.s32.totalorder %s21, 0
      %p84 = por %p82, %p83
      %p85 = scmp.ne.s32.totalorder %s73, %s74
      %p86 = scmp.eq.s32.totalorder %s22, 1
      %p87 = por %p85, %p86
      %p89 = scmp.ne.s32.totalorder %s74, %s88
      %p90 = scmp.eq.s32.totalorder %s22, 0
      %p91 = por %p89, %p90
      %s93 = sadd.s32 %s92, 1
      %p96 = scmp.eq.s32.totalorder %s16, 1
      %p97 = scmp.ne.s32.totalorder %s92, %s94
      %p98 = scmp.eq.s32.totalorder %s16, 0
      %p99 = por %p97, %p98
      %p100 = scmp.ne.s32.totalorder %s92, %s94
      %p101 = scmp.eq.s32.totalorder %s21, 1
      %p102 = por %p100, %p101
      %p103 = scmp.ne.s32.totalorder %s94, %s95
      %p104 = scmp.eq.s32.totalorder %s21, 0
      %p105 = por %p103, %p104
      %p106 = scmp.ne.s32.totalorder %s94, %s95
      %p107 = scmp.eq.s32.totalorder %s22, 1
      %p108 = por %p106, %p107
      %p110 = scmp.ne.s32.totalorder %s95, %s109
      %p111 = scmp.eq.s32.totalorder %s22, 0
      %p112 = por %p110, %p111
      %s114 = sadd.s32 %s113, 1
      %p117 = scmp.eq.s32.totalorder %s16, 1
      %p118 = scmp.ne.s32.totalorder %s113, %s115
      %p119 = scmp.eq.s32.totalorder %s16, 0
      %p120 = por %p118, %p119
      %p121 = scmp.ne.s32.totalorder %s113, %s115
      %p122 = scmp.eq.s32.totalorder %s21, 1
      %p123 = por %p121, %p122
      %p124 = scmp.ne.s32.totalorder %s115, %s116
      %p125 = scmp.eq.s32.totalorder %s21, 0
      %p126 = por %p124, %p125
      %p127 = scmp.ne.s32.totalorder %s115, %s116
      %p128 = scmp.eq.s32.totalorder %s22, 1
      %p129 = por %p127, %p128
      %p131 = scmp.ne.s32.totalorder %s116, %s130
      %p132 = scmp.eq.s32.totalorder %s22, 0
      %p133 = por %p131, %p132
      %s135 = sadd.s32 %s134, 1
      %p138 = scmp.eq.s32.totalorder %s16, 1
      %p139 = scmp.ne.s32.totalorder %s134, %s136
      %p140 = scmp.eq.s32.totalorder %s16, 0
      %p141 = por %p139, %p140
      %p142 = scmp.ne.s32.totalorder %s134, %s136
      %p143 = scmp.eq.s32.totalorder %s21, 1
      %p144 = por %p142, %p143
      %p145 = scmp.ne.s32.totalorder %s136, %s137
      %p146 = scmp.eq.s32.totalorder %s21, 0
      %p147 = por %p145, %p146
      %p148 = scmp.ne.s32.totalorder %s136, %s137
      %p149 = scmp.eq.s32.totalorder %s22, 1
      %p150 = por %p148, %p149
      %p152 = scmp.ne.s32.totalorder %s137, %s151
      %p153 = scmp.eq.s32.totalorder %s22, 0
      %p154 = por %p152, %p153
      %s156 = sadd.s32 %s155, 1
      %p159 = scmp.eq.s32.totalorder %s16, 1
      %p160 = scmp.ne.s32.totalorder %s155, %s157
      %p161 = scmp.eq.s32.totalorder %s16, 0
      %p162 = por %p160, %p161
      %p163 = scmp.ne.s32.totalorder %s155, %s157
      %p164 = scmp.eq.s32.totalorder %s21, 1
      %p165 = por %p163, %p164
      %p166 = scmp.ne.s32.totalorder %s157, %s158
      %p167 = scmp.eq.s32.totalorder %s21, 0
      %p168 = por %p166, %p167
      %p169 = scmp.ne.s32.totalorder %s157, %s158
      %p170 = scmp.eq.s32.totalorder %s22, 1
      %p171 = por %p169, %p170
      %p173 = scmp.ne.s32.totalorder %s158, %s172
      %p174 = scmp.eq.s32.totalorder %s22, 0
      %p175 = por %p173, %p174
      %s176 = ssub.s32 %s16, %s23
      %p177 = scmp.eq.s32.totalorder %s176, 0
      %s179 = sadd.s32 %s178, 1
      %s180 = scalar_select %p177, %s178, %s179
      %p183 = pneg %p177
      %p184 = scmp.eq.s32.totalorder %s16, 1
      %p185 = por %p183, %p184
      %p186 = scmp.ne.s32.totalorder %s178, %s181
      %p187 = scmp.eq.s32.totalorder %s16, 0
      %p188 = por %p186, %p187
      %p189 = scmp.ne.s32.totalorder %s178, %s181
      %p190 = scmp.eq.s32.totalorder %s21, 1
      %p191 = por %p189, %p190
      %p192 = scmp.ne.s32.totalorder %s181, %s182
      %p193 = scmp.eq.s32.totalorder %s21, 0
      %p194 = por %p192, %p193
      %p195 = scmp.ne.s32.totalorder %s181, %s182
      %p196 = scmp.eq.s32.totalorder %s22, 1
      %p197 = por %p195, %p196
      %p199 = scmp.ne.s32.totalorder %s182, %s198
      %p200 = scmp.eq.s32.totalorder %s22, 0
      %p201 = por %p199, %p200
      %p202 = scmp.le.s32.totalorder 1, %s16
      %p203 = scmp.lt.s32.totalorder %s16, 3
      %p204 = pnand %p202, %p203
      %p205 = pneg %p204
      // Predicated region
      $region9: #{embednet_forward.1} parent=5 // pred_check
        _
      $region10: #{embednet_forward.1} parent=5 // pred_check_branch
        %207 = sbr.rel (%p204) target = $region12
      $region11: #{embednet_forward.1} parent=5 // pred_region
        %s208 = ssub.s32 %s16, 1
        // Predicated region
        $region13: #{embednet_forward.1} parent=11 // pred_check
          %p209 = pneg %p63
        $region14: #{embednet_forward.1} parent=11 // pred_check_branch
          %211 = sbr.rel (%p209) target = $region16
        $region15: #{embednet_forward.1} parent=11 // pred_region
          _
        $region16: #{embednet_forward.1} parent=11 // pred_fallthru
          _
        // Predicated region
        $region17: #{embednet_forward.1} parent=11 // pred_check
          %p212 = pneg %p84
        $region18: #{embednet_forward.1} parent=11 // pred_check_branch
          %214 = sbr.rel (%p212) target = $region20
        $region19: #{embednet_forward.1} parent=11 // pred_region
          _
        $region20: #{embednet_forward.1} parent=11 // pred_fallthru
          _
        // Predicated region
        $region21: #{embednet_forward.1} parent=11 // pred_check
          %p215 = pneg %p105
        $region22: #{embednet_forward.1} parent=11 // pred_check_branch
          %217 = sbr.rel (%p215) target = $region24
        $region23: #{embednet_forward.1} parent=11 // pred_region
          _
        $region24: #{embednet_forward.1} parent=11 // pred_fallthru
          _
        // Predicated region
        $region25: #{embednet_forward.1} parent=11 // pred_check
          %p218 = pneg %p126
        $region26: #{embednet_forward.1} parent=11 // pred_check_branch
          %220 = sbr.rel (%p218) target = $region28
        $region27: #{embednet_forward.1} parent=11 // pred_region
          _
        $region28: #{embednet_forward.1} parent=11 // pred_fallthru
          _
        // Predicated region
        $region29: #{embednet_forward.1} parent=11 // pred_check
          %p221 = pneg %p147
        $region30: #{embednet_forward.1} parent=11 // pred_check_branch
          %223 = sbr.rel (%p221) target = $region32
        $region31: #{embednet_forward.1} parent=11 // pred_region
          _
        $region32: #{embednet_forward.1} parent=11 // pred_fallthru
          _
        // Predicated region
        $region33: #{embednet_forward.1} parent=11 // pred_check
          %p224 = pneg %p168
        $region34: #{embednet_forward.1} parent=11 // pred_check_branch
          %226 = sbr.rel (%p224) target = $region36
        $region35: #{embednet_forward.1} parent=11 // pred_region
          _
        $region36: #{embednet_forward.1} parent=11 // pred_fallthru
          _
      $region12: #{embednet_forward.1} parent=5 // pred_fallthru
        _
      %p227 = scmp.lt.s32.totalorder %s16, 2
      // Predicated region
      $region37: #{embednet_forward.1} parent=5 // pred_check
        %p228 = pneg %p227
      $region38: #{embednet_forward.1} parent=5 // pred_check_branch
        %230 = sbr.rel (%p228) target = $region40
      $region39: #{embednet_forward.1} parent=5 // pred_region
        // Predicated region
        $region41: #{embednet_forward.1} parent=39 // pred_check
          %p231 = pneg %p36
        $region42: #{embednet_forward.1} parent=39 // pred_check_branch
          %233 = sbr.rel (%p231) target = $region44
        $region43: #{embednet_forward.1} parent=39 // pred_region
          %s234 = smul.u32 32, %s16
          %p235 = scmp.lt.s32.totalorder %s234, 63
          %s236 = scalar_select %p235, %s234, 63
          %s237 = smul.addr %s236, 8
          %s238 = smul.addr %s237, 4
          %s239 = scalar_lea.vmem %s0, %s238
          %s240 = smul.u32 32, %s16
        $region44: #{embednet_forward.1} parent=39 // pred_fallthru
          _
      $region40: #{embednet_forward.1} parent=5 // pred_fallthru
        _
      %p241 = scmp.le.s32.totalorder 1, %s16
      %p242 = scmp.lt.s32.totalorder %s16, 3
      %p243 = pnand %p241, %p242
      %p244 = pneg %p243
      // Predicated region
      $region45: #{embednet_forward.1} parent=5 // pred_check
        _
      $region46: #{embednet_forward.1} parent=5 // pred_check_branch
        %246 = sbr.rel (%p243) target = $region48
      $region47: #{embednet_forward.1} parent=5 // pred_region
        %s247 = ssub.s32 %s16, 1
        %s248 = smul.u32 32, %s21
        %p249 = scmp.lt.s32.totalorder %s248, 63
        %s250 = scalar_select %p249, %s248, 63
        %s251 = smul.addr %s250, 8
        %s252 = smul.addr %s251, 4
        %s253 = scalar_lea.vmem %s0, %s252
        %p254 = pneg %p42
        %p255 = pneg %p39
        %p256 = pneg %p63
        %p257 = pneg %p60
        %p258 = pneg %p84
        %p259 = pneg %p81
        %p260 = pneg %p105
        %p261 = pneg %p102
        %p262 = pneg %p126
        %p263 = pneg %p123
        %p264 = pneg %p147
        %p265 = pneg %p144
        %p266 = pneg %p168
        %p267 = pneg %p165
        %p268 = pneg %p194
        %p269 = pneg %p191
        %s270 = sand.u32 %s181, 1
        %s271 = scalar_lea.sflag [#allocation3], %s270
        %s272 = sand.u32 %s181, 1
        %s273 = smul.addr %s272, 1024
        %s274 = scalar_lea.vmem [#allocation2], %s273
        %s275 = smul.u32 32, %s21
        %p276 = scmp.lt.s32.totalorder %s275, 63
        %s277 = scalar_select %p276, %s275, 63
        %s278 = smul.addr %s277, 8
        %s279 = smul.addr %s278, 4
        %s280 = scalar_lea.vmem %s0, %s279
        %s281 = smul.u32 32, %s21
        %s282 = smul.u32 32, %s21
        %v283 = vld [vmem:[%s280] sm:$0xff]
        %v284 = vld [vmem:[%s280 + $0x8] sm:$0xff]
        %v285 = vld [vmem:[%s280 + $0x10] sm:$0xff]
        %v286 = vld [vmem:[%s280 + $0x18] sm:$0xff]
        %v287 = vld [vmem:[%s280 + $0x20] sm:$0xff]
        %v288 = vld [vmem:[%s280 + $0x28] sm:$0xff]
        %v289 = vld [vmem:[%s280 + $0x30] sm:$0xff]
        %v290 = vld [vmem:[%s280 + $0x38] sm:$0xff]
        %v291 = vld [vmem:[%s280 + $0x40] sm:$0xff]
        %v292 = vld [vmem:[%s280 + $0x48] sm:$0xff]
        %v293 = vld [vmem:[%s280 + $0x50] sm:$0xff]
        %v294 = vld [vmem:[%s280 + $0x58] sm:$0xff]
        %v295 = vld [vmem:[%s280 + $0x60] sm:$0xff]
        %v296 = vld [vmem:[%s280 + $0x68] sm:$0xff]
        %v297 = vld [vmem:[%s280 + $0x70] sm:$0xff]
        %v298 = vld [vmem:[%s280 + $0x78] sm:$0xff]
        %v299 = vld [vmem:[%s280 + $0x80] sm:$0xff]
        %v300 = vld [vmem:[%s280 + $0x88] sm:$0xff]
        %v301 = vld [vmem:[%s280 + $0x90] sm:$0xff]
        %v302 = vld [vmem:[%s280 + $0x98] sm:$0xff]
        %v303 = vld [vmem:[%s280 + $0xa0] sm:$0xff]
        %v304 = vld [vmem:[%s280 + $0xa8] sm:$0xff]
        %v305 = vld [vmem:[%s280 + $0xb0] sm:$0xff]
        %v306 = vld [vmem:[%s280 + $0xb8] sm:$0xff]
        %v307 = vld [vmem:[%s280 + $0xc0] sm:$0xff]
        %v308 = vld [vmem:[%s280 + $0xc8] sm:$0xff]
        %v309 = vld [vmem:[%s280 + $0xd0] sm:$0xff]
        %v310 = vld [vmem:[%s280 + $0xd8] sm:$0xff]
        %v311 = vld [vmem:[%s280 + $0xe0] sm:$0xff]
        %v312 = vld [vmem:[%s280 + $0xe8] sm:$0xff]
        %v313 = vld [vmem:[%s280 + $0xf0] sm:$0xff]
        %v314 = vld [vmem:[%s280 + $0xf8] sm:$0xff]
        %v315 = vld [vmem:[%s280 + $0x100] sm:$0xff]
        %v316 = vld [vmem:[%s280 + $0x108] sm:$0xff]
        %v317 = vld [vmem:[%s280 + $0x110] sm:$0xff]
        %v318 = vld [vmem:[%s280 + $0x118] sm:$0xff]
        %v319 = vld [vmem:[%s280 + $0x120] sm:$0xff]
        %v320 = vld [vmem:[%s280 + $0x128] sm:$0xff]
        %v321 = vld [vmem:[%s280 + $0x130] sm:$0xff]
        %v322 = vld [vmem:[%s280 + $0x138] sm:$0xff]
        %v323 = vld [vmem:[%s280 + $0x140] sm:$0xff]
        %v324 = vld [vmem:[%s280 + $0x148] sm:$0xff]
        %v325 = vld [vmem:[%s280 + $0x150] sm:$0xff]
        %v326 = vld [vmem:[%s280 + $0x158] sm:$0xff]
        %v327 = vld [vmem:[%s280 + $0x160] sm:$0xff]
        %v328 = vld [vmem:[%s280 + $0x168] sm:$0xff]
        %v329 = vld [vmem:[%s280 + $0x170] sm:$0xff]
        %v330 = vld [vmem:[%s280 + $0x178] sm:$0xff]
        %v331 = vld [vmem:[%s280 + $0x180] sm:$0xff]
        %v332 = vld [vmem:[%s280 + $0x188] sm:$0xff]
        %v333 = vld [vmem:[%s280 + $0x190] sm:$0xff]
        %v334 = vld [vmem:[%s280 + $0x198] sm:$0xff]
        %v335 = vld [vmem:[%s280 + $0x1a0] sm:$0xff]
        %v336 = vld [vmem:[%s280 + $0x1a8] sm:$0xff]
        %v337 = vld [vmem:[%s280 + $0x1b0] sm:$0xff]
        %v338 = vld [vmem:[%s280 + $0x1b8] sm:$0xff]
        %v339 = vld [vmem:[%s280 + $0x1c0] sm:$0xff]
        %v340 = vld [vmem:[%s280 + $0x1c8] sm:$0xff]
        %v341 = vld [vmem:[%s280 + $0x1d0] sm:$0xff]
        %v342 = vld [vmem:[%s280 + $0x1d8] sm:$0xff]
        %v343 = vld [vmem:[%s280 + $0x1e0] sm:$0xff]
        %v344 = vld [vmem:[%s280 + $0x1e8] sm:$0xff]
        %v345 = vld [vmem:[%s280 + $0x1f0] sm:$0xff]
        %v346 = vld [vmem:[%s280 + $0x1f8] sm:$0xff]
        %v347 = vld [vmem:[%s280 + $0x200] sm:$0xff]
        %v348 = vld [vmem:[%s280 + $0x208] sm:$0xff]
        %v349 = vld [vmem:[%s280 + $0x210] sm:$0xff]
        %v350 = vld [vmem:[%s280 + $0x218] sm:$0xff]
        %v351 = vld [vmem:[%s280 + $0x220] sm:$0xff]
        %v352 = vld [vmem:[%s280 + $0x228] sm:$0xff]
        %v353 = vld [vmem:[%s280 + $0x230] sm:$0xff]
        %v354 = vld [vmem:[%s280 + $0x238] sm:$0xff]
        %v355 = vld [vmem:[%s280 + $0x240] sm:$0xff]
        %v356 = vld [vmem:[%s280 + $0x248] sm:$0xff]
        %v357 = vld [vmem:[%s280 + $0x250] sm:$0xff]
        %v358 = vld [vmem:[%s280 + $0x258] sm:$0xff]
        %v359 = vld [vmem:[%s280 + $0x260] sm:$0xff]
        %v360 = vld [vmem:[%s280 + $0x268] sm:$0xff]
        %v361 = vld [vmem:[%s280 + $0x270] sm:$0xff]
        %v362 = vld [vmem:[%s280 + $0x278] sm:$0xff]
        %v363 = vld [vmem:[%s280 + $0x280] sm:$0xff]
        %v364 = vld [vmem:[%s280 + $0x288] sm:$0xff]
        %v365 = vld [vmem:[%s280 + $0x290] sm:$0xff]
        %v366 = vld [vmem:[%s280 + $0x298] sm:$0xff]
        %v367 = vld [vmem:[%s280 + $0x2a0] sm:$0xff]
        %v368 = vld [vmem:[%s280 + $0x2a8] sm:$0xff]
        %v369 = vld [vmem:[%s280 + $0x2b0] sm:$0xff]
        %v370 = vld [vmem:[%s280 + $0x2b8] sm:$0xff]
        %v371 = vld [vmem:[%s280 + $0x2c0] sm:$0xff]
        %v372 = vld [vmem:[%s280 + $0x2c8] sm:$0xff]
        %v373 = vld [vmem:[%s280 + $0x2d0] sm:$0xff]
        %v374 = vld [vmem:[%s280 + $0x2d8] sm:$0xff]
        %v375 = vld [vmem:[%s280 + $0x2e0] sm:$0xff]
        %v376 = vld [vmem:[%s280 + $0x2e8] sm:$0xff]
        %v377 = vld [vmem:[%s280 + $0x2f0] sm:$0xff]
        %v378 = vld [vmem:[%s280 + $0x2f8] sm:$0xff]
        %v379 = vld [vmem:[%s280 + $0x300] sm:$0xff]
        %v380 = vld [vmem:[%s280 + $0x308] sm:$0xff]
        %v381 = vld [vmem:[%s280 + $0x310] sm:$0xff]
        %v382 = vld [vmem:[%s280 + $0x318] sm:$0xff]
        %v383 = vld [vmem:[%s280 + $0x320] sm:$0xff]
        %v384 = vld [vmem:[%s280 + $0x328] sm:$0xff]
        %v385 = vld [vmem:[%s280 + $0x330] sm:$0xff]
        %v386 = vld [vmem:[%s280 + $0x338] sm:$0xff]
        %v387 = vld [vmem:[%s280 + $0x340] sm:$0xff]
        %v388 = vld [vmem:[%s280 + $0x348] sm:$0xff]
        %v389 = vld [vmem:[%s280 + $0x350] sm:$0xff]
        %v390 = vld [vmem:[%s280 + $0x358] sm:$0xff]
        %v391 = vld [vmem:[%s280 + $0x360] sm:$0xff]
        %v392 = vld [vmem:[%s280 + $0x368] sm:$0xff]
        %v393 = vld [vmem:[%s280 + $0x370] sm:$0xff]
        %v394 = vld [vmem:[%s280 + $0x378] sm:$0xff]
        %v395 = vld [vmem:[%s280 + $0x380] sm:$0xff]
        %v396 = vld [vmem:[%s280 + $0x388] sm:$0xff]
        %v397 = vld [vmem:[%s280 + $0x390] sm:$0xff]
        %v398 = vld [vmem:[%s280 + $0x398] sm:$0xff]
        %v399 = vld [vmem:[%s280 + $0x3a0] sm:$0xff]
        %v400 = vld [vmem:[%s280 + $0x3a8] sm:$0xff]
        %v401 = vld [vmem:[%s280 + $0x3b0] sm:$0xff]
        %v402 = vld [vmem:[%s280 + $0x3b8] sm:$0xff]
        %v403 = vld [vmem:[%s280 + $0x3c0] sm:$0xff]
        %v404 = vld [vmem:[%s280 + $0x3c8] sm:$0xff]
        %v405 = vld [vmem:[%s280 + $0x3d0] sm:$0xff]
        %v406 = vld [vmem:[%s280 + $0x3d8] sm:$0xff]
        %v407 = vld [vmem:[%s280 + $0x3e0] sm:$0xff]
        %v408 = vld [vmem:[%s280 + $0x3e8] sm:$0xff]
        %v409 = vld [vmem:[%s280 + $0x3f0] sm:$0xff]
        %v410 = vld [vmem:[%s280 + $0x3f8] sm:$0xff]
        %v411 = vld [vmem:[%s1] sm:$0xff]
        %v412 = vld [vmem:[%s1 + $0x8] sm:$0xff]
        %v413 = vld [vmem:[%s1 + $0x10] sm:$0xff]
        %v414 = vld [vmem:[%s1 + $0x18] sm:$0xff]
        %v415 = vld [vmem:[%s1 + $0x20] sm:$0xff]
        %v416 = vld [vmem:[%s1 + $0x28] sm:$0xff]
        %v417 = vld [vmem:[%s1 + $0x30] sm:$0xff]
        %v418 = vld [vmem:[%s1 + $0x38] sm:$0xff]
        %v419 = vld [vmem:[%s1 + $0x40] sm:$0xff]
        %v420 = vld [vmem:[%s1 + $0x48] sm:$0xff]
        %v421 = vld [vmem:[%s1 + $0x50] sm:$0xff]
        %v422 = vld [vmem:[%s1 + $0x58] sm:$0xff]
        %v423 = vld [vmem:[%s1 + $0x60] sm:$0xff]
        %v424 = vld [vmem:[%s1 + $0x68] sm:$0xff]
        %v425 = vld [vmem:[%s1 + $0x70] sm:$0xff]
        %v426 = vld [vmem:[%s1 + $0x78] sm:$0xff]
        %v427 = vld [vmem:[%s1 + $0x80] sm:$0xff]
        %v428 = vld [vmem:[%s1 + $0x88] sm:$0xff]
        %v429 = vld [vmem:[%s1 + $0x90] sm:$0xff]
        %v430 = vld [vmem:[%s1 + $0x98] sm:$0xff]
        %v431 = vld [vmem:[%s1 + $0xa0] sm:$0xff]
        %v432 = vld [vmem:[%s1 + $0xa8] sm:$0xff]
        %v433 = vld [vmem:[%s1 + $0xb0] sm:$0xff]
        %v434 = vld [vmem:[%s1 + $0xb8] sm:$0xff]
        %v435 = vld [vmem:[%s1 + $0xc0] sm:$0xff]
        %v436 = vld [vmem:[%s1 + $0xc8] sm:$0xff]
        %v437 = vld [vmem:[%s1 + $0xd0] sm:$0xff]
        %v438 = vld [vmem:[%s1 + $0xd8] sm:$0xff]
        %v439 = vld [vmem:[%s1 + $0xe0] sm:$0xff]
        %v440 = vld [vmem:[%s1 + $0xe8] sm:$0xff]
        %v441 = vld [vmem:[%s1 + $0xf0] sm:$0xff]
        %v442 = vld [vmem:[%s1 + $0xf8] sm:$0xff]
        %v443 = vld [vmem:[%s1 + $0x100] sm:$0xff]
        %v444 = vld [vmem:[%s1 + $0x108] sm:$0xff]
        %v445 = vld [vmem:[%s1 + $0x110] sm:$0xff]
        %v446 = vld [vmem:[%s1 + $0x118] sm:$0xff]
        %v447 = vld [vmem:[%s1 + $0x120] sm:$0xff]
        %v448 = vld [vmem:[%s1 + $0x128] sm:$0xff]
        %v449 = vld [vmem:[%s1 + $0x130] sm:$0xff]
        %v450 = vld [vmem:[%s1 + $0x138] sm:$0xff]
        %v451 = vld [vmem:[%s1 + $0x140] sm:$0xff]
        %v452 = vld [vmem:[%s1 + $0x148] sm:$0xff]
        %v453 = vld [vmem:[%s1 + $0x150] sm:$0xff]
        %v454 = vld [vmem:[%s1 + $0x158] sm:$0xff]
        %v455 = vld [vmem:[%s1 + $0x160] sm:$0xff]
        %v456 = vld [vmem:[%s1 + $0x168] sm:$0xff]
        %v457 = vld [vmem:[%s1 + $0x170] sm:$0xff]
        %v458 = vld [vmem:[%s1 + $0x178] sm:$0xff]
        %v459 = vld [vmem:[%s1 + $0x180] sm:$0xff]
        %v460 = vld [vmem:[%s1 + $0x188] sm:$0xff]
        %v461 = vld [vmem:[%s1 + $0x190] sm:$0xff]
        %v462 = vld [vmem:[%s1 + $0x198] sm:$0xff]
        %v463 = vld [vmem:[%s1 + $0x1a0] sm:$0xff]
        %v464 = vld [vmem:[%s1 + $0x1a8] sm:$0xff]
        %v465 = vld [vmem:[%s1 + $0x1b0] sm:$0xff]
        %v466 = vld [vmem:[%s1 + $0x1b8] sm:$0xff]
        %v467 = vld [vmem:[%s1 + $0x1c0] sm:$0xff]
        %v468 = vld [vmem:[%s1 + $0x1c8] sm:$0xff]
        %v469 = vld [vmem:[%s1 + $0x1d0] sm:$0xff]
        %v470 = vld [vmem:[%s1 + $0x1d8] sm:$0xff]
        %v471 = vld [vmem:[%s1 + $0x1e0] sm:$0xff]
        %v472 = vld [vmem:[%s1 + $0x1e8] sm:$0xff]
        %v473 = vld [vmem:[%s1 + $0x1f0] sm:$0xff]
        %v474 = vld [vmem:[%s1 + $0x1f8] sm:$0xff]
        %v475 = vld [vmem:[%s1 + $0x200] sm:$0xff]
        %v476 = vld [vmem:[%s1 + $0x208] sm:$0xff]
        %v477 = vld [vmem:[%s1 + $0x210] sm:$0xff]
        %v478 = vld [vmem:[%s1 + $0x218] sm:$0xff]
        %v479 = vld [vmem:[%s1 + $0x220] sm:$0xff]
        %v480 = vld [vmem:[%s1 + $0x228] sm:$0xff]
        %v481 = vld [vmem:[%s1 + $0x230] sm:$0xff]
        %v482 = vld [vmem:[%s1 + $0x238] sm:$0xff]
        %v483 = vld [vmem:[%s1 + $0x240] sm:$0xff]
        %v484 = vld [vmem:[%s1 + $0x248] sm:$0xff]
        %v485 = vld [vmem:[%s1 + $0x250] sm:$0xff]
        %v486 = vld [vmem:[%s1 + $0x258] sm:$0xff]
        %v487 = vld [vmem:[%s1 + $0x260] sm:$0xff]
        %v488 = vld [vmem:[%s1 + $0x268] sm:$0xff]
        %v489 = vld [vmem:[%s1 + $0x270] sm:$0xff]
        %v490 = vld [vmem:[%s1 + $0x278] sm:$0xff]
        %v491 = vld [vmem:[%s1 + $0x280] sm:$0xff]
        %v492 = vld [vmem:[%s1 + $0x288] sm:$0xff]
        %v493 = vld [vmem:[%s1 + $0x290] sm:$0xff]
        %v494 = vld [vmem:[%s1 + $0x298] sm:$0xff]
        %v495 = vld [vmem:[%s1 + $0x2a0] sm:$0xff]
        %v496 = vld [vmem:[%s1 + $0x2a8] sm:$0xff]
        %v497 = vld [vmem:[%s1 + $0x2b0] sm:$0xff]
        %v498 = vld [vmem:[%s1 + $0x2b8] sm:$0xff]
        %v499 = vld [vmem:[%s1 + $0x2c0] sm:$0xff]
        %v500 = vld [vmem:[%s1 + $0x2c8] sm:$0xff]
        %v501 = vld [vmem:[%s1 + $0x2d0] sm:$0xff]
        %v502 = vld [vmem:[%s1 + $0x2d8] sm:$0xff]
        %v503 = vld [vmem:[%s1 + $0x2e0] sm:$0xff]
        %v504 = vld [vmem:[%s1 + $0x2e8] sm:$0xff]
        %v505 = vld [vmem:[%s1 + $0x2f0] sm:$0xff]
        %v506 = vld [vmem:[%s1 + $0x2f8] sm:$0xff]
        %v507 = vld [vmem:[%s1 + $0x300] sm:$0xff]
        %v508 = vld [vmem:[%s1 + $0x308] sm:$0xff]
        %v509 = vld [vmem:[%s1 + $0x310] sm:$0xff]
        %v510 = vld [vmem:[%s1 + $0x318] sm:$0xff]
        %v511 = vld [vmem:[%s1 + $0x320] sm:$0xff]
        %v512 = vld [vmem:[%s1 + $0x328] sm:$0xff]
        %v513 = vld [vmem:[%s1 + $0x330] sm:$0xff]
        %v514 = vld [vmem:[%s1 + $0x338] sm:$0xff]
        %v515 = vld [vmem:[%s1 + $0x340] sm:$0xff]
        %v516 = vld [vmem:[%s1 + $0x348] sm:$0xff]
        %v517 = vld [vmem:[%s1 + $0x350] sm:$0xff]
        %v518 = vld [vmem:[%s1 + $0x358] sm:$0xff]
        %v519 = vld [vmem:[%s1 + $0x360] sm:$0xff]
        %v520 = vld [vmem:[%s1 + $0x368] sm:$0xff]
        %v521 = vld [vmem:[%s1 + $0x370] sm:$0xff]
        %v522 = vld [vmem:[%s1 + $0x378] sm:$0xff]
        %v523 = vld [vmem:[%s1 + $0x380] sm:$0xff]
        %v524 = vld [vmem:[%s1 + $0x388] sm:$0xff]
        %v525 = vld [vmem:[%s1 + $0x390] sm:$0xff]
        %v526 = vld [vmem:[%s1 + $0x398] sm:$0xff]
        %v527 = vld [vmem:[%s1 + $0x3a0] sm:$0xff]
        %v528 = vld [vmem:[%s1 + $0x3a8] sm:$0xff]
        %v529 = vld [vmem:[%s1 + $0x3b0] sm:$0xff]
        %v530 = vld [vmem:[%s1 + $0x3b8] sm:$0xff]
        %v531 = vld [vmem:[%s1 + $0x3c0] sm:$0xff]
        %v532 = vld [vmem:[%s1 + $0x3c8] sm:$0xff]
        %v533 = vld [vmem:[%s1 + $0x3d0] sm:$0xff]
        %v534 = vld [vmem:[%s1 + $0x3d8] sm:$0xff]
        %v535 = vld [vmem:[%s1 + $0x3e0] sm:$0xff]
        %v536 = vld [vmem:[%s1 + $0x3e8] sm:$0xff]
        %v537 = vld [vmem:[%s1 + $0x3f0] sm:$0xff]
        %v538 = vld [vmem:[%s1 + $0x3f8] sm:$0xff]
        %v539 = vld [vmem:[%s1 + $0x400] sm:$0xff]
        %v540 = vld [vmem:[%s1 + $0x408] sm:$0xff]
        %v541 = vld [vmem:[%s1 + $0x410] sm:$0xff]
        %v542 = vld [vmem:[%s1 + $0x418] sm:$0xff]
        %v543 = vld [vmem:[%s1 + $0x420] sm:$0xff]
        %v544 = vld [vmem:[%s1 + $0x428] sm:$0xff]
        %v545 = vld [vmem:[%s1 + $0x430] sm:$0xff]
        %v546 = vld [vmem:[%s1 + $0x438] sm:$0xff]
        %v547 = vld [vmem:[%s1 + $0x440] sm:$0xff]
        %v548 = vld [vmem:[%s1 + $0x448] sm:$0xff]
        %v549 = vld [vmem:[%s1 + $0x450] sm:$0xff]
        %v550 = vld [vmem:[%s1 + $0x458] sm:$0xff]
        %v551 = vld [vmem:[%s1 + $0x460] sm:$0xff]
        %v552 = vld [vmem:[%s1 + $0x468] sm:$0xff]
        %v553 = vld [vmem:[%s1 + $0x470] sm:$0xff]
        %v554 = vld [vmem:[%s1 + $0x478] sm:$0xff]
        %v555 = vld [vmem:[%s1 + $0x480] sm:$0xff]
        %v556 = vld [vmem:[%s1 + $0x488] sm:$0xff]
        %v557 = vld [vmem:[%s1 + $0x490] sm:$0xff]
        %v558 = vld [vmem:[%s1 + $0x498] sm:$0xff]
        %v559 = vld [vmem:[%s1 + $0x4a0] sm:$0xff]
        %v560 = vld [vmem:[%s1 + $0x4a8] sm:$0xff]
        %v561 = vld [vmem:[%s1 + $0x4b0] sm:$0xff]
        %v562 = vld [vmem:[%s1 + $0x4b8] sm:$0xff]
        %v563 = vld [vmem:[%s1 + $0x4c0] sm:$0xff]
        %v564 = vld [vmem:[%s1 + $0x4c8] sm:$0xff]
        %v565 = vld [vmem:[%s1 + $0x4d0] sm:$0xff]
        %v566 = vld [vmem:[%s1 + $0x4d8] sm:$0xff]
        %v567 = vld [vmem:[%s1 + $0x4e0] sm:$0xff]
        %v568 = vld [vmem:[%s1 + $0x4e8] sm:$0xff]
        %v569 = vld [vmem:[%s1 + $0x4f0] sm:$0xff]
        %v570 = vld [vmem:[%s1 + $0x4f8] sm:$0xff]
        %v571 = vld [vmem:[%s1 + $0x500] sm:$0xff]
        %v572 = vld [vmem:[%s1 + $0x508] sm:$0xff]
        %v573 = vld [vmem:[%s1 + $0x510] sm:$0xff]
        %v574 = vld [vmem:[%s1 + $0x518] sm:$0xff]
        %v575 = vld [vmem:[%s1 + $0x520] sm:$0xff]
        %v576 = vld [vmem:[%s1 + $0x528] sm:$0xff]
        %v577 = vld [vmem:[%s1 + $0x530] sm:$0xff]
        %v578 = vld [vmem:[%s1 + $0x538] sm:$0xff]
        %v579 = vld [vmem:[%s1 + $0x540] sm:$0xff]
        %v580 = vld [vmem:[%s1 + $0x548] sm:$0xff]
        %v581 = vld [vmem:[%s1 + $0x550] sm:$0xff]
        %v582 = vld [vmem:[%s1 + $0x558] sm:$0xff]
        %v583 = vld [vmem:[%s1 + $0x560] sm:$0xff]
        %v584 = vld [vmem:[%s1 + $0x568] sm:$0xff]
        %v585 = vld [vmem:[%s1 + $0x570] sm:$0xff]
        %v586 = vld [vmem:[%s1 + $0x578] sm:$0xff]
        %v587 = vld [vmem:[%s1 + $0x580] sm:$0xff]
        %v588 = vld [vmem:[%s1 + $0x588] sm:$0xff]
        %v589 = vld [vmem:[%s1 + $0x590] sm:$0xff]
        %v590 = vld [vmem:[%s1 + $0x598] sm:$0xff]
        %v591 = vld [vmem:[%s1 + $0x5a0] sm:$0xff]
        %v592 = vld [vmem:[%s1 + $0x5a8] sm:$0xff]
        %v593 = vld [vmem:[%s1 + $0x5b0] sm:$0xff]
        %v594 = vld [vmem:[%s1 + $0x5b8] sm:$0xff]
        %v595 = vld [vmem:[%s1 + $0x5c0] sm:$0xff]
        %v596 = vld [vmem:[%s1 + $0x5c8] sm:$0xff]
        %v597 = vld [vmem:[%s1 + $0x5d0] sm:$0xff]
        %v598 = vld [vmem:[%s1 + $0x5d8] sm:$0xff]
        %v599 = vld [vmem:[%s1 + $0x5e0] sm:$0xff]
        %v600 = vld [vmem:[%s1 + $0x5e8] sm:$0xff]
        %v601 = vld [vmem:[%s1 + $0x5f0] sm:$0xff]
        %v602 = vld [vmem:[%s1 + $0x5f8] sm:$0xff]
        %v603 = vld [vmem:[%s1 + $0x600] sm:$0xff]
        %v604 = vld [vmem:[%s1 + $0x608] sm:$0xff]
        %v605 = vld [vmem:[%s1 + $0x610] sm:$0xff]
        %v606 = vld [vmem:[%s1 + $0x618] sm:$0xff]
        %v607 = vld [vmem:[%s1 + $0x620] sm:$0xff]
        %v608 = vld [vmem:[%s1 + $0x628] sm:$0xff]
        %v609 = vld [vmem:[%s1 + $0x630] sm:$0xff]
        %v610 = vld [vmem:[%s1 + $0x638] sm:$0xff]
        %v611 = vld [vmem:[%s1 + $0x640] sm:$0xff]
        %v612 = vld [vmem:[%s1 + $0x648] sm:$0xff]
        %v613 = vld [vmem:[%s1 + $0x650] sm:$0xff]
        %v614 = vld [vmem:[%s1 + $0x658] sm:$0xff]
        %v615 = vld [vmem:[%s1 + $0x660] sm:$0xff]
        %v616 = vld [vmem:[%s1 + $0x668] sm:$0xff]
        %v617 = vld [vmem:[%s1 + $0x670] sm:$0xff]
        %v618 = vld [vmem:[%s1 + $0x678] sm:$0xff]
        %v619 = vld [vmem:[%s1 + $0x680] sm:$0xff]
        %v620 = vld [vmem:[%s1 + $0x688] sm:$0xff]
        %v621 = vld [vmem:[%s1 + $0x690] sm:$0xff]
        %v622 = vld [vmem:[%s1 + $0x698] sm:$0xff]
        %v623 = vld [vmem:[%s1 + $0x6a0] sm:$0xff]
        %v624 = vld [vmem:[%s1 + $0x6a8] sm:$0xff]
        %v625 = vld [vmem:[%s1 + $0x6b0] sm:$0xff]
        %v626 = vld [vmem:[%s1 + $0x6b8] sm:$0xff]
        %v627 = vld [vmem:[%s1 + $0x6c0] sm:$0xff]
        %v628 = vld [vmem:[%s1 + $0x6c8] sm:$0xff]
        %v629 = vld [vmem:[%s1 + $0x6d0] sm:$0xff]
        %v630 = vld [vmem:[%s1 + $0x6d8] sm:$0xff]
        %v631 = vld [vmem:[%s1 + $0x6e0] sm:$0xff]
        %v632 = vld [vmem:[%s1 + $0x6e8] sm:$0xff]
        %v633 = vld [vmem:[%s1 + $0x6f0] sm:$0xff]
        %v634 = vld [vmem:[%s1 + $0x6f8] sm:$0xff]
        %v635 = vld [vmem:[%s1 + $0x700] sm:$0xff]
        %v636 = vld [vmem:[%s1 + $0x708] sm:$0xff]
        %v637 = vld [vmem:[%s1 + $0x710] sm:$0xff]
        %v638 = vld [vmem:[%s1 + $0x718] sm:$0xff]
        %v639 = vld [vmem:[%s1 + $0x720] sm:$0xff]
        %v640 = vld [vmem:[%s1 + $0x728] sm:$0xff]
        %v641 = vld [vmem:[%s1 + $0x730] sm:$0xff]
        %v642 = vld [vmem:[%s1 + $0x738] sm:$0xff]
        %v643 = vld [vmem:[%s1 + $0x740] sm:$0xff]
        %v644 = vld [vmem:[%s1 + $0x748] sm:$0xff]
        %v645 = vld [vmem:[%s1 + $0x750] sm:$0xff]
        %v646 = vld [vmem:[%s1 + $0x758] sm:$0xff]
        %v647 = vld [vmem:[%s1 + $0x760] sm:$0xff]
        %v648 = vld [vmem:[%s1 + $0x768] sm:$0xff]
        %v649 = vld [vmem:[%s1 + $0x770] sm:$0xff]
        %v650 = vld [vmem:[%s1 + $0x778] sm:$0xff]
        %v651 = vld [vmem:[%s1 + $0x780] sm:$0xff]
        %v652 = vld [vmem:[%s1 + $0x788] sm:$0xff]
        %v653 = vld [vmem:[%s1 + $0x790] sm:$0xff]
        %v654 = vld [vmem:[%s1 + $0x798] sm:$0xff]
        %v655 = vld [vmem:[%s1 + $0x7a0] sm:$0xff]
        %v656 = vld [vmem:[%s1 + $0x7a8] sm:$0xff]
        %v657 = vld [vmem:[%s1 + $0x7b0] sm:$0xff]
        %v658 = vld [vmem:[%s1 + $0x7b8] sm:$0xff]
        %v659 = vld [vmem:[%s1 + $0x7c0] sm:$0xff]
        %v660 = vld [vmem:[%s1 + $0x7c8] sm:$0xff]
        %v661 = vld [vmem:[%s1 + $0x7d0] sm:$0xff]
        %v662 = vld [vmem:[%s1 + $0x7d8] sm:$0xff]
        %v663 = vld [vmem:[%s1 + $0x7e0] sm:$0xff]
        %v664 = vld [vmem:[%s1 + $0x7e8] sm:$0xff]
        %v665 = vld [vmem:[%s1 + $0x7f0] sm:$0xff]
        %v666 = vld [vmem:[%s1 + $0x7f8] sm:$0xff]
        %v667 = vld [vmem:[%s2] sm:$0xf]
        %v669 = vlaneseq
        %v670 = vshrl.u32 %v669, 7
        %v671 = vsub.s32 0, %v670
        %v672 = vrot.slane %v667, %v671
        %v673 = vlaneseq
        %v674 = vshrl.u32 %v673, 7
        %v675 = vsub.s32 1, %v674
        %v676 = vrot.slane %v667, %v675
        %v677 = vlaneseq
        %v678 = vshrl.u32 %v677, 7
        %v679 = vsub.s32 2, %v678
        %v680 = vrot.slane %v667, %v679
        %v681 = vlaneseq
        %v682 = vshrl.u32 %v681, 7
        %v683 = vsub.s32 3, %v682
        %v684 = vrot.slane %v667, %v683
        %v817 = vunpack.c.l.b16 %v283
        %v818 = vunpack.c.h.b16 %v283
        %v819 = vunpack.c.l.b16 %v284
        %v820 = vunpack.c.h.b16 %v284
        %v821 = vunpack.c.l.b16 %v285
        %v822 = vunpack.c.h.b16 %v285
        %v823 = vunpack.c.l.b16 %v286
        %v824 = vunpack.c.h.b16 %v286
        %v825 = vunpack.c.l.b16 %v287
        %v826 = vunpack.c.h.b16 %v287
        %v827 = vunpack.c.l.b16 %v288
        %v828 = vunpack.c.h.b16 %v288
        %v829 = vunpack.c.l.b16 %v289
        %v830 = vunpack.c.h.b16 %v289
        %v831 = vunpack.c.l.b16 %v290
        %v832 = vunpack.c.h.b16 %v290
        %v833 = vunpack.c.l.b16 %v291
        %v834 = vunpack.c.h.b16 %v291
        %v835 = vunpack.c.l.b16 %v292
        %v836 = vunpack.c.h.b16 %v292
        %v837 = vunpack.c.l.b16 %v293
        %v838 = vunpack.c.h.b16 %v293
        %v839 = vunpack.c.l.b16 %v294
        %v840 = vunpack.c.h.b16 %v294
        %v841 = vunpack.c.l.b16 %v295
        %v842 = vunpack.c.h.b16 %v295
        %v843 = vunpack.c.l.b16 %v296
        %v844 = vunpack.c.h.b16 %v296
        %v845 = vunpack.c.l.b16 %v297
        %v846 = vunpack.c.h.b16 %v297
        %v847 = vunpack.c.l.b16 %v298
        %v848 = vunpack.c.h.b16 %v298
        %v849 = vunpack.c.l.b16 %v299
        %v850 = vunpack.c.h.b16 %v299
        %v851 = vunpack.c.l.b16 %v300
        %v852 = vunpack.c.h.b16 %v300
        %v853 = vunpack.c.l.b16 %v301
        %v854 = vunpack.c.h.b16 %v301
        %v855 = vunpack.c.l.b16 %v302
        %v856 = vunpack.c.h.b16 %v302
        %v857 = vunpack.c.l.b16 %v303
        %v858 = vunpack.c.h.b16 %v303
        %v859 = vunpack.c.l.b16 %v304
        %v860 = vunpack.c.h.b16 %v304
        %v861 = vunpack.c.l.b16 %v305
        %v862 = vunpack.c.h.b16 %v305
        %v863 = vunpack.c.l.b16 %v306
        %v864 = vunpack.c.h.b16 %v306
        %v865 = vunpack.c.l.b16 %v307
        %v866 = vunpack.c.h.b16 %v307
        %v867 = vunpack.c.l.b16 %v308
        %v868 = vunpack.c.h.b16 %v308
        %v869 = vunpack.c.l.b16 %v309
        %v870 = vunpack.c.h.b16 %v309
        %v871 = vunpack.c.l.b16 %v310
        %v872 = vunpack.c.h.b16 %v310
        %v873 = vunpack.c.l.b16 %v311
        %v874 = vunpack.c.h.b16 %v311
        %v875 = vunpack.c.l.b16 %v312
        %v876 = vunpack.c.h.b16 %v312
        %v877 = vunpack.c.l.b16 %v313
        %v878 = vunpack.c.h.b16 %v313
        %v879 = vunpack.c.l.b16 %v314
        %v880 = vunpack.c.h.b16 %v314
        %v881 = vunpack.c.l.b16 %v315
        %v882 = vunpack.c.h.b16 %v315
        %v883 = vunpack.c.l.b16 %v316
        %v884 = vunpack.c.h.b16 %v316
        %v885 = vunpack.c.l.b16 %v317
        %v886 = vunpack.c.h.b16 %v317
        %v887 = vunpack.c.l.b16 %v318
        %v888 = vunpack.c.h.b16 %v318
        %v889 = vunpack.c.l.b16 %v319
        %v890 = vunpack.c.h.b16 %v319
        %v891 = vunpack.c.l.b16 %v320
        %v892 = vunpack.c.h.b16 %v320
        %v893 = vunpack.c.l.b16 %v321
        %v894 = vunpack.c.h.b16 %v321
        %v895 = vunpack.c.l.b16 %v322
        %v896 = vunpack.c.h.b16 %v322
        %v897 = vunpack.c.l.b16 %v323
        %v898 = vunpack.c.h.b16 %v323
        %v899 = vunpack.c.l.b16 %v324
        %v900 = vunpack.c.h.b16 %v324
        %v901 = vunpack.c.l.b16 %v325
        %v902 = vunpack.c.h.b16 %v325
        %v903 = vunpack.c.l.b16 %v326
        %v904 = vunpack.c.h.b16 %v326
        %v905 = vunpack.c.l.b16 %v327
        %v906 = vunpack.c.h.b16 %v327
        %v907 = vunpack.c.l.b16 %v328
        %v908 = vunpack.c.h.b16 %v328
        %v909 = vunpack.c.l.b16 %v329
        %v910 = vunpack.c.h.b16 %v329
        %v911 = vunpack.c.l.b16 %v330
        %v912 = vunpack.c.h.b16 %v330
        %v913 = vunpack.c.l.b16 %v331
        %v914 = vunpack.c.h.b16 %v331
        %v915 = vunpack.c.l.b16 %v332
        %v916 = vunpack.c.h.b16 %v332
        %v917 = vunpack.c.l.b16 %v333
        %v918 = vunpack.c.h.b16 %v333
        %v919 = vunpack.c.l.b16 %v334
        %v920 = vunpack.c.h.b16 %v334
        %v921 = vunpack.c.l.b16 %v335
        %v922 = vunpack.c.h.b16 %v335
        %v923 = vunpack.c.l.b16 %v336
        %v924 = vunpack.c.h.b16 %v336
        %v925 = vunpack.c.l.b16 %v337
        %v926 = vunpack.c.h.b16 %v337
        %v927 = vunpack.c.l.b16 %v338
        %v928 = vunpack.c.h.b16 %v338
        %v929 = vunpack.c.l.b16 %v339
        %v930 = vunpack.c.h.b16 %v339
        %v931 = vunpack.c.l.b16 %v340
        %v932 = vunpack.c.h.b16 %v340
        %v933 = vunpack.c.l.b16 %v341
        %v934 = vunpack.c.h.b16 %v341
        %v935 = vunpack.c.l.b16 %v342
        %v936 = vunpack.c.h.b16 %v342
        %v937 = vunpack.c.l.b16 %v343
        %v938 = vunpack.c.h.b16 %v343
        %v939 = vunpack.c.l.b16 %v344
        %v940 = vunpack.c.h.b16 %v344
        %v941 = vunpack.c.l.b16 %v345
        %v942 = vunpack.c.h.b16 %v345
        %v943 = vunpack.c.l.b16 %v346
        %v944 = vunpack.c.h.b16 %v346
        %v945 = vunpack.c.l.b16 %v347
        %v946 = vunpack.c.h.b16 %v347
        %v947 = vunpack.c.l.b16 %v348
        %v948 = vunpack.c.h.b16 %v348
        %v949 = vunpack.c.l.b16 %v349
        %v950 = vunpack.c.h.b16 %v349
        %v951 = vunpack.c.l.b16 %v350
        %v952 = vunpack.c.h.b16 %v350
        %v953 = vunpack.c.l.b16 %v351
        %v954 = vunpack.c.h.b16 %v351
        %v955 = vunpack.c.l.b16 %v352
        %v956 = vunpack.c.h.b16 %v352
        %v957 = vunpack.c.l.b16 %v353
        %v958 = vunpack.c.h.b16 %v353
        %v959 = vunpack.c.l.b16 %v354
        %v960 = vunpack.c.h.b16 %v354
        %v961 = vunpack.c.l.b16 %v355
        %v962 = vunpack.c.h.b16 %v355
        %v963 = vunpack.c.l.b16 %v356
        %v964 = vunpack.c.h.b16 %v356
        %v965 = vunpack.c.l.b16 %v357
        %v966 = vunpack.c.h.b16 %v357
        %v967 = vunpack.c.l.b16 %v358
        %v968 = vunpack.c.h.b16 %v358
        %v969 = vunpack.c.l.b16 %v359
        %v970 = vunpack.c.h.b16 %v359
        %v971 = vunpack.c.l.b16 %v360
        %v972 = vunpack.c.h.b16 %v360
        %v973 = vunpack.c.l.b16 %v361
        %v974 = vunpack.c.h.b16 %v361
        %v975 = vunpack.c.l.b16 %v362
        %v976 = vunpack.c.h.b16 %v362
        %v977 = vunpack.c.l.b16 %v363
        %v978 = vunpack.c.h.b16 %v363
        %v979 = vunpack.c.l.b16 %v364
        %v980 = vunpack.c.h.b16 %v364
        %v981 = vunpack.c.l.b16 %v365
        %v982 = vunpack.c.h.b16 %v365
        %v983 = vunpack.c.l.b16 %v366
        %v984 = vunpack.c.h.b16 %v366
        %v985 = vunpack.c.l.b16 %v367
        %v986 = vunpack.c.h.b16 %v367
        %v987 = vunpack.c.l.b16 %v368
        %v988 = vunpack.c.h.b16 %v368
        %v989 = vunpack.c.l.b16 %v369
        %v990 = vunpack.c.h.b16 %v369
        %v991 = vunpack.c.l.b16 %v370
        %v992 = vunpack.c.h.b16 %v370
        %v993 = vunpack.c.l.b16 %v371
        %v994 = vunpack.c.h.b16 %v371
        %v995 = vunpack.c.l.b16 %v372
        %v996 = vunpack.c.h.b16 %v372
        %v997 = vunpack.c.l.b16 %v373
        %v998 = vunpack.c.h.b16 %v373
        %v999 = vunpack.c.l.b16 %v374
        %v1000 = vunpack.c.h.b16 %v374
        %v1001 = vunpack.c.l.b16 %v375
        %v1002 = vunpack.c.h.b16 %v375
        %v1003 = vunpack.c.l.b16 %v376
        %v1004 = vunpack.c.h.b16 %v376
        %v1005 = vunpack.c.l.b16 %v377
        %v1006 = vunpack.c.h.b16 %v377
        %v1007 = vunpack.c.l.b16 %v378
        %v1008 = vunpack.c.h.b16 %v378
        %v1009 = vunpack.c.l.b16 %v379
        %v1010 = vunpack.c.h.b16 %v379
        %v1011 = vunpack.c.l.b16 %v380
        %v1012 = vunpack.c.h.b16 %v380
        %v1013 = vunpack.c.l.b16 %v381
        %v1014 = vunpack.c.h.b16 %v381
        %v1015 = vunpack.c.l.b16 %v382
        %v1016 = vunpack.c.h.b16 %v382
        %v1017 = vunpack.c.l.b16 %v383
        %v1018 = vunpack.c.h.b16 %v383
        %v1019 = vunpack.c.l.b16 %v384
        %v1020 = vunpack.c.h.b16 %v384
        %v1021 = vunpack.c.l.b16 %v385
        %v1022 = vunpack.c.h.b16 %v385
        %v1023 = vunpack.c.l.b16 %v386
        %v1024 = vunpack.c.h.b16 %v386
        %v1025 = vunpack.c.l.b16 %v387
        %v1026 = vunpack.c.h.b16 %v387
        %v1027 = vunpack.c.l.b16 %v388
        %v1028 = vunpack.c.h.b16 %v388
        %v1029 = vunpack.c.l.b16 %v389
        %v1030 = vunpack.c.h.b16 %v389
        %v1031 = vunpack.c.l.b16 %v390
        %v1032 = vunpack.c.h.b16 %v390
        %v1033 = vunpack.c.l.b16 %v391
        %v1034 = vunpack.c.h.b16 %v391
        %v1035 = vunpack.c.l.b16 %v392
        %v1036 = vunpack.c.h.b16 %v392
        %v1037 = vunpack.c.l.b16 %v393
        %v1038 = vunpack.c.h.b16 %v393
        %v1039 = vunpack.c.l.b16 %v394
        %v1040 = vunpack.c.h.b16 %v394
        %v1041 = vunpack.c.l.b16 %v395
        %v1042 = vunpack.c.h.b16 %v395
        %v1043 = vunpack.c.l.b16 %v396
        %v1044 = vunpack.c.h.b16 %v396
        %v1045 = vunpack.c.l.b16 %v397
        %v1046 = vunpack.c.h.b16 %v397
        %v1047 = vunpack.c.l.b16 %v398
        %v1048 = vunpack.c.h.b16 %v398
        %v1049 = vunpack.c.l.b16 %v399
        %v1050 = vunpack.c.h.b16 %v399
        %v1051 = vunpack.c.l.b16 %v400
        %v1052 = vunpack.c.h.b16 %v400
        %v1053 = vunpack.c.l.b16 %v401
        %v1054 = vunpack.c.h.b16 %v401
        %v1055 = vunpack.c.l.b16 %v402
        %v1056 = vunpack.c.h.b16 %v402
        %v1057 = vunpack.c.l.b16 %v403
        %v1058 = vunpack.c.h.b16 %v403
        %v1059 = vunpack.c.l.b16 %v404
        %v1060 = vunpack.c.h.b16 %v404
        %v1061 = vunpack.c.l.b16 %v405
        %v1062 = vunpack.c.h.b16 %v405
        %v1063 = vunpack.c.l.b16 %v406
        %v1064 = vunpack.c.h.b16 %v406
        %v1065 = vunpack.c.l.b16 %v407
        %v1066 = vunpack.c.h.b16 %v407
        %v1067 = vunpack.c.l.b16 %v408
        %v1068 = vunpack.c.h.b16 %v408
        %v1069 = vunpack.c.l.b16 %v409
        %v1070 = vunpack.c.h.b16 %v409
        %v1071 = vunpack.c.l.b16 %v410
        %v1072 = vunpack.c.h.b16 %v410
        %v1073 = vpack.c.b16 %v825, %v817
        %v1074 = vpack.c.b16 %v826, %v818
        %v1075 = vpack.c.b16 %v827, %v819
        %v1076 = vpack.c.b16 %v828, %v820
        %v1077 = vpack.c.b16 %v829, %v821
        %v1078 = vpack.c.b16 %v830, %v822
        %v1079 = vpack.c.b16 %v831, %v823
        %v1080 = vpack.c.b16 %v832, %v824
        %v1081 = vpack.c.b16 %v841, %v833
        %v1082 = vpack.c.b16 %v842, %v834
        %v1083 = vpack.c.b16 %v843, %v835
        %v1084 = vpack.c.b16 %v844, %v836
        %v1085 = vpack.c.b16 %v845, %v837
        %v1086 = vpack.c.b16 %v846, %v838
        %v1087 = vpack.c.b16 %v847, %v839
        %v1088 = vpack.c.b16 %v848, %v840
        %v1089 = vpack.c.b16 %v857, %v849
        %v1090 = vpack.c.b16 %v858, %v850
        %v1091 = vpack.c.b16 %v859, %v851
        %v1092 = vpack.c.b16 %v860, %v852
        %v1093 = vpack.c.b16 %v861, %v853
        %v1094 = vpack.c.b16 %v862, %v854
        %v1095 = vpack.c.b16 %v863, %v855
        %v1096 = vpack.c.b16 %v864, %v856
        %v1097 = vpack.c.b16 %v873, %v865
        %v1098 = vpack.c.b16 %v874, %v866
        %v1099 = vpack.c.b16 %v875, %v867
        %v1100 = vpack.c.b16 %v876, %v868
        %v1101 = vpack.c.b16 %v877, %v869
        %v1102 = vpack.c.b16 %v878, %v870
        %v1103 = vpack.c.b16 %v879, %v871
        %v1104 = vpack.c.b16 %v880, %v872
        %v1105 = vpack.c.b16 %v889, %v881
        %v1106 = vpack.c.b16 %v890, %v882
        %v1107 = vpack.c.b16 %v891, %v883
        %v1108 = vpack.c.b16 %v892, %v884
        %v1109 = vpack.c.b16 %v893, %v885
        %v1110 = vpack.c.b16 %v894, %v886
        %v1111 = vpack.c.b16 %v895, %v887
        %v1112 = vpack.c.b16 %v896, %v888
        %v1113 = vpack.c.b16 %v905, %v897
        %v1114 = vpack.c.b16 %v906, %v898
        %v1115 = vpack.c.b16 %v907, %v899
        %v1116 = vpack.c.b16 %v908, %v900
        %v1117 = vpack.c.b16 %v909, %v901
        %v1118 = vpack.c.b16 %v910, %v902
        %v1119 = vpack.c.b16 %v911, %v903
        %v1120 = vpack.c.b16 %v912, %v904
        %v1121 = vpack.c.b16 %v921, %v913
        %v1122 = vpack.c.b16 %v922, %v914
        %v1123 = vpack.c.b16 %v923, %v915
        %v1124 = vpack.c.b16 %v924, %v916
        %v1125 = vpack.c.b16 %v925, %v917
        %v1126 = vpack.c.b16 %v926, %v918
        %v1127 = vpack.c.b16 %v927, %v919
        %v1128 = vpack.c.b16 %v928, %v920
        %v1129 = vpack.c.b16 %v937, %v929
        %v1130 = vpack.c.b16 %v938, %v930
        %v1131 = vpack.c.b16 %v939, %v931
        %v1132 = vpack.c.b16 %v940, %v932
        %v1133 = vpack.c.b16 %v941, %v933
        %v1134 = vpack.c.b16 %v942, %v934
        %v1135 = vpack.c.b16 %v943, %v935
        %v1136 = vpack.c.b16 %v944, %v936
        %v1137 = vpack.c.b16 %v953, %v945
        %v1138 = vpack.c.b16 %v954, %v946
        %v1139 = vpack.c.b16 %v955, %v947
        %v1140 = vpack.c.b16 %v956, %v948
        %v1141 = vpack.c.b16 %v957, %v949
        %v1142 = vpack.c.b16 %v958, %v950
        %v1143 = vpack.c.b16 %v959, %v951
        %v1144 = vpack.c.b16 %v960, %v952
        %v1145 = vpack.c.b16 %v969, %v961
        %v1146 = vpack.c.b16 %v970, %v962
        %v1147 = vpack.c.b16 %v971, %v963
        %v1148 = vpack.c.b16 %v972, %v964
        %v1149 = vpack.c.b16 %v973, %v965
        %v1150 = vpack.c.b16 %v974, %v966
        %v1151 = vpack.c.b16 %v975, %v967
        %v1152 = vpack.c.b16 %v976, %v968
        %v1153 = vpack.c.b16 %v985, %v977
        %v1154 = vpack.c.b16 %v986, %v978
        %v1155 = vpack.c.b16 %v987, %v979
        %v1156 = vpack.c.b16 %v988, %v980
        %v1157 = vpack.c.b16 %v989, %v981
        %v1158 = vpack.c.b16 %v990, %v982
        %v1159 = vpack.c.b16 %v991, %v983
        %v1160 = vpack.c.b16 %v992, %v984
        %v1161 = vpack.c.b16 %v1001, %v993
        %v1162 = vpack.c.b16 %v1002, %v994
        %v1163 = vpack.c.b16 %v1003, %v995
        %v1164 = vpack.c.b16 %v1004, %v996
        %v1165 = vpack.c.b16 %v1005, %v997
        %v1166 = vpack.c.b16 %v1006, %v998
        %v1167 = vpack.c.b16 %v1007, %v999
        %v1168 = vpack.c.b16 %v1008, %v1000
        %v1169 = vpack.c.b16 %v1017, %v1009
        %v1170 = vpack.c.b16 %v1018, %v1010
        %v1171 = vpack.c.b16 %v1019, %v1011
        %v1172 = vpack.c.b16 %v1020, %v1012
        %v1173 = vpack.c.b16 %v1021, %v1013
        %v1174 = vpack.c.b16 %v1022, %v1014
        %v1175 = vpack.c.b16 %v1023, %v1015
        %v1176 = vpack.c.b16 %v1024, %v1016
        %v1177 = vpack.c.b16 %v1033, %v1025
        %v1178 = vpack.c.b16 %v1034, %v1026
        %v1179 = vpack.c.b16 %v1035, %v1027
        %v1180 = vpack.c.b16 %v1036, %v1028
        %v1181 = vpack.c.b16 %v1037, %v1029
        %v1182 = vpack.c.b16 %v1038, %v1030
        %v1183 = vpack.c.b16 %v1039, %v1031
        %v1184 = vpack.c.b16 %v1040, %v1032
        %v1185 = vpack.c.b16 %v1049, %v1041
        %v1186 = vpack.c.b16 %v1050, %v1042
        %v1187 = vpack.c.b16 %v1051, %v1043
        %v1188 = vpack.c.b16 %v1052, %v1044
        %v1189 = vpack.c.b16 %v1053, %v1045
        %v1190 = vpack.c.b16 %v1054, %v1046
        %v1191 = vpack.c.b16 %v1055, %v1047
        %v1192 = vpack.c.b16 %v1056, %v1048
        %v1193 = vpack.c.b16 %v1065, %v1057
        %v1194 = vpack.c.b16 %v1066, %v1058
        %v1195 = vpack.c.b16 %v1067, %v1059
        %v1196 = vpack.c.b16 %v1068, %v1060
        %v1197 = vpack.c.b16 %v1069, %v1061
        %v1198 = vpack.c.b16 %v1070, %v1062
        %v1199 = vpack.c.b16 %v1071, %v1063
        %v1200 = vpack.c.b16 %v1072, %v1064
        %v1585 = vunpack.c.l.b16 %v411
        %v1586 = vunpack.c.h.b16 %v411
        %v1587 = vunpack.c.l.b16 %v412
        %v1588 = vunpack.c.h.b16 %v412
        %v1589 = vunpack.c.l.b16 %v413
        %v1590 = vunpack.c.h.b16 %v413
        %v1591 = vunpack.c.l.b16 %v414
        %v1592 = vunpack.c.h.b16 %v414
        %v1593 = vunpack.c.l.b16 %v415
        %v1594 = vunpack.c.h.b16 %v415
        %v1595 = vunpack.c.l.b16 %v416
        %v1596 = vunpack.c.h.b16 %v416
        %v1597 = vunpack.c.l.b16 %v417
        %v1598 = vunpack.c.h.b16 %v417
        %v1599 = vunpack.c.l.b16 %v418
        %v1600 = vunpack.c.h.b16 %v418
        %v1601 = vunpack.c.l.b16 %v419
        %v1602 = vunpack.c.h.b16 %v419
        %v1603 = vunpack.c.l.b16 %v420
        %v1604 = vunpack.c.h.b16 %v420
        %v1605 = vunpack.c.l.b16 %v421
        %v1606 = vunpack.c.h.b16 %v421
        %v1607 = vunpack.c.l.b16 %v422
        %v1608 = vunpack.c.h.b16 %v422
        %v1609 = vunpack.c.l.b16 %v423
        %v1610 = vunpack.c.h.b16 %v423
        %v1611 = vunpack.c.l.b16 %v424
        %v1612 = vunpack.c.h.b16 %v424
        %v1613 = vunpack.c.l.b16 %v425
        %v1614 = vunpack.c.h.b16 %v425
        %v1615 = vunpack.c.l.b16 %v426
        %v1616 = vunpack.c.h.b16 %v426
        %v1617 = vunpack.c.l.b16 %v427
        %v1618 = vunpack.c.h.b16 %v427
        %v1619 = vunpack.c.l.b16 %v428
        %v1620 = vunpack.c.h.b16 %v428
        %v1621 = vunpack.c.l.b16 %v429
        %v1622 = vunpack.c.h.b16 %v429
        %v1623 = vunpack.c.l.b16 %v430
        %v1624 = vunpack.c.h.b16 %v430
        %v1625 = vunpack.c.l.b16 %v431
        %v1626 = vunpack.c.h.b16 %v431
        %v1627 = vunpack.c.l.b16 %v432
        %v1628 = vunpack.c.h.b16 %v432
        %v1629 = vunpack.c.l.b16 %v433
        %v1630 = vunpack.c.h.b16 %v433
        %v1631 = vunpack.c.l.b16 %v434
        %v1632 = vunpack.c.h.b16 %v434
        %v1633 = vunpack.c.l.b16 %v435
        %v1634 = vunpack.c.h.b16 %v435
        %v1635 = vunpack.c.l.b16 %v436
        %v1636 = vunpack.c.h.b16 %v436
        %v1637 = vunpack.c.l.b16 %v437
        %v1638 = vunpack.c.h.b16 %v437
        %v1639 = vunpack.c.l.b16 %v438
        %v1640 = vunpack.c.h.b16 %v438
        %v1641 = vunpack.c.l.b16 %v439
        %v1642 = vunpack.c.h.b16 %v439
        %v1643 = vunpack.c.l.b16 %v440
        %v1644 = vunpack.c.h.b16 %v440
        %v1645 = vunpack.c.l.b16 %v441
        %v1646 = vunpack.c.h.b16 %v441
        %v1647 = vunpack.c.l.b16 %v442
        %v1648 = vunpack.c.h.b16 %v442
        %v1649 = vunpack.c.l.b16 %v443
        %v1650 = vunpack.c.h.b16 %v443
        %v1651 = vunpack.c.l.b16 %v444
        %v1652 = vunpack.c.h.b16 %v444
        %v1653 = vunpack.c.l.b16 %v445
        %v1654 = vunpack.c.h.b16 %v445
        %v1655 = vunpack.c.l.b16 %v446
        %v1656 = vunpack.c.h.b16 %v446
        %v1657 = vunpack.c.l.b16 %v447
        %v1658 = vunpack.c.h.b16 %v447
        %v1659 = vunpack.c.l.b16 %v448
        %v1660 = vunpack.c.h.b16 %v448
        %v1661 = vunpack.c.l.b16 %v449
        %v1662 = vunpack.c.h.b16 %v449
        %v1663 = vunpack.c.l.b16 %v450
        %v1664 = vunpack.c.h.b16 %v450
        %v1665 = vunpack.c.l.b16 %v451
        %v1666 = vunpack.c.h.b16 %v451
        %v1667 = vunpack.c.l.b16 %v452
        %v1668 = vunpack.c.h.b16 %v452
        %v1669 = vunpack.c.l.b16 %v453
        %v1670 = vunpack.c.h.b16 %v453
        %v1671 = vunpack.c.l.b16 %v454
        %v1672 = vunpack.c.h.b16 %v454
        %v1673 = vunpack.c.l.b16 %v455
        %v1674 = vunpack.c.h.b16 %v455
        %v1675 = vunpack.c.l.b16 %v456
        %v1676 = vunpack.c.h.b16 %v456
        %v1677 = vunpack.c.l.b16 %v457
        %v1678 = vunpack.c.h.b16 %v457
        %v1679 = vunpack.c.l.b16 %v458
        %v1680 = vunpack.c.h.b16 %v458
        %v1681 = vunpack.c.l.b16 %v459
        %v1682 = vunpack.c.h.b16 %v459
        %v1683 = vunpack.c.l.b16 %v460
        %v1684 = vunpack.c.h.b16 %v460
        %v1685 = vunpack.c.l.b16 %v461
        %v1686 = vunpack.c.h.b16 %v461
        %v1687 = vunpack.c.l.b16 %v462
        %v1688 = vunpack.c.h.b16 %v462
        %v1689 = vunpack.c.l.b16 %v463
        %v1690 = vunpack.c.h.b16 %v463
        %v1691 = vunpack.c.l.b16 %v464
        %v1692 = vunpack.c.h.b16 %v464
        %v1693 = vunpack.c.l.b16 %v465
        %v1694 = vunpack.c.h.b16 %v465
        %v1695 = vunpack.c.l.b16 %v466
        %v1696 = vunpack.c.h.b16 %v466
        %v1697 = vunpack.c.l.b16 %v467
        %v1698 = vunpack.c.h.b16 %v467
        %v1699 = vunpack.c.l.b16 %v468
        %v1700 = vunpack.c.h.b16 %v468
        %v1701 = vunpack.c.l.b16 %v469
        %v1702 = vunpack.c.h.b16 %v469
        %v1703 = vunpack.c.l.b16 %v470
        %v1704 = vunpack.c.h.b16 %v470
        %v1705 = vunpack.c.l.b16 %v471
        %v1706 = vunpack.c.h.b16 %v471
        %v1707 = vunpack.c.l.b16 %v472
        %v1708 = vunpack.c.h.b16 %v472
        %v1709 = vunpack.c.l.b16 %v473
        %v1710 = vunpack.c.h.b16 %v473
        %v1711 = vunpack.c.l.b16 %v474
        %v1712 = vunpack.c.h.b16 %v474
        %v1713 = vunpack.c.l.b16 %v475
        %v1714 = vunpack.c.h.b16 %v475
        %v1715 = vunpack.c.l.b16 %v476
        %v1716 = vunpack.c.h.b16 %v476
        %v1717 = vunpack.c.l.b16 %v477
        %v1718 = vunpack.c.h.b16 %v477
        %v1719 = vunpack.c.l.b16 %v478
        %v1720 = vunpack.c.h.b16 %v478
        %v1721 = vunpack.c.l.b16 %v479
        %v1722 = vunpack.c.h.b16 %v479
        %v1723 = vunpack.c.l.b16 %v480
        %v1724 = vunpack.c.h.b16 %v480
        %v1725 = vunpack.c.l.b16 %v481
        %v1726 = vunpack.c.h.b16 %v481
        %v1727 = vunpack.c.l.b16 %v482
        %v1728 = vunpack.c.h.b16 %v482
        %v1729 = vunpack.c.l.b16 %v483
        %v1730 = vunpack.c.h.b16 %v483
        %v1731 = vunpack.c.l.b16 %v484
        %v1732 = vunpack.c.h.b16 %v484
        %v1733 = vunpack.c.l.b16 %v485
        %v1734 = vunpack.c.h.b16 %v485
        %v1735 = vunpack.c.l.b16 %v486
        %v1736 = vunpack.c.h.b16 %v486
        %v1737 = vunpack.c.l.b16 %v487
        %v1738 = vunpack.c.h.b16 %v487
        %v1739 = vunpack.c.l.b16 %v488
        %v1740 = vunpack.c.h.b16 %v488
        %v1741 = vunpack.c.l.b16 %v489
        %v1742 = vunpack.c.h.b16 %v489
        %v1743 = vunpack.c.l.b16 %v490
        %v1744 = vunpack.c.h.b16 %v490
        %v1745 = vunpack.c.l.b16 %v491
        %v1746 = vunpack.c.h.b16 %v491
        %v1747 = vunpack.c.l.b16 %v492
        %v1748 = vunpack.c.h.b16 %v492
        %v1749 = vunpack.c.l.b16 %v493
        %v1750 = vunpack.c.h.b16 %v493
        %v1751 = vunpack.c.l.b16 %v494
        %v1752 = vunpack.c.h.b16 %v494
        %v1753 = vunpack.c.l.b16 %v495
        %v1754 = vunpack.c.h.b16 %v495
        %v1755 = vunpack.c.l.b16 %v496
        %v1756 = vunpack.c.h.b16 %v496
        %v1757 = vunpack.c.l.b16 %v497
        %v1758 = vunpack.c.h.b16 %v497
        %v1759 = vunpack.c.l.b16 %v498
        %v1760 = vunpack.c.h.b16 %v498
        %v1761 = vunpack.c.l.b16 %v499
        %v1762 = vunpack.c.h.b16 %v499
        %v1763 = vunpack.c.l.b16 %v500
        %v1764 = vunpack.c.h.b16 %v500
        %v1765 = vunpack.c.l.b16 %v501
        %v1766 = vunpack.c.h.b16 %v501
        %v1767 = vunpack.c.l.b16 %v502
        %v1768 = vunpack.c.h.b16 %v502
        %v1769 = vunpack.c.l.b16 %v503
        %v1770 = vunpack.c.h.b16 %v503
        %v1771 = vunpack.c.l.b16 %v504
        %v1772 = vunpack.c.h.b16 %v504
        %v1773 = vunpack.c.l.b16 %v505
        %v1774 = vunpack.c.h.b16 %v505
        %v1775 = vunpack.c.l.b16 %v506
        %v1776 = vunpack.c.h.b16 %v506
        %v1777 = vunpack.c.l.b16 %v507
        %v1778 = vunpack.c.h.b16 %v507
        %v1779 = vunpack.c.l.b16 %v508
        %v1780 = vunpack.c.h.b16 %v508
        %v1781 = vunpack.c.l.b16 %v509
        %v1782 = vunpack.c.h.b16 %v509
        %v1783 = vunpack.c.l.b16 %v510
        %v1784 = vunpack.c.h.b16 %v510
        %v1785 = vunpack.c.l.b16 %v511
        %v1786 = vunpack.c.h.b16 %v511
        %v1787 = vunpack.c.l.b16 %v512
        %v1788 = vunpack.c.h.b16 %v512
        %v1789 = vunpack.c.l.b16 %v513
        %v1790 = vunpack.c.h.b16 %v513
        %v1791 = vunpack.c.l.b16 %v514
        %v1792 = vunpack.c.h.b16 %v514
        %v1793 = vunpack.c.l.b16 %v515
        %v1794 = vunpack.c.h.b16 %v515
        %v1795 = vunpack.c.l.b16 %v516
        %v1796 = vunpack.c.h.b16 %v516
        %v1797 = vunpack.c.l.b16 %v517
        %v1798 = vunpack.c.h.b16 %v517
        %v1799 = vunpack.c.l.b16 %v518
        %v1800 = vunpack.c.h.b16 %v518
        %v1801 = vunpack.c.l.b16 %v519
        %v1802 = vunpack.c.h.b16 %v519
        %v1803 = vunpack.c.l.b16 %v520
        %v1804 = vunpack.c.h.b16 %v520
        %v1805 = vunpack.c.l.b16 %v521
        %v1806 = vunpack.c.h.b16 %v521
        %v1807 = vunpack.c.l.b16 %v522
        %v1808 = vunpack.c.h.b16 %v522
        %v1809 = vunpack.c.l.b16 %v523
        %v1810 = vunpack.c.h.b16 %v523
        %v1811 = vunpack.c.l.b16 %v524
        %v1812 = vunpack.c.h.b16 %v524
        %v1813 = vunpack.c.l.b16 %v525
        %v1814 = vunpack.c.h.b16 %v525
        %v1815 = vunpack.c.l.b16 %v526
        %v1816 = vunpack.c.h.b16 %v526
        %v1817 = vunpack.c.l.b16 %v527
        %v1818 = vunpack.c.h.b16 %v527
        %v1819 = vunpack.c.l.b16 %v528
        %v1820 = vunpack.c.h.b16 %v528
        %v1821 = vunpack.c.l.b16 %v529
        %v1822 = vunpack.c.h.b16 %v529
        %v1823 = vunpack.c.l.b16 %v530
        %v1824 = vunpack.c.h.b16 %v530
        %v1825 = vunpack.c.l.b16 %v531
        %v1826 = vunpack.c.h.b16 %v531
        %v1827 = vunpack.c.l.b16 %v532
        %v1828 = vunpack.c.h.b16 %v532
        %v1829 = vunpack.c.l.b16 %v533
        %v1830 = vunpack.c.h.b16 %v533
        %v1831 = vunpack.c.l.b16 %v534
        %v1832 = vunpack.c.h.b16 %v534
        %v1833 = vunpack.c.l.b16 %v535
        %v1834 = vunpack.c.h.b16 %v535
        %v1835 = vunpack.c.l.b16 %v536
        %v1836 = vunpack.c.h.b16 %v536
        %v1837 = vunpack.c.l.b16 %v537
        %v1838 = vunpack.c.h.b16 %v537
        %v1839 = vunpack.c.l.b16 %v538
        %v1840 = vunpack.c.h.b16 %v538
        %v1841 = vunpack.c.l.b16 %v539
        %v1842 = vunpack.c.h.b16 %v539
        %v1843 = vunpack.c.l.b16 %v540
        %v1844 = vunpack.c.h.b16 %v540
        %v1845 = vunpack.c.l.b16 %v541
        %v1846 = vunpack.c.h.b16 %v541
        %v1847 = vunpack.c.l.b16 %v542
        %v1848 = vunpack.c.h.b16 %v542
        %v1849 = vunpack.c.l.b16 %v543
        %v1850 = vunpack.c.h.b16 %v543
        %v1851 = vunpack.c.l.b16 %v544
        %v1852 = vunpack.c.h.b16 %v544
        %v1853 = vunpack.c.l.b16 %v545
        %v1854 = vunpack.c.h.b16 %v545
        %v1855 = vunpack.c.l.b16 %v546
        %v1856 = vunpack.c.h.b16 %v546
        %v1857 = vunpack.c.l.b16 %v547
        %v1858 = vunpack.c.h.b16 %v547
        %v1859 = vunpack.c.l.b16 %v548
        %v1860 = vunpack.c.h.b16 %v548
        %v1861 = vunpack.c.l.b16 %v549
        %v1862 = vunpack.c.h.b16 %v549
        %v1863 = vunpack.c.l.b16 %v550
        %v1864 = vunpack.c.h.b16 %v550
        %v1865 = vunpack.c.l.b16 %v551
        %v1866 = vunpack.c.h.b16 %v551
        %v1867 = vunpack.c.l.b16 %v552
        %v1868 = vunpack.c.h.b16 %v552
        %v1869 = vunpack.c.l.b16 %v553
        %v1870 = vunpack.c.h.b16 %v553
        %v1871 = vunpack.c.l.b16 %v554
        %v1872 = vunpack.c.h.b16 %v554
        %v1873 = vunpack.c.l.b16 %v555
        %v1874 = vunpack.c.h.b16 %v555
        %v1875 = vunpack.c.l.b16 %v556
        %v1876 = vunpack.c.h.b16 %v556
        %v1877 = vunpack.c.l.b16 %v557
        %v1878 = vunpack.c.h.b16 %v557
        %v1879 = vunpack.c.l.b16 %v558
        %v1880 = vunpack.c.h.b16 %v558
        %v1881 = vunpack.c.l.b16 %v559
        %v1882 = vunpack.c.h.b16 %v559
        %v1883 = vunpack.c.l.b16 %v560
        %v1884 = vunpack.c.h.b16 %v560
        %v1885 = vunpack.c.l.b16 %v561
        %v1886 = vunpack.c.h.b16 %v561
        %v1887 = vunpack.c.l.b16 %v562
        %v1888 = vunpack.c.h.b16 %v562
        %v1889 = vunpack.c.l.b16 %v563
        %v1890 = vunpack.c.h.b16 %v563
        %v1891 = vunpack.c.l.b16 %v564
        %v1892 = vunpack.c.h.b16 %v564
        %v1893 = vunpack.c.l.b16 %v565
        %v1894 = vunpack.c.h.b16 %v565
        %v1895 = vunpack.c.l.b16 %v566
        %v1896 = vunpack.c.h.b16 %v566
        %v1897 = vunpack.c.l.b16 %v567
        %v1898 = vunpack.c.h.b16 %v567
        %v1899 = vunpack.c.l.b16 %v568
        %v1900 = vunpack.c.h.b16 %v568
        %v1901 = vunpack.c.l.b16 %v569
        %v1902 = vunpack.c.h.b16 %v569
        %v1903 = vunpack.c.l.b16 %v570
        %v1904 = vunpack.c.h.b16 %v570
        %v1905 = vunpack.c.l.b16 %v571
        %v1906 = vunpack.c.h.b16 %v571
        %v1907 = vunpack.c.l.b16 %v572
        %v1908 = vunpack.c.h.b16 %v572
        %v1909 = vunpack.c.l.b16 %v573
        %v1910 = vunpack.c.h.b16 %v573
        %v1911 = vunpack.c.l.b16 %v574
        %v1912 = vunpack.c.h.b16 %v574
        %v1913 = vunpack.c.l.b16 %v575
        %v1914 = vunpack.c.h.b16 %v575
        %v1915 = vunpack.c.l.b16 %v576
        %v1916 = vunpack.c.h.b16 %v576
        %v1917 = vunpack.c.l.b16 %v577
        %v1918 = vunpack.c.h.b16 %v577
        %v1919 = vunpack.c.l.b16 %v578
        %v1920 = vunpack.c.h.b16 %v578
        %v1921 = vunpack.c.l.b16 %v579
        %v1922 = vunpack.c.h.b16 %v579
        %v1923 = vunpack.c.l.b16 %v580
        %v1924 = vunpack.c.h.b16 %v580
        %v1925 = vunpack.c.l.b16 %v581
        %v1926 = vunpack.c.h.b16 %v581
        %v1927 = vunpack.c.l.b16 %v582
        %v1928 = vunpack.c.h.b16 %v582
        %v1929 = vunpack.c.l.b16 %v583
        %v1930 = vunpack.c.h.b16 %v583
        %v1931 = vunpack.c.l.b16 %v584
        %v1932 = vunpack.c.h.b16 %v584
        %v1933 = vunpack.c.l.b16 %v585
        %v1934 = vunpack.c.h.b16 %v585
        %v1935 = vunpack.c.l.b16 %v586
        %v1936 = vunpack.c.h.b16 %v586
        %v1937 = vunpack.c.l.b16 %v587
        %v1938 = vunpack.c.h.b16 %v587
        %v1939 = vunpack.c.l.b16 %v588
        %v1940 = vunpack.c.h.b16 %v588
        %v1941 = vunpack.c.l.b16 %v589
        %v1942 = vunpack.c.h.b16 %v589
        %v1943 = vunpack.c.l.b16 %v590
        %v1944 = vunpack.c.h.b16 %v590
        %v1945 = vunpack.c.l.b16 %v591
        %v1946 = vunpack.c.h.b16 %v591
        %v1947 = vunpack.c.l.b16 %v592
        %v1948 = vunpack.c.h.b16 %v592
        %v1949 = vunpack.c.l.b16 %v593
        %v1950 = vunpack.c.h.b16 %v593
        %v1951 = vunpack.c.l.b16 %v594
        %v1952 = vunpack.c.h.b16 %v594
        %v1953 = vunpack.c.l.b16 %v595
        %v1954 = vunpack.c.h.b16 %v595
        %v1955 = vunpack.c.l.b16 %v596
        %v1956 = vunpack.c.h.b16 %v596
        %v1957 = vunpack.c.l.b16 %v597
        %v1958 = vunpack.c.h.b16 %v597
        %v1959 = vunpack.c.l.b16 %v598
        %v1960 = vunpack.c.h.b16 %v598
        %v1961 = vunpack.c.l.b16 %v599
        %v1962 = vunpack.c.h.b16 %v599
        %v1963 = vunpack.c.l.b16 %v600
        %v1964 = vunpack.c.h.b16 %v600
        %v1965 = vunpack.c.l.b16 %v601
        %v1966 = vunpack.c.h.b16 %v601
        %v1967 = vunpack.c.l.b16 %v602
        %v1968 = vunpack.c.h.b16 %v602
        %v1969 = vunpack.c.l.b16 %v603
        %v1970 = vunpack.c.h.b16 %v603
        %v1971 = vunpack.c.l.b16 %v604
        %v1972 = vunpack.c.h.b16 %v604
        %v1973 = vunpack.c.l.b16 %v605
        %v1974 = vunpack.c.h.b16 %v605
        %v1975 = vunpack.c.l.b16 %v606
        %v1976 = vunpack.c.h.b16 %v606
        %v1977 = vunpack.c.l.b16 %v607
        %v1978 = vunpack.c.h.b16 %v607
        %v1979 = vunpack.c.l.b16 %v608
        %v1980 = vunpack.c.h.b16 %v608
        %v1981 = vunpack.c.l.b16 %v609
        %v1982 = vunpack.c.h.b16 %v609
        %v1983 = vunpack.c.l.b16 %v610
        %v1984 = vunpack.c.h.b16 %v610
        %v1985 = vunpack.c.l.b16 %v611
        %v1986 = vunpack.c.h.b16 %v611
        %v1987 = vunpack.c.l.b16 %v612
        %v1988 = vunpack.c.h.b16 %v612
        %v1989 = vunpack.c.l.b16 %v613
        %v1990 = vunpack.c.h.b16 %v613
        %v1991 = vunpack.c.l.b16 %v614
        %v1992 = vunpack.c.h.b16 %v614
        %v1993 = vunpack.c.l.b16 %v615
        %v1994 = vunpack.c.h.b16 %v615
        %v1995 = vunpack.c.l.b16 %v616
        %v1996 = vunpack.c.h.b16 %v616
        %v1997 = vunpack.c.l.b16 %v617
        %v1998 = vunpack.c.h.b16 %v617
        %v1999 = vunpack.c.l.b16 %v618
        %v2000 = vunpack.c.h.b16 %v618
        %v2001 = vunpack.c.l.b16 %v619
        %v2002 = vunpack.c.h.b16 %v619
        %v2003 = vunpack.c.l.b16 %v620
        %v2004 = vunpack.c.h.b16 %v620
        %v2005 = vunpack.c.l.b16 %v621
        %v2006 = vunpack.c.h.b16 %v621
        %v2007 = vunpack.c.l.b16 %v622
        %v2008 = vunpack.c.h.b16 %v622
        %v2009 = vunpack.c.l.b16 %v623
        %v2010 = vunpack.c.h.b16 %v623
        %v2011 = vunpack.c.l.b16 %v624
        %v2012 = vunpack.c.h.b16 %v624
        %v2013 = vunpack.c.l.b16 %v625
        %v2014 = vunpack.c.h.b16 %v625
        %v2015 = vunpack.c.l.b16 %v626
        %v2016 = vunpack.c.h.b16 %v626
        %v2017 = vunpack.c.l.b16 %v627
        %v2018 = vunpack.c.h.b16 %v627
        %v2019 = vunpack.c.l.b16 %v628
        %v2020 = vunpack.c.h.b16 %v628
        %v2021 = vunpack.c.l.b16 %v629
        %v2022 = vunpack.c.h.b16 %v629
        %v2023 = vunpack.c.l.b16 %v630
        %v2024 = vunpack.c.h.b16 %v630
        %v2025 = vunpack.c.l.b16 %v631
        %v2026 = vunpack.c.h.b16 %v631
        %v2027 = vunpack.c.l.b16 %v632
        %v2028 = vunpack.c.h.b16 %v632
        %v2029 = vunpack.c.l.b16 %v633
        %v2030 = vunpack.c.h.b16 %v633
        %v2031 = vunpack.c.l.b16 %v634
        %v2032 = vunpack.c.h.b16 %v634
        %v2033 = vunpack.c.l.b16 %v635
        %v2034 = vunpack.c.h.b16 %v635
        %v2035 = vunpack.c.l.b16 %v636
        %v2036 = vunpack.c.h.b16 %v636
        %v2037 = vunpack.c.l.b16 %v637
        %v2038 = vunpack.c.h.b16 %v637
        %v2039 = vunpack.c.l.b16 %v638
        %v2040 = vunpack.c.h.b16 %v638
        %v2041 = vunpack.c.l.b16 %v639
        %v2042 = vunpack.c.h.b16 %v639
        %v2043 = vunpack.c.l.b16 %v640
        %v2044 = vunpack.c.h.b16 %v640
        %v2045 = vunpack.c.l.b16 %v641
        %v2046 = vunpack.c.h.b16 %v641
        %v2047 = vunpack.c.l.b16 %v642
        %v2048 = vunpack.c.h.b16 %v642
        %v2049 = vunpack.c.l.b16 %v643
        %v2050 = vunpack.c.h.b16 %v643
        %v2051 = vunpack.c.l.b16 %v644
        %v2052 = vunpack.c.h.b16 %v644
        %v2053 = vunpack.c.l.b16 %v645
        %v2054 = vunpack.c.h.b16 %v645
        %v2055 = vunpack.c.l.b16 %v646
        %v2056 = vunpack.c.h.b16 %v646
        %v2057 = vunpack.c.l.b16 %v647
        %v2058 = vunpack.c.h.b16 %v647
        %v2059 = vunpack.c.l.b16 %v648
        %v2060 = vunpack.c.h.b16 %v648
        %v2061 = vunpack.c.l.b16 %v649
        %v2062 = vunpack.c.h.b16 %v649
        %v2063 = vunpack.c.l.b16 %v650
        %v2064 = vunpack.c.h.b16 %v650
        %v2065 = vunpack.c.l.b16 %v651
        %v2066 = vunpack.c.h.b16 %v651
        %v2067 = vunpack.c.l.b16 %v652
        %v2068 = vunpack.c.h.b16 %v652
        %v2069 = vunpack.c.l.b16 %v653
        %v2070 = vunpack.c.h.b16 %v653
        %v2071 = vunpack.c.l.b16 %v654
        %v2072 = vunpack.c.h.b16 %v654
        %v2073 = vunpack.c.l.b16 %v655
        %v2074 = vunpack.c.h.b16 %v655
        %v2075 = vunpack.c.l.b16 %v656
        %v2076 = vunpack.c.h.b16 %v656
        %v2077 = vunpack.c.l.b16 %v657
        %v2078 = vunpack.c.h.b16 %v657
        %v2079 = vunpack.c.l.b16 %v658
        %v2080 = vunpack.c.h.b16 %v658
        %v2081 = vunpack.c.l.b16 %v659
        %v2082 = vunpack.c.h.b16 %v659
        %v2083 = vunpack.c.l.b16 %v660
        %v2084 = vunpack.c.h.b16 %v660
        %v2085 = vunpack.c.l.b16 %v661
        %v2086 = vunpack.c.h.b16 %v661
        %v2087 = vunpack.c.l.b16 %v662
        %v2088 = vunpack.c.h.b16 %v662
        %v2089 = vunpack.c.l.b16 %v663
        %v2090 = vunpack.c.h.b16 %v663
        %v2091 = vunpack.c.l.b16 %v664
        %v2092 = vunpack.c.h.b16 %v664
        %v2093 = vunpack.c.l.b16 %v665
        %v2094 = vunpack.c.h.b16 %v665
        %v2095 = vunpack.c.l.b16 %v666
        %v2096 = vunpack.c.h.b16 %v666
        %v2097 = vpack.c.b16 %v1589, %v1585
        %v2098 = vpack.c.b16 %v1590, %v1586
        %v2099 = vpack.c.b16 %v1591, %v1587
        %v2100 = vpack.c.b16 %v1592, %v1588
        %v2101 = vpack.c.b16 %v1597, %v1593
        %v2102 = vpack.c.b16 %v1598, %v1594
        %v2103 = vpack.c.b16 %v1599, %v1595
        %v2104 = vpack.c.b16 %v1600, %v1596
        %v2105 = vpack.c.b16 %v1605, %v1601
        %v2106 = vpack.c.b16 %v1606, %v1602
        %v2107 = vpack.c.b16 %v1607, %v1603
        %v2108 = vpack.c.b16 %v1608, %v1604
        %v2109 = vpack.c.b16 %v1613, %v1609
        %v2110 = vpack.c.b16 %v1614, %v1610
        %v2111 = vpack.c.b16 %v1615, %v1611
        %v2112 = vpack.c.b16 %v1616, %v1612
        %v2113 = vpack.c.b16 %v1621, %v1617
        %v2114 = vpack.c.b16 %v1622, %v1618
        %v2115 = vpack.c.b16 %v1623, %v1619
        %v2116 = vpack.c.b16 %v1624, %v1620
        %v2117 = vpack.c.b16 %v1629, %v1625
        %v2118 = vpack.c.b16 %v1630, %v1626
        %v2119 = vpack.c.b16 %v1631, %v1627
        %v2120 = vpack.c.b16 %v1632, %v1628
        %v2121 = vpack.c.b16 %v1637, %v1633
        %v2122 = vpack.c.b16 %v1638, %v1634
        %v2123 = vpack.c.b16 %v1639, %v1635
        %v2124 = vpack.c.b16 %v1640, %v1636
        %v2125 = vpack.c.b16 %v1645, %v1641
        %v2126 = vpack.c.b16 %v1646, %v1642
        %v2127 = vpack.c.b16 %v1647, %v1643
        %v2128 = vpack.c.b16 %v1648, %v1644
        %v2129 = vpack.c.b16 %v1653, %v1649
        %v2130 = vpack.c.b16 %v1654, %v1650
        %v2131 = vpack.c.b16 %v1655, %v1651
        %v2132 = vpack.c.b16 %v1656, %v1652
        %v2133 = vpack.c.b16 %v1661, %v1657
        %v2134 = vpack.c.b16 %v1662, %v1658
        %v2135 = vpack.c.b16 %v1663, %v1659
        %v2136 = vpack.c.b16 %v1664, %v1660
        %v2137 = vpack.c.b16 %v1669, %v1665
        %v2138 = vpack.c.b16 %v1670, %v1666
        %v2139 = vpack.c.b16 %v1671, %v1667
        %v2140 = vpack.c.b16 %v1672, %v1668
        %v2141 = vpack.c.b16 %v1677, %v1673
        %v2142 = vpack.c.b16 %v1678, %v1674
        %v2143 = vpack.c.b16 %v1679, %v1675
        %v2144 = vpack.c.b16 %v1680, %v1676
        %v2145 = vpack.c.b16 %v1685, %v1681
        %v2146 = vpack.c.b16 %v1686, %v1682
        %v2147 = vpack.c.b16 %v1687, %v1683
        %v2148 = vpack.c.b16 %v1688, %v1684
        %v2149 = vpack.c.b16 %v1693, %v1689
        %v2150 = vpack.c.b16 %v1694, %v1690
        %v2151 = vpack.c.b16 %v1695, %v1691
        %v2152 = vpack.c.b16 %v1696, %v1692
        %v2153 = vpack.c.b16 %v1701, %v1697
        %v2154 = vpack.c.b16 %v1702, %v1698
        %v2155 = vpack.c.b16 %v1703, %v1699
        %v2156 = vpack.c.b16 %v1704, %v1700
        %v2157 = vpack.c.b16 %v1709, %v1705
        %v2158 = vpack.c.b16 %v1710, %v1706
        %v2159 = vpack.c.b16 %v1711, %v1707
        %v2160 = vpack.c.b16 %v1712, %v1708
        %v2161 = vpack.c.b16 %v1717, %v1713
        %v2162 = vpack.c.b16 %v1718, %v1714
        %v2163 = vpack.c.b16 %v1719, %v1715
        %v2164 = vpack.c.b16 %v1720, %v1716
        %v2165 = vpack.c.b16 %v1725, %v1721
        %v2166 = vpack.c.b16 %v1726, %v1722
        %v2167 = vpack.c.b16 %v1727, %v1723
        %v2168 = vpack.c.b16 %v1728, %v1724
        %v2169 = vpack.c.b16 %v1733, %v1729
        %v2170 = vpack.c.b16 %v1734, %v1730
        %v2171 = vpack.c.b16 %v1735, %v1731
        %v2172 = vpack.c.b16 %v1736, %v1732
        %v2173 = vpack.c.b16 %v1741, %v1737
        %v2174 = vpack.c.b16 %v1742, %v1738
        %v2175 = vpack.c.b16 %v1743, %v1739
        %v2176 = vpack.c.b16 %v1744, %v1740
        %v2177 = vpack.c.b16 %v1749, %v1745
        %v2178 = vpack.c.b16 %v1750, %v1746
        %v2179 = vpack.c.b16 %v1751, %v1747
        %v2180 = vpack.c.b16 %v1752, %v1748
        %v2181 = vpack.c.b16 %v1757, %v1753
        %v2182 = vpack.c.b16 %v1758, %v1754
        %v2183 = vpack.c.b16 %v1759, %v1755
        %v2184 = vpack.c.b16 %v1760, %v1756
        %v2185 = vpack.c.b16 %v1765, %v1761
        %v2186 = vpack.c.b16 %v1766, %v1762
        %v2187 = vpack.c.b16 %v1767, %v1763
        %v2188 = vpack.c.b16 %v1768, %v1764
        %v2189 = vpack.c.b16 %v1773, %v1769
        %v2190 = vpack.c.b16 %v1774, %v1770
        %v2191 = vpack.c.b16 %v1775, %v1771
        %v2192 = vpack.c.b16 %v1776, %v1772
        %v2193 = vpack.c.b16 %v1781, %v1777
        %v2194 = vpack.c.b16 %v1782, %v1778
        %v2195 = vpack.c.b16 %v1783, %v1779
        %v2196 = vpack.c.b16 %v1784, %v1780
        %v2197 = vpack.c.b16 %v1789, %v1785
        %v2198 = vpack.c.b16 %v1790, %v1786
        %v2199 = vpack.c.b16 %v1791, %v1787
        %v2200 = vpack.c.b16 %v1792, %v1788
        %v2201 = vpack.c.b16 %v1797, %v1793
        %v2202 = vpack.c.b16 %v1798, %v1794
        %v2203 = vpack.c.b16 %v1799, %v1795
        %v2204 = vpack.c.b16 %v1800, %v1796
        %v2205 = vpack.c.b16 %v1805, %v1801
        %v2206 = vpack.c.b16 %v1806, %v1802
        %v2207 = vpack.c.b16 %v1807, %v1803
        %v2208 = vpack.c.b16 %v1808, %v1804
        %v2209 = vpack.c.b16 %v1813, %v1809
        %v2210 = vpack.c.b16 %v1814, %v1810
        %v2211 = vpack.c.b16 %v1815, %v1811
        %v2212 = vpack.c.b16 %v1816, %v1812
        %v2213 = vpack.c.b16 %v1821, %v1817
        %v2214 = vpack.c.b16 %v1822, %v1818
        %v2215 = vpack.c.b16 %v1823, %v1819
        %v2216 = vpack.c.b16 %v1824, %v1820
        %v2217 = vpack.c.b16 %v1829, %v1825
        %v2218 = vpack.c.b16 %v1830, %v1826
        %v2219 = vpack.c.b16 %v1831, %v1827
        %v2220 = vpack.c.b16 %v1832, %v1828
        %v2221 = vpack.c.b16 %v1837, %v1833
        %v2222 = vpack.c.b16 %v1838, %v1834
        %v2223 = vpack.c.b16 %v1839, %v1835
        %v2224 = vpack.c.b16 %v1840, %v1836
        %v2225 = vpack.c.b16 %v1845, %v1841
        %v2226 = vpack.c.b16 %v1846, %v1842
        %v2227 = vpack.c.b16 %v1847, %v1843
        %v2228 = vpack.c.b16 %v1848, %v1844
        %v2229 = vpack.c.b16 %v1853, %v1849
        %v2230 = vpack.c.b16 %v1854, %v1850
        %v2231 = vpack.c.b16 %v1855, %v1851
        %v2232 = vpack.c.b16 %v1856, %v1852
        %v2233 = vpack.c.b16 %v1861, %v1857
        %v2234 = vpack.c.b16 %v1862, %v1858
        %v2235 = vpack.c.b16 %v1863, %v1859
        %v2236 = vpack.c.b16 %v1864, %v1860
        %v2237 = vpack.c.b16 %v1869, %v1865
        %v2238 = vpack.c.b16 %v1870, %v1866
        %v2239 = vpack.c.b16 %v1871, %v1867
        %v2240 = vpack.c.b16 %v1872, %v1868
        %v2241 = vpack.c.b16 %v1877, %v1873
        %v2242 = vpack.c.b16 %v1878, %v1874
        %v2243 = vpack.c.b16 %v1879, %v1875
        %v2244 = vpack.c.b16 %v1880, %v1876
        %v2245 = vpack.c.b16 %v1885, %v1881
        %v2246 = vpack.c.b16 %v1886, %v1882
        %v2247 = vpack.c.b16 %v1887, %v1883
        %v2248 = vpack.c.b16 %v1888, %v1884
        %v2249 = vpack.c.b16 %v1893, %v1889
        %v2250 = vpack.c.b16 %v1894, %v1890
        %v2251 = vpack.c.b16 %v1895, %v1891
        %v2252 = vpack.c.b16 %v1896, %v1892
        %v2253 = vpack.c.b16 %v1901, %v1897
        %v2254 = vpack.c.b16 %v1902, %v1898
        %v2255 = vpack.c.b16 %v1903, %v1899
        %v2256 = vpack.c.b16 %v1904, %v1900
        %v2257 = vpack.c.b16 %v1909, %v1905
        %v2258 = vpack.c.b16 %v1910, %v1906
        %v2259 = vpack.c.b16 %v1911, %v1907
        %v2260 = vpack.c.b16 %v1912, %v1908
        %v2261 = vpack.c.b16 %v1917, %v1913
        %v2262 = vpack.c.b16 %v1918, %v1914
        %v2263 = vpack.c.b16 %v1919, %v1915
        %v2264 = vpack.c.b16 %v1920, %v1916
        %v2265 = vpack.c.b16 %v1925, %v1921
        %v2266 = vpack.c.b16 %v1926, %v1922
        %v2267 = vpack.c.b16 %v1927, %v1923
        %v2268 = vpack.c.b16 %v1928, %v1924
        %v2269 = vpack.c.b16 %v1933, %v1929
        %v2270 = vpack.c.b16 %v1934, %v1930
        %v2271 = vpack.c.b16 %v1935, %v1931
        %v2272 = vpack.c.b16 %v1936, %v1932
        %v2273 = vpack.c.b16 %v1941, %v1937
        %v2274 = vpack.c.b16 %v1942, %v1938
        %v2275 = vpack.c.b16 %v1943, %v1939
        %v2276 = vpack.c.b16 %v1944, %v1940
        %v2277 = vpack.c.b16 %v1949, %v1945
        %v2278 = vpack.c.b16 %v1950, %v1946
        %v2279 = vpack.c.b16 %v1951, %v1947
        %v2280 = vpack.c.b16 %v1952, %v1948
        %v2281 = vpack.c.b16 %v1957, %v1953
        %v2282 = vpack.c.b16 %v1958, %v1954
        %v2283 = vpack.c.b16 %v1959, %v1955
        %v2284 = vpack.c.b16 %v1960, %v1956
        %v2285 = vpack.c.b16 %v1965, %v1961
        %v2286 = vpack.c.b16 %v1966, %v1962
        %v2287 = vpack.c.b16 %v1967, %v1963
        %v2288 = vpack.c.b16 %v1968, %v1964
        %v2289 = vpack.c.b16 %v1973, %v1969
        %v2290 = vpack.c.b16 %v1974, %v1970
        %v2291 = vpack.c.b16 %v1975, %v1971
        %v2292 = vpack.c.b16 %v1976, %v1972
        %v2293 = vpack.c.b16 %v1981, %v1977
        %v2294 = vpack.c.b16 %v1982, %v1978
        %v2295 = vpack.c.b16 %v1983, %v1979
        %v2296 = vpack.c.b16 %v1984, %v1980
        %v2297 = vpack.c.b16 %v1989, %v1985
        %v2298 = vpack.c.b16 %v1990, %v1986
        %v2299 = vpack.c.b16 %v1991, %v1987
        %v2300 = vpack.c.b16 %v1992, %v1988
        %v2301 = vpack.c.b16 %v1997, %v1993
        %v2302 = vpack.c.b16 %v1998, %v1994
        %v2303 = vpack.c.b16 %v1999, %v1995
        %v2304 = vpack.c.b16 %v2000, %v1996
        %v2305 = vpack.c.b16 %v2005, %v2001
        %v2306 = vpack.c.b16 %v2006, %v2002
        %v2307 = vpack.c.b16 %v2007, %v2003
        %v2308 = vpack.c.b16 %v2008, %v2004
        %v2309 = vpack.c.b16 %v2013, %v2009
        %v2310 = vpack.c.b16 %v2014, %v2010
        %v2311 = vpack.c.b16 %v2015, %v2011
        %v2312 = vpack.c.b16 %v2016, %v2012
        %v2313 = vpack.c.b16 %v2021, %v2017
        %v2314 = vpack.c.b16 %v2022, %v2018
        %v2315 = vpack.c.b16 %v2023, %v2019
        %v2316 = vpack.c.b16 %v2024, %v2020
        %v2317 = vpack.c.b16 %v2029, %v2025
        %v2318 = vpack.c.b16 %v2030, %v2026
        %v2319 = vpack.c.b16 %v2031, %v2027
        %v2320 = vpack.c.b16 %v2032, %v2028
        %v2321 = vpack.c.b16 %v2037, %v2033
        %v2322 = vpack.c.b16 %v2038, %v2034
        %v2323 = vpack.c.b16 %v2039, %v2035
        %v2324 = vpack.c.b16 %v2040, %v2036
        %v2325 = vpack.c.b16 %v2045, %v2041
        %v2326 = vpack.c.b16 %v2046, %v2042
        %v2327 = vpack.c.b16 %v2047, %v2043
        %v2328 = vpack.c.b16 %v2048, %v2044
        %v2329 = vpack.c.b16 %v2053, %v2049
        %v2330 = vpack.c.b16 %v2054, %v2050
        %v2331 = vpack.c.b16 %v2055, %v2051
        %v2332 = vpack.c.b16 %v2056, %v2052
        %v2333 = vpack.c.b16 %v2061, %v2057
        %v2334 = vpack.c.b16 %v2062, %v2058
        %v2335 = vpack.c.b16 %v2063, %v2059
        %v2336 = vpack.c.b16 %v2064, %v2060
        %v2337 = vpack.c.b16 %v2069, %v2065
        %v2338 = vpack.c.b16 %v2070, %v2066
        %v2339 = vpack.c.b16 %v2071, %v2067
        %v2340 = vpack.c.b16 %v2072, %v2068
        %v2341 = vpack.c.b16 %v2077, %v2073
        %v2342 = vpack.c.b16 %v2078, %v2074
        %v2343 = vpack.c.b16 %v2079, %v2075
        %v2344 = vpack.c.b16 %v2080, %v2076
        %v2345 = vpack.c.b16 %v2085, %v2081
        %v2346 = vpack.c.b16 %v2086, %v2082
        %v2347 = vpack.c.b16 %v2087, %v2083
        %v2348 = vpack.c.b16 %v2088, %v2084
        %v2349 = vpack.c.b16 %v2093, %v2089
        %v2350 = vpack.c.b16 %v2094, %v2090
        %v2351 = vpack.c.b16 %v2095, %v2091
        %v2352 = vpack.c.b16 %v2096, %v2092
        %2609 = vmatprep.subr.bf16.mxu0 %v2126
        %2610 = vmatpush1.bf16.msra.mxu0 %v2125
        %2611 = vmatprep.subr.bf16.mxu0 %v2122
        %2612 = vmatpush1.bf16.msra.mxu0 %v2121
        %2613 = vmatprep.subr.bf16.mxu0 %v2118
        %2614 = vmatpush1.bf16.msra.mxu0 %v2117
        %2615 = vmatprep.subr.bf16.mxu0 %v2114
        %2616 = vmatpush1.bf16.msra.mxu0 %v2113
        %2617 = vmatprep.subr.bf16.mxu0 %v2110
        %2618 = vmatpush1.bf16.msra.mxu0 %v2109
        %2619 = vmatprep.subr.bf16.mxu0 %v2106
        %2620 = vmatpush1.bf16.msra.mxu0 %v2105
        %2621 = vmatprep.subr.bf16.mxu0 %v2102
        %2622 = vmatpush1.bf16.msra.mxu0 %v2101
        %2623 = vmatprep.subr.bf16.mxu0 %v2098
        %2624 = vmatpush1.bf16.msra.mxu0 %v2097
        %2625 = vmatprep.subr.bf16.mxu0 %v2158
        %2626 = vmatpush2.bf16.msra.mxu0 %v2157
        %2627 = vmatprep.subr.bf16.mxu0 %v2154
        %2628 = vmatpush2.bf16.msra.mxu0 %v2153
        %2629 = vmatprep.subr.bf16.mxu0 %v2150
        %2630 = vmatpush2.bf16.msra.mxu0 %v2149
        %2631 = vmatprep.subr.bf16.mxu0 %v2146
        %2632 = vmatpush2.bf16.msra.mxu0 %v2145
        %2633 = vmatprep.subr.bf16.mxu0 %v2142
        %2634 = vmatpush2.bf16.msra.mxu0 %v2141
        %2635 = vmatprep.subr.bf16.mxu0 %v2138
        %2636 = vmatpush2.bf16.msra.mxu0 %v2137
        %2637 = vmatprep.subr.bf16.mxu0 %v2134
        %2638 = vmatpush2.bf16.msra.mxu0 %v2133
        %2639 = vmatprep.subr.bf16.mxu0 %v2130
        %2640 = vmatpush2.bf16.msra.mxu0 %v2129
        %2641 = vmatprep.mubr.bf16.mxu0 %v1074
        %2642 = vmatmul.mubr.bf16.gmra.mxu0 %v1073
        %v2643 = vpop.f32.mrf.mxu0
        %v2644 = vadd.f32 %v672, %v2643
        %v2645 = vpop.f32.mrf.mxu0
        %v2646 = vadd.f32 %v676, %v2645
        %v2647 = vpop.f32.mrf.mxu0
        %v2648 = vadd.f32 %v672, %v2647
        %v2649 = vpop.f32.mrf.mxu0
        %v2650 = vadd.f32 %v676, %v2649
        %2651 = vmatprep.mubr.bf16.mxu0 %v1082
        %2652 = vmatmul.mubr.bf16.gmra.mxu0 %v1081
        %v2653 = vpop.f32.mrf.mxu0
        %v2654 = vadd.f32 %v672, %v2653
        %v2655 = vpop.f32.mrf.mxu0
        %v2656 = vadd.f32 %v676, %v2655
        %v2657 = vpop.f32.mrf.mxu0
        %v2658 = vadd.f32 %v672, %v2657
        %v2659 = vpop.f32.mrf.mxu0
        %v2660 = vadd.f32 %v676, %v2659
        %2661 = vmatprep.mubr.bf16.mxu0 %v1090
        %2662 = vmatmul.mubr.bf16.gmra.mxu0 %v1089
        %v2663 = vpop.f32.mrf.mxu0
        %v2664 = vadd.f32 %v672, %v2663
        %v2665 = vpop.f32.mrf.mxu0
        %v2666 = vadd.f32 %v676, %v2665
        %v2667 = vpop.f32.mrf.mxu0
        %v2668 = vadd.f32 %v672, %v2667
        %v2669 = vpop.f32.mrf.mxu0
        %v2670 = vadd.f32 %v676, %v2669
        %2671 = vmatprep.mubr.bf16.mxu0 %v1098
        %2672 = vmatmul.mubr.bf16.gmra.mxu0 %v1097
        %v2673 = vpop.f32.mrf.mxu0
        %v2674 = vadd.f32 %v672, %v2673
        %v2675 = vpop.f32.mrf.mxu0
        %v2676 = vadd.f32 %v676, %v2675
        %v2677 = vpop.f32.mrf.mxu0
        %v2678 = vadd.f32 %v672, %v2677
        %v2679 = vpop.f32.mrf.mxu0
        %v2680 = vadd.f32 %v676, %v2679
        %2681 = vmatprep.mubr.bf16.mxu0 %v1106
        %2682 = vmatmul.mubr.bf16.gmra.mxu0 %v1105
        %v2683 = vpop.f32.mrf.mxu0
        %v2684 = vadd.f32 %v672, %v2683
        %v2685 = vpop.f32.mrf.mxu0
        %v2686 = vadd.f32 %v676, %v2685
        %v2687 = vpop.f32.mrf.mxu0
        %v2688 = vadd.f32 %v672, %v2687
        %v2689 = vpop.f32.mrf.mxu0
        %v2690 = vadd.f32 %v676, %v2689
        %2691 = vmatprep.mubr.bf16.mxu0 %v1114
        %2692 = vmatmul.mubr.bf16.gmra.mxu0 %v1113
        %v2693 = vpop.f32.mrf.mxu0
        %v2694 = vadd.f32 %v672, %v2693
        %v2695 = vpop.f32.mrf.mxu0
        %v2696 = vadd.f32 %v676, %v2695
        %v2697 = vpop.f32.mrf.mxu0
        %v2698 = vadd.f32 %v672, %v2697
        %v2699 = vpop.f32.mrf.mxu0
        %v2700 = vadd.f32 %v676, %v2699
        %2701 = vmatprep.mubr.bf16.mxu0 %v1122
        %2702 = vmatmul.mubr.bf16.gmra.mxu0 %v1121
        %v2703 = vpop.f32.mrf.mxu0
        %v2704 = vadd.f32 %v672, %v2703
        %v2705 = vpop.f32.mrf.mxu0
        %v2706 = vadd.f32 %v676, %v2705
        %v2707 = vpop.f32.mrf.mxu0
        %v2708 = vadd.f32 %v672, %v2707
        %v2709 = vpop.f32.mrf.mxu0
        %v2710 = vadd.f32 %v676, %v2709
        %2711 = vmatprep.mubr.bf16.mxu0 %v1130
        %2712 = vmatmul.mubr.bf16.gmra.mxu0 %v1129
        %v2713 = vpop.f32.mrf.mxu0
        %v2714 = vadd.f32 %v672, %v2713
        %v2715 = vpop.f32.mrf.mxu0
        %v2716 = vadd.f32 %v676, %v2715
        %v2717 = vpop.f32.mrf.mxu0
        %v2718 = vadd.f32 %v672, %v2717
        %v2719 = vpop.f32.mrf.mxu0
        %v2720 = vadd.f32 %v676, %v2719
        %2721 = vmatprep.mubr.bf16.mxu0 %v1138
        %2722 = vmatmul.mubr.bf16.gmra.mxu0 %v1137
        %v2723 = vpop.f32.mrf.mxu0
        %v2724 = vadd.f32 %v672, %v2723
        %v2725 = vpop.f32.mrf.mxu0
        %v2726 = vadd.f32 %v676, %v2725
        %v2727 = vpop.f32.mrf.mxu0
        %v2728 = vadd.f32 %v672, %v2727
        %v2729 = vpop.f32.mrf.mxu0
        %v2730 = vadd.f32 %v676, %v2729
        %2731 = vmatprep.mubr.bf16.mxu0 %v1146
        %2732 = vmatmul.mubr.bf16.gmra.mxu0 %v1145
        %v2733 = vpop.f32.mrf.mxu0
        %v2734 = vadd.f32 %v672, %v2733
        %v2735 = vpop.f32.mrf.mxu0
        %v2736 = vadd.f32 %v676, %v2735
        %v2737 = vpop.f32.mrf.mxu0
        %v2738 = vadd.f32 %v672, %v2737
        %v2739 = vpop.f32.mrf.mxu0
        %v2740 = vadd.f32 %v676, %v2739
        %2741 = vmatprep.mubr.bf16.mxu0 %v1154
        %2742 = vmatmul.mubr.bf16.gmra.mxu0 %v1153
        %v2743 = vpop.f32.mrf.mxu0
        %v2744 = vadd.f32 %v672, %v2743
        %v2745 = vpop.f32.mrf.mxu0
        %v2746 = vadd.f32 %v676, %v2745
        %v2747 = vpop.f32.mrf.mxu0
        %v2748 = vadd.f32 %v672, %v2747
        %v2749 = vpop.f32.mrf.mxu0
        %v2750 = vadd.f32 %v676, %v2749
        %2751 = vmatprep.mubr.bf16.mxu0 %v1162
        %2752 = vmatmul.mubr.bf16.gmra.mxu0 %v1161
        %v2753 = vpop.f32.mrf.mxu0
        %v2754 = vadd.f32 %v672, %v2753
        %v2755 = vpop.f32.mrf.mxu0
        %v2756 = vadd.f32 %v676, %v2755
        %v2757 = vpop.f32.mrf.mxu0
        %v2758 = vadd.f32 %v672, %v2757
        %v2759 = vpop.f32.mrf.mxu0
        %v2760 = vadd.f32 %v676, %v2759
        %2761 = vmatprep.mubr.bf16.mxu0 %v1170
        %2762 = vmatmul.mubr.bf16.gmra.mxu0 %v1169
        %v2763 = vpop.f32.mrf.mxu0
        %v2764 = vadd.f32 %v672, %v2763
        %v2765 = vpop.f32.mrf.mxu0
        %v2766 = vadd.f32 %v676, %v2765
        %v2767 = vpop.f32.mrf.mxu0
        %v2768 = vadd.f32 %v672, %v2767
        %v2769 = vpop.f32.mrf.mxu0
        %v2770 = vadd.f32 %v676, %v2769
        %2771 = vmatprep.mubr.bf16.mxu0 %v1178
        %2772 = vmatmul.mubr.bf16.gmra.mxu0 %v1177
        %v2773 = vpop.f32.mrf.mxu0
        %v2774 = vadd.f32 %v672, %v2773
        %v2775 = vpop.f32.mrf.mxu0
        %v2776 = vadd.f32 %v676, %v2775
        %v2777 = vpop.f32.mrf.mxu0
        %v2778 = vadd.f32 %v672, %v2777
        %v2779 = vpop.f32.mrf.mxu0
        %v2780 = vadd.f32 %v676, %v2779
        %2781 = vmatprep.mubr.bf16.mxu0 %v1186
        %2782 = vmatmul.mubr.bf16.gmra.mxu0 %v1185
        %v2783 = vpop.f32.mrf.mxu0
        %v2784 = vadd.f32 %v672, %v2783
        %v2785 = vpop.f32.mrf.mxu0
        %v2786 = vadd.f32 %v676, %v2785
        %v2787 = vpop.f32.mrf.mxu0
        %v2788 = vadd.f32 %v672, %v2787
        %v2789 = vpop.f32.mrf.mxu0
        %v2790 = vadd.f32 %v676, %v2789
        %2791 = vmatprep.mubr.bf16.mxu0 %v1194
        %2792 = vmatmul.mubr.bf16.gmra.mxu0 %v1193
        %v2793 = vpop.f32.mrf.mxu0
        %v2794 = vadd.f32 %v672, %v2793
        %v2795 = vpop.f32.mrf.mxu0
        %v2796 = vadd.f32 %v676, %v2795
        %v2797 = vpop.f32.mrf.mxu0
        %v2798 = vadd.f32 %v672, %v2797
        %v2799 = vpop.f32.mrf.mxu0
        %v2800 = vadd.f32 %v676, %v2799
        %2801 = vdwg.mxu0
        %2802 = vmatprep.subr.bf16.mxu0 %v2190
        %2803 = vmatpush1.bf16.msra.mxu0 %v2189
        %2804 = vmatprep.subr.bf16.mxu0 %v2186
        %2805 = vmatpush1.bf16.msra.mxu0 %v2185
        %2806 = vmatprep.subr.bf16.mxu0 %v2182
        %2807 = vmatpush1.bf16.msra.mxu0 %v2181
        %2808 = vmatprep.subr.bf16.mxu0 %v2178
        %2809 = vmatpush1.bf16.msra.mxu0 %v2177
        %2810 = vmatprep.subr.bf16.mxu0 %v2174
        %2811 = vmatpush1.bf16.msra.mxu0 %v2173
        %2812 = vmatprep.subr.bf16.mxu0 %v2170
        %2813 = vmatpush1.bf16.msra.mxu0 %v2169
        %2814 = vmatprep.subr.bf16.mxu0 %v2166
        %2815 = vmatpush1.bf16.msra.mxu0 %v2165
        %2816 = vmatprep.subr.bf16.mxu0 %v2162
        %2817 = vmatpush1.bf16.msra.mxu0 %v2161
        %2818 = vmatprep.subr.bf16.mxu0 %v2222
        %2819 = vmatpush2.bf16.msra.mxu0 %v2221
        %2820 = vmatprep.subr.bf16.mxu0 %v2218
        %2821 = vmatpush2.bf16.msra.mxu0 %v2217
        %2822 = vmatprep.subr.bf16.mxu0 %v2214
        %2823 = vmatpush2.bf16.msra.mxu0 %v2213
        %2824 = vmatprep.subr.bf16.mxu0 %v2210
        %2825 = vmatpush2.bf16.msra.mxu0 %v2209
        %2826 = vmatprep.subr.bf16.mxu0 %v2206
        %2827 = vmatpush2.bf16.msra.mxu0 %v2205
        %2828 = vmatprep.subr.bf16.mxu0 %v2202
        %2829 = vmatpush2.bf16.msra.mxu0 %v2201
        %2830 = vmatprep.subr.bf16.mxu0 %v2198
        %2831 = vmatpush2.bf16.msra.mxu0 %v2197
        %2832 = vmatprep.subr.bf16.mxu0 %v2194
        %2833 = vmatpush2.bf16.msra.mxu0 %v2193
        %2834 = vmatprep.mubr.bf16.mxu0 %v1076
        %2835 = vmatmul.mubr.bf16.gmra.mxu0 %v1075
        %v2836 = vpop.f32.mrf.mxu0
        %v2837 = vadd.f32 %v2644, %v2836
        %v2838 = vpop.f32.mrf.mxu0
        %v2839 = vadd.f32 %v2646, %v2838
        %v2840 = vpop.f32.mrf.mxu0
        %v2841 = vadd.f32 %v2648, %v2840
        %v2842 = vpop.f32.mrf.mxu0
        %v2843 = vadd.f32 %v2650, %v2842
        %2844 = vmatprep.mubr.bf16.mxu0 %v1084
        %2845 = vmatmul.mubr.bf16.gmra.mxu0 %v1083
        %v2846 = vpop.f32.mrf.mxu0
        %v2847 = vadd.f32 %v2654, %v2846
        %v2848 = vpop.f32.mrf.mxu0
        %v2849 = vadd.f32 %v2656, %v2848
        %v2850 = vpop.f32.mrf.mxu0
        %v2851 = vadd.f32 %v2658, %v2850
        %v2852 = vpop.f32.mrf.mxu0
        %v2853 = vadd.f32 %v2660, %v2852
        %2854 = vmatprep.mubr.bf16.mxu0 %v1092
        %2855 = vmatmul.mubr.bf16.gmra.mxu0 %v1091
        %v2856 = vpop.f32.mrf.mxu0
        %v2857 = vadd.f32 %v2664, %v2856
        %v2858 = vpop.f32.mrf.mxu0
        %v2859 = vadd.f32 %v2666, %v2858
        %v2860 = vpop.f32.mrf.mxu0
        %v2861 = vadd.f32 %v2668, %v2860
        %v2862 = vpop.f32.mrf.mxu0
        %v2863 = vadd.f32 %v2670, %v2862
        %2864 = vmatprep.mubr.bf16.mxu0 %v1100
        %2865 = vmatmul.mubr.bf16.gmra.mxu0 %v1099
        %v2866 = vpop.f32.mrf.mxu0
        %v2867 = vadd.f32 %v2674, %v2866
        %v2868 = vpop.f32.mrf.mxu0
        %v2869 = vadd.f32 %v2676, %v2868
        %v2870 = vpop.f32.mrf.mxu0
        %v2871 = vadd.f32 %v2678, %v2870
        %v2872 = vpop.f32.mrf.mxu0
        %v2873 = vadd.f32 %v2680, %v2872
        %2874 = vmatprep.mubr.bf16.mxu0 %v1108
        %2875 = vmatmul.mubr.bf16.gmra.mxu0 %v1107
        %v2876 = vpop.f32.mrf.mxu0
        %v2877 = vadd.f32 %v2684, %v2876
        %v2878 = vpop.f32.mrf.mxu0
        %v2879 = vadd.f32 %v2686, %v2878
        %v2880 = vpop.f32.mrf.mxu0
        %v2881 = vadd.f32 %v2688, %v2880
        %v2882 = vpop.f32.mrf.mxu0
        %v2883 = vadd.f32 %v2690, %v2882
        %2884 = vmatprep.mubr.bf16.mxu0 %v1116
        %2885 = vmatmul.mubr.bf16.gmra.mxu0 %v1115
        %v2886 = vpop.f32.mrf.mxu0
        %v2887 = vadd.f32 %v2694, %v2886
        %v2888 = vpop.f32.mrf.mxu0
        %v2889 = vadd.f32 %v2696, %v2888
        %v2890 = vpop.f32.mrf.mxu0
        %v2891 = vadd.f32 %v2698, %v2890
        %v2892 = vpop.f32.mrf.mxu0
        %v2893 = vadd.f32 %v2700, %v2892
        %2894 = vmatprep.mubr.bf16.mxu0 %v1124
        %2895 = vmatmul.mubr.bf16.gmra.mxu0 %v1123
        %v2896 = vpop.f32.mrf.mxu0
        %v2897 = vadd.f32 %v2704, %v2896
        %v2898 = vpop.f32.mrf.mxu0
        %v2899 = vadd.f32 %v2706, %v2898
        %v2900 = vpop.f32.mrf.mxu0
        %v2901 = vadd.f32 %v2708, %v2900
        %v2902 = vpop.f32.mrf.mxu0
        %v2903 = vadd.f32 %v2710, %v2902
        %2904 = vmatprep.mubr.bf16.mxu0 %v1132
        %2905 = vmatmul.mubr.bf16.gmra.mxu0 %v1131
        %v2906 = vpop.f32.mrf.mxu0
        %v2907 = vadd.f32 %v2714, %v2906
        %v2908 = vpop.f32.mrf.mxu0
        %v2909 = vadd.f32 %v2716, %v2908
        %v2910 = vpop.f32.mrf.mxu0
        %v2911 = vadd.f32 %v2718, %v2910
        %v2912 = vpop.f32.mrf.mxu0
        %v2913 = vadd.f32 %v2720, %v2912
        %2914 = vmatprep.mubr.bf16.mxu0 %v1140
        %2915 = vmatmul.mubr.bf16.gmra.mxu0 %v1139
        %v2916 = vpop.f32.mrf.mxu0
        %v2917 = vadd.f32 %v2724, %v2916
        %v2918 = vpop.f32.mrf.mxu0
        %v2919 = vadd.f32 %v2726, %v2918
        %v2920 = vpop.f32.mrf.mxu0
        %v2921 = vadd.f32 %v2728, %v2920
        %v2922 = vpop.f32.mrf.mxu0
        %v2923 = vadd.f32 %v2730, %v2922
        %2924 = vmatprep.mubr.bf16.mxu0 %v1148
        %2925 = vmatmul.mubr.bf16.gmra.mxu0 %v1147
        %v2926 = vpop.f32.mrf.mxu0
        %v2927 = vadd.f32 %v2734, %v2926
        %v2928 = vpop.f32.mrf.mxu0
        %v2929 = vadd.f32 %v2736, %v2928
        %v2930 = vpop.f32.mrf.mxu0
        %v2931 = vadd.f32 %v2738, %v2930
        %v2932 = vpop.f32.mrf.mxu0
        %v2933 = vadd.f32 %v2740, %v2932
        %2934 = vmatprep.mubr.bf16.mxu0 %v1156
        %2935 = vmatmul.mubr.bf16.gmra.mxu0 %v1155
        %v2936 = vpop.f32.mrf.mxu0
        %v2937 = vadd.f32 %v2744, %v2936
        %v2938 = vpop.f32.mrf.mxu0
        %v2939 = vadd.f32 %v2746, %v2938
        %v2940 = vpop.f32.mrf.mxu0
        %v2941 = vadd.f32 %v2748, %v2940
        %v2942 = vpop.f32.mrf.mxu0
        %v2943 = vadd.f32 %v2750, %v2942
        %2944 = vmatprep.mubr.bf16.mxu0 %v1164
        %2945 = vmatmul.mubr.bf16.gmra.mxu0 %v1163
        %v2946 = vpop.f32.mrf.mxu0
        %v2947 = vadd.f32 %v2754, %v2946
        %v2948 = vpop.f32.mrf.mxu0
        %v2949 = vadd.f32 %v2756, %v2948
        %v2950 = vpop.f32.mrf.mxu0
        %v2951 = vadd.f32 %v2758, %v2950
        %v2952 = vpop.f32.mrf.mxu0
        %v2953 = vadd.f32 %v2760, %v2952
        %2954 = vmatprep.mubr.bf16.mxu0 %v1172
        %2955 = vmatmul.mubr.bf16.gmra.mxu0 %v1171
        %v2956 = vpop.f32.mrf.mxu0
        %v2957 = vadd.f32 %v2764, %v2956
        %v2958 = vpop.f32.mrf.mxu0
        %v2959 = vadd.f32 %v2766, %v2958
        %v2960 = vpop.f32.mrf.mxu0
        %v2961 = vadd.f32 %v2768, %v2960
        %v2962 = vpop.f32.mrf.mxu0
        %v2963 = vadd.f32 %v2770, %v2962
        %2964 = vmatprep.mubr.bf16.mxu0 %v1180
        %2965 = vmatmul.mubr.bf16.gmra.mxu0 %v1179
        %v2966 = vpop.f32.mrf.mxu0
        %v2967 = vadd.f32 %v2774, %v2966
        %v2968 = vpop.f32.mrf.mxu0
        %v2969 = vadd.f32 %v2776, %v2968
        %v2970 = vpop.f32.mrf.mxu0
        %v2971 = vadd.f32 %v2778, %v2970
        %v2972 = vpop.f32.mrf.mxu0
        %v2973 = vadd.f32 %v2780, %v2972
        %2974 = vmatprep.mubr.bf16.mxu0 %v1188
        %2975 = vmatmul.mubr.bf16.gmra.mxu0 %v1187
        %v2976 = vpop.f32.mrf.mxu0
        %v2977 = vadd.f32 %v2784, %v2976
        %v2978 = vpop.f32.mrf.mxu0
        %v2979 = vadd.f32 %v2786, %v2978
        %v2980 = vpop.f32.mrf.mxu0
        %v2981 = vadd.f32 %v2788, %v2980
        %v2982 = vpop.f32.mrf.mxu0
        %v2983 = vadd.f32 %v2790, %v2982
        %2984 = vmatprep.mubr.bf16.mxu0 %v1196
        %2985 = vmatmul.mubr.bf16.gmra.mxu0 %v1195
        %v2986 = vpop.f32.mrf.mxu0
        %v2987 = vadd.f32 %v2794, %v2986
        %v2988 = vpop.f32.mrf.mxu0
        %v2989 = vadd.f32 %v2796, %v2988
        %v2990 = vpop.f32.mrf.mxu0
        %v2991 = vadd.f32 %v2798, %v2990
        %v2992 = vpop.f32.mrf.mxu0
        %v2993 = vadd.f32 %v2800, %v2992
        %2994 = vdwg.mxu0
        %2995 = vmatprep.subr.bf16.mxu0 %v2254
        %2996 = vmatpush1.bf16.msra.mxu0 %v2253
        %2997 = vmatprep.subr.bf16.mxu0 %v2250
        %2998 = vmatpush1.bf16.msra.mxu0 %v2249
        %2999 = vmatprep.subr.bf16.mxu0 %v2246
        %3000 = vmatpush1.bf16.msra.mxu0 %v2245
        %3001 = vmatprep.subr.bf16.mxu0 %v2242
        %3002 = vmatpush1.bf16.msra.mxu0 %v2241
        %3003 = vmatprep.subr.bf16.mxu0 %v2238
        %3004 = vmatpush1.bf16.msra.mxu0 %v2237
        %3005 = vmatprep.subr.bf16.mxu0 %v2234
        %3006 = vmatpush1.bf16.msra.mxu0 %v2233
        %3007 = vmatprep.subr.bf16.mxu0 %v2230
        %3008 = vmatpush1.bf16.msra.mxu0 %v2229
        %3009 = vmatprep.subr.bf16.mxu0 %v2226
        %3010 = vmatpush1.bf16.msra.mxu0 %v2225
        %3011 = vmatprep.subr.bf16.mxu0 %v2286
        %3012 = vmatpush2.bf16.msra.mxu0 %v2285
        %3013 = vmatprep.subr.bf16.mxu0 %v2282
        %3014 = vmatpush2.bf16.msra.mxu0 %v2281
        %3015 = vmatprep.subr.bf16.mxu0 %v2278
        %3016 = vmatpush2.bf16.msra.mxu0 %v2277
        %3017 = vmatprep.subr.bf16.mxu0 %v2274
        %3018 = vmatpush2.bf16.msra.mxu0 %v2273
        %3019 = vmatprep.subr.bf16.mxu0 %v2270
        %3020 = vmatpush2.bf16.msra.mxu0 %v2269
        %3021 = vmatprep.subr.bf16.mxu0 %v2266
        %3022 = vmatpush2.bf16.msra.mxu0 %v2265
        %3023 = vmatprep.subr.bf16.mxu0 %v2262
        %3024 = vmatpush2.bf16.msra.mxu0 %v2261
        %3025 = vmatprep.subr.bf16.mxu0 %v2258
        %3026 = vmatpush2.bf16.msra.mxu0 %v2257
        %3027 = vmatprep.mubr.bf16.mxu0 %v1078
        %3028 = vmatmul.mubr.bf16.gmra.mxu0 %v1077
        %v3029 = vpop.f32.mrf.mxu0
        %v3030 = vadd.f32 %v2837, %v3029
        %v3031 = vpop.f32.mrf.mxu0
        %v3032 = vadd.f32 %v2839, %v3031
        %v3033 = vpop.f32.mrf.mxu0
        %v3034 = vadd.f32 %v2841, %v3033
        %v3035 = vpop.f32.mrf.mxu0
        %v3036 = vadd.f32 %v2843, %v3035
        %3037 = vmatprep.mubr.bf16.mxu0 %v1086
        %3038 = vmatmul.mubr.bf16.gmra.mxu0 %v1085
        %v3039 = vpop.f32.mrf.mxu0
        %v3040 = vadd.f32 %v2847, %v3039
        %v3041 = vpop.f32.mrf.mxu0
        %v3042 = vadd.f32 %v2849, %v3041
        %v3043 = vpop.f32.mrf.mxu0
        %v3044 = vadd.f32 %v2851, %v3043
        %v3045 = vpop.f32.mrf.mxu0
        %v3046 = vadd.f32 %v2853, %v3045
        %3047 = vmatprep.mubr.bf16.mxu0 %v1094
        %3048 = vmatmul.mubr.bf16.gmra.mxu0 %v1093
        %v3049 = vpop.f32.mrf.mxu0
        %v3050 = vadd.f32 %v2857, %v3049
        %v3051 = vpop.f32.mrf.mxu0
        %v3052 = vadd.f32 %v2859, %v3051
        %v3053 = vpop.f32.mrf.mxu0
        %v3054 = vadd.f32 %v2861, %v3053
        %v3055 = vpop.f32.mrf.mxu0
        %v3056 = vadd.f32 %v2863, %v3055
        %3057 = vmatprep.mubr.bf16.mxu0 %v1102
        %3058 = vmatmul.mubr.bf16.gmra.mxu0 %v1101
        %v3059 = vpop.f32.mrf.mxu0
        %v3060 = vadd.f32 %v2867, %v3059
        %v3061 = vpop.f32.mrf.mxu0
        %v3062 = vadd.f32 %v2869, %v3061
        %v3063 = vpop.f32.mrf.mxu0
        %v3064 = vadd.f32 %v2871, %v3063
        %v3065 = vpop.f32.mrf.mxu0
        %v3066 = vadd.f32 %v2873, %v3065
        %3067 = vmatprep.mubr.bf16.mxu0 %v1110
        %3068 = vmatmul.mubr.bf16.gmra.mxu0 %v1109
        %v3069 = vpop.f32.mrf.mxu0
        %v3070 = vadd.f32 %v2877, %v3069
        %v3071 = vpop.f32.mrf.mxu0
        %v3072 = vadd.f32 %v2879, %v3071
        %v3073 = vpop.f32.mrf.mxu0
        %v3074 = vadd.f32 %v2881, %v3073
        %v3075 = vpop.f32.mrf.mxu0
        %v3076 = vadd.f32 %v2883, %v3075
        %3077 = vmatprep.mubr.bf16.mxu0 %v1118
        %3078 = vmatmul.mubr.bf16.gmra.mxu0 %v1117
        %v3079 = vpop.f32.mrf.mxu0
        %v3080 = vadd.f32 %v2887, %v3079
        %v3081 = vpop.f32.mrf.mxu0
        %v3082 = vadd.f32 %v2889, %v3081
        %v3083 = vpop.f32.mrf.mxu0
        %v3084 = vadd.f32 %v2891, %v3083
        %v3085 = vpop.f32.mrf.mxu0
        %v3086 = vadd.f32 %v2893, %v3085
        %3087 = vmatprep.mubr.bf16.mxu0 %v1126
        %3088 = vmatmul.mubr.bf16.gmra.mxu0 %v1125
        %v3089 = vpop.f32.mrf.mxu0
        %v3090 = vadd.f32 %v2897, %v3089
        %v3091 = vpop.f32.mrf.mxu0
        %v3092 = vadd.f32 %v2899, %v3091
        %v3093 = vpop.f32.mrf.mxu0
        %v3094 = vadd.f32 %v2901, %v3093
        %v3095 = vpop.f32.mrf.mxu0
        %v3096 = vadd.f32 %v2903, %v3095
        %3097 = vmatprep.mubr.bf16.mxu0 %v1134
        %3098 = vmatmul.mubr.bf16.gmra.mxu0 %v1133
        %v3099 = vpop.f32.mrf.mxu0
        %v3100 = vadd.f32 %v2907, %v3099
        %v3101 = vpop.f32.mrf.mxu0
        %v3102 = vadd.f32 %v2909, %v3101
        %v3103 = vpop.f32.mrf.mxu0
        %v3104 = vadd.f32 %v2911, %v3103
        %v3105 = vpop.f32.mrf.mxu0
        %v3106 = vadd.f32 %v2913, %v3105
        %3107 = vmatprep.mubr.bf16.mxu0 %v1142
        %3108 = vmatmul.mubr.bf16.gmra.mxu0 %v1141
        %v3109 = vpop.f32.mrf.mxu0
        %v3110 = vadd.f32 %v2917, %v3109
        %v3111 = vpop.f32.mrf.mxu0
        %v3112 = vadd.f32 %v2919, %v3111
        %v3113 = vpop.f32.mrf.mxu0
        %v3114 = vadd.f32 %v2921, %v3113
        %v3115 = vpop.f32.mrf.mxu0
        %v3116 = vadd.f32 %v2923, %v3115
        %3117 = vmatprep.mubr.bf16.mxu0 %v1150
        %3118 = vmatmul.mubr.bf16.gmra.mxu0 %v1149
        %v3119 = vpop.f32.mrf.mxu0
        %v3120 = vadd.f32 %v2927, %v3119
        %v3121 = vpop.f32.mrf.mxu0
        %v3122 = vadd.f32 %v2929, %v3121
        %v3123 = vpop.f32.mrf.mxu0
        %v3124 = vadd.f32 %v2931, %v3123
        %v3125 = vpop.f32.mrf.mxu0
        %v3126 = vadd.f32 %v2933, %v3125
        %3127 = vmatprep.mubr.bf16.mxu0 %v1158
        %3128 = vmatmul.mubr.bf16.gmra.mxu0 %v1157
        %v3129 = vpop.f32.mrf.mxu0
        %v3130 = vadd.f32 %v2937, %v3129
        %v3131 = vpop.f32.mrf.mxu0
        %v3132 = vadd.f32 %v2939, %v3131
        %v3133 = vpop.f32.mrf.mxu0
        %v3134 = vadd.f32 %v2941, %v3133
        %v3135 = vpop.f32.mrf.mxu0
        %v3136 = vadd.f32 %v2943, %v3135
        %3137 = vmatprep.mubr.bf16.mxu0 %v1166
        %3138 = vmatmul.mubr.bf16.gmra.mxu0 %v1165
        %v3139 = vpop.f32.mrf.mxu0
        %v3140 = vadd.f32 %v2947, %v3139
        %v3141 = vpop.f32.mrf.mxu0
        %v3142 = vadd.f32 %v2949, %v3141
        %v3143 = vpop.f32.mrf.mxu0
        %v3144 = vadd.f32 %v2951, %v3143
        %v3145 = vpop.f32.mrf.mxu0
        %v3146 = vadd.f32 %v2953, %v3145
        %3147 = vmatprep.mubr.bf16.mxu0 %v1174
        %3148 = vmatmul.mubr.bf16.gmra.mxu0 %v1173
        %v3149 = vpop.f32.mrf.mxu0
        %v3150 = vadd.f32 %v2957, %v3149
        %v3151 = vpop.f32.mrf.mxu0
        %v3152 = vadd.f32 %v2959, %v3151
        %v3153 = vpop.f32.mrf.mxu0
        %v3154 = vadd.f32 %v2961, %v3153
        %v3155 = vpop.f32.mrf.mxu0
        %v3156 = vadd.f32 %v2963, %v3155
        %3157 = vmatprep.mubr.bf16.mxu0 %v1182
        %3158 = vmatmul.mubr.bf16.gmra.mxu0 %v1181
        %v3159 = vpop.f32.mrf.mxu0
        %v3160 = vadd.f32 %v2967, %v3159
        %v3161 = vpop.f32.mrf.mxu0
        %v3162 = vadd.f32 %v2969, %v3161
        %v3163 = vpop.f32.mrf.mxu0
        %v3164 = vadd.f32 %v2971, %v3163
        %v3165 = vpop.f32.mrf.mxu0
        %v3166 = vadd.f32 %v2973, %v3165
        %3167 = vmatprep.mubr.bf16.mxu0 %v1190
        %3168 = vmatmul.mubr.bf16.gmra.mxu0 %v1189
        %v3169 = vpop.f32.mrf.mxu0
        %v3170 = vadd.f32 %v2977, %v3169
        %v3171 = vpop.f32.mrf.mxu0
        %v3172 = vadd.f32 %v2979, %v3171
        %v3173 = vpop.f32.mrf.mxu0
        %v3174 = vadd.f32 %v2981, %v3173
        %v3175 = vpop.f32.mrf.mxu0
        %v3176 = vadd.f32 %v2983, %v3175
        %3177 = vmatprep.mubr.bf16.mxu0 %v1198
        %3178 = vmatmul.mubr.bf16.gmra.mxu0 %v1197
        %v3179 = vpop.f32.mrf.mxu0
        %v3180 = vadd.f32 %v2987, %v3179
        %v3181 = vpop.f32.mrf.mxu0
        %v3182 = vadd.f32 %v2989, %v3181
        %v3183 = vpop.f32.mrf.mxu0
        %v3184 = vadd.f32 %v2991, %v3183
        %v3185 = vpop.f32.mrf.mxu0
        %v3186 = vadd.f32 %v2993, %v3185
        %3187 = vdwg.mxu0
        %3188 = vmatprep.subr.bf16.mxu0 %v2318
        %3189 = vmatpush1.bf16.msra.mxu0 %v2317
        %3190 = vmatprep.subr.bf16.mxu0 %v2314
        %3191 = vmatpush1.bf16.msra.mxu0 %v2313
        %3192 = vmatprep.subr.bf16.mxu0 %v2310
        %3193 = vmatpush1.bf16.msra.mxu0 %v2309
        %3194 = vmatprep.subr.bf16.mxu0 %v2306
        %3195 = vmatpush1.bf16.msra.mxu0 %v2305
        %3196 = vmatprep.subr.bf16.mxu0 %v2302
        %3197 = vmatpush1.bf16.msra.mxu0 %v2301
        %3198 = vmatprep.subr.bf16.mxu0 %v2298
        %3199 = vmatpush1.bf16.msra.mxu0 %v2297
        %3200 = vmatprep.subr.bf16.mxu0 %v2294
        %3201 = vmatpush1.bf16.msra.mxu0 %v2293
        %3202 = vmatprep.subr.bf16.mxu0 %v2290
        %3203 = vmatpush1.bf16.msra.mxu0 %v2289
        %3204 = vmatprep.subr.bf16.mxu0 %v2350
        %3205 = vmatpush2.bf16.msra.mxu0 %v2349
        %3206 = vmatprep.subr.bf16.mxu0 %v2346
        %3207 = vmatpush2.bf16.msra.mxu0 %v2345
        %3208 = vmatprep.subr.bf16.mxu0 %v2342
        %3209 = vmatpush2.bf16.msra.mxu0 %v2341
        %3210 = vmatprep.subr.bf16.mxu0 %v2338
        %3211 = vmatpush2.bf16.msra.mxu0 %v2337
        %3212 = vmatprep.subr.bf16.mxu0 %v2334
        %3213 = vmatpush2.bf16.msra.mxu0 %v2333
        %3214 = vmatprep.subr.bf16.mxu0 %v2330
        %3215 = vmatpush2.bf16.msra.mxu0 %v2329
        %3216 = vmatprep.subr.bf16.mxu0 %v2326
        %3217 = vmatpush2.bf16.msra.mxu0 %v2325
        %3218 = vmatprep.subr.bf16.mxu0 %v2322
        %3219 = vmatpush2.bf16.msra.mxu0 %v2321
        %3220 = vmatprep.mubr.bf16.mxu0 %v1080
        %3221 = vmatmul.mubr.bf16.gmra.mxu0 %v1079
        %v3222 = vpop.f32.mrf.mxu0
        %v3223 = vadd.f32 %v3030, %v3222
        %v3224 = vpop.f32.mrf.mxu0
        %v3225 = vadd.f32 %v3032, %v3224
        %v3226 = vpop.f32.mrf.mxu0
        %v3227 = vadd.f32 %v3034, %v3226
        %v3228 = vpop.f32.mrf.mxu0
        %v3229 = vadd.f32 %v3036, %v3228
        %3230 = vmatprep.mubr.bf16.mxu0 %v1088
        %3231 = vmatmul.mubr.bf16.gmra.mxu0 %v1087
        %v3232 = vpop.f32.mrf.mxu0
        %v3233 = vadd.f32 %v3040, %v3232
        %v3234 = vpop.f32.mrf.mxu0
        %v3235 = vadd.f32 %v3042, %v3234
        %v3236 = vpop.f32.mrf.mxu0
        %v3237 = vadd.f32 %v3044, %v3236
        %v3238 = vpop.f32.mrf.mxu0
        %v3239 = vadd.f32 %v3046, %v3238
        %3240 = vmatprep.mubr.bf16.mxu0 %v1096
        %3241 = vmatmul.mubr.bf16.gmra.mxu0 %v1095
        %v3242 = vpop.f32.mrf.mxu0
        %v3243 = vadd.f32 %v3050, %v3242
        %v3244 = vpop.f32.mrf.mxu0
        %v3245 = vadd.f32 %v3052, %v3244
        %v3246 = vpop.f32.mrf.mxu0
        %v3247 = vadd.f32 %v3054, %v3246
        %v3248 = vpop.f32.mrf.mxu0
        %v3249 = vadd.f32 %v3056, %v3248
        %3250 = vmatprep.mubr.bf16.mxu0 %v1104
        %3251 = vmatmul.mubr.bf16.gmra.mxu0 %v1103
        %v3252 = vpop.f32.mrf.mxu0
        %v3253 = vadd.f32 %v3060, %v3252
        %v3254 = vpop.f32.mrf.mxu0
        %v3255 = vadd.f32 %v3062, %v3254
        %v3256 = vpop.f32.mrf.mxu0
        %v3257 = vadd.f32 %v3064, %v3256
        %v3258 = vpop.f32.mrf.mxu0
        %v3259 = vadd.f32 %v3066, %v3258
        %3260 = vmatprep.mubr.bf16.mxu0 %v1112
        %3261 = vmatmul.mubr.bf16.gmra.mxu0 %v1111
        %v3262 = vpop.f32.mrf.mxu0
        %v3263 = vadd.f32 %v3070, %v3262
        %v3264 = vpop.f32.mrf.mxu0
        %v3265 = vadd.f32 %v3072, %v3264
        %v3266 = vpop.f32.mrf.mxu0
        %v3267 = vadd.f32 %v3074, %v3266
        %v3268 = vpop.f32.mrf.mxu0
        %v3269 = vadd.f32 %v3076, %v3268
        %3270 = vmatprep.mubr.bf16.mxu0 %v1120
        %3271 = vmatmul.mubr.bf16.gmra.mxu0 %v1119
        %v3272 = vpop.f32.mrf.mxu0
        %v3273 = vadd.f32 %v3080, %v3272
        %v3274 = vpop.f32.mrf.mxu0
        %v3275 = vadd.f32 %v3082, %v3274
        %v3276 = vpop.f32.mrf.mxu0
        %v3277 = vadd.f32 %v3084, %v3276
        %v3278 = vpop.f32.mrf.mxu0
        %v3279 = vadd.f32 %v3086, %v3278
        %3280 = vmatprep.mubr.bf16.mxu0 %v1128
        %3281 = vmatmul.mubr.bf16.gmra.mxu0 %v1127
        %v3282 = vpop.f32.mrf.mxu0
        %v3283 = vadd.f32 %v3090, %v3282
        %v3284 = vpop.f32.mrf.mxu0
        %v3285 = vadd.f32 %v3092, %v3284
        %v3286 = vpop.f32.mrf.mxu0
        %v3287 = vadd.f32 %v3094, %v3286
        %v3288 = vpop.f32.mrf.mxu0
        %v3289 = vadd.f32 %v3096, %v3288
        %3290 = vmatprep.mubr.bf16.mxu0 %v1136
        %3291 = vmatmul.mubr.bf16.gmra.mxu0 %v1135
        %v3292 = vpop.f32.mrf.mxu0
        %v3293 = vadd.f32 %v3100, %v3292
        %v3294 = vpop.f32.mrf.mxu0
        %v3295 = vadd.f32 %v3102, %v3294
        %v3296 = vpop.f32.mrf.mxu0
        %v3297 = vadd.f32 %v3104, %v3296
        %v3298 = vpop.f32.mrf.mxu0
        %v3299 = vadd.f32 %v3106, %v3298
        %3300 = vmatprep.mubr.bf16.mxu0 %v1144
        %3301 = vmatmul.mubr.bf16.gmra.mxu0 %v1143
        %v3302 = vpop.f32.mrf.mxu0
        %v3303 = vadd.f32 %v3110, %v3302
        %v3304 = vpop.f32.mrf.mxu0
        %v3305 = vadd.f32 %v3112, %v3304
        %v3306 = vpop.f32.mrf.mxu0
        %v3307 = vadd.f32 %v3114, %v3306
        %v3308 = vpop.f32.mrf.mxu0
        %v3309 = vadd.f32 %v3116, %v3308
        %3310 = vmatprep.mubr.bf16.mxu0 %v1152
        %3311 = vmatmul.mubr.bf16.gmra.mxu0 %v1151
        %v3312 = vpop.f32.mrf.mxu0
        %v3313 = vadd.f32 %v3120, %v3312
        %v3314 = vpop.f32.mrf.mxu0
        %v3315 = vadd.f32 %v3122, %v3314
        %v3316 = vpop.f32.mrf.mxu0
        %v3317 = vadd.f32 %v3124, %v3316
        %v3318 = vpop.f32.mrf.mxu0
        %v3319 = vadd.f32 %v3126, %v3318
        %3320 = vmatprep.mubr.bf16.mxu0 %v1160
        %3321 = vmatmul.mubr.bf16.gmra.mxu0 %v1159
        %v3322 = vpop.f32.mrf.mxu0
        %v3323 = vadd.f32 %v3130, %v3322
        %v3324 = vpop.f32.mrf.mxu0
        %v3325 = vadd.f32 %v3132, %v3324
        %v3326 = vpop.f32.mrf.mxu0
        %v3327 = vadd.f32 %v3134, %v3326
        %v3328 = vpop.f32.mrf.mxu0
        %v3329 = vadd.f32 %v3136, %v3328
        %3330 = vmatprep.mubr.bf16.mxu0 %v1168
        %3331 = vmatmul.mubr.bf16.gmra.mxu0 %v1167
        %v3332 = vpop.f32.mrf.mxu0
        %v3333 = vadd.f32 %v3140, %v3332
        %v3334 = vpop.f32.mrf.mxu0
        %v3335 = vadd.f32 %v3142, %v3334
        %v3336 = vpop.f32.mrf.mxu0
        %v3337 = vadd.f32 %v3144, %v3336
        %v3338 = vpop.f32.mrf.mxu0
        %v3339 = vadd.f32 %v3146, %v3338
        %3340 = vmatprep.mubr.bf16.mxu0 %v1176
        %3341 = vmatmul.mubr.bf16.gmra.mxu0 %v1175
        %v3342 = vpop.f32.mrf.mxu0
        %v3343 = vadd.f32 %v3150, %v3342
        %v3344 = vpop.f32.mrf.mxu0
        %v3345 = vadd.f32 %v3152, %v3344
        %v3346 = vpop.f32.mrf.mxu0
        %v3347 = vadd.f32 %v3154, %v3346
        %v3348 = vpop.f32.mrf.mxu0
        %v3349 = vadd.f32 %v3156, %v3348
        %3350 = vmatprep.mubr.bf16.mxu0 %v1184
        %3351 = vmatmul.mubr.bf16.gmra.mxu0 %v1183
        %v3352 = vpop.f32.mrf.mxu0
        %v3353 = vadd.f32 %v3160, %v3352
        %v3354 = vpop.f32.mrf.mxu0
        %v3355 = vadd.f32 %v3162, %v3354
        %v3356 = vpop.f32.mrf.mxu0
        %v3357 = vadd.f32 %v3164, %v3356
        %v3358 = vpop.f32.mrf.mxu0
        %v3359 = vadd.f32 %v3166, %v3358
        %3360 = vmatprep.mubr.bf16.mxu0 %v1192
        %3361 = vmatmul.mubr.bf16.gmra.mxu0 %v1191
        %v3362 = vpop.f32.mrf.mxu0
        %v3363 = vadd.f32 %v3170, %v3362
        %v3364 = vpop.f32.mrf.mxu0
        %v3365 = vadd.f32 %v3172, %v3364
        %v3366 = vpop.f32.mrf.mxu0
        %v3367 = vadd.f32 %v3174, %v3366
        %v3368 = vpop.f32.mrf.mxu0
        %v3369 = vadd.f32 %v3176, %v3368
        %3370 = vmatprep.mubr.bf16.mxu0 %v1200
        %3371 = vmatmul.mubr.bf16.gmra.mxu0 %v1199
        %v3372 = vpop.f32.mrf.mxu0
        %v3373 = vadd.f32 %v3180, %v3372
        %v3374 = vpop.f32.mrf.mxu0
        %v3375 = vadd.f32 %v3182, %v3374
        %v3376 = vpop.f32.mrf.mxu0
        %v3377 = vadd.f32 %v3184, %v3376
        %v3378 = vpop.f32.mrf.mxu0
        %v3379 = vadd.f32 %v3186, %v3378
        %3380 = vdwg.mxu0
        %3381 = vmatprep.subr.bf16.mxu0 %v2128
        %3382 = vmatpush1.bf16.msra.mxu0 %v2127
        %3383 = vmatprep.subr.bf16.mxu0 %v2124
        %3384 = vmatpush1.bf16.msra.mxu0 %v2123
        %3385 = vmatprep.subr.bf16.mxu0 %v2120
        %3386 = vmatpush1.bf16.msra.mxu0 %v2119
        %3387 = vmatprep.subr.bf16.mxu0 %v2116
        %3388 = vmatpush1.bf16.msra.mxu0 %v2115
        %3389 = vmatprep.subr.bf16.mxu0 %v2112
        %3390 = vmatpush1.bf16.msra.mxu0 %v2111
        %3391 = vmatprep.subr.bf16.mxu0 %v2108
        %3392 = vmatpush1.bf16.msra.mxu0 %v2107
        %3393 = vmatprep.subr.bf16.mxu0 %v2104
        %3394 = vmatpush1.bf16.msra.mxu0 %v2103
        %3395 = vmatprep.subr.bf16.mxu0 %v2100
        %3396 = vmatpush1.bf16.msra.mxu0 %v2099
        %3397 = vmatprep.subr.bf16.mxu0 %v2160
        %3398 = vmatpush2.bf16.msra.mxu0 %v2159
        %3399 = vmatprep.subr.bf16.mxu0 %v2156
        %3400 = vmatpush2.bf16.msra.mxu0 %v2155
        %3401 = vmatprep.subr.bf16.mxu0 %v2152
        %3402 = vmatpush2.bf16.msra.mxu0 %v2151
        %3403 = vmatprep.subr.bf16.mxu0 %v2148
        %3404 = vmatpush2.bf16.msra.mxu0 %v2147
        %3405 = vmatprep.subr.bf16.mxu0 %v2144
        %3406 = vmatpush2.bf16.msra.mxu0 %v2143
        %3407 = vmatprep.subr.bf16.mxu0 %v2140
        %3408 = vmatpush2.bf16.msra.mxu0 %v2139
        %3409 = vmatprep.subr.bf16.mxu0 %v2136
        %3410 = vmatpush2.bf16.msra.mxu0 %v2135
        %3411 = vmatprep.subr.bf16.mxu0 %v2132
        %3412 = vmatpush2.bf16.msra.mxu0 %v2131
        %3413 = vmatprep.mubr.bf16.mxu0 %v1074
        %3414 = vmatmul.mubr.bf16.gmra.mxu0 %v1073
        %v3415 = vpop.f32.mrf.mxu0
        %v3416 = vadd.f32 %v680, %v3415
        %v3417 = vpop.f32.mrf.mxu0
        %v3418 = vadd.f32 %v684, %v3417
        %v3419 = vpop.f32.mrf.mxu0
        %v3420 = vadd.f32 %v680, %v3419
        %v3421 = vpop.f32.mrf.mxu0
        %v3422 = vadd.f32 %v684, %v3421
        %3423 = vmatprep.mubr.bf16.mxu0 %v1082
        %3424 = vmatmul.mubr.bf16.gmra.mxu0 %v1081
        %v3425 = vpop.f32.mrf.mxu0
        %v3426 = vadd.f32 %v680, %v3425
        %v3427 = vpop.f32.mrf.mxu0
        %v3428 = vadd.f32 %v684, %v3427
        %v3429 = vpop.f32.mrf.mxu0
        %v3430 = vadd.f32 %v680, %v3429
        %v3431 = vpop.f32.mrf.mxu0
        %v3432 = vadd.f32 %v684, %v3431
        %3433 = vmatprep.mubr.bf16.mxu0 %v1090
        %3434 = vmatmul.mubr.bf16.gmra.mxu0 %v1089
        %v3435 = vpop.f32.mrf.mxu0
        %v3436 = vadd.f32 %v680, %v3435
        %v3437 = vpop.f32.mrf.mxu0
        %v3438 = vadd.f32 %v684, %v3437
        %v3439 = vpop.f32.mrf.mxu0
        %v3440 = vadd.f32 %v680, %v3439
        %v3441 = vpop.f32.mrf.mxu0
        %v3442 = vadd.f32 %v684, %v3441
        %3443 = vmatprep.mubr.bf16.mxu0 %v1098
        %3444 = vmatmul.mubr.bf16.gmra.mxu0 %v1097
        %v3445 = vpop.f32.mrf.mxu0
        %v3446 = vadd.f32 %v680, %v3445
        %v3447 = vpop.f32.mrf.mxu0
        %v3448 = vadd.f32 %v684, %v3447
        %v3449 = vpop.f32.mrf.mxu0
        %v3450 = vadd.f32 %v680, %v3449
        %v3451 = vpop.f32.mrf.mxu0
        %v3452 = vadd.f32 %v684, %v3451
        %3453 = vmatprep.mubr.bf16.mxu0 %v1106
        %3454 = vmatmul.mubr.bf16.gmra.mxu0 %v1105
        %v3455 = vpop.f32.mrf.mxu0
        %v3456 = vadd.f32 %v680, %v3455
        %v3457 = vpop.f32.mrf.mxu0
        %v3458 = vadd.f32 %v684, %v3457
        %v3459 = vpop.f32.mrf.mxu0
        %v3460 = vadd.f32 %v680, %v3459
        %v3461 = vpop.f32.mrf.mxu0
        %v3462 = vadd.f32 %v684, %v3461
        %3463 = vmatprep.mubr.bf16.mxu0 %v1114
        %3464 = vmatmul.mubr.bf16.gmra.mxu0 %v1113
        %v3465 = vpop.f32.mrf.mxu0
        %v3466 = vadd.f32 %v680, %v3465
        %v3467 = vpop.f32.mrf.mxu0
        %v3468 = vadd.f32 %v684, %v3467
        %v3469 = vpop.f32.mrf.mxu0
        %v3470 = vadd.f32 %v680, %v3469
        %v3471 = vpop.f32.mrf.mxu0
        %v3472 = vadd.f32 %v684, %v3471
        %3473 = vmatprep.mubr.bf16.mxu0 %v1122
        %3474 = vmatmul.mubr.bf16.gmra.mxu0 %v1121
        %v3475 = vpop.f32.mrf.mxu0
        %v3476 = vadd.f32 %v680, %v3475
        %v3477 = vpop.f32.mrf.mxu0
        %v3478 = vadd.f32 %v684, %v3477
        %v3479 = vpop.f32.mrf.mxu0
        %v3480 = vadd.f32 %v680, %v3479
        %v3481 = vpop.f32.mrf.mxu0
        %v3482 = vadd.f32 %v684, %v3481
        %3483 = vmatprep.mubr.bf16.mxu0 %v1130
        %3484 = vmatmul.mubr.bf16.gmra.mxu0 %v1129
        %v3485 = vpop.f32.mrf.mxu0
        %v3486 = vadd.f32 %v680, %v3485
        %v3487 = vpop.f32.mrf.mxu0
        %v3488 = vadd.f32 %v684, %v3487
        %v3489 = vpop.f32.mrf.mxu0
        %v3490 = vadd.f32 %v680, %v3489
        %v3491 = vpop.f32.mrf.mxu0
        %v3492 = vadd.f32 %v684, %v3491
        %3493 = vmatprep.mubr.bf16.mxu0 %v1138
        %3494 = vmatmul.mubr.bf16.gmra.mxu0 %v1137
        %v3495 = vpop.f32.mrf.mxu0
        %v3496 = vadd.f32 %v680, %v3495
        %v3497 = vpop.f32.mrf.mxu0
        %v3498 = vadd.f32 %v684, %v3497
        %v3499 = vpop.f32.mrf.mxu0
        %v3500 = vadd.f32 %v680, %v3499
        %v3501 = vpop.f32.mrf.mxu0
        %v3502 = vadd.f32 %v684, %v3501
        %3503 = vmatprep.mubr.bf16.mxu0 %v1146
        %3504 = vmatmul.mubr.bf16.gmra.mxu0 %v1145
        %v3505 = vpop.f32.mrf.mxu0
        %v3506 = vadd.f32 %v680, %v3505
        %v3507 = vpop.f32.mrf.mxu0
        %v3508 = vadd.f32 %v684, %v3507
        %v3509 = vpop.f32.mrf.mxu0
        %v3510 = vadd.f32 %v680, %v3509
        %v3511 = vpop.f32.mrf.mxu0
        %v3512 = vadd.f32 %v684, %v3511
        %3513 = vmatprep.mubr.bf16.mxu0 %v1154
        %3514 = vmatmul.mubr.bf16.gmra.mxu0 %v1153
        %v3515 = vpop.f32.mrf.mxu0
        %v3516 = vadd.f32 %v680, %v3515
        %v3517 = vpop.f32.mrf.mxu0
        %v3518 = vadd.f32 %v684, %v3517
        %v3519 = vpop.f32.mrf.mxu0
        %v3520 = vadd.f32 %v680, %v3519
        %v3521 = vpop.f32.mrf.mxu0
        %v3522 = vadd.f32 %v684, %v3521
        %3523 = vmatprep.mubr.bf16.mxu0 %v1162
        %3524 = vmatmul.mubr.bf16.gmra.mxu0 %v1161
        %v3525 = vpop.f32.mrf.mxu0
        %v3526 = vadd.f32 %v680, %v3525
        %v3527 = vpop.f32.mrf.mxu0
        %v3528 = vadd.f32 %v684, %v3527
        %v3529 = vpop.f32.mrf.mxu0
        %v3530 = vadd.f32 %v680, %v3529
        %v3531 = vpop.f32.mrf.mxu0
        %v3532 = vadd.f32 %v684, %v3531
        %3533 = vmatprep.mubr.bf16.mxu0 %v1170
        %3534 = vmatmul.mubr.bf16.gmra.mxu0 %v1169
        %v3535 = vpop.f32.mrf.mxu0
        %v3536 = vadd.f32 %v680, %v3535
        %v3537 = vpop.f32.mrf.mxu0
        %v3538 = vadd.f32 %v684, %v3537
        %v3539 = vpop.f32.mrf.mxu0
        %v3540 = vadd.f32 %v680, %v3539
        %v3541 = vpop.f32.mrf.mxu0
        %v3542 = vadd.f32 %v684, %v3541
        %3543 = vmatprep.mubr.bf16.mxu0 %v1178
        %3544 = vmatmul.mubr.bf16.gmra.mxu0 %v1177
        %v3545 = vpop.f32.mrf.mxu0
        %v3546 = vadd.f32 %v680, %v3545
        %v3547 = vpop.f32.mrf.mxu0
        %v3548 = vadd.f32 %v684, %v3547
        %v3549 = vpop.f32.mrf.mxu0
        %v3550 = vadd.f32 %v680, %v3549
        %v3551 = vpop.f32.mrf.mxu0
        %v3552 = vadd.f32 %v684, %v3551
        %3553 = vmatprep.mubr.bf16.mxu0 %v1186
        %3554 = vmatmul.mubr.bf16.gmra.mxu0 %v1185
        %v3555 = vpop.f32.mrf.mxu0
        %v3556 = vadd.f32 %v680, %v3555
        %v3557 = vpop.f32.mrf.mxu0
        %v3558 = vadd.f32 %v684, %v3557
        %v3559 = vpop.f32.mrf.mxu0
        %v3560 = vadd.f32 %v680, %v3559
        %v3561 = vpop.f32.mrf.mxu0
        %v3562 = vadd.f32 %v684, %v3561
        %3563 = vmatprep.mubr.bf16.mxu0 %v1194
        %3564 = vmatmul.mubr.bf16.gmra.mxu0 %v1193
        %v3565 = vpop.f32.mrf.mxu0
        %v3566 = vadd.f32 %v680, %v3565
        %v3567 = vpop.f32.mrf.mxu0
        %v3568 = vadd.f32 %v684, %v3567
        %v3569 = vpop.f32.mrf.mxu0
        %v3570 = vadd.f32 %v680, %v3569
        %v3571 = vpop.f32.mrf.mxu0
        %v3572 = vadd.f32 %v684, %v3571
        %3573 = vdwg.mxu0
        %3574 = vmatprep.subr.bf16.mxu0 %v2192
        %3575 = vmatpush1.bf16.msra.mxu0 %v2191
        %3576 = vmatprep.subr.bf16.mxu0 %v2188
        %3577 = vmatpush1.bf16.msra.mxu0 %v2187
        %3578 = vmatprep.subr.bf16.mxu0 %v2184
        %3579 = vmatpush1.bf16.msra.mxu0 %v2183
        %3580 = vmatprep.subr.bf16.mxu0 %v2180
        %3581 = vmatpush1.bf16.msra.mxu0 %v2179
        %3582 = vmatprep.subr.bf16.mxu0 %v2176
        %3583 = vmatpush1.bf16.msra.mxu0 %v2175
        %3584 = vmatprep.subr.bf16.mxu0 %v2172
        %3585 = vmatpush1.bf16.msra.mxu0 %v2171
        %3586 = vmatprep.subr.bf16.mxu0 %v2168
        %3587 = vmatpush1.bf16.msra.mxu0 %v2167
        %3588 = vmatprep.subr.bf16.mxu0 %v2164
        %3589 = vmatpush1.bf16.msra.mxu0 %v2163
        %3590 = vmatprep.subr.bf16.mxu0 %v2224
        %3591 = vmatpush2.bf16.msra.mxu0 %v2223
        %3592 = vmatprep.subr.bf16.mxu0 %v2220
        %3593 = vmatpush2.bf16.msra.mxu0 %v2219
        %3594 = vmatprep.subr.bf16.mxu0 %v2216
        %3595 = vmatpush2.bf16.msra.mxu0 %v2215
        %3596 = vmatprep.subr.bf16.mxu0 %v2212
        %3597 = vmatpush2.bf16.msra.mxu0 %v2211
        %3598 = vmatprep.subr.bf16.mxu0 %v2208
        %3599 = vmatpush2.bf16.msra.mxu0 %v2207
        %3600 = vmatprep.subr.bf16.mxu0 %v2204
        %3601 = vmatpush2.bf16.msra.mxu0 %v2203
        %3602 = vmatprep.subr.bf16.mxu0 %v2200
        %3603 = vmatpush2.bf16.msra.mxu0 %v2199
        %3604 = vmatprep.subr.bf16.mxu0 %v2196
        %3605 = vmatpush2.bf16.msra.mxu0 %v2195
        %3606 = vmatprep.mubr.bf16.mxu0 %v1076
        %3607 = vmatmul.mubr.bf16.gmra.mxu0 %v1075
        %v3608 = vpop.f32.mrf.mxu0
        %v3609 = vadd.f32 %v3416, %v3608
        %v3610 = vpop.f32.mrf.mxu0
        %v3611 = vadd.f32 %v3418, %v3610
        %v3612 = vpop.f32.mrf.mxu0
        %v3613 = vadd.f32 %v3420, %v3612
        %v3614 = vpop.f32.mrf.mxu0
        %v3615 = vadd.f32 %v3422, %v3614
        %3616 = vmatprep.mubr.bf16.mxu0 %v1084
        %3617 = vmatmul.mubr.bf16.gmra.mxu0 %v1083
        %v3618 = vpop.f32.mrf.mxu0
        %v3619 = vadd.f32 %v3426, %v3618
        %v3620 = vpop.f32.mrf.mxu0
        %v3621 = vadd.f32 %v3428, %v3620
        %v3622 = vpop.f32.mrf.mxu0
        %v3623 = vadd.f32 %v3430, %v3622
        %v3624 = vpop.f32.mrf.mxu0
        %v3625 = vadd.f32 %v3432, %v3624
        %3626 = vmatprep.mubr.bf16.mxu0 %v1092
        %3627 = vmatmul.mubr.bf16.gmra.mxu0 %v1091
        %v3628 = vpop.f32.mrf.mxu0
        %v3629 = vadd.f32 %v3436, %v3628
        %v3630 = vpop.f32.mrf.mxu0
        %v3631 = vadd.f32 %v3438, %v3630
        %v3632 = vpop.f32.mrf.mxu0
        %v3633 = vadd.f32 %v3440, %v3632
        %v3634 = vpop.f32.mrf.mxu0
        %v3635 = vadd.f32 %v3442, %v3634
        %3636 = vmatprep.mubr.bf16.mxu0 %v1100
        %3637 = vmatmul.mubr.bf16.gmra.mxu0 %v1099
        %v3638 = vpop.f32.mrf.mxu0
        %v3639 = vadd.f32 %v3446, %v3638
        %v3640 = vpop.f32.mrf.mxu0
        %v3641 = vadd.f32 %v3448, %v3640
        %v3642 = vpop.f32.mrf.mxu0
        %v3643 = vadd.f32 %v3450, %v3642
        %v3644 = vpop.f32.mrf.mxu0
        %v3645 = vadd.f32 %v3452, %v3644
        %3646 = vmatprep.mubr.bf16.mxu0 %v1108
        %3647 = vmatmul.mubr.bf16.gmra.mxu0 %v1107
        %v3648 = vpop.f32.mrf.mxu0
        %v3649 = vadd.f32 %v3456, %v3648
        %v3650 = vpop.f32.mrf.mxu0
        %v3651 = vadd.f32 %v3458, %v3650
        %v3652 = vpop.f32.mrf.mxu0
        %v3653 = vadd.f32 %v3460, %v3652
        %v3654 = vpop.f32.mrf.mxu0
        %v3655 = vadd.f32 %v3462, %v3654
        %3656 = vmatprep.mubr.bf16.mxu0 %v1116
        %3657 = vmatmul.mubr.bf16.gmra.mxu0 %v1115
        %v3658 = vpop.f32.mrf.mxu0
        %v3659 = vadd.f32 %v3466, %v3658
        %v3660 = vpop.f32.mrf.mxu0
        %v3661 = vadd.f32 %v3468, %v3660
        %v3662 = vpop.f32.mrf.mxu0
        %v3663 = vadd.f32 %v3470, %v3662
        %v3664 = vpop.f32.mrf.mxu0
        %v3665 = vadd.f32 %v3472, %v3664
        %3666 = vmatprep.mubr.bf16.mxu0 %v1124
        %3667 = vmatmul.mubr.bf16.gmra.mxu0 %v1123
        %v3668 = vpop.f32.mrf.mxu0
        %v3669 = vadd.f32 %v3476, %v3668
        %v3670 = vpop.f32.mrf.mxu0
        %v3671 = vadd.f32 %v3478, %v3670
        %v3672 = vpop.f32.mrf.mxu0
        %v3673 = vadd.f32 %v3480, %v3672
        %v3674 = vpop.f32.mrf.mxu0
        %v3675 = vadd.f32 %v3482, %v3674
        %3676 = vmatprep.mubr.bf16.mxu0 %v1132
        %3677 = vmatmul.mubr.bf16.gmra.mxu0 %v1131
        %v3678 = vpop.f32.mrf.mxu0
        %v3679 = vadd.f32 %v3486, %v3678
        %v3680 = vpop.f32.mrf.mxu0
        %v3681 = vadd.f32 %v3488, %v3680
        %v3682 = vpop.f32.mrf.mxu0
        %v3683 = vadd.f32 %v3490, %v3682
        %v3684 = vpop.f32.mrf.mxu0
        %v3685 = vadd.f32 %v3492, %v3684
        %3686 = vmatprep.mubr.bf16.mxu0 %v1140
        %3687 = vmatmul.mubr.bf16.gmra.mxu0 %v1139
        %v3688 = vpop.f32.mrf.mxu0
        %v3689 = vadd.f32 %v3496, %v3688
        %v3690 = vpop.f32.mrf.mxu0
        %v3691 = vadd.f32 %v3498, %v3690
        %v3692 = vpop.f32.mrf.mxu0
        %v3693 = vadd.f32 %v3500, %v3692
        %v3694 = vpop.f32.mrf.mxu0
        %v3695 = vadd.f32 %v3502, %v3694
        %3696 = vmatprep.mubr.bf16.mxu0 %v1148
        %3697 = vmatmul.mubr.bf16.gmra.mxu0 %v1147
        %v3698 = vpop.f32.mrf.mxu0
        %v3699 = vadd.f32 %v3506, %v3698
        %v3700 = vpop.f32.mrf.mxu0
        %v3701 = vadd.f32 %v3508, %v3700
        %v3702 = vpop.f32.mrf.mxu0
        %v3703 = vadd.f32 %v3510, %v3702
        %v3704 = vpop.f32.mrf.mxu0
        %v3705 = vadd.f32 %v3512, %v3704
        %3706 = vmatprep.mubr.bf16.mxu0 %v1156
        %3707 = vmatmul.mubr.bf16.gmra.mxu0 %v1155
        %v3708 = vpop.f32.mrf.mxu0
        %v3709 = vadd.f32 %v3516, %v3708
        %v3710 = vpop.f32.mrf.mxu0
        %v3711 = vadd.f32 %v3518, %v3710
        %v3712 = vpop.f32.mrf.mxu0
        %v3713 = vadd.f32 %v3520, %v3712
        %v3714 = vpop.f32.mrf.mxu0
        %v3715 = vadd.f32 %v3522, %v3714
        %3716 = vmatprep.mubr.bf16.mxu0 %v1164
        %3717 = vmatmul.mubr.bf16.gmra.mxu0 %v1163
        %v3718 = vpop.f32.mrf.mxu0
        %v3719 = vadd.f32 %v3526, %v3718
        %v3720 = vpop.f32.mrf.mxu0
        %v3721 = vadd.f32 %v3528, %v3720
        %v3722 = vpop.f32.mrf.mxu0
        %v3723 = vadd.f32 %v3530, %v3722
        %v3724 = vpop.f32.mrf.mxu0
        %v3725 = vadd.f32 %v3532, %v3724
        %3726 = vmatprep.mubr.bf16.mxu0 %v1172
        %3727 = vmatmul.mubr.bf16.gmra.mxu0 %v1171
        %v3728 = vpop.f32.mrf.mxu0
        %v3729 = vadd.f32 %v3536, %v3728
        %v3730 = vpop.f32.mrf.mxu0
        %v3731 = vadd.f32 %v3538, %v3730
        %v3732 = vpop.f32.mrf.mxu0
        %v3733 = vadd.f32 %v3540, %v3732
        %v3734 = vpop.f32.mrf.mxu0
        %v3735 = vadd.f32 %v3542, %v3734
        %3736 = vmatprep.mubr.bf16.mxu0 %v1180
        %3737 = vmatmul.mubr.bf16.gmra.mxu0 %v1179
        %v3738 = vpop.f32.mrf.mxu0
        %v3739 = vadd.f32 %v3546, %v3738
        %v3740 = vpop.f32.mrf.mxu0
        %v3741 = vadd.f32 %v3548, %v3740
        %v3742 = vpop.f32.mrf.mxu0
        %v3743 = vadd.f32 %v3550, %v3742
        %v3744 = vpop.f32.mrf.mxu0
        %v3745 = vadd.f32 %v3552, %v3744
        %3746 = vmatprep.mubr.bf16.mxu0 %v1188
        %3747 = vmatmul.mubr.bf16.gmra.mxu0 %v1187
        %v3748 = vpop.f32.mrf.mxu0
        %v3749 = vadd.f32 %v3556, %v3748
        %v3750 = vpop.f32.mrf.mxu0
        %v3751 = vadd.f32 %v3558, %v3750
        %v3752 = vpop.f32.mrf.mxu0
        %v3753 = vadd.f32 %v3560, %v3752
        %v3754 = vpop.f32.mrf.mxu0
        %v3755 = vadd.f32 %v3562, %v3754
        %3756 = vmatprep.mubr.bf16.mxu0 %v1196
        %3757 = vmatmul.mubr.bf16.gmra.mxu0 %v1195
        %v3758 = vpop.f32.mrf.mxu0
        %v3759 = vadd.f32 %v3566, %v3758
        %v3760 = vpop.f32.mrf.mxu0
        %v3761 = vadd.f32 %v3568, %v3760
        %v3762 = vpop.f32.mrf.mxu0
        %v3763 = vadd.f32 %v3570, %v3762
        %v3764 = vpop.f32.mrf.mxu0
        %v3765 = vadd.f32 %v3572, %v3764
        %3766 = vdwg.mxu0
        %3767 = vmatprep.subr.bf16.mxu0 %v2256
        %3768 = vmatpush1.bf16.msra.mxu0 %v2255
        %3769 = vmatprep.subr.bf16.mxu0 %v2252
        %3770 = vmatpush1.bf16.msra.mxu0 %v2251
        %3771 = vmatprep.subr.bf16.mxu0 %v2248
        %3772 = vmatpush1.bf16.msra.mxu0 %v2247
        %3773 = vmatprep.subr.bf16.mxu0 %v2244
        %3774 = vmatpush1.bf16.msra.mxu0 %v2243
        %3775 = vmatprep.subr.bf16.mxu0 %v2240
        %3776 = vmatpush1.bf16.msra.mxu0 %v2239
        %3777 = vmatprep.subr.bf16.mxu0 %v2236
        %3778 = vmatpush1.bf16.msra.mxu0 %v2235
        %3779 = vmatprep.subr.bf16.mxu0 %v2232
        %3780 = vmatpush1.bf16.msra.mxu0 %v2231
        %3781 = vmatprep.subr.bf16.mxu0 %v2228
        %3782 = vmatpush1.bf16.msra.mxu0 %v2227
        %3783 = vmatprep.subr.bf16.mxu0 %v2288
        %3784 = vmatpush2.bf16.msra.mxu0 %v2287
        %3785 = vmatprep.subr.bf16.mxu0 %v2284
        %3786 = vmatpush2.bf16.msra.mxu0 %v2283
        %3787 = vmatprep.subr.bf16.mxu0 %v2280
        %3788 = vmatpush2.bf16.msra.mxu0 %v2279
        %3789 = vmatprep.subr.bf16.mxu0 %v2276
        %3790 = vmatpush2.bf16.msra.mxu0 %v2275
        %3791 = vmatprep.subr.bf16.mxu0 %v2272
        %3792 = vmatpush2.bf16.msra.mxu0 %v2271
        %3793 = vmatprep.subr.bf16.mxu0 %v2268
        %3794 = vmatpush2.bf16.msra.mxu0 %v2267
        %3795 = vmatprep.subr.bf16.mxu0 %v2264
        %3796 = vmatpush2.bf16.msra.mxu0 %v2263
        %3797 = vmatprep.subr.bf16.mxu0 %v2260
        %3798 = vmatpush2.bf16.msra.mxu0 %v2259
        %3799 = vmatprep.mubr.bf16.mxu0 %v1078
        %3800 = vmatmul.mubr.bf16.gmra.mxu0 %v1077
        %v3801 = vpop.f32.mrf.mxu0
        %v3802 = vadd.f32 %v3609, %v3801
        %v3803 = vpop.f32.mrf.mxu0
        %v3804 = vadd.f32 %v3611, %v3803
        %v3805 = vpop.f32.mrf.mxu0
        %v3806 = vadd.f32 %v3613, %v3805
        %v3807 = vpop.f32.mrf.mxu0
        %v3808 = vadd.f32 %v3615, %v3807
        %3809 = vmatprep.mubr.bf16.mxu0 %v1086
        %3810 = vmatmul.mubr.bf16.gmra.mxu0 %v1085
        %v3811 = vpop.f32.mrf.mxu0
        %v3812 = vadd.f32 %v3619, %v3811
        %v3813 = vpop.f32.mrf.mxu0
        %v3814 = vadd.f32 %v3621, %v3813
        %v3815 = vpop.f32.mrf.mxu0
        %v3816 = vadd.f32 %v3623, %v3815
        %v3817 = vpop.f32.mrf.mxu0
        %v3818 = vadd.f32 %v3625, %v3817
        %3819 = vmatprep.mubr.bf16.mxu0 %v1094
        %3820 = vmatmul.mubr.bf16.gmra.mxu0 %v1093
        %v3821 = vpop.f32.mrf.mxu0
        %v3822 = vadd.f32 %v3629, %v3821
        %v3823 = vpop.f32.mrf.mxu0
        %v3824 = vadd.f32 %v3631, %v3823
        %v3825 = vpop.f32.mrf.mxu0
        %v3826 = vadd.f32 %v3633, %v3825
        %v3827 = vpop.f32.mrf.mxu0
        %v3828 = vadd.f32 %v3635, %v3827
        %3829 = vmatprep.mubr.bf16.mxu0 %v1102
        %3830 = vmatmul.mubr.bf16.gmra.mxu0 %v1101
        %v3831 = vpop.f32.mrf.mxu0
        %v3832 = vadd.f32 %v3639, %v3831
        %v3833 = vpop.f32.mrf.mxu0
        %v3834 = vadd.f32 %v3641, %v3833
        %v3835 = vpop.f32.mrf.mxu0
        %v3836 = vadd.f32 %v3643, %v3835
        %v3837 = vpop.f32.mrf.mxu0
        %v3838 = vadd.f32 %v3645, %v3837
        %3839 = vmatprep.mubr.bf16.mxu0 %v1110
        %3840 = vmatmul.mubr.bf16.gmra.mxu0 %v1109
        %v3841 = vpop.f32.mrf.mxu0
        %v3842 = vadd.f32 %v3649, %v3841
        %v3843 = vpop.f32.mrf.mxu0
        %v3844 = vadd.f32 %v3651, %v3843
        %v3845 = vpop.f32.mrf.mxu0
        %v3846 = vadd.f32 %v3653, %v3845
        %v3847 = vpop.f32.mrf.mxu0
        %v3848 = vadd.f32 %v3655, %v3847
        %3849 = vmatprep.mubr.bf16.mxu0 %v1118
        %3850 = vmatmul.mubr.bf16.gmra.mxu0 %v1117
        %v3851 = vpop.f32.mrf.mxu0
        %v3852 = vadd.f32 %v3659, %v3851
        %v3853 = vpop.f32.mrf.mxu0
        %v3854 = vadd.f32 %v3661, %v3853
        %v3855 = vpop.f32.mrf.mxu0
        %v3856 = vadd.f32 %v3663, %v3855
        %v3857 = vpop.f32.mrf.mxu0
        %v3858 = vadd.f32 %v3665, %v3857
        %3859 = vmatprep.mubr.bf16.mxu0 %v1126
        %3860 = vmatmul.mubr.bf16.gmra.mxu0 %v1125
        %v3861 = vpop.f32.mrf.mxu0
        %v3862 = vadd.f32 %v3669, %v3861
        %v3863 = vpop.f32.mrf.mxu0
        %v3864 = vadd.f32 %v3671, %v3863
        %v3865 = vpop.f32.mrf.mxu0
        %v3866 = vadd.f32 %v3673, %v3865
        %v3867 = vpop.f32.mrf.mxu0
        %v3868 = vadd.f32 %v3675, %v3867
        %3869 = vmatprep.mubr.bf16.mxu0 %v1134
        %3870 = vmatmul.mubr.bf16.gmra.mxu0 %v1133
        %v3871 = vpop.f32.mrf.mxu0
        %v3872 = vadd.f32 %v3679, %v3871
        %v3873 = vpop.f32.mrf.mxu0
        %v3874 = vadd.f32 %v3681, %v3873
        %v3875 = vpop.f32.mrf.mxu0
        %v3876 = vadd.f32 %v3683, %v3875
        %v3877 = vpop.f32.mrf.mxu0
        %v3878 = vadd.f32 %v3685, %v3877
        %3879 = vmatprep.mubr.bf16.mxu0 %v1142
        %3880 = vmatmul.mubr.bf16.gmra.mxu0 %v1141
        %v3881 = vpop.f32.mrf.mxu0
        %v3882 = vadd.f32 %v3689, %v3881
        %v3883 = vpop.f32.mrf.mxu0
        %v3884 = vadd.f32 %v3691, %v3883
        %v3885 = vpop.f32.mrf.mxu0
        %v3886 = vadd.f32 %v3693, %v3885
        %v3887 = vpop.f32.mrf.mxu0
        %v3888 = vadd.f32 %v3695, %v3887
        %3889 = vmatprep.mubr.bf16.mxu0 %v1150
        %3890 = vmatmul.mubr.bf16.gmra.mxu0 %v1149
        %v3891 = vpop.f32.mrf.mxu0
        %v3892 = vadd.f32 %v3699, %v3891
        %v3893 = vpop.f32.mrf.mxu0
        %v3894 = vadd.f32 %v3701, %v3893
        %v3895 = vpop.f32.mrf.mxu0
        %v3896 = vadd.f32 %v3703, %v3895
        %v3897 = vpop.f32.mrf.mxu0
        %v3898 = vadd.f32 %v3705, %v3897
        %3899 = vmatprep.mubr.bf16.mxu0 %v1158
        %3900 = vmatmul.mubr.bf16.gmra.mxu0 %v1157
        %v3901 = vpop.f32.mrf.mxu0
        %v3902 = vadd.f32 %v3709, %v3901
        %v3903 = vpop.f32.mrf.mxu0
        %v3904 = vadd.f32 %v3711, %v3903
        %v3905 = vpop.f32.mrf.mxu0
        %v3906 = vadd.f32 %v3713, %v3905
        %v3907 = vpop.f32.mrf.mxu0
        %v3908 = vadd.f32 %v3715, %v3907
        %3909 = vmatprep.mubr.bf16.mxu0 %v1166
        %3910 = vmatmul.mubr.bf16.gmra.mxu0 %v1165
        %v3911 = vpop.f32.mrf.mxu0
        %v3912 = vadd.f32 %v3719, %v3911
        %v3913 = vpop.f32.mrf.mxu0
        %v3914 = vadd.f32 %v3721, %v3913
        %v3915 = vpop.f32.mrf.mxu0
        %v3916 = vadd.f32 %v3723, %v3915
        %v3917 = vpop.f32.mrf.mxu0
        %v3918 = vadd.f32 %v3725, %v3917
        %3919 = vmatprep.mubr.bf16.mxu0 %v1174
        %3920 = vmatmul.mubr.bf16.gmra.mxu0 %v1173
        %v3921 = vpop.f32.mrf.mxu0
        %v3922 = vadd.f32 %v3729, %v3921
        %v3923 = vpop.f32.mrf.mxu0
        %v3924 = vadd.f32 %v3731, %v3923
        %v3925 = vpop.f32.mrf.mxu0
        %v3926 = vadd.f32 %v3733, %v3925
        %v3927 = vpop.f32.mrf.mxu0
        %v3928 = vadd.f32 %v3735, %v3927
        %3929 = vmatprep.mubr.bf16.mxu0 %v1182
        %3930 = vmatmul.mubr.bf16.gmra.mxu0 %v1181
        %v3931 = vpop.f32.mrf.mxu0
        %v3932 = vadd.f32 %v3739, %v3931
        %v3933 = vpop.f32.mrf.mxu0
        %v3934 = vadd.f32 %v3741, %v3933
        %v3935 = vpop.f32.mrf.mxu0
        %v3936 = vadd.f32 %v3743, %v3935
        %v3937 = vpop.f32.mrf.mxu0
        %v3938 = vadd.f32 %v3745, %v3937
        %3939 = vmatprep.mubr.bf16.mxu0 %v1190
        %3940 = vmatmul.mubr.bf16.gmra.mxu0 %v1189
        %v3941 = vpop.f32.mrf.mxu0
        %v3942 = vadd.f32 %v3749, %v3941
        %v3943 = vpop.f32.mrf.mxu0
        %v3944 = vadd.f32 %v3751, %v3943
        %v3945 = vpop.f32.mrf.mxu0
        %v3946 = vadd.f32 %v3753, %v3945
        %v3947 = vpop.f32.mrf.mxu0
        %v3948 = vadd.f32 %v3755, %v3947
        %3949 = vmatprep.mubr.bf16.mxu0 %v1198
        %3950 = vmatmul.mubr.bf16.gmra.mxu0 %v1197
        %v3951 = vpop.f32.mrf.mxu0
        %v3952 = vadd.f32 %v3759, %v3951
        %v3953 = vpop.f32.mrf.mxu0
        %v3954 = vadd.f32 %v3761, %v3953
        %v3955 = vpop.f32.mrf.mxu0
        %v3956 = vadd.f32 %v3763, %v3955
        %v3957 = vpop.f32.mrf.mxu0
        %v3958 = vadd.f32 %v3765, %v3957
        %3959 = vdwg.mxu0
        %3960 = vmatprep.subr.bf16.mxu0 %v2320
        %3961 = vmatpush1.bf16.msra.mxu0 %v2319
        %3962 = vmatprep.subr.bf16.mxu0 %v2316
        %3963 = vmatpush1.bf16.msra.mxu0 %v2315
        %3964 = vmatprep.subr.bf16.mxu0 %v2312
        %3965 = vmatpush1.bf16.msra.mxu0 %v2311
        %3966 = vmatprep.subr.bf16.mxu0 %v2308
        %3967 = vmatpush1.bf16.msra.mxu0 %v2307
        %3968 = vmatprep.subr.bf16.mxu0 %v2304
        %3969 = vmatpush1.bf16.msra.mxu0 %v2303
        %3970 = vmatprep.subr.bf16.mxu0 %v2300
        %3971 = vmatpush1.bf16.msra.mxu0 %v2299
        %3972 = vmatprep.subr.bf16.mxu0 %v2296
        %3973 = vmatpush1.bf16.msra.mxu0 %v2295
        %3974 = vmatprep.subr.bf16.mxu0 %v2292
        %3975 = vmatpush1.bf16.msra.mxu0 %v2291
        %3976 = vmatprep.subr.bf16.mxu0 %v2352
        %3977 = vmatpush2.bf16.msra.mxu0 %v2351
        %3978 = vmatprep.subr.bf16.mxu0 %v2348
        %3979 = vmatpush2.bf16.msra.mxu0 %v2347
        %3980 = vmatprep.subr.bf16.mxu0 %v2344
        %3981 = vmatpush2.bf16.msra.mxu0 %v2343
        %3982 = vmatprep.subr.bf16.mxu0 %v2340
        %3983 = vmatpush2.bf16.msra.mxu0 %v2339
        %3984 = vmatprep.subr.bf16.mxu0 %v2336
        %3985 = vmatpush2.bf16.msra.mxu0 %v2335
        %3986 = vmatprep.subr.bf16.mxu0 %v2332
        %3987 = vmatpush2.bf16.msra.mxu0 %v2331
        %3988 = vmatprep.subr.bf16.mxu0 %v2328
        %3989 = vmatpush2.bf16.msra.mxu0 %v2327
        %3990 = vmatprep.subr.bf16.mxu0 %v2324
        %3991 = vmatpush2.bf16.msra.mxu0 %v2323
        %3992 = vmatprep.mubr.bf16.mxu0 %v1080
        %3993 = vmatmul.mubr.bf16.gmra.mxu0 %v1079
        %v3994 = vpop.f32.mrf.mxu0
        %v3995 = vadd.f32 %v3802, %v3994
        %v3996 = vpop.f32.mrf.mxu0
        %v3997 = vadd.f32 %v3804, %v3996
        %v3998 = vpop.f32.mrf.mxu0
        %v3999 = vadd.f32 %v3806, %v3998
        %v4000 = vpop.f32.mrf.mxu0
        %v4001 = vadd.f32 %v3808, %v4000
        %4002 = vmatprep.mubr.bf16.mxu0 %v1088
        %4003 = vmatmul.mubr.bf16.gmra.mxu0 %v1087
        %v4004 = vpop.f32.mrf.mxu0
        %v4005 = vadd.f32 %v3812, %v4004
        %v4006 = vpop.f32.mrf.mxu0
        %v4007 = vadd.f32 %v3814, %v4006
        %v4008 = vpop.f32.mrf.mxu0
        %v4009 = vadd.f32 %v3816, %v4008
        %v4010 = vpop.f32.mrf.mxu0
        %v4011 = vadd.f32 %v3818, %v4010
        %4012 = vmatprep.mubr.bf16.mxu0 %v1096
        %4013 = vmatmul.mubr.bf16.gmra.mxu0 %v1095
        %v4014 = vpop.f32.mrf.mxu0
        %v4015 = vadd.f32 %v3822, %v4014
        %v4016 = vpop.f32.mrf.mxu0
        %v4017 = vadd.f32 %v3824, %v4016
        %v4018 = vpop.f32.mrf.mxu0
        %v4019 = vadd.f32 %v3826, %v4018
        %v4020 = vpop.f32.mrf.mxu0
        %v4021 = vadd.f32 %v3828, %v4020
        %4022 = vmatprep.mubr.bf16.mxu0 %v1104
        %4023 = vmatmul.mubr.bf16.gmra.mxu0 %v1103
        %v4024 = vpop.f32.mrf.mxu0
        %v4025 = vadd.f32 %v3832, %v4024
        %v4026 = vpop.f32.mrf.mxu0
        %v4027 = vadd.f32 %v3834, %v4026
        %v4028 = vpop.f32.mrf.mxu0
        %v4029 = vadd.f32 %v3836, %v4028
        %v4030 = vpop.f32.mrf.mxu0
        %v4031 = vadd.f32 %v3838, %v4030
        %4032 = vmatprep.mubr.bf16.mxu0 %v1112
        %4033 = vmatmul.mubr.bf16.gmra.mxu0 %v1111
        %v4034 = vpop.f32.mrf.mxu0
        %v4035 = vadd.f32 %v3842, %v4034
        %v4036 = vpop.f32.mrf.mxu0
        %v4037 = vadd.f32 %v3844, %v4036
        %v4038 = vpop.f32.mrf.mxu0
        %v4039 = vadd.f32 %v3846, %v4038
        %v4040 = vpop.f32.mrf.mxu0
        %v4041 = vadd.f32 %v3848, %v4040
        %4042 = vmatprep.mubr.bf16.mxu0 %v1120
        %4043 = vmatmul.mubr.bf16.gmra.mxu0 %v1119
        %v4044 = vpop.f32.mrf.mxu0
        %v4045 = vadd.f32 %v3852, %v4044
        %v4046 = vpop.f32.mrf.mxu0
        %v4047 = vadd.f32 %v3854, %v4046
        %v4048 = vpop.f32.mrf.mxu0
        %v4049 = vadd.f32 %v3856, %v4048
        %v4050 = vpop.f32.mrf.mxu0
        %v4051 = vadd.f32 %v3858, %v4050
        %4052 = vmatprep.mubr.bf16.mxu0 %v1128
        %4053 = vmatmul.mubr.bf16.gmra.mxu0 %v1127
        %v4054 = vpop.f32.mrf.mxu0
        %v4055 = vadd.f32 %v3862, %v4054
        %v4056 = vpop.f32.mrf.mxu0
        %v4057 = vadd.f32 %v3864, %v4056
        %v4058 = vpop.f32.mrf.mxu0
        %v4059 = vadd.f32 %v3866, %v4058
        %v4060 = vpop.f32.mrf.mxu0
        %v4061 = vadd.f32 %v3868, %v4060
        %4062 = vmatprep.mubr.bf16.mxu0 %v1136
        %4063 = vmatmul.mubr.bf16.gmra.mxu0 %v1135
        %v4064 = vpop.f32.mrf.mxu0
        %v4065 = vadd.f32 %v3872, %v4064
        %v4066 = vpop.f32.mrf.mxu0
        %v4067 = vadd.f32 %v3874, %v4066
        %v4068 = vpop.f32.mrf.mxu0
        %v4069 = vadd.f32 %v3876, %v4068
        %v4070 = vpop.f32.mrf.mxu0
        %v4071 = vadd.f32 %v3878, %v4070
        %4072 = vmatprep.mubr.bf16.mxu0 %v1144
        %4073 = vmatmul.mubr.bf16.gmra.mxu0 %v1143
        %v4074 = vpop.f32.mrf.mxu0
        %v4075 = vadd.f32 %v3882, %v4074
        %v4076 = vpop.f32.mrf.mxu0
        %v4077 = vadd.f32 %v3884, %v4076
        %v4078 = vpop.f32.mrf.mxu0
        %v4079 = vadd.f32 %v3886, %v4078
        %v4080 = vpop.f32.mrf.mxu0
        %v4081 = vadd.f32 %v3888, %v4080
        %4082 = vmatprep.mubr.bf16.mxu0 %v1152
        %4083 = vmatmul.mubr.bf16.gmra.mxu0 %v1151
        %v4084 = vpop.f32.mrf.mxu0
        %v4085 = vadd.f32 %v3892, %v4084
        %v4086 = vpop.f32.mrf.mxu0
        %v4087 = vadd.f32 %v3894, %v4086
        %v4088 = vpop.f32.mrf.mxu0
        %v4089 = vadd.f32 %v3896, %v4088
        %v4090 = vpop.f32.mrf.mxu0
        %v4091 = vadd.f32 %v3898, %v4090
        %4092 = vmatprep.mubr.bf16.mxu0 %v1160
        %4093 = vmatmul.mubr.bf16.gmra.mxu0 %v1159
        %v4094 = vpop.f32.mrf.mxu0
        %v4095 = vadd.f32 %v3902, %v4094
        %v4096 = vpop.f32.mrf.mxu0
        %v4097 = vadd.f32 %v3904, %v4096
        %v4098 = vpop.f32.mrf.mxu0
        %v4099 = vadd.f32 %v3906, %v4098
        %v4100 = vpop.f32.mrf.mxu0
        %v4101 = vadd.f32 %v3908, %v4100
        %4102 = vmatprep.mubr.bf16.mxu0 %v1168
        %4103 = vmatmul.mubr.bf16.gmra.mxu0 %v1167
        %v4104 = vpop.f32.mrf.mxu0
        %v4105 = vadd.f32 %v3912, %v4104
        %v4106 = vpop.f32.mrf.mxu0
        %v4107 = vadd.f32 %v3914, %v4106
        %v4108 = vpop.f32.mrf.mxu0
        %v4109 = vadd.f32 %v3916, %v4108
        %v4110 = vpop.f32.mrf.mxu0
        %v4111 = vadd.f32 %v3918, %v4110
        %4112 = vmatprep.mubr.bf16.mxu0 %v1176
        %4113 = vmatmul.mubr.bf16.gmra.mxu0 %v1175
        %v4114 = vpop.f32.mrf.mxu0
        %v4115 = vadd.f32 %v3922, %v4114
        %v4116 = vpop.f32.mrf.mxu0
        %v4117 = vadd.f32 %v3924, %v4116
        %v4118 = vpop.f32.mrf.mxu0
        %v4119 = vadd.f32 %v3926, %v4118
        %v4120 = vpop.f32.mrf.mxu0
        %v4121 = vadd.f32 %v3928, %v4120
        %4122 = vmatprep.mubr.bf16.mxu0 %v1184
        %4123 = vmatmul.mubr.bf16.gmra.mxu0 %v1183
        %v4124 = vpop.f32.mrf.mxu0
        %v4125 = vadd.f32 %v3932, %v4124
        %v4126 = vpop.f32.mrf.mxu0
        %v4127 = vadd.f32 %v3934, %v4126
        %v4128 = vpop.f32.mrf.mxu0
        %v4129 = vadd.f32 %v3936, %v4128
        %v4130 = vpop.f32.mrf.mxu0
        %v4131 = vadd.f32 %v3938, %v4130
        %4132 = vmatprep.mubr.bf16.mxu0 %v1192
        %4133 = vmatmul.mubr.bf16.gmra.mxu0 %v1191
        %v4134 = vpop.f32.mrf.mxu0
        %v4135 = vadd.f32 %v3942, %v4134
        %v4136 = vpop.f32.mrf.mxu0
        %v4137 = vadd.f32 %v3944, %v4136
        %v4138 = vpop.f32.mrf.mxu0
        %v4139 = vadd.f32 %v3946, %v4138
        %v4140 = vpop.f32.mrf.mxu0
        %v4141 = vadd.f32 %v3948, %v4140
        %4142 = vmatprep.mubr.bf16.mxu0 %v1200
        %4143 = vmatmul.mubr.bf16.gmra.mxu0 %v1199
        %v4144 = vpop.f32.mrf.mxu0
        %v4145 = vadd.f32 %v3952, %v4144
        %v4146 = vpop.f32.mrf.mxu0
        %v4147 = vadd.f32 %v3954, %v4146
        %v4148 = vpop.f32.mrf.mxu0
        %v4149 = vadd.f32 %v3956, %v4148
        %v4150 = vpop.f32.mrf.mxu0
        %v4151 = vadd.f32 %v3958, %v4150
        %4152 = vdwg.mxu0
        %v4153 = vmax.f32 %v3223, 0.0
        %v4154 = vmax.f32 %v3225, 0.0
        %v4155 = vmax.f32 %v3995, 0.0
        %v4156 = vmax.f32 %v3997, 0.0
        %v4157 = vmax.f32 %v3227, 0.0
        %v4158 = vmax.f32 %v3229, 0.0
        %v4159 = vmax.f32 %v3999, 0.0
        %v4160 = vmax.f32 %v4001, 0.0
        %v4161 = vmax.f32 %v3233, 0.0
        %v4162 = vmax.f32 %v3235, 0.0
        %v4163 = vmax.f32 %v4005, 0.0
        %v4164 = vmax.f32 %v4007, 0.0
        %v4165 = vmax.f32 %v3237, 0.0
        %v4166 = vmax.f32 %v3239, 0.0
        %v4167 = vmax.f32 %v4009, 0.0
        %v4168 = vmax.f32 %v4011, 0.0
        %v4169 = vmax.f32 %v3243, 0.0
        %v4170 = vmax.f32 %v3245, 0.0
        %v4171 = vmax.f32 %v4015, 0.0
        %v4172 = vmax.f32 %v4017, 0.0
        %v4173 = vmax.f32 %v3247, 0.0
        %v4174 = vmax.f32 %v3249, 0.0
        %v4175 = vmax.f32 %v4019, 0.0
        %v4176 = vmax.f32 %v4021, 0.0
        %v4177 = vmax.f32 %v3253, 0.0
        %v4178 = vmax.f32 %v3255, 0.0
        %v4179 = vmax.f32 %v4025, 0.0
        %v4180 = vmax.f32 %v4027, 0.0
        %v4181 = vmax.f32 %v3257, 0.0
        %v4182 = vmax.f32 %v3259, 0.0
        %v4183 = vmax.f32 %v4029, 0.0
        %v4184 = vmax.f32 %v4031, 0.0
        %v4185 = vmax.f32 %v3263, 0.0
        %v4186 = vmax.f32 %v3265, 0.0
        %v4187 = vmax.f32 %v4035, 0.0
        %v4188 = vmax.f32 %v4037, 0.0
        %v4189 = vmax.f32 %v3267, 0.0
        %v4190 = vmax.f32 %v3269, 0.0
        %v4191 = vmax.f32 %v4039, 0.0
        %v4192 = vmax.f32 %v4041, 0.0
        %v4193 = vmax.f32 %v3273, 0.0
        %v4194 = vmax.f32 %v3275, 0.0
        %v4195 = vmax.f32 %v4045, 0.0
        %v4196 = vmax.f32 %v4047, 0.0
        %v4197 = vmax.f32 %v3277, 0.0
        %v4198 = vmax.f32 %v3279, 0.0
        %v4199 = vmax.f32 %v4049, 0.0
        %v4200 = vmax.f32 %v4051, 0.0
        %v4201 = vmax.f32 %v3283, 0.0
        %v4202 = vmax.f32 %v3285, 0.0
        %v4203 = vmax.f32 %v4055, 0.0
        %v4204 = vmax.f32 %v4057, 0.0
        %v4205 = vmax.f32 %v3287, 0.0
        %v4206 = vmax.f32 %v3289, 0.0
        %v4207 = vmax.f32 %v4059, 0.0
        %v4208 = vmax.f32 %v4061, 0.0
        %v4209 = vmax.f32 %v3293, 0.0
        %v4210 = vmax.f32 %v3295, 0.0
        %v4211 = vmax.f32 %v4065, 0.0
        %v4212 = vmax.f32 %v4067, 0.0
        %v4213 = vmax.f32 %v3297, 0.0
        %v4214 = vmax.f32 %v3299, 0.0
        %v4215 = vmax.f32 %v4069, 0.0
        %v4216 = vmax.f32 %v4071, 0.0
        %v4217 = vmax.f32 %v3303, 0.0
        %v4218 = vmax.f32 %v3305, 0.0
        %v4219 = vmax.f32 %v4075, 0.0
        %v4220 = vmax.f32 %v4077, 0.0
        %v4221 = vmax.f32 %v3307, 0.0
        %v4222 = vmax.f32 %v3309, 0.0
        %v4223 = vmax.f32 %v4079, 0.0
        %v4224 = vmax.f32 %v4081, 0.0
        %v4225 = vmax.f32 %v3313, 0.0
        %v4226 = vmax.f32 %v3315, 0.0
        %v4227 = vmax.f32 %v4085, 0.0
        %v4228 = vmax.f32 %v4087, 0.0
        %v4229 = vmax.f32 %v3317, 0.0
        %v4230 = vmax.f32 %v3319, 0.0
        %v4231 = vmax.f32 %v4089, 0.0
        %v4232 = vmax.f32 %v4091, 0.0
        %v4233 = vmax.f32 %v3323, 0.0
        %v4234 = vmax.f32 %v3325, 0.0
        %v4235 = vmax.f32 %v4095, 0.0
        %v4236 = vmax.f32 %v4097, 0.0
        %v4237 = vmax.f32 %v3327, 0.0
        %v4238 = vmax.f32 %v3329, 0.0
        %v4239 = vmax.f32 %v4099, 0.0
        %v4240 = vmax.f32 %v4101, 0.0
        %v4241 = vmax.f32 %v3333, 0.0
        %v4242 = vmax.f32 %v3335, 0.0
        %v4243 = vmax.f32 %v4105, 0.0
        %v4244 = vmax.f32 %v4107, 0.0
        %v4245 = vmax.f32 %v3337, 0.0
        %v4246 = vmax.f32 %v3339, 0.0
        %v4247 = vmax.f32 %v4109, 0.0
        %v4248 = vmax.f32 %v4111, 0.0
        %v4249 = vmax.f32 %v3343, 0.0
        %v4250 = vmax.f32 %v3345, 0.0
        %v4251 = vmax.f32 %v4115, 0.0
        %v4252 = vmax.f32 %v4117, 0.0
        %v4253 = vmax.f32 %v3347, 0.0
        %v4254 = vmax.f32 %v3349, 0.0
        %v4255 = vmax.f32 %v4119, 0.0
        %v4256 = vmax.f32 %v4121, 0.0
        %v4257 = vmax.f32 %v3353, 0.0
        %v4258 = vmax.f32 %v3355, 0.0
        %v4259 = vmax.f32 %v4125, 0.0
        %v4260 = vmax.f32 %v4127, 0.0
        %v4261 = vmax.f32 %v3357, 0.0
        %v4262 = vmax.f32 %v3359, 0.0
        %v4263 = vmax.f32 %v4129, 0.0
        %v4264 = vmax.f32 %v4131, 0.0
        %v4265 = vmax.f32 %v3363, 0.0
        %v4266 = vmax.f32 %v3365, 0.0
        %v4267 = vmax.f32 %v4135, 0.0
        %v4268 = vmax.f32 %v4137, 0.0
        %v4269 = vmax.f32 %v3367, 0.0
        %v4270 = vmax.f32 %v3369, 0.0
        %v4271 = vmax.f32 %v4139, 0.0
        %v4272 = vmax.f32 %v4141, 0.0
        %v4273 = vmax.f32 %v3373, 0.0
        %v4274 = vmax.f32 %v3375, 0.0
        %v4275 = vmax.f32 %v4145, 0.0
        %v4276 = vmax.f32 %v4147, 0.0
        %v4277 = vmax.f32 %v3377, 0.0
        %v4278 = vmax.f32 %v3379, 0.0
        %v4279 = vmax.f32 %v4149, 0.0
        %v4280 = vmax.f32 %v4151, 0.0
        %v4281 = vpack.c.bf16 %v4157, %v4153
        %v4282 = vpack.c.bf16 %v4158, %v4154
        %v4283 = vpack.c.bf16 %v4159, %v4155
        %v4284 = vpack.c.bf16 %v4160, %v4156
        %v4285 = vpack.c.bf16 %v4165, %v4161
        %v4286 = vpack.c.bf16 %v4166, %v4162
        %v4287 = vpack.c.bf16 %v4167, %v4163
        %v4288 = vpack.c.bf16 %v4168, %v4164
        %v4289 = vpack.c.bf16 %v4173, %v4169
        %v4290 = vpack.c.bf16 %v4174, %v4170
        %v4291 = vpack.c.bf16 %v4175, %v4171
        %v4292 = vpack.c.bf16 %v4176, %v4172
        %v4293 = vpack.c.bf16 %v4181, %v4177
        %v4294 = vpack.c.bf16 %v4182, %v4178
        %v4295 = vpack.c.bf16 %v4183, %v4179
        %v4296 = vpack.c.bf16 %v4184, %v4180
        %v4297 = vpack.c.bf16 %v4189, %v4185
        %v4298 = vpack.c.bf16 %v4190, %v4186
        %v4299 = vpack.c.bf16 %v4191, %v4187
        %v4300 = vpack.c.bf16 %v4192, %v4188
        %v4301 = vpack.c.bf16 %v4197, %v4193
        %v4302 = vpack.c.bf16 %v4198, %v4194
        %v4303 = vpack.c.bf16 %v4199, %v4195
        %v4304 = vpack.c.bf16 %v4200, %v4196
        %v4305 = vpack.c.bf16 %v4205, %v4201
        %v4306 = vpack.c.bf16 %v4206, %v4202
        %v4307 = vpack.c.bf16 %v4207, %v4203
        %v4308 = vpack.c.bf16 %v4208, %v4204
        %v4309 = vpack.c.bf16 %v4213, %v4209
        %v4310 = vpack.c.bf16 %v4214, %v4210
        %v4311 = vpack.c.bf16 %v4215, %v4211
        %v4312 = vpack.c.bf16 %v4216, %v4212
        %v4313 = vpack.c.bf16 %v4221, %v4217
        %v4314 = vpack.c.bf16 %v4222, %v4218
        %v4315 = vpack.c.bf16 %v4223, %v4219
        %v4316 = vpack.c.bf16 %v4224, %v4220
        %v4317 = vpack.c.bf16 %v4229, %v4225
        %v4318 = vpack.c.bf16 %v4230, %v4226
        %v4319 = vpack.c.bf16 %v4231, %v4227
        %v4320 = vpack.c.bf16 %v4232, %v4228
        %v4321 = vpack.c.bf16 %v4237, %v4233
        %v4322 = vpack.c.bf16 %v4238, %v4234
        %v4323 = vpack.c.bf16 %v4239, %v4235
        %v4324 = vpack.c.bf16 %v4240, %v4236
        %v4325 = vpack.c.bf16 %v4245, %v4241
        %v4326 = vpack.c.bf16 %v4246, %v4242
        %v4327 = vpack.c.bf16 %v4247, %v4243
        %v4328 = vpack.c.bf16 %v4248, %v4244
        %v4329 = vpack.c.bf16 %v4253, %v4249
        %v4330 = vpack.c.bf16 %v4254, %v4250
        %v4331 = vpack.c.bf16 %v4255, %v4251
        %v4332 = vpack.c.bf16 %v4256, %v4252
        %v4333 = vpack.c.bf16 %v4261, %v4257
        %v4334 = vpack.c.bf16 %v4262, %v4258
        %v4335 = vpack.c.bf16 %v4263, %v4259
        %v4336 = vpack.c.bf16 %v4264, %v4260
        %v4337 = vpack.c.bf16 %v4269, %v4265
        %v4338 = vpack.c.bf16 %v4270, %v4266
        %v4339 = vpack.c.bf16 %v4271, %v4267
        %v4340 = vpack.c.bf16 %v4272, %v4268
        %v4341 = vpack.c.bf16 %v4277, %v4273
        %v4342 = vpack.c.bf16 %v4278, %v4274
        %v4343 = vpack.c.bf16 %v4279, %v4275
        %v4344 = vpack.c.bf16 %v4280, %v4276
        %v4345 = vld [vmem:[%s3] sm:$0xff]
        %v4346 = vld [vmem:[%s3 + $0x8] sm:$0xff]
        %v4347 = vld [vmem:[%s3 + $0x10] sm:$0xff]
        %v4348 = vld [vmem:[%s3 + $0x18] sm:$0xff]
        %v4349 = vld [vmem:[%s3 + $0x20] sm:$0xff]
        %v4350 = vld [vmem:[%s3 + $0x28] sm:$0xff]
        %v4351 = vld [vmem:[%s3 + $0x30] sm:$0xff]
        %v4352 = vld [vmem:[%s3 + $0x38] sm:$0xff]
        %v4353 = vld [vmem:[%s3 + $0x40] sm:$0xff]
        %v4354 = vld [vmem:[%s3 + $0x48] sm:$0xff]
        %v4355 = vld [vmem:[%s3 + $0x50] sm:$0xff]
        %v4356 = vld [vmem:[%s3 + $0x58] sm:$0xff]
        %v4357 = vld [vmem:[%s3 + $0x60] sm:$0xff]
        %v4358 = vld [vmem:[%s3 + $0x68] sm:$0xff]
        %v4359 = vld [vmem:[%s3 + $0x70] sm:$0xff]
        %v4360 = vld [vmem:[%s3 + $0x78] sm:$0xff]
        %v4361 = vld [vmem:[%s3 + $0x80] sm:$0xff]
        %v4362 = vld [vmem:[%s3 + $0x88] sm:$0xff]
        %v4363 = vld [vmem:[%s3 + $0x90] sm:$0xff]
        %v4364 = vld [vmem:[%s3 + $0x98] sm:$0xff]
        %v4365 = vld [vmem:[%s3 + $0xa0] sm:$0xff]
        %v4366 = vld [vmem:[%s3 + $0xa8] sm:$0xff]
        %v4367 = vld [vmem:[%s3 + $0xb0] sm:$0xff]
        %v4368 = vld [vmem:[%s3 + $0xb8] sm:$0xff]
        %v4369 = vld [vmem:[%s3 + $0xc0] sm:$0xff]
        %v4370 = vld [vmem:[%s3 + $0xc8] sm:$0xff]
        %v4371 = vld [vmem:[%s3 + $0xd0] sm:$0xff]
        %v4372 = vld [vmem:[%s3 + $0xd8] sm:$0xff]
        %v4373 = vld [vmem:[%s3 + $0xe0] sm:$0xff]
        %v4374 = vld [vmem:[%s3 + $0xe8] sm:$0xff]
        %v4375 = vld [vmem:[%s3 + $0xf0] sm:$0xff]
        %v4376 = vld [vmem:[%s3 + $0xf8] sm:$0xff]
        %v4377 = vld [vmem:[%s3 + $0x100] sm:$0xff]
        %v4378 = vld [vmem:[%s3 + $0x108] sm:$0xff]
        %v4379 = vld [vmem:[%s3 + $0x110] sm:$0xff]
        %v4380 = vld [vmem:[%s3 + $0x118] sm:$0xff]
        %v4381 = vld [vmem:[%s3 + $0x120] sm:$0xff]
        %v4382 = vld [vmem:[%s3 + $0x128] sm:$0xff]
        %v4383 = vld [vmem:[%s3 + $0x130] sm:$0xff]
        %v4384 = vld [vmem:[%s3 + $0x138] sm:$0xff]
        %v4385 = vld [vmem:[%s3 + $0x140] sm:$0xff]
        %v4386 = vld [vmem:[%s3 + $0x148] sm:$0xff]
        %v4387 = vld [vmem:[%s3 + $0x150] sm:$0xff]
        %v4388 = vld [vmem:[%s3 + $0x158] sm:$0xff]
        %v4389 = vld [vmem:[%s3 + $0x160] sm:$0xff]
        %v4390 = vld [vmem:[%s3 + $0x168] sm:$0xff]
        %v4391 = vld [vmem:[%s3 + $0x170] sm:$0xff]
        %v4392 = vld [vmem:[%s3 + $0x178] sm:$0xff]
        %v4393 = vld [vmem:[%s3 + $0x180] sm:$0xff]
        %v4394 = vld [vmem:[%s3 + $0x188] sm:$0xff]
        %v4395 = vld [vmem:[%s3 + $0x190] sm:$0xff]
        %v4396 = vld [vmem:[%s3 + $0x198] sm:$0xff]
        %v4397 = vld [vmem:[%s3 + $0x1a0] sm:$0xff]
        %v4398 = vld [vmem:[%s3 + $0x1a8] sm:$0xff]
        %v4399 = vld [vmem:[%s3 + $0x1b0] sm:$0xff]
        %v4400 = vld [vmem:[%s3 + $0x1b8] sm:$0xff]
        %v4401 = vld [vmem:[%s3 + $0x1c0] sm:$0xff]
        %v4402 = vld [vmem:[%s3 + $0x1c8] sm:$0xff]
        %v4403 = vld [vmem:[%s3 + $0x1d0] sm:$0xff]
        %v4404 = vld [vmem:[%s3 + $0x1d8] sm:$0xff]
        %v4405 = vld [vmem:[%s3 + $0x1e0] sm:$0xff]
        %v4406 = vld [vmem:[%s3 + $0x1e8] sm:$0xff]
        %v4407 = vld [vmem:[%s3 + $0x1f0] sm:$0xff]
        %v4408 = vld [vmem:[%s3 + $0x1f8] sm:$0xff]
        %v4409 = vld [vmem:[%s3 + $0x200] sm:$0xff]
        %v4410 = vld [vmem:[%s3 + $0x208] sm:$0xff]
        %v4411 = vld [vmem:[%s3 + $0x210] sm:$0xff]
        %v4412 = vld [vmem:[%s3 + $0x218] sm:$0xff]
        %v4413 = vld [vmem:[%s3 + $0x220] sm:$0xff]
        %v4414 = vld [vmem:[%s3 + $0x228] sm:$0xff]
        %v4415 = vld [vmem:[%s3 + $0x230] sm:$0xff]
        %v4416 = vld [vmem:[%s3 + $0x238] sm:$0xff]
        %v4417 = vld [vmem:[%s3 + $0x240] sm:$0xff]
        %v4418 = vld [vmem:[%s3 + $0x248] sm:$0xff]
        %v4419 = vld [vmem:[%s3 + $0x250] sm:$0xff]
        %v4420 = vld [vmem:[%s3 + $0x258] sm:$0xff]
        %v4421 = vld [vmem:[%s3 + $0x260] sm:$0xff]
        %v4422 = vld [vmem:[%s3 + $0x268] sm:$0xff]
        %v4423 = vld [vmem:[%s3 + $0x270] sm:$0xff]
        %v4424 = vld [vmem:[%s3 + $0x278] sm:$0xff]
        %v4425 = vld [vmem:[%s3 + $0x280] sm:$0xff]
        %v4426 = vld [vmem:[%s3 + $0x288] sm:$0xff]
        %v4427 = vld [vmem:[%s3 + $0x290] sm:$0xff]
        %v4428 = vld [vmem:[%s3 + $0x298] sm:$0xff]
        %v4429 = vld [vmem:[%s3 + $0x2a0] sm:$0xff]
        %v4430 = vld [vmem:[%s3 + $0x2a8] sm:$0xff]
        %v4431 = vld [vmem:[%s3 + $0x2b0] sm:$0xff]
        %v4432 = vld [vmem:[%s3 + $0x2b8] sm:$0xff]
        %v4433 = vld [vmem:[%s3 + $0x2c0] sm:$0xff]
        %v4434 = vld [vmem:[%s3 + $0x2c8] sm:$0xff]
        %v4435 = vld [vmem:[%s3 + $0x2d0] sm:$0xff]
        %v4436 = vld [vmem:[%s3 + $0x2d8] sm:$0xff]
        %v4437 = vld [vmem:[%s3 + $0x2e0] sm:$0xff]
        %v4438 = vld [vmem:[%s3 + $0x2e8] sm:$0xff]
        %v4439 = vld [vmem:[%s3 + $0x2f0] sm:$0xff]
        %v4440 = vld [vmem:[%s3 + $0x2f8] sm:$0xff]
        %v4441 = vld [vmem:[%s3 + $0x300] sm:$0xff]
        %v4442 = vld [vmem:[%s3 + $0x308] sm:$0xff]
        %v4443 = vld [vmem:[%s3 + $0x310] sm:$0xff]
        %v4444 = vld [vmem:[%s3 + $0x318] sm:$0xff]
        %v4445 = vld [vmem:[%s3 + $0x320] sm:$0xff]
        %v4446 = vld [vmem:[%s3 + $0x328] sm:$0xff]
        %v4447 = vld [vmem:[%s3 + $0x330] sm:$0xff]
        %v4448 = vld [vmem:[%s3 + $0x338] sm:$0xff]
        %v4449 = vld [vmem:[%s3 + $0x340] sm:$0xff]
        %v4450 = vld [vmem:[%s3 + $0x348] sm:$0xff]
        %v4451 = vld [vmem:[%s3 + $0x350] sm:$0xff]
        %v4452 = vld [vmem:[%s3 + $0x358] sm:$0xff]
        %v4453 = vld [vmem:[%s3 + $0x360] sm:$0xff]
        %v4454 = vld [vmem:[%s3 + $0x368] sm:$0xff]
        %v4455 = vld [vmem:[%s3 + $0x370] sm:$0xff]
        %v4456 = vld [vmem:[%s3 + $0x378] sm:$0xff]
        %v4457 = vld [vmem:[%s3 + $0x380] sm:$0xff]
        %v4458 = vld [vmem:[%s3 + $0x388] sm:$0xff]
        %v4459 = vld [vmem:[%s3 + $0x390] sm:$0xff]
        %v4460 = vld [vmem:[%s3 + $0x398] sm:$0xff]
        %v4461 = vld [vmem:[%s3 + $0x3a0] sm:$0xff]
        %v4462 = vld [vmem:[%s3 + $0x3a8] sm:$0xff]
        %v4463 = vld [vmem:[%s3 + $0x3b0] sm:$0xff]
        %v4464 = vld [vmem:[%s3 + $0x3b8] sm:$0xff]
        %v4465 = vld [vmem:[%s3 + $0x3c0] sm:$0xff]
        %v4466 = vld [vmem:[%s3 + $0x3c8] sm:$0xff]
        %v4467 = vld [vmem:[%s3 + $0x3d0] sm:$0xff]
        %v4468 = vld [vmem:[%s3 + $0x3d8] sm:$0xff]
        %v4469 = vld [vmem:[%s3 + $0x3e0] sm:$0xff]
        %v4470 = vld [vmem:[%s3 + $0x3e8] sm:$0xff]
        %v4471 = vld [vmem:[%s3 + $0x3f0] sm:$0xff]
        %v4472 = vld [vmem:[%s3 + $0x3f8] sm:$0xff]
        %v4473 = vld [vmem:[%s4] sm:$0xf]
        %v4475 = vlaneseq
        %v4476 = vshrl.u32 %v4475, 7
        %v4477 = vsub.s32 0, %v4476
        %v4478 = vrot.slane %v4473, %v4477
        %v4479 = vlaneseq
        %v4480 = vshrl.u32 %v4479, 7
        %v4481 = vsub.s32 1, %v4480
        %v4482 = vrot.slane %v4473, %v4481
        %v4483 = vlaneseq
        %v4484 = vshrl.u32 %v4483, 7
        %v4485 = vsub.s32 2, %v4484
        %v4486 = vrot.slane %v4473, %v4485
        %v4487 = vlaneseq
        %v4488 = vshrl.u32 %v4487, 7
        %v4489 = vsub.s32 3, %v4488
        %v4490 = vrot.slane %v4473, %v4489
        %v4623 = vunpack.c.l.b16 %v4345
        %v4624 = vunpack.c.h.b16 %v4345
        %v4625 = vunpack.c.l.b16 %v4346
        %v4626 = vunpack.c.h.b16 %v4346
        %v4627 = vunpack.c.l.b16 %v4347
        %v4628 = vunpack.c.h.b16 %v4347
        %v4629 = vunpack.c.l.b16 %v4348
        %v4630 = vunpack.c.h.b16 %v4348
        %v4631 = vunpack.c.l.b16 %v4349
        %v4632 = vunpack.c.h.b16 %v4349
        %v4633 = vunpack.c.l.b16 %v4350
        %v4634 = vunpack.c.h.b16 %v4350
        %v4635 = vunpack.c.l.b16 %v4351
        %v4636 = vunpack.c.h.b16 %v4351
        %v4637 = vunpack.c.l.b16 %v4352
        %v4638 = vunpack.c.h.b16 %v4352
        %v4639 = vunpack.c.l.b16 %v4353
        %v4640 = vunpack.c.h.b16 %v4353
        %v4641 = vunpack.c.l.b16 %v4354
        %v4642 = vunpack.c.h.b16 %v4354
        %v4643 = vunpack.c.l.b16 %v4355
        %v4644 = vunpack.c.h.b16 %v4355
        %v4645 = vunpack.c.l.b16 %v4356
        %v4646 = vunpack.c.h.b16 %v4356
        %v4647 = vunpack.c.l.b16 %v4357
        %v4648 = vunpack.c.h.b16 %v4357
        %v4649 = vunpack.c.l.b16 %v4358
        %v4650 = vunpack.c.h.b16 %v4358
        %v4651 = vunpack.c.l.b16 %v4359
        %v4652 = vunpack.c.h.b16 %v4359
        %v4653 = vunpack.c.l.b16 %v4360
        %v4654 = vunpack.c.h.b16 %v4360
        %v4655 = vunpack.c.l.b16 %v4361
        %v4656 = vunpack.c.h.b16 %v4361
        %v4657 = vunpack.c.l.b16 %v4362
        %v4658 = vunpack.c.h.b16 %v4362
        %v4659 = vunpack.c.l.b16 %v4363
        %v4660 = vunpack.c.h.b16 %v4363
        %v4661 = vunpack.c.l.b16 %v4364
        %v4662 = vunpack.c.h.b16 %v4364
        %v4663 = vunpack.c.l.b16 %v4365
        %v4664 = vunpack.c.h.b16 %v4365
        %v4665 = vunpack.c.l.b16 %v4366
        %v4666 = vunpack.c.h.b16 %v4366
        %v4667 = vunpack.c.l.b16 %v4367
        %v4668 = vunpack.c.h.b16 %v4367
        %v4669 = vunpack.c.l.b16 %v4368
        %v4670 = vunpack.c.h.b16 %v4368
        %v4671 = vunpack.c.l.b16 %v4369
        %v4672 = vunpack.c.h.b16 %v4369
        %v4673 = vunpack.c.l.b16 %v4370
        %v4674 = vunpack.c.h.b16 %v4370
        %v4675 = vunpack.c.l.b16 %v4371
        %v4676 = vunpack.c.h.b16 %v4371
        %v4677 = vunpack.c.l.b16 %v4372
        %v4678 = vunpack.c.h.b16 %v4372
        %v4679 = vunpack.c.l.b16 %v4373
        %v4680 = vunpack.c.h.b16 %v4373
        %v4681 = vunpack.c.l.b16 %v4374
        %v4682 = vunpack.c.h.b16 %v4374
        %v4683 = vunpack.c.l.b16 %v4375
        %v4684 = vunpack.c.h.b16 %v4375
        %v4685 = vunpack.c.l.b16 %v4376
        %v4686 = vunpack.c.h.b16 %v4376
        %v4687 = vunpack.c.l.b16 %v4377
        %v4688 = vunpack.c.h.b16 %v4377
        %v4689 = vunpack.c.l.b16 %v4378
        %v4690 = vunpack.c.h.b16 %v4378
        %v4691 = vunpack.c.l.b16 %v4379
        %v4692 = vunpack.c.h.b16 %v4379
        %v4693 = vunpack.c.l.b16 %v4380
        %v4694 = vunpack.c.h.b16 %v4380
        %v4695 = vunpack.c.l.b16 %v4381
        %v4696 = vunpack.c.h.b16 %v4381
        %v4697 = vunpack.c.l.b16 %v4382
        %v4698 = vunpack.c.h.b16 %v4382
        %v4699 = vunpack.c.l.b16 %v4383
        %v4700 = vunpack.c.h.b16 %v4383
        %v4701 = vunpack.c.l.b16 %v4384
        %v4702 = vunpack.c.h.b16 %v4384
        %v4703 = vunpack.c.l.b16 %v4385
        %v4704 = vunpack.c.h.b16 %v4385
        %v4705 = vunpack.c.l.b16 %v4386
        %v4706 = vunpack.c.h.b16 %v4386
        %v4707 = vunpack.c.l.b16 %v4387
        %v4708 = vunpack.c.h.b16 %v4387
        %v4709 = vunpack.c.l.b16 %v4388
        %v4710 = vunpack.c.h.b16 %v4388
        %v4711 = vunpack.c.l.b16 %v4389
        %v4712 = vunpack.c.h.b16 %v4389
        %v4713 = vunpack.c.l.b16 %v4390
        %v4714 = vunpack.c.h.b16 %v4390
        %v4715 = vunpack.c.l.b16 %v4391
        %v4716 = vunpack.c.h.b16 %v4391
        %v4717 = vunpack.c.l.b16 %v4392
        %v4718 = vunpack.c.h.b16 %v4392
        %v4719 = vunpack.c.l.b16 %v4393
        %v4720 = vunpack.c.h.b16 %v4393
        %v4721 = vunpack.c.l.b16 %v4394
        %v4722 = vunpack.c.h.b16 %v4394
        %v4723 = vunpack.c.l.b16 %v4395
        %v4724 = vunpack.c.h.b16 %v4395
        %v4725 = vunpack.c.l.b16 %v4396
        %v4726 = vunpack.c.h.b16 %v4396
        %v4727 = vunpack.c.l.b16 %v4397
        %v4728 = vunpack.c.h.b16 %v4397
        %v4729 = vunpack.c.l.b16 %v4398
        %v4730 = vunpack.c.h.b16 %v4398
        %v4731 = vunpack.c.l.b16 %v4399
        %v4732 = vunpack.c.h.b16 %v4399
        %v4733 = vunpack.c.l.b16 %v4400
        %v4734 = vunpack.c.h.b16 %v4400
        %v4735 = vunpack.c.l.b16 %v4401
        %v4736 = vunpack.c.h.b16 %v4401
        %v4737 = vunpack.c.l.b16 %v4402
        %v4738 = vunpack.c.h.b16 %v4402
        %v4739 = vunpack.c.l.b16 %v4403
        %v4740 = vunpack.c.h.b16 %v4403
        %v4741 = vunpack.c.l.b16 %v4404
        %v4742 = vunpack.c.h.b16 %v4404
        %v4743 = vunpack.c.l.b16 %v4405
        %v4744 = vunpack.c.h.b16 %v4405
        %v4745 = vunpack.c.l.b16 %v4406
        %v4746 = vunpack.c.h.b16 %v4406
        %v4747 = vunpack.c.l.b16 %v4407
        %v4748 = vunpack.c.h.b16 %v4407
        %v4749 = vunpack.c.l.b16 %v4408
        %v4750 = vunpack.c.h.b16 %v4408
        %v4751 = vunpack.c.l.b16 %v4409
        %v4752 = vunpack.c.h.b16 %v4409
        %v4753 = vunpack.c.l.b16 %v4410
        %v4754 = vunpack.c.h.b16 %v4410
        %v4755 = vunpack.c.l.b16 %v4411
        %v4756 = vunpack.c.h.b16 %v4411
        %v4757 = vunpack.c.l.b16 %v4412
        %v4758 = vunpack.c.h.b16 %v4412
        %v4759 = vunpack.c.l.b16 %v4413
        %v4760 = vunpack.c.h.b16 %v4413
        %v4761 = vunpack.c.l.b16 %v4414
        %v4762 = vunpack.c.h.b16 %v4414
        %v4763 = vunpack.c.l.b16 %v4415
        %v4764 = vunpack.c.h.b16 %v4415
        %v4765 = vunpack.c.l.b16 %v4416
        %v4766 = vunpack.c.h.b16 %v4416
        %v4767 = vunpack.c.l.b16 %v4417
        %v4768 = vunpack.c.h.b16 %v4417
        %v4769 = vunpack.c.l.b16 %v4418
        %v4770 = vunpack.c.h.b16 %v4418
        %v4771 = vunpack.c.l.b16 %v4419
        %v4772 = vunpack.c.h.b16 %v4419
        %v4773 = vunpack.c.l.b16 %v4420
        %v4774 = vunpack.c.h.b16 %v4420
        %v4775 = vunpack.c.l.b16 %v4421
        %v4776 = vunpack.c.h.b16 %v4421
        %v4777 = vunpack.c.l.b16 %v4422
        %v4778 = vunpack.c.h.b16 %v4422
        %v4779 = vunpack.c.l.b16 %v4423
        %v4780 = vunpack.c.h.b16 %v4423
        %v4781 = vunpack.c.l.b16 %v4424
        %v4782 = vunpack.c.h.b16 %v4424
        %v4783 = vunpack.c.l.b16 %v4425
        %v4784 = vunpack.c.h.b16 %v4425
        %v4785 = vunpack.c.l.b16 %v4426
        %v4786 = vunpack.c.h.b16 %v4426
        %v4787 = vunpack.c.l.b16 %v4427
        %v4788 = vunpack.c.h.b16 %v4427
        %v4789 = vunpack.c.l.b16 %v4428
        %v4790 = vunpack.c.h.b16 %v4428
        %v4791 = vunpack.c.l.b16 %v4429
        %v4792 = vunpack.c.h.b16 %v4429
        %v4793 = vunpack.c.l.b16 %v4430
        %v4794 = vunpack.c.h.b16 %v4430
        %v4795 = vunpack.c.l.b16 %v4431
        %v4796 = vunpack.c.h.b16 %v4431
        %v4797 = vunpack.c.l.b16 %v4432
        %v4798 = vunpack.c.h.b16 %v4432
        %v4799 = vunpack.c.l.b16 %v4433
        %v4800 = vunpack.c.h.b16 %v4433
        %v4801 = vunpack.c.l.b16 %v4434
        %v4802 = vunpack.c.h.b16 %v4434
        %v4803 = vunpack.c.l.b16 %v4435
        %v4804 = vunpack.c.h.b16 %v4435
        %v4805 = vunpack.c.l.b16 %v4436
        %v4806 = vunpack.c.h.b16 %v4436
        %v4807 = vunpack.c.l.b16 %v4437
        %v4808 = vunpack.c.h.b16 %v4437
        %v4809 = vunpack.c.l.b16 %v4438
        %v4810 = vunpack.c.h.b16 %v4438
        %v4811 = vunpack.c.l.b16 %v4439
        %v4812 = vunpack.c.h.b16 %v4439
        %v4813 = vunpack.c.l.b16 %v4440
        %v4814 = vunpack.c.h.b16 %v4440
        %v4815 = vunpack.c.l.b16 %v4441
        %v4816 = vunpack.c.h.b16 %v4441
        %v4817 = vunpack.c.l.b16 %v4442
        %v4818 = vunpack.c.h.b16 %v4442
        %v4819 = vunpack.c.l.b16 %v4443
        %v4820 = vunpack.c.h.b16 %v4443
        %v4821 = vunpack.c.l.b16 %v4444
        %v4822 = vunpack.c.h.b16 %v4444
        %v4823 = vunpack.c.l.b16 %v4445
        %v4824 = vunpack.c.h.b16 %v4445
        %v4825 = vunpack.c.l.b16 %v4446
        %v4826 = vunpack.c.h.b16 %v4446
        %v4827 = vunpack.c.l.b16 %v4447
        %v4828 = vunpack.c.h.b16 %v4447
        %v4829 = vunpack.c.l.b16 %v4448
        %v4830 = vunpack.c.h.b16 %v4448
        %v4831 = vunpack.c.l.b16 %v4449
        %v4832 = vunpack.c.h.b16 %v4449
        %v4833 = vunpack.c.l.b16 %v4450
        %v4834 = vunpack.c.h.b16 %v4450
        %v4835 = vunpack.c.l.b16 %v4451
        %v4836 = vunpack.c.h.b16 %v4451
        %v4837 = vunpack.c.l.b16 %v4452
        %v4838 = vunpack.c.h.b16 %v4452
        %v4839 = vunpack.c.l.b16 %v4453
        %v4840 = vunpack.c.h.b16 %v4453
        %v4841 = vunpack.c.l.b16 %v4454
        %v4842 = vunpack.c.h.b16 %v4454
        %v4843 = vunpack.c.l.b16 %v4455
        %v4844 = vunpack.c.h.b16 %v4455
        %v4845 = vunpack.c.l.b16 %v4456
        %v4846 = vunpack.c.h.b16 %v4456
        %v4847 = vunpack.c.l.b16 %v4457
        %v4848 = vunpack.c.h.b16 %v4457
        %v4849 = vunpack.c.l.b16 %v4458
        %v4850 = vunpack.c.h.b16 %v4458
        %v4851 = vunpack.c.l.b16 %v4459
        %v4852 = vunpack.c.h.b16 %v4459
        %v4853 = vunpack.c.l.b16 %v4460
        %v4854 = vunpack.c.h.b16 %v4460
        %v4855 = vunpack.c.l.b16 %v4461
        %v4856 = vunpack.c.h.b16 %v4461
        %v4857 = vunpack.c.l.b16 %v4462
        %v4858 = vunpack.c.h.b16 %v4462
        %v4859 = vunpack.c.l.b16 %v4463
        %v4860 = vunpack.c.h.b16 %v4463
        %v4861 = vunpack.c.l.b16 %v4464
        %v4862 = vunpack.c.h.b16 %v4464
        %v4863 = vunpack.c.l.b16 %v4465
        %v4864 = vunpack.c.h.b16 %v4465
        %v4865 = vunpack.c.l.b16 %v4466
        %v4866 = vunpack.c.h.b16 %v4466
        %v4867 = vunpack.c.l.b16 %v4467
        %v4868 = vunpack.c.h.b16 %v4467
        %v4869 = vunpack.c.l.b16 %v4468
        %v4870 = vunpack.c.h.b16 %v4468
        %v4871 = vunpack.c.l.b16 %v4469
        %v4872 = vunpack.c.h.b16 %v4469
        %v4873 = vunpack.c.l.b16 %v4470
        %v4874 = vunpack.c.h.b16 %v4470
        %v4875 = vunpack.c.l.b16 %v4471
        %v4876 = vunpack.c.h.b16 %v4471
        %v4877 = vunpack.c.l.b16 %v4472
        %v4878 = vunpack.c.h.b16 %v4472
        %v4879 = vpack.c.b16 %v4627, %v4623
        %v4880 = vpack.c.b16 %v4628, %v4624
        %v4881 = vpack.c.b16 %v4629, %v4625
        %v4882 = vpack.c.b16 %v4630, %v4626
        %v4883 = vpack.c.b16 %v4635, %v4631
        %v4884 = vpack.c.b16 %v4636, %v4632
        %v4885 = vpack.c.b16 %v4637, %v4633
        %v4886 = vpack.c.b16 %v4638, %v4634
        %v4887 = vpack.c.b16 %v4643, %v4639
        %v4888 = vpack.c.b16 %v4644, %v4640
        %v4889 = vpack.c.b16 %v4645, %v4641
        %v4890 = vpack.c.b16 %v4646, %v4642
        %v4891 = vpack.c.b16 %v4651, %v4647
        %v4892 = vpack.c.b16 %v4652, %v4648
        %v4893 = vpack.c.b16 %v4653, %v4649
        %v4894 = vpack.c.b16 %v4654, %v4650
        %v4895 = vpack.c.b16 %v4659, %v4655
        %v4896 = vpack.c.b16 %v4660, %v4656
        %v4897 = vpack.c.b16 %v4661, %v4657
        %v4898 = vpack.c.b16 %v4662, %v4658
        %v4899 = vpack.c.b16 %v4667, %v4663
        %v4900 = vpack.c.b16 %v4668, %v4664
        %v4901 = vpack.c.b16 %v4669, %v4665
        %v4902 = vpack.c.b16 %v4670, %v4666
        %v4903 = vpack.c.b16 %v4675, %v4671
        %v4904 = vpack.c.b16 %v4676, %v4672
        %v4905 = vpack.c.b16 %v4677, %v4673
        %v4906 = vpack.c.b16 %v4678, %v4674
        %v4907 = vpack.c.b16 %v4683, %v4679
        %v4908 = vpack.c.b16 %v4684, %v4680
        %v4909 = vpack.c.b16 %v4685, %v4681
        %v4910 = vpack.c.b16 %v4686, %v4682
        %v4911 = vpack.c.b16 %v4691, %v4687
        %v4912 = vpack.c.b16 %v4692, %v4688
        %v4913 = vpack.c.b16 %v4693, %v4689
        %v4914 = vpack.c.b16 %v4694, %v4690
        %v4915 = vpack.c.b16 %v4699, %v4695
        %v4916 = vpack.c.b16 %v4700, %v4696
        %v4917 = vpack.c.b16 %v4701, %v4697
        %v4918 = vpack.c.b16 %v4702, %v4698
        %v4919 = vpack.c.b16 %v4707, %v4703
        %v4920 = vpack.c.b16 %v4708, %v4704
        %v4921 = vpack.c.b16 %v4709, %v4705
        %v4922 = vpack.c.b16 %v4710, %v4706
        %v4923 = vpack.c.b16 %v4715, %v4711
        %v4924 = vpack.c.b16 %v4716, %v4712
        %v4925 = vpack.c.b16 %v4717, %v4713
        %v4926 = vpack.c.b16 %v4718, %v4714
        %v4927 = vpack.c.b16 %v4723, %v4719
        %v4928 = vpack.c.b16 %v4724, %v4720
        %v4929 = vpack.c.b16 %v4725, %v4721
        %v4930 = vpack.c.b16 %v4726, %v4722
        %v4931 = vpack.c.b16 %v4731, %v4727
        %v4932 = vpack.c.b16 %v4732, %v4728
        %v4933 = vpack.c.b16 %v4733, %v4729
        %v4934 = vpack.c.b16 %v4734, %v4730
        %v4935 = vpack.c.b16 %v4739, %v4735
        %v4936 = vpack.c.b16 %v4740, %v4736
        %v4937 = vpack.c.b16 %v4741, %v4737
        %v4938 = vpack.c.b16 %v4742, %v4738
        %v4939 = vpack.c.b16 %v4747, %v4743
        %v4940 = vpack.c.b16 %v4748, %v4744
        %v4941 = vpack.c.b16 %v4749, %v4745
        %v4942 = vpack.c.b16 %v4750, %v4746
        %v4943 = vpack.c.b16 %v4755, %v4751
        %v4944 = vpack.c.b16 %v4756, %v4752
        %v4945 = vpack.c.b16 %v4757, %v4753
        %v4946 = vpack.c.b16 %v4758, %v4754
        %v4947 = vpack.c.b16 %v4763, %v4759
        %v4948 = vpack.c.b16 %v4764, %v4760
        %v4949 = vpack.c.b16 %v4765, %v4761
        %v4950 = vpack.c.b16 %v4766, %v4762
        %v4951 = vpack.c.b16 %v4771, %v4767
        %v4952 = vpack.c.b16 %v4772, %v4768
        %v4953 = vpack.c.b16 %v4773, %v4769
        %v4954 = vpack.c.b16 %v4774, %v4770
        %v4955 = vpack.c.b16 %v4779, %v4775
        %v4956 = vpack.c.b16 %v4780, %v4776
        %v4957 = vpack.c.b16 %v4781, %v4777
        %v4958 = vpack.c.b16 %v4782, %v4778
        %v4959 = vpack.c.b16 %v4787, %v4783
        %v4960 = vpack.c.b16 %v4788, %v4784
        %v4961 = vpack.c.b16 %v4789, %v4785
        %v4962 = vpack.c.b16 %v4790, %v4786
        %v4963 = vpack.c.b16 %v4795, %v4791
        %v4964 = vpack.c.b16 %v4796, %v4792
        %v4965 = vpack.c.b16 %v4797, %v4793
        %v4966 = vpack.c.b16 %v4798, %v4794
        %v4967 = vpack.c.b16 %v4803, %v4799
        %v4968 = vpack.c.b16 %v4804, %v4800
        %v4969 = vpack.c.b16 %v4805, %v4801
        %v4970 = vpack.c.b16 %v4806, %v4802
        %v4971 = vpack.c.b16 %v4811, %v4807
        %v4972 = vpack.c.b16 %v4812, %v4808
        %v4973 = vpack.c.b16 %v4813, %v4809
        %v4974 = vpack.c.b16 %v4814, %v4810
        %v4975 = vpack.c.b16 %v4819, %v4815
        %v4976 = vpack.c.b16 %v4820, %v4816
        %v4977 = vpack.c.b16 %v4821, %v4817
        %v4978 = vpack.c.b16 %v4822, %v4818
        %v4979 = vpack.c.b16 %v4827, %v4823
        %v4980 = vpack.c.b16 %v4828, %v4824
        %v4981 = vpack.c.b16 %v4829, %v4825
        %v4982 = vpack.c.b16 %v4830, %v4826
        %v4983 = vpack.c.b16 %v4835, %v4831
        %v4984 = vpack.c.b16 %v4836, %v4832
        %v4985 = vpack.c.b16 %v4837, %v4833
        %v4986 = vpack.c.b16 %v4838, %v4834
        %v4987 = vpack.c.b16 %v4843, %v4839
        %v4988 = vpack.c.b16 %v4844, %v4840
        %v4989 = vpack.c.b16 %v4845, %v4841
        %v4990 = vpack.c.b16 %v4846, %v4842
        %v4991 = vpack.c.b16 %v4851, %v4847
        %v4992 = vpack.c.b16 %v4852, %v4848
        %v4993 = vpack.c.b16 %v4853, %v4849
        %v4994 = vpack.c.b16 %v4854, %v4850
        %v4995 = vpack.c.b16 %v4859, %v4855
        %v4996 = vpack.c.b16 %v4860, %v4856
        %v4997 = vpack.c.b16 %v4861, %v4857
        %v4998 = vpack.c.b16 %v4862, %v4858
        %v4999 = vpack.c.b16 %v4867, %v4863
        %v5000 = vpack.c.b16 %v4868, %v4864
        %v5001 = vpack.c.b16 %v4869, %v4865
        %v5002 = vpack.c.b16 %v4870, %v4866
        %v5003 = vpack.c.b16 %v4875, %v4871
        %v5004 = vpack.c.b16 %v4876, %v4872
        %v5005 = vpack.c.b16 %v4877, %v4873
        %v5006 = vpack.c.b16 %v4878, %v4874
        %5135 = vmatprep.subr.bf16.mxu0 %v4908
        %5136 = vmatpush1.bf16.msra.mxu0 %v4907
        %5137 = vmatprep.subr.bf16.mxu0 %v4904
        %5138 = vmatpush1.bf16.msra.mxu0 %v4903
        %5139 = vmatprep.subr.bf16.mxu0 %v4900
        %5140 = vmatpush1.bf16.msra.mxu0 %v4899
        %5141 = vmatprep.subr.bf16.mxu0 %v4896
        %5142 = vmatpush1.bf16.msra.mxu0 %v4895
        %5143 = vmatprep.subr.bf16.mxu0 %v4892
        %5144 = vmatpush1.bf16.msra.mxu0 %v4891
        %5145 = vmatprep.subr.bf16.mxu0 %v4888
        %5146 = vmatpush1.bf16.msra.mxu0 %v4887
        %5147 = vmatprep.subr.bf16.mxu0 %v4884
        %5148 = vmatpush1.bf16.msra.mxu0 %v4883
        %5149 = vmatprep.subr.bf16.mxu0 %v4880
        %5150 = vmatpush1.bf16.msra.mxu0 %v4879
        %5151 = vmatprep.subr.bf16.mxu0 %v4940
        %5152 = vmatpush2.bf16.msra.mxu0 %v4939
        %5153 = vmatprep.subr.bf16.mxu0 %v4936
        %5154 = vmatpush2.bf16.msra.mxu0 %v4935
        %5155 = vmatprep.subr.bf16.mxu0 %v4932
        %5156 = vmatpush2.bf16.msra.mxu0 %v4931
        %5157 = vmatprep.subr.bf16.mxu0 %v4928
        %5158 = vmatpush2.bf16.msra.mxu0 %v4927
        %5159 = vmatprep.subr.bf16.mxu0 %v4924
        %5160 = vmatpush2.bf16.msra.mxu0 %v4923
        %5161 = vmatprep.subr.bf16.mxu0 %v4920
        %5162 = vmatpush2.bf16.msra.mxu0 %v4919
        %5163 = vmatprep.subr.bf16.mxu0 %v4916
        %5164 = vmatpush2.bf16.msra.mxu0 %v4915
        %5165 = vmatprep.subr.bf16.mxu0 %v4912
        %5166 = vmatpush2.bf16.msra.mxu0 %v4911
        %5167 = vmatprep.mubr.bf16.mxu0 %v4282
        %5168 = vmatmul.mubr.bf16.gmra.mxu0 %v4281
        %v5169 = vpop.f32.mrf.mxu0
        %v5170 = vadd.f32 %v4478, %v5169
        %v5171 = vpop.f32.mrf.mxu0
        %v5172 = vadd.f32 %v4482, %v5171
        %v5173 = vpop.f32.mrf.mxu0
        %v5174 = vadd.f32 %v4478, %v5173
        %v5175 = vpop.f32.mrf.mxu0
        %v5176 = vadd.f32 %v4482, %v5175
        %5177 = vmatprep.mubr.bf16.mxu0 %v4286
        %5178 = vmatmul.mubr.bf16.gmra.mxu0 %v4285
        %v5179 = vpop.f32.mrf.mxu0
        %v5180 = vadd.f32 %v4478, %v5179
        %v5181 = vpop.f32.mrf.mxu0
        %v5182 = vadd.f32 %v4482, %v5181
        %v5183 = vpop.f32.mrf.mxu0
        %v5184 = vadd.f32 %v4478, %v5183
        %v5185 = vpop.f32.mrf.mxu0
        %v5186 = vadd.f32 %v4482, %v5185
        %5187 = vmatprep.mubr.bf16.mxu0 %v4290
        %5188 = vmatmul.mubr.bf16.gmra.mxu0 %v4289
        %v5189 = vpop.f32.mrf.mxu0
        %v5190 = vadd.f32 %v4478, %v5189
        %v5191 = vpop.f32.mrf.mxu0
        %v5192 = vadd.f32 %v4482, %v5191
        %v5193 = vpop.f32.mrf.mxu0
        %v5194 = vadd.f32 %v4478, %v5193
        %v5195 = vpop.f32.mrf.mxu0
        %v5196 = vadd.f32 %v4482, %v5195
        %5197 = vmatprep.mubr.bf16.mxu0 %v4294
        %5198 = vmatmul.mubr.bf16.gmra.mxu0 %v4293
        %v5199 = vpop.f32.mrf.mxu0
        %v5200 = vadd.f32 %v4478, %v5199
        %v5201 = vpop.f32.mrf.mxu0
        %v5202 = vadd.f32 %v4482, %v5201
        %v5203 = vpop.f32.mrf.mxu0
        %v5204 = vadd.f32 %v4478, %v5203
        %v5205 = vpop.f32.mrf.mxu0
        %v5206 = vadd.f32 %v4482, %v5205
        %5207 = vmatprep.mubr.bf16.mxu0 %v4298
        %5208 = vmatmul.mubr.bf16.gmra.mxu0 %v4297
        %v5209 = vpop.f32.mrf.mxu0
        %v5210 = vadd.f32 %v4478, %v5209
        %v5211 = vpop.f32.mrf.mxu0
        %v5212 = vadd.f32 %v4482, %v5211
        %v5213 = vpop.f32.mrf.mxu0
        %v5214 = vadd.f32 %v4478, %v5213
        %v5215 = vpop.f32.mrf.mxu0
        %v5216 = vadd.f32 %v4482, %v5215
        %5217 = vmatprep.mubr.bf16.mxu0 %v4302
        %5218 = vmatmul.mubr.bf16.gmra.mxu0 %v4301
        %v5219 = vpop.f32.mrf.mxu0
        %v5220 = vadd.f32 %v4478, %v5219
        %v5221 = vpop.f32.mrf.mxu0
        %v5222 = vadd.f32 %v4482, %v5221
        %v5223 = vpop.f32.mrf.mxu0
        %v5224 = vadd.f32 %v4478, %v5223
        %v5225 = vpop.f32.mrf.mxu0
        %v5226 = vadd.f32 %v4482, %v5225
        %5227 = vmatprep.mubr.bf16.mxu0 %v4306
        %5228 = vmatmul.mubr.bf16.gmra.mxu0 %v4305
        %v5229 = vpop.f32.mrf.mxu0
        %v5230 = vadd.f32 %v4478, %v5229
        %v5231 = vpop.f32.mrf.mxu0
        %v5232 = vadd.f32 %v4482, %v5231
        %v5233 = vpop.f32.mrf.mxu0
        %v5234 = vadd.f32 %v4478, %v5233
        %v5235 = vpop.f32.mrf.mxu0
        %v5236 = vadd.f32 %v4482, %v5235
        %5237 = vmatprep.mubr.bf16.mxu0 %v4310
        %5238 = vmatmul.mubr.bf16.gmra.mxu0 %v4309
        %v5239 = vpop.f32.mrf.mxu0
        %v5240 = vadd.f32 %v4478, %v5239
        %v5241 = vpop.f32.mrf.mxu0
        %v5242 = vadd.f32 %v4482, %v5241
        %v5243 = vpop.f32.mrf.mxu0
        %v5244 = vadd.f32 %v4478, %v5243
        %v5245 = vpop.f32.mrf.mxu0
        %v5246 = vadd.f32 %v4482, %v5245
        %5247 = vmatprep.mubr.bf16.mxu0 %v4314
        %5248 = vmatmul.mubr.bf16.gmra.mxu0 %v4313
        %v5249 = vpop.f32.mrf.mxu0
        %v5250 = vadd.f32 %v4478, %v5249
        %v5251 = vpop.f32.mrf.mxu0
        %v5252 = vadd.f32 %v4482, %v5251
        %v5253 = vpop.f32.mrf.mxu0
        %v5254 = vadd.f32 %v4478, %v5253
        %v5255 = vpop.f32.mrf.mxu0
        %v5256 = vadd.f32 %v4482, %v5255
        %5257 = vmatprep.mubr.bf16.mxu0 %v4318
        %5258 = vmatmul.mubr.bf16.gmra.mxu0 %v4317
        %v5259 = vpop.f32.mrf.mxu0
        %v5260 = vadd.f32 %v4478, %v5259
        %v5261 = vpop.f32.mrf.mxu0
        %v5262 = vadd.f32 %v4482, %v5261
        %v5263 = vpop.f32.mrf.mxu0
        %v5264 = vadd.f32 %v4478, %v5263
        %v5265 = vpop.f32.mrf.mxu0
        %v5266 = vadd.f32 %v4482, %v5265
        %5267 = vmatprep.mubr.bf16.mxu0 %v4322
        %5268 = vmatmul.mubr.bf16.gmra.mxu0 %v4321
        %v5269 = vpop.f32.mrf.mxu0
        %v5270 = vadd.f32 %v4478, %v5269
        %v5271 = vpop.f32.mrf.mxu0
        %v5272 = vadd.f32 %v4482, %v5271
        %v5273 = vpop.f32.mrf.mxu0
        %v5274 = vadd.f32 %v4478, %v5273
        %v5275 = vpop.f32.mrf.mxu0
        %v5276 = vadd.f32 %v4482, %v5275
        %5277 = vmatprep.mubr.bf16.mxu0 %v4326
        %5278 = vmatmul.mubr.bf16.gmra.mxu0 %v4325
        %v5279 = vpop.f32.mrf.mxu0
        %v5280 = vadd.f32 %v4478, %v5279
        %v5281 = vpop.f32.mrf.mxu0
        %v5282 = vadd.f32 %v4482, %v5281
        %v5283 = vpop.f32.mrf.mxu0
        %v5284 = vadd.f32 %v4478, %v5283
        %v5285 = vpop.f32.mrf.mxu0
        %v5286 = vadd.f32 %v4482, %v5285
        %5287 = vmatprep.mubr.bf16.mxu0 %v4330
        %5288 = vmatmul.mubr.bf16.gmra.mxu0 %v4329
        %v5289 = vpop.f32.mrf.mxu0
        %v5290 = vadd.f32 %v4478, %v5289
        %v5291 = vpop.f32.mrf.mxu0
        %v5292 = vadd.f32 %v4482, %v5291
        %v5293 = vpop.f32.mrf.mxu0
        %v5294 = vadd.f32 %v4478, %v5293
        %v5295 = vpop.f32.mrf.mxu0
        %v5296 = vadd.f32 %v4482, %v5295
        %5297 = vmatprep.mubr.bf16.mxu0 %v4334
        %5298 = vmatmul.mubr.bf16.gmra.mxu0 %v4333
        %v5299 = vpop.f32.mrf.mxu0
        %v5300 = vadd.f32 %v4478, %v5299
        %v5301 = vpop.f32.mrf.mxu0
        %v5302 = vadd.f32 %v4482, %v5301
        %v5303 = vpop.f32.mrf.mxu0
        %v5304 = vadd.f32 %v4478, %v5303
        %v5305 = vpop.f32.mrf.mxu0
        %v5306 = vadd.f32 %v4482, %v5305
        %5307 = vmatprep.mubr.bf16.mxu0 %v4338
        %5308 = vmatmul.mubr.bf16.gmra.mxu0 %v4337
        %v5309 = vpop.f32.mrf.mxu0
        %v5310 = vadd.f32 %v4478, %v5309
        %v5311 = vpop.f32.mrf.mxu0
        %v5312 = vadd.f32 %v4482, %v5311
        %v5313 = vpop.f32.mrf.mxu0
        %v5314 = vadd.f32 %v4478, %v5313
        %v5315 = vpop.f32.mrf.mxu0
        %v5316 = vadd.f32 %v4482, %v5315
        %5317 = vmatprep.mubr.bf16.mxu0 %v4342
        %5318 = vmatmul.mubr.bf16.gmra.mxu0 %v4341
        %v5319 = vpop.f32.mrf.mxu0
        %v5320 = vadd.f32 %v4478, %v5319
        %v5321 = vpop.f32.mrf.mxu0
        %v5322 = vadd.f32 %v4482, %v5321
        %v5323 = vpop.f32.mrf.mxu0
        %v5324 = vadd.f32 %v4478, %v5323
        %v5325 = vpop.f32.mrf.mxu0
        %v5326 = vadd.f32 %v4482, %v5325
        %5327 = vdwg.mxu0
        %5328 = vmatprep.subr.bf16.mxu0 %v4972
        %5329 = vmatpush1.bf16.msra.mxu0 %v4971
        %5330 = vmatprep.subr.bf16.mxu0 %v4968
        %5331 = vmatpush1.bf16.msra.mxu0 %v4967
        %5332 = vmatprep.subr.bf16.mxu0 %v4964
        %5333 = vmatpush1.bf16.msra.mxu0 %v4963
        %5334 = vmatprep.subr.bf16.mxu0 %v4960
        %5335 = vmatpush1.bf16.msra.mxu0 %v4959
        %5336 = vmatprep.subr.bf16.mxu0 %v4956
        %5337 = vmatpush1.bf16.msra.mxu0 %v4955
        %5338 = vmatprep.subr.bf16.mxu0 %v4952
        %5339 = vmatpush1.bf16.msra.mxu0 %v4951
        %5340 = vmatprep.subr.bf16.mxu0 %v4948
        %5341 = vmatpush1.bf16.msra.mxu0 %v4947
        %5342 = vmatprep.subr.bf16.mxu0 %v4944
        %5343 = vmatpush1.bf16.msra.mxu0 %v4943
        %5344 = vmatprep.subr.bf16.mxu0 %v5004
        %5345 = vmatpush2.bf16.msra.mxu0 %v5003
        %5346 = vmatprep.subr.bf16.mxu0 %v5000
        %5347 = vmatpush2.bf16.msra.mxu0 %v4999
        %5348 = vmatprep.subr.bf16.mxu0 %v4996
        %5349 = vmatpush2.bf16.msra.mxu0 %v4995
        %5350 = vmatprep.subr.bf16.mxu0 %v4992
        %5351 = vmatpush2.bf16.msra.mxu0 %v4991
        %5352 = vmatprep.subr.bf16.mxu0 %v4988
        %5353 = vmatpush2.bf16.msra.mxu0 %v4987
        %5354 = vmatprep.subr.bf16.mxu0 %v4984
        %5355 = vmatpush2.bf16.msra.mxu0 %v4983
        %5356 = vmatprep.subr.bf16.mxu0 %v4980
        %5357 = vmatpush2.bf16.msra.mxu0 %v4979
        %5358 = vmatprep.subr.bf16.mxu0 %v4976
        %5359 = vmatpush2.bf16.msra.mxu0 %v4975
        %5360 = vmatprep.mubr.bf16.mxu0 %v4284
        %5361 = vmatmul.mubr.bf16.gmra.mxu0 %v4283
        %v5362 = vpop.f32.mrf.mxu0
        %v5363 = vadd.f32 %v5170, %v5362
        %v5364 = vpop.f32.mrf.mxu0
        %v5365 = vadd.f32 %v5172, %v5364
        %v5366 = vpop.f32.mrf.mxu0
        %v5367 = vadd.f32 %v5174, %v5366
        %v5368 = vpop.f32.mrf.mxu0
        %v5369 = vadd.f32 %v5176, %v5368
        %5370 = vmatprep.mubr.bf16.mxu0 %v4288
        %5371 = vmatmul.mubr.bf16.gmra.mxu0 %v4287
        %v5372 = vpop.f32.mrf.mxu0
        %v5373 = vadd.f32 %v5180, %v5372
        %v5374 = vpop.f32.mrf.mxu0
        %v5375 = vadd.f32 %v5182, %v5374
        %v5376 = vpop.f32.mrf.mxu0
        %v5377 = vadd.f32 %v5184, %v5376
        %v5378 = vpop.f32.mrf.mxu0
        %v5379 = vadd.f32 %v5186, %v5378
        %5380 = vmatprep.mubr.bf16.mxu0 %v4292
        %5381 = vmatmul.mubr.bf16.gmra.mxu0 %v4291
        %v5382 = vpop.f32.mrf.mxu0
        %v5383 = vadd.f32 %v5190, %v5382
        %v5384 = vpop.f32.mrf.mxu0
        %v5385 = vadd.f32 %v5192, %v5384
        %v5386 = vpop.f32.mrf.mxu0
        %v5387 = vadd.f32 %v5194, %v5386
        %v5388 = vpop.f32.mrf.mxu0
        %v5389 = vadd.f32 %v5196, %v5388
        %5390 = vmatprep.mubr.bf16.mxu0 %v4296
        %5391 = vmatmul.mubr.bf16.gmra.mxu0 %v4295
        %v5392 = vpop.f32.mrf.mxu0
        %v5393 = vadd.f32 %v5200, %v5392
        %v5394 = vpop.f32.mrf.mxu0
        %v5395 = vadd.f32 %v5202, %v5394
        %v5396 = vpop.f32.mrf.mxu0
        %v5397 = vadd.f32 %v5204, %v5396
        %v5398 = vpop.f32.mrf.mxu0
        %v5399 = vadd.f32 %v5206, %v5398
        %5400 = vmatprep.mubr.bf16.mxu0 %v4300
        %5401 = vmatmul.mubr.bf16.gmra.mxu0 %v4299
        %v5402 = vpop.f32.mrf.mxu0
        %v5403 = vadd.f32 %v5210, %v5402
        %v5404 = vpop.f32.mrf.mxu0
        %v5405 = vadd.f32 %v5212, %v5404
        %v5406 = vpop.f32.mrf.mxu0
        %v5407 = vadd.f32 %v5214, %v5406
        %v5408 = vpop.f32.mrf.mxu0
        %v5409 = vadd.f32 %v5216, %v5408
        %5410 = vmatprep.mubr.bf16.mxu0 %v4304
        %5411 = vmatmul.mubr.bf16.gmra.mxu0 %v4303
        %v5412 = vpop.f32.mrf.mxu0
        %v5413 = vadd.f32 %v5220, %v5412
        %v5414 = vpop.f32.mrf.mxu0
        %v5415 = vadd.f32 %v5222, %v5414
        %v5416 = vpop.f32.mrf.mxu0
        %v5417 = vadd.f32 %v5224, %v5416
        %v5418 = vpop.f32.mrf.mxu0
        %v5419 = vadd.f32 %v5226, %v5418
        %5420 = vmatprep.mubr.bf16.mxu0 %v4308
        %5421 = vmatmul.mubr.bf16.gmra.mxu0 %v4307
        %v5422 = vpop.f32.mrf.mxu0
        %v5423 = vadd.f32 %v5230, %v5422
        %v5424 = vpop.f32.mrf.mxu0
        %v5425 = vadd.f32 %v5232, %v5424
        %v5426 = vpop.f32.mrf.mxu0
        %v5427 = vadd.f32 %v5234, %v5426
        %v5428 = vpop.f32.mrf.mxu0
        %v5429 = vadd.f32 %v5236, %v5428
        %5430 = vmatprep.mubr.bf16.mxu0 %v4312
        %5431 = vmatmul.mubr.bf16.gmra.mxu0 %v4311
        %v5432 = vpop.f32.mrf.mxu0
        %v5433 = vadd.f32 %v5240, %v5432
        %v5434 = vpop.f32.mrf.mxu0
        %v5435 = vadd.f32 %v5242, %v5434
        %v5436 = vpop.f32.mrf.mxu0
        %v5437 = vadd.f32 %v5244, %v5436
        %v5438 = vpop.f32.mrf.mxu0
        %v5439 = vadd.f32 %v5246, %v5438
        %5440 = vmatprep.mubr.bf16.mxu0 %v4316
        %5441 = vmatmul.mubr.bf16.gmra.mxu0 %v4315
        %v5442 = vpop.f32.mrf.mxu0
        %v5443 = vadd.f32 %v5250, %v5442
        %v5444 = vpop.f32.mrf.mxu0
        %v5445 = vadd.f32 %v5252, %v5444
        %v5446 = vpop.f32.mrf.mxu0
        %v5447 = vadd.f32 %v5254, %v5446
        %v5448 = vpop.f32.mrf.mxu0
        %v5449 = vadd.f32 %v5256, %v5448
        %5450 = vmatprep.mubr.bf16.mxu0 %v4320
        %5451 = vmatmul.mubr.bf16.gmra.mxu0 %v4319
        %v5452 = vpop.f32.mrf.mxu0
        %v5453 = vadd.f32 %v5260, %v5452
        %v5454 = vpop.f32.mrf.mxu0
        %v5455 = vadd.f32 %v5262, %v5454
        %v5456 = vpop.f32.mrf.mxu0
        %v5457 = vadd.f32 %v5264, %v5456
        %v5458 = vpop.f32.mrf.mxu0
        %v5459 = vadd.f32 %v5266, %v5458
        %5460 = vmatprep.mubr.bf16.mxu0 %v4324
        %5461 = vmatmul.mubr.bf16.gmra.mxu0 %v4323
        %v5462 = vpop.f32.mrf.mxu0
        %v5463 = vadd.f32 %v5270, %v5462
        %v5464 = vpop.f32.mrf.mxu0
        %v5465 = vadd.f32 %v5272, %v5464
        %v5466 = vpop.f32.mrf.mxu0
        %v5467 = vadd.f32 %v5274, %v5466
        %v5468 = vpop.f32.mrf.mxu0
        %v5469 = vadd.f32 %v5276, %v5468
        %5470 = vmatprep.mubr.bf16.mxu0 %v4328
        %5471 = vmatmul.mubr.bf16.gmra.mxu0 %v4327
        %v5472 = vpop.f32.mrf.mxu0
        %v5473 = vadd.f32 %v5280, %v5472
        %v5474 = vpop.f32.mrf.mxu0
        %v5475 = vadd.f32 %v5282, %v5474
        %v5476 = vpop.f32.mrf.mxu0
        %v5477 = vadd.f32 %v5284, %v5476
        %v5478 = vpop.f32.mrf.mxu0
        %v5479 = vadd.f32 %v5286, %v5478
        %5480 = vmatprep.mubr.bf16.mxu0 %v4332
        %5481 = vmatmul.mubr.bf16.gmra.mxu0 %v4331
        %v5482 = vpop.f32.mrf.mxu0
        %v5483 = vadd.f32 %v5290, %v5482
        %v5484 = vpop.f32.mrf.mxu0
        %v5485 = vadd.f32 %v5292, %v5484
        %v5486 = vpop.f32.mrf.mxu0
        %v5487 = vadd.f32 %v5294, %v5486
        %v5488 = vpop.f32.mrf.mxu0
        %v5489 = vadd.f32 %v5296, %v5488
        %5490 = vmatprep.mubr.bf16.mxu0 %v4336
        %5491 = vmatmul.mubr.bf16.gmra.mxu0 %v4335
        %v5492 = vpop.f32.mrf.mxu0
        %v5493 = vadd.f32 %v5300, %v5492
        %v5494 = vpop.f32.mrf.mxu0
        %v5495 = vadd.f32 %v5302, %v5494
        %v5496 = vpop.f32.mrf.mxu0
        %v5497 = vadd.f32 %v5304, %v5496
        %v5498 = vpop.f32.mrf.mxu0
        %v5499 = vadd.f32 %v5306, %v5498
        %5500 = vmatprep.mubr.bf16.mxu0 %v4340
        %5501 = vmatmul.mubr.bf16.gmra.mxu0 %v4339
        %v5502 = vpop.f32.mrf.mxu0
        %v5503 = vadd.f32 %v5310, %v5502
        %v5504 = vpop.f32.mrf.mxu0
        %v5505 = vadd.f32 %v5312, %v5504
        %v5506 = vpop.f32.mrf.mxu0
        %v5507 = vadd.f32 %v5314, %v5506
        %v5508 = vpop.f32.mrf.mxu0
        %v5509 = vadd.f32 %v5316, %v5508
        %5510 = vmatprep.mubr.bf16.mxu0 %v4344
        %5511 = vmatmul.mubr.bf16.gmra.mxu0 %v4343
        %v5512 = vpop.f32.mrf.mxu0
        %v5513 = vadd.f32 %v5320, %v5512
        %v5514 = vpop.f32.mrf.mxu0
        %v5515 = vadd.f32 %v5322, %v5514
        %v5516 = vpop.f32.mrf.mxu0
        %v5517 = vadd.f32 %v5324, %v5516
        %v5518 = vpop.f32.mrf.mxu0
        %v5519 = vadd.f32 %v5326, %v5518
        %5520 = vdwg.mxu0
        %5521 = vmatprep.subr.bf16.mxu0 %v4910
        %5522 = vmatpush1.bf16.msra.mxu0 %v4909
        %5523 = vmatprep.subr.bf16.mxu0 %v4906
        %5524 = vmatpush1.bf16.msra.mxu0 %v4905
        %5525 = vmatprep.subr.bf16.mxu0 %v4902
        %5526 = vmatpush1.bf16.msra.mxu0 %v4901
        %5527 = vmatprep.subr.bf16.mxu0 %v4898
        %5528 = vmatpush1.bf16.msra.mxu0 %v4897
        %5529 = vmatprep.subr.bf16.mxu0 %v4894
        %5530 = vmatpush1.bf16.msra.mxu0 %v4893
        %5531 = vmatprep.subr.bf16.mxu0 %v4890
        %5532 = vmatpush1.bf16.msra.mxu0 %v4889
        %5533 = vmatprep.subr.bf16.mxu0 %v4886
        %5534 = vmatpush1.bf16.msra.mxu0 %v4885
        %5535 = vmatprep.subr.bf16.mxu0 %v4882
        %5536 = vmatpush1.bf16.msra.mxu0 %v4881
        %5537 = vmatprep.subr.bf16.mxu0 %v4942
        %5538 = vmatpush2.bf16.msra.mxu0 %v4941
        %5539 = vmatprep.subr.bf16.mxu0 %v4938
        %5540 = vmatpush2.bf16.msra.mxu0 %v4937
        %5541 = vmatprep.subr.bf16.mxu0 %v4934
        %5542 = vmatpush2.bf16.msra.mxu0 %v4933
        %5543 = vmatprep.subr.bf16.mxu0 %v4930
        %5544 = vmatpush2.bf16.msra.mxu0 %v4929
        %5545 = vmatprep.subr.bf16.mxu0 %v4926
        %5546 = vmatpush2.bf16.msra.mxu0 %v4925
        %5547 = vmatprep.subr.bf16.mxu0 %v4922
        %5548 = vmatpush2.bf16.msra.mxu0 %v4921
        %5549 = vmatprep.subr.bf16.mxu0 %v4918
        %5550 = vmatpush2.bf16.msra.mxu0 %v4917
        %5551 = vmatprep.subr.bf16.mxu0 %v4914
        %5552 = vmatpush2.bf16.msra.mxu0 %v4913
        %5553 = vmatprep.mubr.bf16.mxu0 %v4282
        %5554 = vmatmul.mubr.bf16.gmra.mxu0 %v4281
        %v5555 = vpop.f32.mrf.mxu0
        %v5556 = vadd.f32 %v4486, %v5555
        %v5557 = vpop.f32.mrf.mxu0
        %v5558 = vadd.f32 %v4490, %v5557
        %v5559 = vpop.f32.mrf.mxu0
        %v5560 = vadd.f32 %v4486, %v5559
        %v5561 = vpop.f32.mrf.mxu0
        %v5562 = vadd.f32 %v4490, %v5561
        %5563 = vmatprep.mubr.bf16.mxu0 %v4286
        %5564 = vmatmul.mubr.bf16.gmra.mxu0 %v4285
        %v5565 = vpop.f32.mrf.mxu0
        %v5566 = vadd.f32 %v4486, %v5565
        %v5567 = vpop.f32.mrf.mxu0
        %v5568 = vadd.f32 %v4490, %v5567
        %v5569 = vpop.f32.mrf.mxu0
        %v5570 = vadd.f32 %v4486, %v5569
        %v5571 = vpop.f32.mrf.mxu0
        %v5572 = vadd.f32 %v4490, %v5571
        %5573 = vmatprep.mubr.bf16.mxu0 %v4290
        %5574 = vmatmul.mubr.bf16.gmra.mxu0 %v4289
        %v5575 = vpop.f32.mrf.mxu0
        %v5576 = vadd.f32 %v4486, %v5575
        %v5577 = vpop.f32.mrf.mxu0
        %v5578 = vadd.f32 %v4490, %v5577
        %v5579 = vpop.f32.mrf.mxu0
        %v5580 = vadd.f32 %v4486, %v5579
        %v5581 = vpop.f32.mrf.mxu0
        %v5582 = vadd.f32 %v4490, %v5581
        %5583 = vmatprep.mubr.bf16.mxu0 %v4294
        %5584 = vmatmul.mubr.bf16.gmra.mxu0 %v4293
        %v5585 = vpop.f32.mrf.mxu0
        %v5586 = vadd.f32 %v4486, %v5585
        %v5587 = vpop.f32.mrf.mxu0
        %v5588 = vadd.f32 %v4490, %v5587
        %v5589 = vpop.f32.mrf.mxu0
        %v5590 = vadd.f32 %v4486, %v5589
        %v5591 = vpop.f32.mrf.mxu0
        %v5592 = vadd.f32 %v4490, %v5591
        %5593 = vmatprep.mubr.bf16.mxu0 %v4298
        %5594 = vmatmul.mubr.bf16.gmra.mxu0 %v4297
        %v5595 = vpop.f32.mrf.mxu0
        %v5596 = vadd.f32 %v4486, %v5595
        %v5597 = vpop.f32.mrf.mxu0
        %v5598 = vadd.f32 %v4490, %v5597
        %v5599 = vpop.f32.mrf.mxu0
        %v5600 = vadd.f32 %v4486, %v5599
        %v5601 = vpop.f32.mrf.mxu0
        %v5602 = vadd.f32 %v4490, %v5601
        %5603 = vmatprep.mubr.bf16.mxu0 %v4302
        %5604 = vmatmul.mubr.bf16.gmra.mxu0 %v4301
        %v5605 = vpop.f32.mrf.mxu0
        %v5606 = vadd.f32 %v4486, %v5605
        %v5607 = vpop.f32.mrf.mxu0
        %v5608 = vadd.f32 %v4490, %v5607
        %v5609 = vpop.f32.mrf.mxu0
        %v5610 = vadd.f32 %v4486, %v5609
        %v5611 = vpop.f32.mrf.mxu0
        %v5612 = vadd.f32 %v4490, %v5611
        %5613 = vmatprep.mubr.bf16.mxu0 %v4306
        %5614 = vmatmul.mubr.bf16.gmra.mxu0 %v4305
        %v5615 = vpop.f32.mrf.mxu0
        %v5616 = vadd.f32 %v4486, %v5615
        %v5617 = vpop.f32.mrf.mxu0
        %v5618 = vadd.f32 %v4490, %v5617
        %v5619 = vpop.f32.mrf.mxu0
        %v5620 = vadd.f32 %v4486, %v5619
        %v5621 = vpop.f32.mrf.mxu0
        %v5622 = vadd.f32 %v4490, %v5621
        %5623 = vmatprep.mubr.bf16.mxu0 %v4310
        %5624 = vmatmul.mubr.bf16.gmra.mxu0 %v4309
        %v5625 = vpop.f32.mrf.mxu0
        %v5626 = vadd.f32 %v4486, %v5625
        %v5627 = vpop.f32.mrf.mxu0
        %v5628 = vadd.f32 %v4490, %v5627
        %v5629 = vpop.f32.mrf.mxu0
        %v5630 = vadd.f32 %v4486, %v5629
        %v5631 = vpop.f32.mrf.mxu0
        %v5632 = vadd.f32 %v4490, %v5631
        %5633 = vmatprep.mubr.bf16.mxu0 %v4314
        %5634 = vmatmul.mubr.bf16.gmra.mxu0 %v4313
        %v5635 = vpop.f32.mrf.mxu0
        %v5636 = vadd.f32 %v4486, %v5635
        %v5637 = vpop.f32.mrf.mxu0
        %v5638 = vadd.f32 %v4490, %v5637
        %v5639 = vpop.f32.mrf.mxu0
        %v5640 = vadd.f32 %v4486, %v5639
        %v5641 = vpop.f32.mrf.mxu0
        %v5642 = vadd.f32 %v4490, %v5641
        %5643 = vmatprep.mubr.bf16.mxu0 %v4318
        %5644 = vmatmul.mubr.bf16.gmra.mxu0 %v4317
        %v5645 = vpop.f32.mrf.mxu0
        %v5646 = vadd.f32 %v4486, %v5645
        %v5647 = vpop.f32.mrf.mxu0
        %v5648 = vadd.f32 %v4490, %v5647
        %v5649 = vpop.f32.mrf.mxu0
        %v5650 = vadd.f32 %v4486, %v5649
        %v5651 = vpop.f32.mrf.mxu0
        %v5652 = vadd.f32 %v4490, %v5651
        %5653 = vmatprep.mubr.bf16.mxu0 %v4322
        %5654 = vmatmul.mubr.bf16.gmra.mxu0 %v4321
        %v5655 = vpop.f32.mrf.mxu0
        %v5656 = vadd.f32 %v4486, %v5655
        %v5657 = vpop.f32.mrf.mxu0
        %v5658 = vadd.f32 %v4490, %v5657
        %v5659 = vpop.f32.mrf.mxu0
        %v5660 = vadd.f32 %v4486, %v5659
        %v5661 = vpop.f32.mrf.mxu0
        %v5662 = vadd.f32 %v4490, %v5661
        %5663 = vmatprep.mubr.bf16.mxu0 %v4326
        %5664 = vmatmul.mubr.bf16.gmra.mxu0 %v4325
        %v5665 = vpop.f32.mrf.mxu0
        %v5666 = vadd.f32 %v4486, %v5665
        %v5667 = vpop.f32.mrf.mxu0
        %v5668 = vadd.f32 %v4490, %v5667
        %v5669 = vpop.f32.mrf.mxu0
        %v5670 = vadd.f32 %v4486, %v5669
        %v5671 = vpop.f32.mrf.mxu0
        %v5672 = vadd.f32 %v4490, %v5671
        %5673 = vmatprep.mubr.bf16.mxu0 %v4330
        %5674 = vmatmul.mubr.bf16.gmra.mxu0 %v4329
        %v5675 = vpop.f32.mrf.mxu0
        %v5676 = vadd.f32 %v4486, %v5675
        %v5677 = vpop.f32.mrf.mxu0
        %v5678 = vadd.f32 %v4490, %v5677
        %v5679 = vpop.f32.mrf.mxu0
        %v5680 = vadd.f32 %v4486, %v5679
        %v5681 = vpop.f32.mrf.mxu0
        %v5682 = vadd.f32 %v4490, %v5681
        %5683 = vmatprep.mubr.bf16.mxu0 %v4334
        %5684 = vmatmul.mubr.bf16.gmra.mxu0 %v4333
        %v5685 = vpop.f32.mrf.mxu0
        %v5686 = vadd.f32 %v4486, %v5685
        %v5687 = vpop.f32.mrf.mxu0
        %v5688 = vadd.f32 %v4490, %v5687
        %v5689 = vpop.f32.mrf.mxu0
        %v5690 = vadd.f32 %v4486, %v5689
        %v5691 = vpop.f32.mrf.mxu0
        %v5692 = vadd.f32 %v4490, %v5691
        %5693 = vmatprep.mubr.bf16.mxu0 %v4338
        %5694 = vmatmul.mubr.bf16.gmra.mxu0 %v4337
        %v5695 = vpop.f32.mrf.mxu0
        %v5696 = vadd.f32 %v4486, %v5695
        %v5697 = vpop.f32.mrf.mxu0
        %v5698 = vadd.f32 %v4490, %v5697
        %v5699 = vpop.f32.mrf.mxu0
        %v5700 = vadd.f32 %v4486, %v5699
        %v5701 = vpop.f32.mrf.mxu0
        %v5702 = vadd.f32 %v4490, %v5701
        %5703 = vmatprep.mubr.bf16.mxu0 %v4342
        %5704 = vmatmul.mubr.bf16.gmra.mxu0 %v4341
        %v5705 = vpop.f32.mrf.mxu0
        %v5706 = vadd.f32 %v4486, %v5705
        %v5707 = vpop.f32.mrf.mxu0
        %v5708 = vadd.f32 %v4490, %v5707
        %v5709 = vpop.f32.mrf.mxu0
        %v5710 = vadd.f32 %v4486, %v5709
        %v5711 = vpop.f32.mrf.mxu0
        %v5712 = vadd.f32 %v4490, %v5711
        %5713 = vdwg.mxu0
        %5714 = vmatprep.subr.bf16.mxu0 %v4974
        %5715 = vmatpush1.bf16.msra.mxu0 %v4973
        %5716 = vmatprep.subr.bf16.mxu0 %v4970
        %5717 = vmatpush1.bf16.msra.mxu0 %v4969
        %5718 = vmatprep.subr.bf16.mxu0 %v4966
        %5719 = vmatpush1.bf16.msra.mxu0 %v4965
        %5720 = vmatprep.subr.bf16.mxu0 %v4962
        %5721 = vmatpush1.bf16.msra.mxu0 %v4961
        %5722 = vmatprep.subr.bf16.mxu0 %v4958
        %5723 = vmatpush1.bf16.msra.mxu0 %v4957
        %5724 = vmatprep.subr.bf16.mxu0 %v4954
        %5725 = vmatpush1.bf16.msra.mxu0 %v4953
        %5726 = vmatprep.subr.bf16.mxu0 %v4950
        %5727 = vmatpush1.bf16.msra.mxu0 %v4949
        %5728 = vmatprep.subr.bf16.mxu0 %v4946
        %5729 = vmatpush1.bf16.msra.mxu0 %v4945
        %5730 = vmatprep.subr.bf16.mxu0 %v5006
        %5731 = vmatpush2.bf16.msra.mxu0 %v5005
        %5732 = vmatprep.subr.bf16.mxu0 %v5002
        %5733 = vmatpush2.bf16.msra.mxu0 %v5001
        %5734 = vmatprep.subr.bf16.mxu0 %v4998
        %5735 = vmatpush2.bf16.msra.mxu0 %v4997
        %5736 = vmatprep.subr.bf16.mxu0 %v4994
        %5737 = vmatpush2.bf16.msra.mxu0 %v4993
        %5738 = vmatprep.subr.bf16.mxu0 %v4990
        %5739 = vmatpush2.bf16.msra.mxu0 %v4989
        %5740 = vmatprep.subr.bf16.mxu0 %v4986
        %5741 = vmatpush2.bf16.msra.mxu0 %v4985
        %5742 = vmatprep.subr.bf16.mxu0 %v4982
        %5743 = vmatpush2.bf16.msra.mxu0 %v4981
        %5744 = vmatprep.subr.bf16.mxu0 %v4978
        %5745 = vmatpush2.bf16.msra.mxu0 %v4977
        %5746 = vmatprep.mubr.bf16.mxu0 %v4284
        %5747 = vmatmul.mubr.bf16.gmra.mxu0 %v4283
        %v5748 = vpop.f32.mrf.mxu0
        %v5749 = vadd.f32 %v5556, %v5748
        %v5750 = vpop.f32.mrf.mxu0
        %v5751 = vadd.f32 %v5558, %v5750
        %v5752 = vpop.f32.mrf.mxu0
        %v5753 = vadd.f32 %v5560, %v5752
        %v5754 = vpop.f32.mrf.mxu0
        %v5755 = vadd.f32 %v5562, %v5754
        %5756 = vmatprep.mubr.bf16.mxu0 %v4288
        %5757 = vmatmul.mubr.bf16.gmra.mxu0 %v4287
        %v5758 = vpop.f32.mrf.mxu0
        %v5759 = vadd.f32 %v5566, %v5758
        %v5760 = vpop.f32.mrf.mxu0
        %v5761 = vadd.f32 %v5568, %v5760
        %v5762 = vpop.f32.mrf.mxu0
        %v5763 = vadd.f32 %v5570, %v5762
        %v5764 = vpop.f32.mrf.mxu0
        %v5765 = vadd.f32 %v5572, %v5764
        %5766 = vmatprep.mubr.bf16.mxu0 %v4292
        %5767 = vmatmul.mubr.bf16.gmra.mxu0 %v4291
        %v5768 = vpop.f32.mrf.mxu0
        %v5769 = vadd.f32 %v5576, %v5768
        %v5770 = vpop.f32.mrf.mxu0
        %v5771 = vadd.f32 %v5578, %v5770
        %v5772 = vpop.f32.mrf.mxu0
        %v5773 = vadd.f32 %v5580, %v5772
        %v5774 = vpop.f32.mrf.mxu0
        %v5775 = vadd.f32 %v5582, %v5774
        %5776 = vmatprep.mubr.bf16.mxu0 %v4296
        %5777 = vmatmul.mubr.bf16.gmra.mxu0 %v4295
        %v5778 = vpop.f32.mrf.mxu0
        %v5779 = vadd.f32 %v5586, %v5778
        %v5780 = vpop.f32.mrf.mxu0
        %v5781 = vadd.f32 %v5588, %v5780
        %v5782 = vpop.f32.mrf.mxu0
        %v5783 = vadd.f32 %v5590, %v5782
        %v5784 = vpop.f32.mrf.mxu0
        %v5785 = vadd.f32 %v5592, %v5784
        %5786 = vmatprep.mubr.bf16.mxu0 %v4300
        %5787 = vmatmul.mubr.bf16.gmra.mxu0 %v4299
        %v5788 = vpop.f32.mrf.mxu0
        %v5789 = vadd.f32 %v5596, %v5788
        %v5790 = vpop.f32.mrf.mxu0
        %v5791 = vadd.f32 %v5598, %v5790
        %v5792 = vpop.f32.mrf.mxu0
        %v5793 = vadd.f32 %v5600, %v5792
        %v5794 = vpop.f32.mrf.mxu0
        %v5795 = vadd.f32 %v5602, %v5794
        %5796 = vmatprep.mubr.bf16.mxu0 %v4304
        %5797 = vmatmul.mubr.bf16.gmra.mxu0 %v4303
        %v5798 = vpop.f32.mrf.mxu0
        %v5799 = vadd.f32 %v5606, %v5798
        %v5800 = vpop.f32.mrf.mxu0
        %v5801 = vadd.f32 %v5608, %v5800
        %v5802 = vpop.f32.mrf.mxu0
        %v5803 = vadd.f32 %v5610, %v5802
        %v5804 = vpop.f32.mrf.mxu0
        %v5805 = vadd.f32 %v5612, %v5804
        %5806 = vmatprep.mubr.bf16.mxu0 %v4308
        %5807 = vmatmul.mubr.bf16.gmra.mxu0 %v4307
        %v5808 = vpop.f32.mrf.mxu0
        %v5809 = vadd.f32 %v5616, %v5808
        %v5810 = vpop.f32.mrf.mxu0
        %v5811 = vadd.f32 %v5618, %v5810
        %v5812 = vpop.f32.mrf.mxu0
        %v5813 = vadd.f32 %v5620, %v5812
        %v5814 = vpop.f32.mrf.mxu0
        %v5815 = vadd.f32 %v5622, %v5814
        %5816 = vmatprep.mubr.bf16.mxu0 %v4312
        %5817 = vmatmul.mubr.bf16.gmra.mxu0 %v4311
        %v5818 = vpop.f32.mrf.mxu0
        %v5819 = vadd.f32 %v5626, %v5818
        %v5820 = vpop.f32.mrf.mxu0
        %v5821 = vadd.f32 %v5628, %v5820
        %v5822 = vpop.f32.mrf.mxu0
        %v5823 = vadd.f32 %v5630, %v5822
        %v5824 = vpop.f32.mrf.mxu0
        %v5825 = vadd.f32 %v5632, %v5824
        %5826 = vmatprep.mubr.bf16.mxu0 %v4316
        %5827 = vmatmul.mubr.bf16.gmra.mxu0 %v4315
        %v5828 = vpop.f32.mrf.mxu0
        %v5829 = vadd.f32 %v5636, %v5828
        %v5830 = vpop.f32.mrf.mxu0
        %v5831 = vadd.f32 %v5638, %v5830
        %v5832 = vpop.f32.mrf.mxu0
        %v5833 = vadd.f32 %v5640, %v5832
        %v5834 = vpop.f32.mrf.mxu0
        %v5835 = vadd.f32 %v5642, %v5834
        %5836 = vmatprep.mubr.bf16.mxu0 %v4320
        %5837 = vmatmul.mubr.bf16.gmra.mxu0 %v4319
        %v5838 = vpop.f32.mrf.mxu0
        %v5839 = vadd.f32 %v5646, %v5838
        %v5840 = vpop.f32.mrf.mxu0
        %v5841 = vadd.f32 %v5648, %v5840
        %v5842 = vpop.f32.mrf.mxu0
        %v5843 = vadd.f32 %v5650, %v5842
        %v5844 = vpop.f32.mrf.mxu0
        %v5845 = vadd.f32 %v5652, %v5844
        %5846 = vmatprep.mubr.bf16.mxu0 %v4324
        %5847 = vmatmul.mubr.bf16.gmra.mxu0 %v4323
        %v5848 = vpop.f32.mrf.mxu0
        %v5849 = vadd.f32 %v5656, %v5848
        %v5850 = vpop.f32.mrf.mxu0
        %v5851 = vadd.f32 %v5658, %v5850
        %v5852 = vpop.f32.mrf.mxu0
        %v5853 = vadd.f32 %v5660, %v5852
        %v5854 = vpop.f32.mrf.mxu0
        %v5855 = vadd.f32 %v5662, %v5854
        %5856 = vmatprep.mubr.bf16.mxu0 %v4328
        %5857 = vmatmul.mubr.bf16.gmra.mxu0 %v4327
        %v5858 = vpop.f32.mrf.mxu0
        %v5859 = vadd.f32 %v5666, %v5858
        %v5860 = vpop.f32.mrf.mxu0
        %v5861 = vadd.f32 %v5668, %v5860
        %v5862 = vpop.f32.mrf.mxu0
        %v5863 = vadd.f32 %v5670, %v5862
        %v5864 = vpop.f32.mrf.mxu0
        %v5865 = vadd.f32 %v5672, %v5864
        %5866 = vmatprep.mubr.bf16.mxu0 %v4332
        %5867 = vmatmul.mubr.bf16.gmra.mxu0 %v4331
        %v5868 = vpop.f32.mrf.mxu0
        %v5869 = vadd.f32 %v5676, %v5868
        %v5870 = vpop.f32.mrf.mxu0
        %v5871 = vadd.f32 %v5678, %v5870
        %v5872 = vpop.f32.mrf.mxu0
        %v5873 = vadd.f32 %v5680, %v5872
        %v5874 = vpop.f32.mrf.mxu0
        %v5875 = vadd.f32 %v5682, %v5874
        %5876 = vmatprep.mubr.bf16.mxu0 %v4336
        %5877 = vmatmul.mubr.bf16.gmra.mxu0 %v4335
        %v5878 = vpop.f32.mrf.mxu0
        %v5879 = vadd.f32 %v5686, %v5878
        %v5880 = vpop.f32.mrf.mxu0
        %v5881 = vadd.f32 %v5688, %v5880
        %v5882 = vpop.f32.mrf.mxu0
        %v5883 = vadd.f32 %v5690, %v5882
        %v5884 = vpop.f32.mrf.mxu0
        %v5885 = vadd.f32 %v5692, %v5884
        %5886 = vmatprep.mubr.bf16.mxu0 %v4340
        %5887 = vmatmul.mubr.bf16.gmra.mxu0 %v4339
        %v5888 = vpop.f32.mrf.mxu0
        %v5889 = vadd.f32 %v5696, %v5888
        %v5890 = vpop.f32.mrf.mxu0
        %v5891 = vadd.f32 %v5698, %v5890
        %v5892 = vpop.f32.mrf.mxu0
        %v5893 = vadd.f32 %v5700, %v5892
        %v5894 = vpop.f32.mrf.mxu0
        %v5895 = vadd.f32 %v5702, %v5894
        %5896 = vmatprep.mubr.bf16.mxu0 %v4344
        %5897 = vmatmul.mubr.bf16.gmra.mxu0 %v4343
        %v5898 = vpop.f32.mrf.mxu0
        %v5899 = vadd.f32 %v5706, %v5898
        %v5900 = vpop.f32.mrf.mxu0
        %v5901 = vadd.f32 %v5708, %v5900
        %v5902 = vpop.f32.mrf.mxu0
        %v5903 = vadd.f32 %v5710, %v5902
        %v5904 = vpop.f32.mrf.mxu0
        %v5905 = vadd.f32 %v5712, %v5904
        %5906 = vdwg.mxu0
        %v5907 = vmax.f32 %v5363, 0.0
        %v5908 = vmax.f32 %v5365, 0.0
        %v5909 = vmax.f32 %v5749, 0.0
        %v5910 = vmax.f32 %v5751, 0.0
        %v5911 = vmax.f32 %v5367, 0.0
        %v5912 = vmax.f32 %v5369, 0.0
        %v5913 = vmax.f32 %v5753, 0.0
        %v5914 = vmax.f32 %v5755, 0.0
        %v5915 = vmax.f32 %v5373, 0.0
        %v5916 = vmax.f32 %v5375, 0.0
        %v5917 = vmax.f32 %v5759, 0.0
        %v5918 = vmax.f32 %v5761, 0.0
        %v5919 = vmax.f32 %v5377, 0.0
        %v5920 = vmax.f32 %v5379, 0.0
        %v5921 = vmax.f32 %v5763, 0.0
        %v5922 = vmax.f32 %v5765, 0.0
        %v5923 = vmax.f32 %v5383, 0.0
        %v5924 = vmax.f32 %v5385, 0.0
        %v5925 = vmax.f32 %v5769, 0.0
        %v5926 = vmax.f32 %v5771, 0.0
        %v5927 = vmax.f32 %v5387, 0.0
        %v5928 = vmax.f32 %v5389, 0.0
        %v5929 = vmax.f32 %v5773, 0.0
        %v5930 = vmax.f32 %v5775, 0.0
        %v5931 = vmax.f32 %v5393, 0.0
        %v5932 = vmax.f32 %v5395, 0.0
        %v5933 = vmax.f32 %v5779, 0.0
        %v5934 = vmax.f32 %v5781, 0.0
        %v5935 = vmax.f32 %v5397, 0.0
        %v5936 = vmax.f32 %v5399, 0.0
        %v5937 = vmax.f32 %v5783, 0.0
        %v5938 = vmax.f32 %v5785, 0.0
        %v5939 = vmax.f32 %v5403, 0.0
        %v5940 = vmax.f32 %v5405, 0.0
        %v5941 = vmax.f32 %v5789, 0.0
        %v5942 = vmax.f32 %v5791, 0.0
        %v5943 = vmax.f32 %v5407, 0.0
        %v5944 = vmax.f32 %v5409, 0.0
        %v5945 = vmax.f32 %v5793, 0.0
        %v5946 = vmax.f32 %v5795, 0.0
        %v5947 = vmax.f32 %v5413, 0.0
        %v5948 = vmax.f32 %v5415, 0.0
        %v5949 = vmax.f32 %v5799, 0.0
        %v5950 = vmax.f32 %v5801, 0.0
        %v5951 = vmax.f32 %v5417, 0.0
        %v5952 = vmax.f32 %v5419, 0.0
        %v5953 = vmax.f32 %v5803, 0.0
        %v5954 = vmax.f32 %v5805, 0.0
        %v5955 = vmax.f32 %v5423, 0.0
        %v5956 = vmax.f32 %v5425, 0.0
        %v5957 = vmax.f32 %v5809, 0.0
        %v5958 = vmax.f32 %v5811, 0.0
        %v5959 = vmax.f32 %v5427, 0.0
        %v5960 = vmax.f32 %v5429, 0.0
        %v5961 = vmax.f32 %v5813, 0.0
        %v5962 = vmax.f32 %v5815, 0.0
        %v5963 = vmax.f32 %v5433, 0.0
        %v5964 = vmax.f32 %v5435, 0.0
        %v5965 = vmax.f32 %v5819, 0.0
        %v5966 = vmax.f32 %v5821, 0.0
        %v5967 = vmax.f32 %v5437, 0.0
        %v5968 = vmax.f32 %v5439, 0.0
        %v5969 = vmax.f32 %v5823, 0.0
        %v5970 = vmax.f32 %v5825, 0.0
        %v5971 = vmax.f32 %v5443, 0.0
        %v5972 = vmax.f32 %v5445, 0.0
        %v5973 = vmax.f32 %v5829, 0.0
        %v5974 = vmax.f32 %v5831, 0.0
        %v5975 = vmax.f32 %v5447, 0.0
        %v5976 = vmax.f32 %v5449, 0.0
        %v5977 = vmax.f32 %v5833, 0.0
        %v5978 = vmax.f32 %v5835, 0.0
        %v5979 = vmax.f32 %v5453, 0.0
        %v5980 = vmax.f32 %v5455, 0.0
        %v5981 = vmax.f32 %v5839, 0.0
        %v5982 = vmax.f32 %v5841, 0.0
        %v5983 = vmax.f32 %v5457, 0.0
        %v5984 = vmax.f32 %v5459, 0.0
        %v5985 = vmax.f32 %v5843, 0.0
        %v5986 = vmax.f32 %v5845, 0.0
        %v5987 = vmax.f32 %v5463, 0.0
        %v5988 = vmax.f32 %v5465, 0.0
        %v5989 = vmax.f32 %v5849, 0.0
        %v5990 = vmax.f32 %v5851, 0.0
        %v5991 = vmax.f32 %v5467, 0.0
        %v5992 = vmax.f32 %v5469, 0.0
        %v5993 = vmax.f32 %v5853, 0.0
        %v5994 = vmax.f32 %v5855, 0.0
        %v5995 = vmax.f32 %v5473, 0.0
        %v5996 = vmax.f32 %v5475, 0.0
        %v5997 = vmax.f32 %v5859, 0.0
        %v5998 = vmax.f32 %v5861, 0.0
        %v5999 = vmax.f32 %v5477, 0.0
        %v6000 = vmax.f32 %v5479, 0.0
        %v6001 = vmax.f32 %v5863, 0.0
        %v6002 = vmax.f32 %v5865, 0.0
        %v6003 = vmax.f32 %v5483, 0.0
        %v6004 = vmax.f32 %v5485, 0.0
        %v6005 = vmax.f32 %v5869, 0.0
        %v6006 = vmax.f32 %v5871, 0.0
        %v6007 = vmax.f32 %v5487, 0.0
        %v6008 = vmax.f32 %v5489, 0.0
        %v6009 = vmax.f32 %v5873, 0.0
        %v6010 = vmax.f32 %v5875, 0.0
        %v6011 = vmax.f32 %v5493, 0.0
        %v6012 = vmax.f32 %v5495, 0.0
        %v6013 = vmax.f32 %v5879, 0.0
        %v6014 = vmax.f32 %v5881, 0.0
        %v6015 = vmax.f32 %v5497, 0.0
        %v6016 = vmax.f32 %v5499, 0.0
        %v6017 = vmax.f32 %v5883, 0.0
        %v6018 = vmax.f32 %v5885, 0.0
        %v6019 = vmax.f32 %v5503, 0.0
        %v6020 = vmax.f32 %v5505, 0.0
        %v6021 = vmax.f32 %v5889, 0.0
        %v6022 = vmax.f32 %v5891, 0.0
        %v6023 = vmax.f32 %v5507, 0.0
        %v6024 = vmax.f32 %v5509, 0.0
        %v6025 = vmax.f32 %v5893, 0.0
        %v6026 = vmax.f32 %v5895, 0.0
        %v6027 = vmax.f32 %v5513, 0.0
        %v6028 = vmax.f32 %v5515, 0.0
        %v6029 = vmax.f32 %v5899, 0.0
        %v6030 = vmax.f32 %v5901, 0.0
        %v6031 = vmax.f32 %v5517, 0.0
        %v6032 = vmax.f32 %v5519, 0.0
        %v6033 = vmax.f32 %v5903, 0.0
        %v6034 = vmax.f32 %v5905, 0.0
        %v6035 = vpack.c.bf16 %v5911, %v5907
        %v6036 = vpack.c.bf16 %v5912, %v5908
        %v6037 = vpack.c.bf16 %v5913, %v5909
        %v6038 = vpack.c.bf16 %v5914, %v5910
        %v6039 = vpack.c.bf16 %v5919, %v5915
        %v6040 = vpack.c.bf16 %v5920, %v5916
        %v6041 = vpack.c.bf16 %v5921, %v5917
        %v6042 = vpack.c.bf16 %v5922, %v5918
        %v6043 = vpack.c.bf16 %v5927, %v5923
        %v6044 = vpack.c.bf16 %v5928, %v5924
        %v6045 = vpack.c.bf16 %v5929, %v5925
        %v6046 = vpack.c.bf16 %v5930, %v5926
        %v6047 = vpack.c.bf16 %v5935, %v5931
        %v6048 = vpack.c.bf16 %v5936, %v5932
        %v6049 = vpack.c.bf16 %v5937, %v5933
        %v6050 = vpack.c.bf16 %v5938, %v5934
        %v6051 = vpack.c.bf16 %v5943, %v5939
        %v6052 = vpack.c.bf16 %v5944, %v5940
        %v6053 = vpack.c.bf16 %v5945, %v5941
        %v6054 = vpack.c.bf16 %v5946, %v5942
        %v6055 = vpack.c.bf16 %v5951, %v5947
        %v6056 = vpack.c.bf16 %v5952, %v5948
        %v6057 = vpack.c.bf16 %v5953, %v5949
        %v6058 = vpack.c.bf16 %v5954, %v5950
        %v6059 = vpack.c.bf16 %v5959, %v5955
        %v6060 = vpack.c.bf16 %v5960, %v5956
        %v6061 = vpack.c.bf16 %v5961, %v5957
        %v6062 = vpack.c.bf16 %v5962, %v5958
        %v6063 = vpack.c.bf16 %v5967, %v5963
        %v6064 = vpack.c.bf16 %v5968, %v5964
        %v6065 = vpack.c.bf16 %v5969, %v5965
        %v6066 = vpack.c.bf16 %v5970, %v5966
        %v6067 = vpack.c.bf16 %v5975, %v5971
        %v6068 = vpack.c.bf16 %v5976, %v5972
        %v6069 = vpack.c.bf16 %v5977, %v5973
        %v6070 = vpack.c.bf16 %v5978, %v5974
        %v6071 = vpack.c.bf16 %v5983, %v5979
        %v6072 = vpack.c.bf16 %v5984, %v5980
        %v6073 = vpack.c.bf16 %v5985, %v5981
        %v6074 = vpack.c.bf16 %v5986, %v5982
        %v6075 = vpack.c.bf16 %v5991, %v5987
        %v6076 = vpack.c.bf16 %v5992, %v5988
        %v6077 = vpack.c.bf16 %v5993, %v5989
        %v6078 = vpack.c.bf16 %v5994, %v5990
        %v6079 = vpack.c.bf16 %v5999, %v5995
        %v6080 = vpack.c.bf16 %v6000, %v5996
        %v6081 = vpack.c.bf16 %v6001, %v5997
        %v6082 = vpack.c.bf16 %v6002, %v5998
        %v6083 = vpack.c.bf16 %v6007, %v6003
        %v6084 = vpack.c.bf16 %v6008, %v6004
        %v6085 = vpack.c.bf16 %v6009, %v6005
        %v6086 = vpack.c.bf16 %v6010, %v6006
        %v6087 = vpack.c.bf16 %v6015, %v6011
        %v6088 = vpack.c.bf16 %v6016, %v6012
        %v6089 = vpack.c.bf16 %v6017, %v6013
        %v6090 = vpack.c.bf16 %v6018, %v6014
        %v6091 = vpack.c.bf16 %v6023, %v6019
        %v6092 = vpack.c.bf16 %v6024, %v6020
        %v6093 = vpack.c.bf16 %v6025, %v6021
        %v6094 = vpack.c.bf16 %v6026, %v6022
        %v6095 = vpack.c.bf16 %v6031, %v6027
        %v6096 = vpack.c.bf16 %v6032, %v6028
        %v6097 = vpack.c.bf16 %v6033, %v6029
        %v6098 = vpack.c.bf16 %v6034, %v6030
        %v6099 = vld [vmem:[%s5] sm:$0xff]
        %v6100 = vld [vmem:[%s5 + $0x8] sm:$0xff]
        %v6101 = vld [vmem:[%s5 + $0x10] sm:$0xff]
        %v6102 = vld [vmem:[%s5 + $0x18] sm:$0xff]
        %v6103 = vld [vmem:[%s5 + $0x20] sm:$0xff]
        %v6104 = vld [vmem:[%s5 + $0x28] sm:$0xff]
        %v6105 = vld [vmem:[%s5 + $0x30] sm:$0xff]
        %v6106 = vld [vmem:[%s5 + $0x38] sm:$0xff]
        %v6107 = vld [vmem:[%s5 + $0x40] sm:$0xff]
        %v6108 = vld [vmem:[%s5 + $0x48] sm:$0xff]
        %v6109 = vld [vmem:[%s5 + $0x50] sm:$0xff]
        %v6110 = vld [vmem:[%s5 + $0x58] sm:$0xff]
        %v6111 = vld [vmem:[%s5 + $0x60] sm:$0xff]
        %v6112 = vld [vmem:[%s5 + $0x68] sm:$0xff]
        %v6113 = vld [vmem:[%s5 + $0x70] sm:$0xff]
        %v6114 = vld [vmem:[%s5 + $0x78] sm:$0xff]
        %v6115 = vld [vmem:[%s5 + $0x80] sm:$0xff]
        %v6116 = vld [vmem:[%s5 + $0x88] sm:$0xff]
        %v6117 = vld [vmem:[%s5 + $0x90] sm:$0xff]
        %v6118 = vld [vmem:[%s5 + $0x98] sm:$0xff]
        %v6119 = vld [vmem:[%s5 + $0xa0] sm:$0xff]
        %v6120 = vld [vmem:[%s5 + $0xa8] sm:$0xff]
        %v6121 = vld [vmem:[%s5 + $0xb0] sm:$0xff]
        %v6122 = vld [vmem:[%s5 + $0xb8] sm:$0xff]
        %v6123 = vld [vmem:[%s5 + $0xc0] sm:$0xff]
        %v6124 = vld [vmem:[%s5 + $0xc8] sm:$0xff]
        %v6125 = vld [vmem:[%s5 + $0xd0] sm:$0xff]
        %v6126 = vld [vmem:[%s5 + $0xd8] sm:$0xff]
        %v6127 = vld [vmem:[%s5 + $0xe0] sm:$0xff]
        %v6128 = vld [vmem:[%s5 + $0xe8] sm:$0xff]
        %v6129 = vld [vmem:[%s5 + $0xf0] sm:$0xff]
        %v6130 = vld [vmem:[%s5 + $0xf8] sm:$0xff]
        %v6131 = vld [vmem:[%s5 + $0x100] sm:$0xff]
        %v6132 = vld [vmem:[%s5 + $0x108] sm:$0xff]
        %v6133 = vld [vmem:[%s5 + $0x110] sm:$0xff]
        %v6134 = vld [vmem:[%s5 + $0x118] sm:$0xff]
        %v6135 = vld [vmem:[%s5 + $0x120] sm:$0xff]
        %v6136 = vld [vmem:[%s5 + $0x128] sm:$0xff]
        %v6137 = vld [vmem:[%s5 + $0x130] sm:$0xff]
        %v6138 = vld [vmem:[%s5 + $0x138] sm:$0xff]
        %v6139 = vld [vmem:[%s5 + $0x140] sm:$0xff]
        %v6140 = vld [vmem:[%s5 + $0x148] sm:$0xff]
        %v6141 = vld [vmem:[%s5 + $0x150] sm:$0xff]
        %v6142 = vld [vmem:[%s5 + $0x158] sm:$0xff]
        %v6143 = vld [vmem:[%s5 + $0x160] sm:$0xff]
        %v6144 = vld [vmem:[%s5 + $0x168] sm:$0xff]
        %v6145 = vld [vmem:[%s5 + $0x170] sm:$0xff]
        %v6146 = vld [vmem:[%s5 + $0x178] sm:$0xff]
        %v6147 = vld [vmem:[%s5 + $0x180] sm:$0xff]
        %v6148 = vld [vmem:[%s5 + $0x188] sm:$0xff]
        %v6149 = vld [vmem:[%s5 + $0x190] sm:$0xff]
        %v6150 = vld [vmem:[%s5 + $0x198] sm:$0xff]
        %v6151 = vld [vmem:[%s5 + $0x1a0] sm:$0xff]
        %v6152 = vld [vmem:[%s5 + $0x1a8] sm:$0xff]
        %v6153 = vld [vmem:[%s5 + $0x1b0] sm:$0xff]
        %v6154 = vld [vmem:[%s5 + $0x1b8] sm:$0xff]
        %v6155 = vld [vmem:[%s5 + $0x1c0] sm:$0xff]
        %v6156 = vld [vmem:[%s5 + $0x1c8] sm:$0xff]
        %v6157 = vld [vmem:[%s5 + $0x1d0] sm:$0xff]
        %v6158 = vld [vmem:[%s5 + $0x1d8] sm:$0xff]
        %v6159 = vld [vmem:[%s5 + $0x1e0] sm:$0xff]
        %v6160 = vld [vmem:[%s5 + $0x1e8] sm:$0xff]
        %v6161 = vld [vmem:[%s5 + $0x1f0] sm:$0xff]
        %v6162 = vld [vmem:[%s5 + $0x1f8] sm:$0xff]
        %v6163 = vld [vmem:[%s5 + $0x200] sm:$0xff]
        %v6164 = vld [vmem:[%s5 + $0x208] sm:$0xff]
        %v6165 = vld [vmem:[%s5 + $0x210] sm:$0xff]
        %v6166 = vld [vmem:[%s5 + $0x218] sm:$0xff]
        %v6167 = vld [vmem:[%s5 + $0x220] sm:$0xff]
        %v6168 = vld [vmem:[%s5 + $0x228] sm:$0xff]
        %v6169 = vld [vmem:[%s5 + $0x230] sm:$0xff]
        %v6170 = vld [vmem:[%s5 + $0x238] sm:$0xff]
        %v6171 = vld [vmem:[%s5 + $0x240] sm:$0xff]
        %v6172 = vld [vmem:[%s5 + $0x248] sm:$0xff]
        %v6173 = vld [vmem:[%s5 + $0x250] sm:$0xff]
        %v6174 = vld [vmem:[%s5 + $0x258] sm:$0xff]
        %v6175 = vld [vmem:[%s5 + $0x260] sm:$0xff]
        %v6176 = vld [vmem:[%s5 + $0x268] sm:$0xff]
        %v6177 = vld [vmem:[%s5 + $0x270] sm:$0xff]
        %v6178 = vld [vmem:[%s5 + $0x278] sm:$0xff]
        %v6179 = vld [vmem:[%s5 + $0x280] sm:$0xff]
        %v6180 = vld [vmem:[%s5 + $0x288] sm:$0xff]
        %v6181 = vld [vmem:[%s5 + $0x290] sm:$0xff]
        %v6182 = vld [vmem:[%s5 + $0x298] sm:$0xff]
        %v6183 = vld [vmem:[%s5 + $0x2a0] sm:$0xff]
        %v6184 = vld [vmem:[%s5 + $0x2a8] sm:$0xff]
        %v6185 = vld [vmem:[%s5 + $0x2b0] sm:$0xff]
        %v6186 = vld [vmem:[%s5 + $0x2b8] sm:$0xff]
        %v6187 = vld [vmem:[%s5 + $0x2c0] sm:$0xff]
        %v6188 = vld [vmem:[%s5 + $0x2c8] sm:$0xff]
        %v6189 = vld [vmem:[%s5 + $0x2d0] sm:$0xff]
        %v6190 = vld [vmem:[%s5 + $0x2d8] sm:$0xff]
        %v6191 = vld [vmem:[%s5 + $0x2e0] sm:$0xff]
        %v6192 = vld [vmem:[%s5 + $0x2e8] sm:$0xff]
        %v6193 = vld [vmem:[%s5 + $0x2f0] sm:$0xff]
        %v6194 = vld [vmem:[%s5 + $0x2f8] sm:$0xff]
        %v6195 = vld [vmem:[%s5 + $0x300] sm:$0xff]
        %v6196 = vld [vmem:[%s5 + $0x308] sm:$0xff]
        %v6197 = vld [vmem:[%s5 + $0x310] sm:$0xff]
        %v6198 = vld [vmem:[%s5 + $0x318] sm:$0xff]
        %v6199 = vld [vmem:[%s5 + $0x320] sm:$0xff]
        %v6200 = vld [vmem:[%s5 + $0x328] sm:$0xff]
        %v6201 = vld [vmem:[%s5 + $0x330] sm:$0xff]
        %v6202 = vld [vmem:[%s5 + $0x338] sm:$0xff]
        %v6203 = vld [vmem:[%s5 + $0x340] sm:$0xff]
        %v6204 = vld [vmem:[%s5 + $0x348] sm:$0xff]
        %v6205 = vld [vmem:[%s5 + $0x350] sm:$0xff]
        %v6206 = vld [vmem:[%s5 + $0x358] sm:$0xff]
        %v6207 = vld [vmem:[%s5 + $0x360] sm:$0xff]
        %v6208 = vld [vmem:[%s5 + $0x368] sm:$0xff]
        %v6209 = vld [vmem:[%s5 + $0x370] sm:$0xff]
        %v6210 = vld [vmem:[%s5 + $0x378] sm:$0xff]
        %v6211 = vld [vmem:[%s5 + $0x380] sm:$0xff]
        %v6212 = vld [vmem:[%s5 + $0x388] sm:$0xff]
        %v6213 = vld [vmem:[%s5 + $0x390] sm:$0xff]
        %v6214 = vld [vmem:[%s5 + $0x398] sm:$0xff]
        %v6215 = vld [vmem:[%s5 + $0x3a0] sm:$0xff]
        %v6216 = vld [vmem:[%s5 + $0x3a8] sm:$0xff]
        %v6217 = vld [vmem:[%s5 + $0x3b0] sm:$0xff]
        %v6218 = vld [vmem:[%s5 + $0x3b8] sm:$0xff]
        %v6219 = vld [vmem:[%s5 + $0x3c0] sm:$0xff]
        %v6220 = vld [vmem:[%s5 + $0x3c8] sm:$0xff]
        %v6221 = vld [vmem:[%s5 + $0x3d0] sm:$0xff]
        %v6222 = vld [vmem:[%s5 + $0x3d8] sm:$0xff]
        %v6223 = vld [vmem:[%s5 + $0x3e0] sm:$0xff]
        %v6224 = vld [vmem:[%s5 + $0x3e8] sm:$0xff]
        %v6225 = vld [vmem:[%s5 + $0x3f0] sm:$0xff]
        %v6226 = vld [vmem:[%s5 + $0x3f8] sm:$0xff]
        %v6227 = vld [vmem:[%s6] sm:$0xf]
        %v6229 = vlaneseq
        %v6230 = vshrl.u32 %v6229, 7
        %v6231 = vsub.s32 0, %v6230
        %v6232 = vrot.slane %v6227, %v6231
        %v6233 = vlaneseq
        %v6234 = vshrl.u32 %v6233, 7
        %v6235 = vsub.s32 1, %v6234
        %v6236 = vrot.slane %v6227, %v6235
        %v6237 = vlaneseq
        %v6238 = vshrl.u32 %v6237, 7
        %v6239 = vsub.s32 2, %v6238
        %v6240 = vrot.slane %v6227, %v6239
        %v6241 = vlaneseq
        %v6242 = vshrl.u32 %v6241, 7
        %v6243 = vsub.s32 3, %v6242
        %v6244 = vrot.slane %v6227, %v6243
        %v6377 = vunpack.c.l.b16 %v6099
        %v6378 = vunpack.c.h.b16 %v6099
        %v6379 = vunpack.c.l.b16 %v6100
        %v6380 = vunpack.c.h.b16 %v6100
        %v6381 = vunpack.c.l.b16 %v6101
        %v6382 = vunpack.c.h.b16 %v6101
        %v6383 = vunpack.c.l.b16 %v6102
        %v6384 = vunpack.c.h.b16 %v6102
        %v6385 = vunpack.c.l.b16 %v6103
        %v6386 = vunpack.c.h.b16 %v6103
        %v6387 = vunpack.c.l.b16 %v6104
        %v6388 = vunpack.c.h.b16 %v6104
        %v6389 = vunpack.c.l.b16 %v6105
        %v6390 = vunpack.c.h.b16 %v6105
        %v6391 = vunpack.c.l.b16 %v6106
        %v6392 = vunpack.c.h.b16 %v6106
        %v6393 = vunpack.c.l.b16 %v6107
        %v6394 = vunpack.c.h.b16 %v6107
        %v6395 = vunpack.c.l.b16 %v6108
        %v6396 = vunpack.c.h.b16 %v6108
        %v6397 = vunpack.c.l.b16 %v6109
        %v6398 = vunpack.c.h.b16 %v6109
        %v6399 = vunpack.c.l.b16 %v6110
        %v6400 = vunpack.c.h.b16 %v6110
        %v6401 = vunpack.c.l.b16 %v6111
        %v6402 = vunpack.c.h.b16 %v6111
        %v6403 = vunpack.c.l.b16 %v6112
        %v6404 = vunpack.c.h.b16 %v6112
        %v6405 = vunpack.c.l.b16 %v6113
        %v6406 = vunpack.c.h.b16 %v6113
        %v6407 = vunpack.c.l.b16 %v6114
        %v6408 = vunpack.c.h.b16 %v6114
        %v6409 = vunpack.c.l.b16 %v6115
        %v6410 = vunpack.c.h.b16 %v6115
        %v6411 = vunpack.c.l.b16 %v6116
        %v6412 = vunpack.c.h.b16 %v6116
        %v6413 = vunpack.c.l.b16 %v6117
        %v6414 = vunpack.c.h.b16 %v6117
        %v6415 = vunpack.c.l.b16 %v6118
        %v6416 = vunpack.c.h.b16 %v6118
        %v6417 = vunpack.c.l.b16 %v6119
        %v6418 = vunpack.c.h.b16 %v6119
        %v6419 = vunpack.c.l.b16 %v6120
        %v6420 = vunpack.c.h.b16 %v6120
        %v6421 = vunpack.c.l.b16 %v6121
        %v6422 = vunpack.c.h.b16 %v6121
        %v6423 = vunpack.c.l.b16 %v6122
        %v6424 = vunpack.c.h.b16 %v6122
        %v6425 = vunpack.c.l.b16 %v6123
        %v6426 = vunpack.c.h.b16 %v6123
        %v6427 = vunpack.c.l.b16 %v6124
        %v6428 = vunpack.c.h.b16 %v6124
        %v6429 = vunpack.c.l.b16 %v6125
        %v6430 = vunpack.c.h.b16 %v6125
        %v6431 = vunpack.c.l.b16 %v6126
        %v6432 = vunpack.c.h.b16 %v6126
        %v6433 = vunpack.c.l.b16 %v6127
        %v6434 = vunpack.c.h.b16 %v6127
        %v6435 = vunpack.c.l.b16 %v6128
        %v6436 = vunpack.c.h.b16 %v6128
        %v6437 = vunpack.c.l.b16 %v6129
        %v6438 = vunpack.c.h.b16 %v6129
        %v6439 = vunpack.c.l.b16 %v6130
        %v6440 = vunpack.c.h.b16 %v6130
        %v6441 = vunpack.c.l.b16 %v6131
        %v6442 = vunpack.c.h.b16 %v6131
        %v6443 = vunpack.c.l.b16 %v6132
        %v6444 = vunpack.c.h.b16 %v6132
        %v6445 = vunpack.c.l.b16 %v6133
        %v6446 = vunpack.c.h.b16 %v6133
        %v6447 = vunpack.c.l.b16 %v6134
        %v6448 = vunpack.c.h.b16 %v6134
        %v6449 = vunpack.c.l.b16 %v6135
        %v6450 = vunpack.c.h.b16 %v6135
        %v6451 = vunpack.c.l.b16 %v6136
        %v6452 = vunpack.c.h.b16 %v6136
        %v6453 = vunpack.c.l.b16 %v6137
        %v6454 = vunpack.c.h.b16 %v6137
        %v6455 = vunpack.c.l.b16 %v6138
        %v6456 = vunpack.c.h.b16 %v6138
        %v6457 = vunpack.c.l.b16 %v6139
        %v6458 = vunpack.c.h.b16 %v6139
        %v6459 = vunpack.c.l.b16 %v6140
        %v6460 = vunpack.c.h.b16 %v6140
        %v6461 = vunpack.c.l.b16 %v6141
        %v6462 = vunpack.c.h.b16 %v6141
        %v6463 = vunpack.c.l.b16 %v6142
        %v6464 = vunpack.c.h.b16 %v6142
        %v6465 = vunpack.c.l.b16 %v6143
        %v6466 = vunpack.c.h.b16 %v6143
        %v6467 = vunpack.c.l.b16 %v6144
        %v6468 = vunpack.c.h.b16 %v6144
        %v6469 = vunpack.c.l.b16 %v6145
        %v6470 = vunpack.c.h.b16 %v6145
        %v6471 = vunpack.c.l.b16 %v6146
        %v6472 = vunpack.c.h.b16 %v6146
        %v6473 = vunpack.c.l.b16 %v6147
        %v6474 = vunpack.c.h.b16 %v6147
        %v6475 = vunpack.c.l.b16 %v6148
        %v6476 = vunpack.c.h.b16 %v6148
        %v6477 = vunpack.c.l.b16 %v6149
        %v6478 = vunpack.c.h.b16 %v6149
        %v6479 = vunpack.c.l.b16 %v6150
        %v6480 = vunpack.c.h.b16 %v6150
        %v6481 = vunpack.c.l.b16 %v6151
        %v6482 = vunpack.c.h.b16 %v6151
        %v6483 = vunpack.c.l.b16 %v6152
        %v6484 = vunpack.c.h.b16 %v6152
        %v6485 = vunpack.c.l.b16 %v6153
        %v6486 = vunpack.c.h.b16 %v6153
        %v6487 = vunpack.c.l.b16 %v6154
        %v6488 = vunpack.c.h.b16 %v6154
        %v6489 = vunpack.c.l.b16 %v6155
        %v6490 = vunpack.c.h.b16 %v6155
        %v6491 = vunpack.c.l.b16 %v6156
        %v6492 = vunpack.c.h.b16 %v6156
        %v6493 = vunpack.c.l.b16 %v6157
        %v6494 = vunpack.c.h.b16 %v6157
        %v6495 = vunpack.c.l.b16 %v6158
        %v6496 = vunpack.c.h.b16 %v6158
        %v6497 = vunpack.c.l.b16 %v6159
        %v6498 = vunpack.c.h.b16 %v6159
        %v6499 = vunpack.c.l.b16 %v6160
        %v6500 = vunpack.c.h.b16 %v6160
        %v6501 = vunpack.c.l.b16 %v6161
        %v6502 = vunpack.c.h.b16 %v6161
        %v6503 = vunpack.c.l.b16 %v6162
        %v6504 = vunpack.c.h.b16 %v6162
        %v6505 = vunpack.c.l.b16 %v6163
        %v6506 = vunpack.c.h.b16 %v6163
        %v6507 = vunpack.c.l.b16 %v6164
        %v6508 = vunpack.c.h.b16 %v6164
        %v6509 = vunpack.c.l.b16 %v6165
        %v6510 = vunpack.c.h.b16 %v6165
        %v6511 = vunpack.c.l.b16 %v6166
        %v6512 = vunpack.c.h.b16 %v6166
        %v6513 = vunpack.c.l.b16 %v6167
        %v6514 = vunpack.c.h.b16 %v6167
        %v6515 = vunpack.c.l.b16 %v6168
        %v6516 = vunpack.c.h.b16 %v6168
        %v6517 = vunpack.c.l.b16 %v6169
        %v6518 = vunpack.c.h.b16 %v6169
        %v6519 = vunpack.c.l.b16 %v6170
        %v6520 = vunpack.c.h.b16 %v6170
        %v6521 = vunpack.c.l.b16 %v6171
        %v6522 = vunpack.c.h.b16 %v6171
        %v6523 = vunpack.c.l.b16 %v6172
        %v6524 = vunpack.c.h.b16 %v6172
        %v6525 = vunpack.c.l.b16 %v6173
        %v6526 = vunpack.c.h.b16 %v6173
        %v6527 = vunpack.c.l.b16 %v6174
        %v6528 = vunpack.c.h.b16 %v6174
        %v6529 = vunpack.c.l.b16 %v6175
        %v6530 = vunpack.c.h.b16 %v6175
        %v6531 = vunpack.c.l.b16 %v6176
        %v6532 = vunpack.c.h.b16 %v6176
        %v6533 = vunpack.c.l.b16 %v6177
        %v6534 = vunpack.c.h.b16 %v6177
        %v6535 = vunpack.c.l.b16 %v6178
        %v6536 = vunpack.c.h.b16 %v6178
        %v6537 = vunpack.c.l.b16 %v6179
        %v6538 = vunpack.c.h.b16 %v6179
        %v6539 = vunpack.c.l.b16 %v6180
        %v6540 = vunpack.c.h.b16 %v6180
        %v6541 = vunpack.c.l.b16 %v6181
        %v6542 = vunpack.c.h.b16 %v6181
        %v6543 = vunpack.c.l.b16 %v6182
        %v6544 = vunpack.c.h.b16 %v6182
        %v6545 = vunpack.c.l.b16 %v6183
        %v6546 = vunpack.c.h.b16 %v6183
        %v6547 = vunpack.c.l.b16 %v6184
        %v6548 = vunpack.c.h.b16 %v6184
        %v6549 = vunpack.c.l.b16 %v6185
        %v6550 = vunpack.c.h.b16 %v6185
        %v6551 = vunpack.c.l.b16 %v6186
        %v6552 = vunpack.c.h.b16 %v6186
        %v6553 = vunpack.c.l.b16 %v6187
        %v6554 = vunpack.c.h.b16 %v6187
        %v6555 = vunpack.c.l.b16 %v6188
        %v6556 = vunpack.c.h.b16 %v6188
        %v6557 = vunpack.c.l.b16 %v6189
        %v6558 = vunpack.c.h.b16 %v6189
        %v6559 = vunpack.c.l.b16 %v6190
        %v6560 = vunpack.c.h.b16 %v6190
        %v6561 = vunpack.c.l.b16 %v6191
        %v6562 = vunpack.c.h.b16 %v6191
        %v6563 = vunpack.c.l.b16 %v6192
        %v6564 = vunpack.c.h.b16 %v6192
        %v6565 = vunpack.c.l.b16 %v6193
        %v6566 = vunpack.c.h.b16 %v6193
        %v6567 = vunpack.c.l.b16 %v6194
        %v6568 = vunpack.c.h.b16 %v6194
        %v6569 = vunpack.c.l.b16 %v6195
        %v6570 = vunpack.c.h.b16 %v6195
        %v6571 = vunpack.c.l.b16 %v6196
        %v6572 = vunpack.c.h.b16 %v6196
        %v6573 = vunpack.c.l.b16 %v6197
        %v6574 = vunpack.c.h.b16 %v6197
        %v6575 = vunpack.c.l.b16 %v6198
        %v6576 = vunpack.c.h.b16 %v6198
        %v6577 = vunpack.c.l.b16 %v6199
        %v6578 = vunpack.c.h.b16 %v6199
        %v6579 = vunpack.c.l.b16 %v6200
        %v6580 = vunpack.c.h.b16 %v6200
        %v6581 = vunpack.c.l.b16 %v6201
        %v6582 = vunpack.c.h.b16 %v6201
        %v6583 = vunpack.c.l.b16 %v6202
        %v6584 = vunpack.c.h.b16 %v6202
        %v6585 = vunpack.c.l.b16 %v6203
        %v6586 = vunpack.c.h.b16 %v6203
        %v6587 = vunpack.c.l.b16 %v6204
        %v6588 = vunpack.c.h.b16 %v6204
        %v6589 = vunpack.c.l.b16 %v6205
        %v6590 = vunpack.c.h.b16 %v6205
        %v6591 = vunpack.c.l.b16 %v6206
        %v6592 = vunpack.c.h.b16 %v6206
        %v6593 = vunpack.c.l.b16 %v6207
        %v6594 = vunpack.c.h.b16 %v6207
        %v6595 = vunpack.c.l.b16 %v6208
        %v6596 = vunpack.c.h.b16 %v6208
        %v6597 = vunpack.c.l.b16 %v6209
        %v6598 = vunpack.c.h.b16 %v6209
        %v6599 = vunpack.c.l.b16 %v6210
        %v6600 = vunpack.c.h.b16 %v6210
        %v6601 = vunpack.c.l.b16 %v6211
        %v6602 = vunpack.c.h.b16 %v6211
        %v6603 = vunpack.c.l.b16 %v6212
        %v6604 = vunpack.c.h.b16 %v6212
        %v6605 = vunpack.c.l.b16 %v6213
        %v6606 = vunpack.c.h.b16 %v6213
        %v6607 = vunpack.c.l.b16 %v6214
        %v6608 = vunpack.c.h.b16 %v6214
        %v6609 = vunpack.c.l.b16 %v6215
        %v6610 = vunpack.c.h.b16 %v6215
        %v6611 = vunpack.c.l.b16 %v6216
        %v6612 = vunpack.c.h.b16 %v6216
        %v6613 = vunpack.c.l.b16 %v6217
        %v6614 = vunpack.c.h.b16 %v6217
        %v6615 = vunpack.c.l.b16 %v6218
        %v6616 = vunpack.c.h.b16 %v6218
        %v6617 = vunpack.c.l.b16 %v6219
        %v6618 = vunpack.c.h.b16 %v6219
        %v6619 = vunpack.c.l.b16 %v6220
        %v6620 = vunpack.c.h.b16 %v6220
        %v6621 = vunpack.c.l.b16 %v6221
        %v6622 = vunpack.c.h.b16 %v6221
        %v6623 = vunpack.c.l.b16 %v6222
        %v6624 = vunpack.c.h.b16 %v6222
        %v6625 = vunpack.c.l.b16 %v6223
        %v6626 = vunpack.c.h.b16 %v6223
        %v6627 = vunpack.c.l.b16 %v6224
        %v6628 = vunpack.c.h.b16 %v6224
        %v6629 = vunpack.c.l.b16 %v6225
        %v6630 = vunpack.c.h.b16 %v6225
        %v6631 = vunpack.c.l.b16 %v6226
        %v6632 = vunpack.c.h.b16 %v6226
        %v6633 = vpack.c.b16 %v6381, %v6377
        %v6634 = vpack.c.b16 %v6382, %v6378
        %v6635 = vpack.c.b16 %v6383, %v6379
        %v6636 = vpack.c.b16 %v6384, %v6380
        %v6637 = vpack.c.b16 %v6389, %v6385
        %v6638 = vpack.c.b16 %v6390, %v6386
        %v6639 = vpack.c.b16 %v6391, %v6387
        %v6640 = vpack.c.b16 %v6392, %v6388
        %v6641 = vpack.c.b16 %v6397, %v6393
        %v6642 = vpack.c.b16 %v6398, %v6394
        %v6643 = vpack.c.b16 %v6399, %v6395
        %v6644 = vpack.c.b16 %v6400, %v6396
        %v6645 = vpack.c.b16 %v6405, %v6401
        %v6646 = vpack.c.b16 %v6406, %v6402
        %v6647 = vpack.c.b16 %v6407, %v6403
        %v6648 = vpack.c.b16 %v6408, %v6404
        %v6649 = vpack.c.b16 %v6413, %v6409
        %v6650 = vpack.c.b16 %v6414, %v6410
        %v6651 = vpack.c.b16 %v6415, %v6411
        %v6652 = vpack.c.b16 %v6416, %v6412
        %v6653 = vpack.c.b16 %v6421, %v6417
        %v6654 = vpack.c.b16 %v6422, %v6418
        %v6655 = vpack.c.b16 %v6423, %v6419
        %v6656 = vpack.c.b16 %v6424, %v6420
        %v6657 = vpack.c.b16 %v6429, %v6425
        %v6658 = vpack.c.b16 %v6430, %v6426
        %v6659 = vpack.c.b16 %v6431, %v6427
        %v6660 = vpack.c.b16 %v6432, %v6428
        %v6661 = vpack.c.b16 %v6437, %v6433
        %v6662 = vpack.c.b16 %v6438, %v6434
        %v6663 = vpack.c.b16 %v6439, %v6435
        %v6664 = vpack.c.b16 %v6440, %v6436
        %v6665 = vpack.c.b16 %v6445, %v6441
        %v6666 = vpack.c.b16 %v6446, %v6442
        %v6667 = vpack.c.b16 %v6447, %v6443
        %v6668 = vpack.c.b16 %v6448, %v6444
        %v6669 = vpack.c.b16 %v6453, %v6449
        %v6670 = vpack.c.b16 %v6454, %v6450
        %v6671 = vpack.c.b16 %v6455, %v6451
        %v6672 = vpack.c.b16 %v6456, %v6452
        %v6673 = vpack.c.b16 %v6461, %v6457
        %v6674 = vpack.c.b16 %v6462, %v6458
        %v6675 = vpack.c.b16 %v6463, %v6459
        %v6676 = vpack.c.b16 %v6464, %v6460
        %v6677 = vpack.c.b16 %v6469, %v6465
        %v6678 = vpack.c.b16 %v6470, %v6466
        %v6679 = vpack.c.b16 %v6471, %v6467
        %v6680 = vpack.c.b16 %v6472, %v6468
        %v6681 = vpack.c.b16 %v6477, %v6473
        %v6682 = vpack.c.b16 %v6478, %v6474
        %v6683 = vpack.c.b16 %v6479, %v6475
        %v6684 = vpack.c.b16 %v6480, %v6476
        %v6685 = vpack.c.b16 %v6485, %v6481
        %v6686 = vpack.c.b16 %v6486, %v6482
        %v6687 = vpack.c.b16 %v6487, %v6483
        %v6688 = vpack.c.b16 %v6488, %v6484
        %v6689 = vpack.c.b16 %v6493, %v6489
        %v6690 = vpack.c.b16 %v6494, %v6490
        %v6691 = vpack.c.b16 %v6495, %v6491
        %v6692 = vpack.c.b16 %v6496, %v6492
        %v6693 = vpack.c.b16 %v6501, %v6497
        %v6694 = vpack.c.b16 %v6502, %v6498
        %v6695 = vpack.c.b16 %v6503, %v6499
        %v6696 = vpack.c.b16 %v6504, %v6500
        %v6697 = vpack.c.b16 %v6509, %v6505
        %v6698 = vpack.c.b16 %v6510, %v6506
        %v6699 = vpack.c.b16 %v6511, %v6507
        %v6700 = vpack.c.b16 %v6512, %v6508
        %v6701 = vpack.c.b16 %v6517, %v6513
        %v6702 = vpack.c.b16 %v6518, %v6514
        %v6703 = vpack.c.b16 %v6519, %v6515
        %v6704 = vpack.c.b16 %v6520, %v6516
        %v6705 = vpack.c.b16 %v6525, %v6521
        %v6706 = vpack.c.b16 %v6526, %v6522
        %v6707 = vpack.c.b16 %v6527, %v6523
        %v6708 = vpack.c.b16 %v6528, %v6524
        %v6709 = vpack.c.b16 %v6533, %v6529
        %v6710 = vpack.c.b16 %v6534, %v6530
        %v6711 = vpack.c.b16 %v6535, %v6531
        %v6712 = vpack.c.b16 %v6536, %v6532
        %v6713 = vpack.c.b16 %v6541, %v6537
        %v6714 = vpack.c.b16 %v6542, %v6538
        %v6715 = vpack.c.b16 %v6543, %v6539
        %v6716 = vpack.c.b16 %v6544, %v6540
        %v6717 = vpack.c.b16 %v6549, %v6545
        %v6718 = vpack.c.b16 %v6550, %v6546
        %v6719 = vpack.c.b16 %v6551, %v6547
        %v6720 = vpack.c.b16 %v6552, %v6548
        %v6721 = vpack.c.b16 %v6557, %v6553
        %v6722 = vpack.c.b16 %v6558, %v6554
        %v6723 = vpack.c.b16 %v6559, %v6555
        %v6724 = vpack.c.b16 %v6560, %v6556
        %v6725 = vpack.c.b16 %v6565, %v6561
        %v6726 = vpack.c.b16 %v6566, %v6562
        %v6727 = vpack.c.b16 %v6567, %v6563
        %v6728 = vpack.c.b16 %v6568, %v6564
        %v6729 = vpack.c.b16 %v6573, %v6569
        %v6730 = vpack.c.b16 %v6574, %v6570
        %v6731 = vpack.c.b16 %v6575, %v6571
        %v6732 = vpack.c.b16 %v6576, %v6572
        %v6733 = vpack.c.b16 %v6581, %v6577
        %v6734 = vpack.c.b16 %v6582, %v6578
        %v6735 = vpack.c.b16 %v6583, %v6579
        %v6736 = vpack.c.b16 %v6584, %v6580
        %v6737 = vpack.c.b16 %v6589, %v6585
        %v6738 = vpack.c.b16 %v6590, %v6586
        %v6739 = vpack.c.b16 %v6591, %v6587
        %v6740 = vpack.c.b16 %v6592, %v6588
        %v6741 = vpack.c.b16 %v6597, %v6593
        %v6742 = vpack.c.b16 %v6598, %v6594
        %v6743 = vpack.c.b16 %v6599, %v6595
        %v6744 = vpack.c.b16 %v6600, %v6596
        %v6745 = vpack.c.b16 %v6605, %v6601
        %v6746 = vpack.c.b16 %v6606, %v6602
        %v6747 = vpack.c.b16 %v6607, %v6603
        %v6748 = vpack.c.b16 %v6608, %v6604
        %v6749 = vpack.c.b16 %v6613, %v6609
        %v6750 = vpack.c.b16 %v6614, %v6610
        %v6751 = vpack.c.b16 %v6615, %v6611
        %v6752 = vpack.c.b16 %v6616, %v6612
        %v6753 = vpack.c.b16 %v6621, %v6617
        %v6754 = vpack.c.b16 %v6622, %v6618
        %v6755 = vpack.c.b16 %v6623, %v6619
        %v6756 = vpack.c.b16 %v6624, %v6620
        %v6757 = vpack.c.b16 %v6629, %v6625
        %v6758 = vpack.c.b16 %v6630, %v6626
        %v6759 = vpack.c.b16 %v6631, %v6627
        %v6760 = vpack.c.b16 %v6632, %v6628
        %6889 = vmatprep.subr.bf16.mxu0 %v6662
        %6890 = vmatpush1.bf16.msra.mxu0 %v6661
        %6891 = vmatprep.subr.bf16.mxu0 %v6658
        %6892 = vmatpush1.bf16.msra.mxu0 %v6657
        %6893 = vmatprep.subr.bf16.mxu0 %v6654
        %6894 = vmatpush1.bf16.msra.mxu0 %v6653
        %6895 = vmatprep.subr.bf16.mxu0 %v6650
        %6896 = vmatpush1.bf16.msra.mxu0 %v6649
        %6897 = vmatprep.subr.bf16.mxu0 %v6646
        %6898 = vmatpush1.bf16.msra.mxu0 %v6645
        %6899 = vmatprep.subr.bf16.mxu0 %v6642
        %6900 = vmatpush1.bf16.msra.mxu0 %v6641
        %6901 = vmatprep.subr.bf16.mxu0 %v6638
        %6902 = vmatpush1.bf16.msra.mxu0 %v6637
        %6903 = vmatprep.subr.bf16.mxu0 %v6634
        %6904 = vmatpush1.bf16.msra.mxu0 %v6633
        %6905 = vmatprep.subr.bf16.mxu0 %v6694
        %6906 = vmatpush2.bf16.msra.mxu0 %v6693
        %6907 = vmatprep.subr.bf16.mxu0 %v6690
        %6908 = vmatpush2.bf16.msra.mxu0 %v6689
        %6909 = vmatprep.subr.bf16.mxu0 %v6686
        %6910 = vmatpush2.bf16.msra.mxu0 %v6685
        %6911 = vmatprep.subr.bf16.mxu0 %v6682
        %6912 = vmatpush2.bf16.msra.mxu0 %v6681
        %6913 = vmatprep.subr.bf16.mxu0 %v6678
        %6914 = vmatpush2.bf16.msra.mxu0 %v6677
        %6915 = vmatprep.subr.bf16.mxu0 %v6674
        %6916 = vmatpush2.bf16.msra.mxu0 %v6673
        %6917 = vmatprep.subr.bf16.mxu0 %v6670
        %6918 = vmatpush2.bf16.msra.mxu0 %v6669
        %6919 = vmatprep.subr.bf16.mxu0 %v6666
        %6920 = vmatpush2.bf16.msra.mxu0 %v6665
        %6921 = vmatprep.mubr.bf16.mxu0 %v6036
        %6922 = vmatmul.mubr.bf16.gmra.mxu0 %v6035
        %v6923 = vpop.f32.mrf.mxu0
        %v6924 = vadd.f32 %v6232, %v6923
        %v6925 = vpop.f32.mrf.mxu0
        %v6926 = vadd.f32 %v6236, %v6925
        %v6927 = vpop.f32.mrf.mxu0
        %v6928 = vadd.f32 %v6232, %v6927
        %v6929 = vpop.f32.mrf.mxu0
        %v6930 = vadd.f32 %v6236, %v6929
        %6931 = vmatprep.mubr.bf16.mxu0 %v6040
        %6932 = vmatmul.mubr.bf16.gmra.mxu0 %v6039
        %v6933 = vpop.f32.mrf.mxu0
        %v6934 = vadd.f32 %v6232, %v6933
        %v6935 = vpop.f32.mrf.mxu0
        %v6936 = vadd.f32 %v6236, %v6935
        %v6937 = vpop.f32.mrf.mxu0
        %v6938 = vadd.f32 %v6232, %v6937
        %v6939 = vpop.f32.mrf.mxu0
        %v6940 = vadd.f32 %v6236, %v6939
        %6941 = vmatprep.mubr.bf16.mxu0 %v6044
        %6942 = vmatmul.mubr.bf16.gmra.mxu0 %v6043
        %v6943 = vpop.f32.mrf.mxu0
        %v6944 = vadd.f32 %v6232, %v6943
        %v6945 = vpop.f32.mrf.mxu0
        %v6946 = vadd.f32 %v6236, %v6945
        %v6947 = vpop.f32.mrf.mxu0
        %v6948 = vadd.f32 %v6232, %v6947
        %v6949 = vpop.f32.mrf.mxu0
        %v6950 = vadd.f32 %v6236, %v6949
        %6951 = vmatprep.mubr.bf16.mxu0 %v6048
        %6952 = vmatmul.mubr.bf16.gmra.mxu0 %v6047
        %v6953 = vpop.f32.mrf.mxu0
        %v6954 = vadd.f32 %v6232, %v6953
        %v6955 = vpop.f32.mrf.mxu0
        %v6956 = vadd.f32 %v6236, %v6955
        %v6957 = vpop.f32.mrf.mxu0
        %v6958 = vadd.f32 %v6232, %v6957
        %v6959 = vpop.f32.mrf.mxu0
        %v6960 = vadd.f32 %v6236, %v6959
        %6961 = vmatprep.mubr.bf16.mxu0 %v6052
        %6962 = vmatmul.mubr.bf16.gmra.mxu0 %v6051
        %v6963 = vpop.f32.mrf.mxu0
        %v6964 = vadd.f32 %v6232, %v6963
        %v6965 = vpop.f32.mrf.mxu0
        %v6966 = vadd.f32 %v6236, %v6965
        %v6967 = vpop.f32.mrf.mxu0
        %v6968 = vadd.f32 %v6232, %v6967
        %v6969 = vpop.f32.mrf.mxu0
        %v6970 = vadd.f32 %v6236, %v6969
        %6971 = vmatprep.mubr.bf16.mxu0 %v6056
        %6972 = vmatmul.mubr.bf16.gmra.mxu0 %v6055
        %v6973 = vpop.f32.mrf.mxu0
        %v6974 = vadd.f32 %v6232, %v6973
        %v6975 = vpop.f32.mrf.mxu0
        %v6976 = vadd.f32 %v6236, %v6975
        %v6977 = vpop.f32.mrf.mxu0
        %v6978 = vadd.f32 %v6232, %v6977
        %v6979 = vpop.f32.mrf.mxu0
        %v6980 = vadd.f32 %v6236, %v6979
        %6981 = vmatprep.mubr.bf16.mxu0 %v6060
        %6982 = vmatmul.mubr.bf16.gmra.mxu0 %v6059
        %v6983 = vpop.f32.mrf.mxu0
        %v6984 = vadd.f32 %v6232, %v6983
        %v6985 = vpop.f32.mrf.mxu0
        %v6986 = vadd.f32 %v6236, %v6985
        %v6987 = vpop.f32.mrf.mxu0
        %v6988 = vadd.f32 %v6232, %v6987
        %v6989 = vpop.f32.mrf.mxu0
        %v6990 = vadd.f32 %v6236, %v6989
        %6991 = vmatprep.mubr.bf16.mxu0 %v6064
        %6992 = vmatmul.mubr.bf16.gmra.mxu0 %v6063
        %v6993 = vpop.f32.mrf.mxu0
        %v6994 = vadd.f32 %v6232, %v6993
        %v6995 = vpop.f32.mrf.mxu0
        %v6996 = vadd.f32 %v6236, %v6995
        %v6997 = vpop.f32.mrf.mxu0
        %v6998 = vadd.f32 %v6232, %v6997
        %v6999 = vpop.f32.mrf.mxu0
        %v7000 = vadd.f32 %v6236, %v6999
        %7001 = vmatprep.mubr.bf16.mxu0 %v6068
        %7002 = vmatmul.mubr.bf16.gmra.mxu0 %v6067
        %v7003 = vpop.f32.mrf.mxu0
        %v7004 = vadd.f32 %v6232, %v7003
        %v7005 = vpop.f32.mrf.mxu0
        %v7006 = vadd.f32 %v6236, %v7005
        %v7007 = vpop.f32.mrf.mxu0
        %v7008 = vadd.f32 %v6232, %v7007
        %v7009 = vpop.f32.mrf.mxu0
        %v7010 = vadd.f32 %v6236, %v7009
        %7011 = vmatprep.mubr.bf16.mxu0 %v6072
        %7012 = vmatmul.mubr.bf16.gmra.mxu0 %v6071
        %v7013 = vpop.f32.mrf.mxu0
        %v7014 = vadd.f32 %v6232, %v7013
        %v7015 = vpop.f32.mrf.mxu0
        %v7016 = vadd.f32 %v6236, %v7015
        %v7017 = vpop.f32.mrf.mxu0
        %v7018 = vadd.f32 %v6232, %v7017
        %v7019 = vpop.f32.mrf.mxu0
        %v7020 = vadd.f32 %v6236, %v7019
        %7021 = vmatprep.mubr.bf16.mxu0 %v6076
        %7022 = vmatmul.mubr.bf16.gmra.mxu0 %v6075
        %v7023 = vpop.f32.mrf.mxu0
        %v7024 = vadd.f32 %v6232, %v7023
        %v7025 = vpop.f32.mrf.mxu0
        %v7026 = vadd.f32 %v6236, %v7025
        %v7027 = vpop.f32.mrf.mxu0
        %v7028 = vadd.f32 %v6232, %v7027
        %v7029 = vpop.f32.mrf.mxu0
        %v7030 = vadd.f32 %v6236, %v7029
        %7031 = vmatprep.mubr.bf16.mxu0 %v6080
        %7032 = vmatmul.mubr.bf16.gmra.mxu0 %v6079
        %v7033 = vpop.f32.mrf.mxu0
        %v7034 = vadd.f32 %v6232, %v7033
        %v7035 = vpop.f32.mrf.mxu0
        %v7036 = vadd.f32 %v6236, %v7035
        %v7037 = vpop.f32.mrf.mxu0
        %v7038 = vadd.f32 %v6232, %v7037
        %v7039 = vpop.f32.mrf.mxu0
        %v7040 = vadd.f32 %v6236, %v7039
        %7041 = vmatprep.mubr.bf16.mxu0 %v6084
        %7042 = vmatmul.mubr.bf16.gmra.mxu0 %v6083
        %v7043 = vpop.f32.mrf.mxu0
        %v7044 = vadd.f32 %v6232, %v7043
        %v7045 = vpop.f32.mrf.mxu0
        %v7046 = vadd.f32 %v6236, %v7045
        %v7047 = vpop.f32.mrf.mxu0
        %v7048 = vadd.f32 %v6232, %v7047
        %v7049 = vpop.f32.mrf.mxu0
        %v7050 = vadd.f32 %v6236, %v7049
        %7051 = vmatprep.mubr.bf16.mxu0 %v6088
        %7052 = vmatmul.mubr.bf16.gmra.mxu0 %v6087
        %v7053 = vpop.f32.mrf.mxu0
        %v7054 = vadd.f32 %v6232, %v7053
        %v7055 = vpop.f32.mrf.mxu0
        %v7056 = vadd.f32 %v6236, %v7055
        %v7057 = vpop.f32.mrf.mxu0
        %v7058 = vadd.f32 %v6232, %v7057
        %v7059 = vpop.f32.mrf.mxu0
        %v7060 = vadd.f32 %v6236, %v7059
        %7061 = vmatprep.mubr.bf16.mxu0 %v6092
        %7062 = vmatmul.mubr.bf16.gmra.mxu0 %v6091
        %v7063 = vpop.f32.mrf.mxu0
        %v7064 = vadd.f32 %v6232, %v7063
        %v7065 = vpop.f32.mrf.mxu0
        %v7066 = vadd.f32 %v6236, %v7065
        %v7067 = vpop.f32.mrf.mxu0
        %v7068 = vadd.f32 %v6232, %v7067
        %v7069 = vpop.f32.mrf.mxu0
        %v7070 = vadd.f32 %v6236, %v7069
        %7071 = vmatprep.mubr.bf16.mxu0 %v6096
        %7072 = vmatmul.mubr.bf16.gmra.mxu0 %v6095
        %v7073 = vpop.f32.mrf.mxu0
        %v7074 = vadd.f32 %v6232, %v7073
        %v7075 = vpop.f32.mrf.mxu0
        %v7076 = vadd.f32 %v6236, %v7075
        %v7077 = vpop.f32.mrf.mxu0
        %v7078 = vadd.f32 %v6232, %v7077
        %v7079 = vpop.f32.mrf.mxu0
        %v7080 = vadd.f32 %v6236, %v7079
        %7081 = vdwg.mxu0
        %7082 = vmatprep.subr.bf16.mxu0 %v6726
        %7083 = vmatpush1.bf16.msra.mxu0 %v6725
        %7084 = vmatprep.subr.bf16.mxu0 %v6722
        %7085 = vmatpush1.bf16.msra.mxu0 %v6721
        %7086 = vmatprep.subr.bf16.mxu0 %v6718
        %7087 = vmatpush1.bf16.msra.mxu0 %v6717
        %7088 = vmatprep.subr.bf16.mxu0 %v6714
        %7089 = vmatpush1.bf16.msra.mxu0 %v6713
        %7090 = vmatprep.subr.bf16.mxu0 %v6710
        %7091 = vmatpush1.bf16.msra.mxu0 %v6709
        %7092 = vmatprep.subr.bf16.mxu0 %v6706
        %7093 = vmatpush1.bf16.msra.mxu0 %v6705
        %7094 = vmatprep.subr.bf16.mxu0 %v6702
        %7095 = vmatpush1.bf16.msra.mxu0 %v6701
        %7096 = vmatprep.subr.bf16.mxu0 %v6698
        %7097 = vmatpush1.bf16.msra.mxu0 %v6697
        %7098 = vmatprep.subr.bf16.mxu0 %v6758
        %7099 = vmatpush2.bf16.msra.mxu0 %v6757
        %7100 = vmatprep.subr.bf16.mxu0 %v6754
        %7101 = vmatpush2.bf16.msra.mxu0 %v6753
        %7102 = vmatprep.subr.bf16.mxu0 %v6750
        %7103 = vmatpush2.bf16.msra.mxu0 %v6749
        %7104 = vmatprep.subr.bf16.mxu0 %v6746
        %7105 = vmatpush2.bf16.msra.mxu0 %v6745
        %7106 = vmatprep.subr.bf16.mxu0 %v6742
        %7107 = vmatpush2.bf16.msra.mxu0 %v6741
        %7108 = vmatprep.subr.bf16.mxu0 %v6738
        %7109 = vmatpush2.bf16.msra.mxu0 %v6737
        %7110 = vmatprep.subr.bf16.mxu0 %v6734
        %7111 = vmatpush2.bf16.msra.mxu0 %v6733
        %7112 = vmatprep.subr.bf16.mxu0 %v6730
        %7113 = vmatpush2.bf16.msra.mxu0 %v6729
        %7114 = vmatprep.mubr.bf16.mxu0 %v6038
        %7115 = vmatmul.mubr.bf16.gmra.mxu0 %v6037
        %v7116 = vpop.f32.mrf.mxu0
        %v7117 = vadd.f32 %v6924, %v7116
        %v7118 = vpop.f32.mrf.mxu0
        %v7119 = vadd.f32 %v6926, %v7118
        %v7120 = vpop.f32.mrf.mxu0
        %v7121 = vadd.f32 %v6928, %v7120
        %v7122 = vpop.f32.mrf.mxu0
        %v7123 = vadd.f32 %v6930, %v7122
        %7124 = vmatprep.mubr.bf16.mxu0 %v6042
        %7125 = vmatmul.mubr.bf16.gmra.mxu0 %v6041
        %v7126 = vpop.f32.mrf.mxu0
        %v7127 = vadd.f32 %v6934, %v7126
        %v7128 = vpop.f32.mrf.mxu0
        %v7129 = vadd.f32 %v6936, %v7128
        %v7130 = vpop.f32.mrf.mxu0
        %v7131 = vadd.f32 %v6938, %v7130
        %v7132 = vpop.f32.mrf.mxu0
        %v7133 = vadd.f32 %v6940, %v7132
        %7134 = vmatprep.mubr.bf16.mxu0 %v6046
        %7135 = vmatmul.mubr.bf16.gmra.mxu0 %v6045
        %v7136 = vpop.f32.mrf.mxu0
        %v7137 = vadd.f32 %v6944, %v7136
        %v7138 = vpop.f32.mrf.mxu0
        %v7139 = vadd.f32 %v6946, %v7138
        %v7140 = vpop.f32.mrf.mxu0
        %v7141 = vadd.f32 %v6948, %v7140
        %v7142 = vpop.f32.mrf.mxu0
        %v7143 = vadd.f32 %v6950, %v7142
        %7144 = vmatprep.mubr.bf16.mxu0 %v6050
        %7145 = vmatmul.mubr.bf16.gmra.mxu0 %v6049
        %v7146 = vpop.f32.mrf.mxu0
        %v7147 = vadd.f32 %v6954, %v7146
        %v7148 = vpop.f32.mrf.mxu0
        %v7149 = vadd.f32 %v6956, %v7148
        %v7150 = vpop.f32.mrf.mxu0
        %v7151 = vadd.f32 %v6958, %v7150
        %v7152 = vpop.f32.mrf.mxu0
        %v7153 = vadd.f32 %v6960, %v7152
        %7154 = vmatprep.mubr.bf16.mxu0 %v6054
        %7155 = vmatmul.mubr.bf16.gmra.mxu0 %v6053
        %v7156 = vpop.f32.mrf.mxu0
        %v7157 = vadd.f32 %v6964, %v7156
        %v7158 = vpop.f32.mrf.mxu0
        %v7159 = vadd.f32 %v6966, %v7158
        %v7160 = vpop.f32.mrf.mxu0
        %v7161 = vadd.f32 %v6968, %v7160
        %v7162 = vpop.f32.mrf.mxu0
        %v7163 = vadd.f32 %v6970, %v7162
        %7164 = vmatprep.mubr.bf16.mxu0 %v6058
        %7165 = vmatmul.mubr.bf16.gmra.mxu0 %v6057
        %v7166 = vpop.f32.mrf.mxu0
        %v7167 = vadd.f32 %v6974, %v7166
        %v7168 = vpop.f32.mrf.mxu0
        %v7169 = vadd.f32 %v6976, %v7168
        %v7170 = vpop.f32.mrf.mxu0
        %v7171 = vadd.f32 %v6978, %v7170
        %v7172 = vpop.f32.mrf.mxu0
        %v7173 = vadd.f32 %v6980, %v7172
        %7174 = vmatprep.mubr.bf16.mxu0 %v6062
        %7175 = vmatmul.mubr.bf16.gmra.mxu0 %v6061
        %v7176 = vpop.f32.mrf.mxu0
        %v7177 = vadd.f32 %v6984, %v7176
        %v7178 = vpop.f32.mrf.mxu0
        %v7179 = vadd.f32 %v6986, %v7178
        %v7180 = vpop.f32.mrf.mxu0
        %v7181 = vadd.f32 %v6988, %v7180
        %v7182 = vpop.f32.mrf.mxu0
        %v7183 = vadd.f32 %v6990, %v7182
        %7184 = vmatprep.mubr.bf16.mxu0 %v6066
        %7185 = vmatmul.mubr.bf16.gmra.mxu0 %v6065
        %v7186 = vpop.f32.mrf.mxu0
        %v7187 = vadd.f32 %v6994, %v7186
        %v7188 = vpop.f32.mrf.mxu0
        %v7189 = vadd.f32 %v6996, %v7188
        %v7190 = vpop.f32.mrf.mxu0
        %v7191 = vadd.f32 %v6998, %v7190
        %v7192 = vpop.f32.mrf.mxu0
        %v7193 = vadd.f32 %v7000, %v7192
        %7194 = vmatprep.mubr.bf16.mxu0 %v6070
        %7195 = vmatmul.mubr.bf16.gmra.mxu0 %v6069
        %v7196 = vpop.f32.mrf.mxu0
        %v7197 = vadd.f32 %v7004, %v7196
        %v7198 = vpop.f32.mrf.mxu0
        %v7199 = vadd.f32 %v7006, %v7198
        %v7200 = vpop.f32.mrf.mxu0
        %v7201 = vadd.f32 %v7008, %v7200
        %v7202 = vpop.f32.mrf.mxu0
        %v7203 = vadd.f32 %v7010, %v7202
        %7204 = vmatprep.mubr.bf16.mxu0 %v6074
        %7205 = vmatmul.mubr.bf16.gmra.mxu0 %v6073
        %v7206 = vpop.f32.mrf.mxu0
        %v7207 = vadd.f32 %v7014, %v7206
        %v7208 = vpop.f32.mrf.mxu0
        %v7209 = vadd.f32 %v7016, %v7208
        %v7210 = vpop.f32.mrf.mxu0
        %v7211 = vadd.f32 %v7018, %v7210
        %v7212 = vpop.f32.mrf.mxu0
        %v7213 = vadd.f32 %v7020, %v7212
        %7214 = vmatprep.mubr.bf16.mxu0 %v6078
        %7215 = vmatmul.mubr.bf16.gmra.mxu0 %v6077
        %v7216 = vpop.f32.mrf.mxu0
        %v7217 = vadd.f32 %v7024, %v7216
        %v7218 = vpop.f32.mrf.mxu0
        %v7219 = vadd.f32 %v7026, %v7218
        %v7220 = vpop.f32.mrf.mxu0
        %v7221 = vadd.f32 %v7028, %v7220
        %v7222 = vpop.f32.mrf.mxu0
        %v7223 = vadd.f32 %v7030, %v7222
        %7224 = vmatprep.mubr.bf16.mxu0 %v6082
        %7225 = vmatmul.mubr.bf16.gmra.mxu0 %v6081
        %v7226 = vpop.f32.mrf.mxu0
        %v7227 = vadd.f32 %v7034, %v7226
        %v7228 = vpop.f32.mrf.mxu0
        %v7229 = vadd.f32 %v7036, %v7228
        %v7230 = vpop.f32.mrf.mxu0
        %v7231 = vadd.f32 %v7038, %v7230
        %v7232 = vpop.f32.mrf.mxu0
        %v7233 = vadd.f32 %v7040, %v7232
        %7234 = vmatprep.mubr.bf16.mxu0 %v6086
        %7235 = vmatmul.mubr.bf16.gmra.mxu0 %v6085
        %v7236 = vpop.f32.mrf.mxu0
        %v7237 = vadd.f32 %v7044, %v7236
        %v7238 = vpop.f32.mrf.mxu0
        %v7239 = vadd.f32 %v7046, %v7238
        %v7240 = vpop.f32.mrf.mxu0
        %v7241 = vadd.f32 %v7048, %v7240
        %v7242 = vpop.f32.mrf.mxu0
        %v7243 = vadd.f32 %v7050, %v7242
        %7244 = vmatprep.mubr.bf16.mxu0 %v6090
        %7245 = vmatmul.mubr.bf16.gmra.mxu0 %v6089
        %v7246 = vpop.f32.mrf.mxu0
        %v7247 = vadd.f32 %v7054, %v7246
        %v7248 = vpop.f32.mrf.mxu0
        %v7249 = vadd.f32 %v7056, %v7248
        %v7250 = vpop.f32.mrf.mxu0
        %v7251 = vadd.f32 %v7058, %v7250
        %v7252 = vpop.f32.mrf.mxu0
        %v7253 = vadd.f32 %v7060, %v7252
        %7254 = vmatprep.mubr.bf16.mxu0 %v6094
        %7255 = vmatmul.mubr.bf16.gmra.mxu0 %v6093
        %v7256 = vpop.f32.mrf.mxu0
        %v7257 = vadd.f32 %v7064, %v7256
        %v7258 = vpop.f32.mrf.mxu0
        %v7259 = vadd.f32 %v7066, %v7258
        %v7260 = vpop.f32.mrf.mxu0
        %v7261 = vadd.f32 %v7068, %v7260
        %v7262 = vpop.f32.mrf.mxu0
        %v7263 = vadd.f32 %v7070, %v7262
        %7264 = vmatprep.mubr.bf16.mxu0 %v6098
        %7265 = vmatmul.mubr.bf16.gmra.mxu0 %v6097
        %v7266 = vpop.f32.mrf.mxu0
        %v7267 = vadd.f32 %v7074, %v7266
        %v7268 = vpop.f32.mrf.mxu0
        %v7269 = vadd.f32 %v7076, %v7268
        %v7270 = vpop.f32.mrf.mxu0
        %v7271 = vadd.f32 %v7078, %v7270
        %v7272 = vpop.f32.mrf.mxu0
        %v7273 = vadd.f32 %v7080, %v7272
        %7274 = vdwg.mxu0
        %7275 = vmatprep.subr.bf16.mxu0 %v6664
        %7276 = vmatpush1.bf16.msra.mxu0 %v6663
        %7277 = vmatprep.subr.bf16.mxu0 %v6660
        %7278 = vmatpush1.bf16.msra.mxu0 %v6659
        %7279 = vmatprep.subr.bf16.mxu0 %v6656
        %7280 = vmatpush1.bf16.msra.mxu0 %v6655
        %7281 = vmatprep.subr.bf16.mxu0 %v6652
        %7282 = vmatpush1.bf16.msra.mxu0 %v6651
        %7283 = vmatprep.subr.bf16.mxu0 %v6648
        %7284 = vmatpush1.bf16.msra.mxu0 %v6647
        %7285 = vmatprep.subr.bf16.mxu0 %v6644
        %7286 = vmatpush1.bf16.msra.mxu0 %v6643
        %7287 = vmatprep.subr.bf16.mxu0 %v6640
        %7288 = vmatpush1.bf16.msra.mxu0 %v6639
        %7289 = vmatprep.subr.bf16.mxu0 %v6636
        %7290 = vmatpush1.bf16.msra.mxu0 %v6635
        %7291 = vmatprep.subr.bf16.mxu0 %v6696
        %7292 = vmatpush2.bf16.msra.mxu0 %v6695
        %7293 = vmatprep.subr.bf16.mxu0 %v6692
        %7294 = vmatpush2.bf16.msra.mxu0 %v6691
        %7295 = vmatprep.subr.bf16.mxu0 %v6688
        %7296 = vmatpush2.bf16.msra.mxu0 %v6687
        %7297 = vmatprep.subr.bf16.mxu0 %v6684
        %7298 = vmatpush2.bf16.msra.mxu0 %v6683
        %7299 = vmatprep.subr.bf16.mxu0 %v6680
        %7300 = vmatpush2.bf16.msra.mxu0 %v6679
        %7301 = vmatprep.subr.bf16.mxu0 %v6676
        %7302 = vmatpush2.bf16.msra.mxu0 %v6675
        %7303 = vmatprep.subr.bf16.mxu0 %v6672
        %7304 = vmatpush2.bf16.msra.mxu0 %v6671
        %7305 = vmatprep.subr.bf16.mxu0 %v6668
        %7306 = vmatpush2.bf16.msra.mxu0 %v6667
        %7307 = vmatprep.mubr.bf16.mxu0 %v6036
        %7308 = vmatmul.mubr.bf16.gmra.mxu0 %v6035
        %v7309 = vpop.f32.mrf.mxu0
        %v7310 = vadd.f32 %v6240, %v7309
        %v7311 = vpop.f32.mrf.mxu0
        %v7312 = vadd.f32 %v6244, %v7311
        %v7313 = vpop.f32.mrf.mxu0
        %v7314 = vadd.f32 %v6240, %v7313
        %v7315 = vpop.f32.mrf.mxu0
        %v7316 = vadd.f32 %v6244, %v7315
        %7317 = vmatprep.mubr.bf16.mxu0 %v6040
        %7318 = vmatmul.mubr.bf16.gmra.mxu0 %v6039
        %v7319 = vpop.f32.mrf.mxu0
        %v7320 = vadd.f32 %v6240, %v7319
        %v7321 = vpop.f32.mrf.mxu0
        %v7322 = vadd.f32 %v6244, %v7321
        %v7323 = vpop.f32.mrf.mxu0
        %v7324 = vadd.f32 %v6240, %v7323
        %v7325 = vpop.f32.mrf.mxu0
        %v7326 = vadd.f32 %v6244, %v7325
        %7327 = vmatprep.mubr.bf16.mxu0 %v6044
        %7328 = vmatmul.mubr.bf16.gmra.mxu0 %v6043
        %v7329 = vpop.f32.mrf.mxu0
        %v7330 = vadd.f32 %v6240, %v7329
        %v7331 = vpop.f32.mrf.mxu0
        %v7332 = vadd.f32 %v6244, %v7331
        %v7333 = vpop.f32.mrf.mxu0
        %v7334 = vadd.f32 %v6240, %v7333
        %v7335 = vpop.f32.mrf.mxu0
        %v7336 = vadd.f32 %v6244, %v7335
        %7337 = vmatprep.mubr.bf16.mxu0 %v6048
        %7338 = vmatmul.mubr.bf16.gmra.mxu0 %v6047
        %v7339 = vpop.f32.mrf.mxu0
        %v7340 = vadd.f32 %v6240, %v7339
        %v7341 = vpop.f32.mrf.mxu0
        %v7342 = vadd.f32 %v6244, %v7341
        %v7343 = vpop.f32.mrf.mxu0
        %v7344 = vadd.f32 %v6240, %v7343
        %v7345 = vpop.f32.mrf.mxu0
        %v7346 = vadd.f32 %v6244, %v7345
        %7347 = vmatprep.mubr.bf16.mxu0 %v6052
        %7348 = vmatmul.mubr.bf16.gmra.mxu0 %v6051
        %v7349 = vpop.f32.mrf.mxu0
        %v7350 = vadd.f32 %v6240, %v7349
        %v7351 = vpop.f32.mrf.mxu0
        %v7352 = vadd.f32 %v6244, %v7351
        %v7353 = vpop.f32.mrf.mxu0
        %v7354 = vadd.f32 %v6240, %v7353
        %v7355 = vpop.f32.mrf.mxu0
        %v7356 = vadd.f32 %v6244, %v7355
        %7357 = vmatprep.mubr.bf16.mxu0 %v6056
        %7358 = vmatmul.mubr.bf16.gmra.mxu0 %v6055
        %v7359 = vpop.f32.mrf.mxu0
        %v7360 = vadd.f32 %v6240, %v7359
        %v7361 = vpop.f32.mrf.mxu0
        %v7362 = vadd.f32 %v6244, %v7361
        %v7363 = vpop.f32.mrf.mxu0
        %v7364 = vadd.f32 %v6240, %v7363
        %v7365 = vpop.f32.mrf.mxu0
        %v7366 = vadd.f32 %v6244, %v7365
        %7367 = vmatprep.mubr.bf16.mxu0 %v6060
        %7368 = vmatmul.mubr.bf16.gmra.mxu0 %v6059
        %v7369 = vpop.f32.mrf.mxu0
        %v7370 = vadd.f32 %v6240, %v7369
        %v7371 = vpop.f32.mrf.mxu0
        %v7372 = vadd.f32 %v6244, %v7371
        %v7373 = vpop.f32.mrf.mxu0
        %v7374 = vadd.f32 %v6240, %v7373
        %v7375 = vpop.f32.mrf.mxu0
        %v7376 = vadd.f32 %v6244, %v7375
        %7377 = vmatprep.mubr.bf16.mxu0 %v6064
        %7378 = vmatmul.mubr.bf16.gmra.mxu0 %v6063
        %v7379 = vpop.f32.mrf.mxu0
        %v7380 = vadd.f32 %v6240, %v7379
        %v7381 = vpop.f32.mrf.mxu0
        %v7382 = vadd.f32 %v6244, %v7381
        %v7383 = vpop.f32.mrf.mxu0
        %v7384 = vadd.f32 %v6240, %v7383
        %v7385 = vpop.f32.mrf.mxu0
        %v7386 = vadd.f32 %v6244, %v7385
        %7387 = vmatprep.mubr.bf16.mxu0 %v6068
        %7388 = vmatmul.mubr.bf16.gmra.mxu0 %v6067
        %v7389 = vpop.f32.mrf.mxu0
        %v7390 = vadd.f32 %v6240, %v7389
        %v7391 = vpop.f32.mrf.mxu0
        %v7392 = vadd.f32 %v6244, %v7391
        %v7393 = vpop.f32.mrf.mxu0
        %v7394 = vadd.f32 %v6240, %v7393
        %v7395 = vpop.f32.mrf.mxu0
        %v7396 = vadd.f32 %v6244, %v7395
        %7397 = vmatprep.mubr.bf16.mxu0 %v6072
        %7398 = vmatmul.mubr.bf16.gmra.mxu0 %v6071
        %v7399 = vpop.f32.mrf.mxu0
        %v7400 = vadd.f32 %v6240, %v7399
        %v7401 = vpop.f32.mrf.mxu0
        %v7402 = vadd.f32 %v6244, %v7401
        %v7403 = vpop.f32.mrf.mxu0
        %v7404 = vadd.f32 %v6240, %v7403
        %v7405 = vpop.f32.mrf.mxu0
        %v7406 = vadd.f32 %v6244, %v7405
        %7407 = vmatprep.mubr.bf16.mxu0 %v6076
        %7408 = vmatmul.mubr.bf16.gmra.mxu0 %v6075
        %v7409 = vpop.f32.mrf.mxu0
        %v7410 = vadd.f32 %v6240, %v7409
        %v7411 = vpop.f32.mrf.mxu0
        %v7412 = vadd.f32 %v6244, %v7411
        %v7413 = vpop.f32.mrf.mxu0
        %v7414 = vadd.f32 %v6240, %v7413
        %v7415 = vpop.f32.mrf.mxu0
        %v7416 = vadd.f32 %v6244, %v7415
        %7417 = vmatprep.mubr.bf16.mxu0 %v6080
        %7418 = vmatmul.mubr.bf16.gmra.mxu0 %v6079
        %v7419 = vpop.f32.mrf.mxu0
        %v7420 = vadd.f32 %v6240, %v7419
        %v7421 = vpop.f32.mrf.mxu0
        %v7422 = vadd.f32 %v6244, %v7421
        %v7423 = vpop.f32.mrf.mxu0
        %v7424 = vadd.f32 %v6240, %v7423
        %v7425 = vpop.f32.mrf.mxu0
        %v7426 = vadd.f32 %v6244, %v7425
        %7427 = vmatprep.mubr.bf16.mxu0 %v6084
        %7428 = vmatmul.mubr.bf16.gmra.mxu0 %v6083
        %v7429 = vpop.f32.mrf.mxu0
        %v7430 = vadd.f32 %v6240, %v7429
        %v7431 = vpop.f32.mrf.mxu0
        %v7432 = vadd.f32 %v6244, %v7431
        %v7433 = vpop.f32.mrf.mxu0
        %v7434 = vadd.f32 %v6240, %v7433
        %v7435 = vpop.f32.mrf.mxu0
        %v7436 = vadd.f32 %v6244, %v7435
        %7437 = vmatprep.mubr.bf16.mxu0 %v6088
        %7438 = vmatmul.mubr.bf16.gmra.mxu0 %v6087
        %v7439 = vpop.f32.mrf.mxu0
        %v7440 = vadd.f32 %v6240, %v7439
        %v7441 = vpop.f32.mrf.mxu0
        %v7442 = vadd.f32 %v6244, %v7441
        %v7443 = vpop.f32.mrf.mxu0
        %v7444 = vadd.f32 %v6240, %v7443
        %v7445 = vpop.f32.mrf.mxu0
        %v7446 = vadd.f32 %v6244, %v7445
        %7447 = vmatprep.mubr.bf16.mxu0 %v6092
        %7448 = vmatmul.mubr.bf16.gmra.mxu0 %v6091
        %v7449 = vpop.f32.mrf.mxu0
        %v7450 = vadd.f32 %v6240, %v7449
        %v7451 = vpop.f32.mrf.mxu0
        %v7452 = vadd.f32 %v6244, %v7451
        %v7453 = vpop.f32.mrf.mxu0
        %v7454 = vadd.f32 %v6240, %v7453
        %v7455 = vpop.f32.mrf.mxu0
        %v7456 = vadd.f32 %v6244, %v7455
        %7457 = vmatprep.mubr.bf16.mxu0 %v6096
        %7458 = vmatmul.mubr.bf16.gmra.mxu0 %v6095
        %v7459 = vpop.f32.mrf.mxu0
        %v7460 = vadd.f32 %v6240, %v7459
        %v7461 = vpop.f32.mrf.mxu0
        %v7462 = vadd.f32 %v6244, %v7461
        %v7463 = vpop.f32.mrf.mxu0
        %v7464 = vadd.f32 %v6240, %v7463
        %v7465 = vpop.f32.mrf.mxu0
        %v7466 = vadd.f32 %v6244, %v7465
        %7467 = vdwg.mxu0
        %7468 = vmatprep.subr.bf16.mxu0 %v6728
        %7469 = vmatpush1.bf16.msra.mxu0 %v6727
        %7470 = vmatprep.subr.bf16.mxu0 %v6724
        %7471 = vmatpush1.bf16.msra.mxu0 %v6723
        %7472 = vmatprep.subr.bf16.mxu0 %v6720
        %7473 = vmatpush1.bf16.msra.mxu0 %v6719
        %7474 = vmatprep.subr.bf16.mxu0 %v6716
        %7475 = vmatpush1.bf16.msra.mxu0 %v6715
        %7476 = vmatprep.subr.bf16.mxu0 %v6712
        %7477 = vmatpush1.bf16.msra.mxu0 %v6711
        %7478 = vmatprep.subr.bf16.mxu0 %v6708
        %7479 = vmatpush1.bf16.msra.mxu0 %v6707
        %7480 = vmatprep.subr.bf16.mxu0 %v6704
        %7481 = vmatpush1.bf16.msra.mxu0 %v6703
        %7482 = vmatprep.subr.bf16.mxu0 %v6700
        %7483 = vmatpush1.bf16.msra.mxu0 %v6699
        %7484 = vmatprep.subr.bf16.mxu0 %v6760
        %7485 = vmatpush2.bf16.msra.mxu0 %v6759
        %7486 = vmatprep.subr.bf16.mxu0 %v6756
        %7487 = vmatpush2.bf16.msra.mxu0 %v6755
        %7488 = vmatprep.subr.bf16.mxu0 %v6752
        %7489 = vmatpush2.bf16.msra.mxu0 %v6751
        %7490 = vmatprep.subr.bf16.mxu0 %v6748
        %7491 = vmatpush2.bf16.msra.mxu0 %v6747
        %7492 = vmatprep.subr.bf16.mxu0 %v6744
        %7493 = vmatpush2.bf16.msra.mxu0 %v6743
        %7494 = vmatprep.subr.bf16.mxu0 %v6740
        %7495 = vmatpush2.bf16.msra.mxu0 %v6739
        %7496 = vmatprep.subr.bf16.mxu0 %v6736
        %7497 = vmatpush2.bf16.msra.mxu0 %v6735
        %7498 = vmatprep.subr.bf16.mxu0 %v6732
        %7499 = vmatpush2.bf16.msra.mxu0 %v6731
        %7500 = vmatprep.mubr.bf16.mxu0 %v6038
        %7501 = vmatmul.mubr.bf16.gmra.mxu0 %v6037
        %v7502 = vpop.f32.mrf.mxu0
        %v7503 = vadd.f32 %v7310, %v7502
        %v7504 = vpop.f32.mrf.mxu0
        %v7505 = vadd.f32 %v7312, %v7504
        %v7506 = vpop.f32.mrf.mxu0
        %v7507 = vadd.f32 %v7314, %v7506
        %v7508 = vpop.f32.mrf.mxu0
        %v7509 = vadd.f32 %v7316, %v7508
        %7510 = vmatprep.mubr.bf16.mxu0 %v6042
        %7511 = vmatmul.mubr.bf16.gmra.mxu0 %v6041
        %v7512 = vpop.f32.mrf.mxu0
        %v7513 = vadd.f32 %v7320, %v7512
        %v7514 = vpop.f32.mrf.mxu0
        %v7515 = vadd.f32 %v7322, %v7514
        %v7516 = vpop.f32.mrf.mxu0
        %v7517 = vadd.f32 %v7324, %v7516
        %v7518 = vpop.f32.mrf.mxu0
        %v7519 = vadd.f32 %v7326, %v7518
        %7520 = vmatprep.mubr.bf16.mxu0 %v6046
        %7521 = vmatmul.mubr.bf16.gmra.mxu0 %v6045
        %v7522 = vpop.f32.mrf.mxu0
        %v7523 = vadd.f32 %v7330, %v7522
        %v7524 = vpop.f32.mrf.mxu0
        %v7525 = vadd.f32 %v7332, %v7524
        %v7526 = vpop.f32.mrf.mxu0
        %v7527 = vadd.f32 %v7334, %v7526
        %v7528 = vpop.f32.mrf.mxu0
        %v7529 = vadd.f32 %v7336, %v7528
        %7530 = vmatprep.mubr.bf16.mxu0 %v6050
        %7531 = vmatmul.mubr.bf16.gmra.mxu0 %v6049
        %v7532 = vpop.f32.mrf.mxu0
        %v7533 = vadd.f32 %v7340, %v7532
        %v7534 = vpop.f32.mrf.mxu0
        %v7535 = vadd.f32 %v7342, %v7534
        %v7536 = vpop.f32.mrf.mxu0
        %v7537 = vadd.f32 %v7344, %v7536
        %v7538 = vpop.f32.mrf.mxu0
        %v7539 = vadd.f32 %v7346, %v7538
        %7540 = vmatprep.mubr.bf16.mxu0 %v6054
        %7541 = vmatmul.mubr.bf16.gmra.mxu0 %v6053
        %v7542 = vpop.f32.mrf.mxu0
        %v7543 = vadd.f32 %v7350, %v7542
        %v7544 = vpop.f32.mrf.mxu0
        %v7545 = vadd.f32 %v7352, %v7544
        %v7546 = vpop.f32.mrf.mxu0
        %v7547 = vadd.f32 %v7354, %v7546
        %v7548 = vpop.f32.mrf.mxu0
        %v7549 = vadd.f32 %v7356, %v7548
        %7550 = vmatprep.mubr.bf16.mxu0 %v6058
        %7551 = vmatmul.mubr.bf16.gmra.mxu0 %v6057
        %v7552 = vpop.f32.mrf.mxu0
        %v7553 = vadd.f32 %v7360, %v7552
        %v7554 = vpop.f32.mrf.mxu0
        %v7555 = vadd.f32 %v7362, %v7554
        %v7556 = vpop.f32.mrf.mxu0
        %v7557 = vadd.f32 %v7364, %v7556
        %v7558 = vpop.f32.mrf.mxu0
        %v7559 = vadd.f32 %v7366, %v7558
        %7560 = vmatprep.mubr.bf16.mxu0 %v6062
        %7561 = vmatmul.mubr.bf16.gmra.mxu0 %v6061
        %v7562 = vpop.f32.mrf.mxu0
        %v7563 = vadd.f32 %v7370, %v7562
        %v7564 = vpop.f32.mrf.mxu0
        %v7565 = vadd.f32 %v7372, %v7564
        %v7566 = vpop.f32.mrf.mxu0
        %v7567 = vadd.f32 %v7374, %v7566
        %v7568 = vpop.f32.mrf.mxu0
        %v7569 = vadd.f32 %v7376, %v7568
        %7570 = vmatprep.mubr.bf16.mxu0 %v6066
        %7571 = vmatmul.mubr.bf16.gmra.mxu0 %v6065
        %v7572 = vpop.f32.mrf.mxu0
        %v7573 = vadd.f32 %v7380, %v7572
        %v7574 = vpop.f32.mrf.mxu0
        %v7575 = vadd.f32 %v7382, %v7574
        %v7576 = vpop.f32.mrf.mxu0
        %v7577 = vadd.f32 %v7384, %v7576
        %v7578 = vpop.f32.mrf.mxu0
        %v7579 = vadd.f32 %v7386, %v7578
        %7580 = vmatprep.mubr.bf16.mxu0 %v6070
        %7581 = vmatmul.mubr.bf16.gmra.mxu0 %v6069
        %v7582 = vpop.f32.mrf.mxu0
        %v7583 = vadd.f32 %v7390, %v7582
        %v7584 = vpop.f32.mrf.mxu0
        %v7585 = vadd.f32 %v7392, %v7584
        %v7586 = vpop.f32.mrf.mxu0
        %v7587 = vadd.f32 %v7394, %v7586
        %v7588 = vpop.f32.mrf.mxu0
        %v7589 = vadd.f32 %v7396, %v7588
        %7590 = vmatprep.mubr.bf16.mxu0 %v6074
        %7591 = vmatmul.mubr.bf16.gmra.mxu0 %v6073
        %v7592 = vpop.f32.mrf.mxu0
        %v7593 = vadd.f32 %v7400, %v7592
        %v7594 = vpop.f32.mrf.mxu0
        %v7595 = vadd.f32 %v7402, %v7594
        %v7596 = vpop.f32.mrf.mxu0
        %v7597 = vadd.f32 %v7404, %v7596
        %v7598 = vpop.f32.mrf.mxu0
        %v7599 = vadd.f32 %v7406, %v7598
        %7600 = vmatprep.mubr.bf16.mxu0 %v6078
        %7601 = vmatmul.mubr.bf16.gmra.mxu0 %v6077
        %v7602 = vpop.f32.mrf.mxu0
        %v7603 = vadd.f32 %v7410, %v7602
        %v7604 = vpop.f32.mrf.mxu0
        %v7605 = vadd.f32 %v7412, %v7604
        %v7606 = vpop.f32.mrf.mxu0
        %v7607 = vadd.f32 %v7414, %v7606
        %v7608 = vpop.f32.mrf.mxu0
        %v7609 = vadd.f32 %v7416, %v7608
        %7610 = vmatprep.mubr.bf16.mxu0 %v6082
        %7611 = vmatmul.mubr.bf16.gmra.mxu0 %v6081
        %v7612 = vpop.f32.mrf.mxu0
        %v7613 = vadd.f32 %v7420, %v7612
        %v7614 = vpop.f32.mrf.mxu0
        %v7615 = vadd.f32 %v7422, %v7614
        %v7616 = vpop.f32.mrf.mxu0
        %v7617 = vadd.f32 %v7424, %v7616
        %v7618 = vpop.f32.mrf.mxu0
        %v7619 = vadd.f32 %v7426, %v7618
        %7620 = vmatprep.mubr.bf16.mxu0 %v6086
        %7621 = vmatmul.mubr.bf16.gmra.mxu0 %v6085
        %v7622 = vpop.f32.mrf.mxu0
        %v7623 = vadd.f32 %v7430, %v7622
        %v7624 = vpop.f32.mrf.mxu0
        %v7625 = vadd.f32 %v7432, %v7624
        %v7626 = vpop.f32.mrf.mxu0
        %v7627 = vadd.f32 %v7434, %v7626
        %v7628 = vpop.f32.mrf.mxu0
        %v7629 = vadd.f32 %v7436, %v7628
        %7630 = vmatprep.mubr.bf16.mxu0 %v6090
        %7631 = vmatmul.mubr.bf16.gmra.mxu0 %v6089
        %v7632 = vpop.f32.mrf.mxu0
        %v7633 = vadd.f32 %v7440, %v7632
        %v7634 = vpop.f32.mrf.mxu0
        %v7635 = vadd.f32 %v7442, %v7634
        %v7636 = vpop.f32.mrf.mxu0
        %v7637 = vadd.f32 %v7444, %v7636
        %v7638 = vpop.f32.mrf.mxu0
        %v7639 = vadd.f32 %v7446, %v7638
        %7640 = vmatprep.mubr.bf16.mxu0 %v6094
        %7641 = vmatmul.mubr.bf16.gmra.mxu0 %v6093
        %v7642 = vpop.f32.mrf.mxu0
        %v7643 = vadd.f32 %v7450, %v7642
        %v7644 = vpop.f32.mrf.mxu0
        %v7645 = vadd.f32 %v7452, %v7644
        %v7646 = vpop.f32.mrf.mxu0
        %v7647 = vadd.f32 %v7454, %v7646
        %v7648 = vpop.f32.mrf.mxu0
        %v7649 = vadd.f32 %v7456, %v7648
        %7650 = vmatprep.mubr.bf16.mxu0 %v6098
        %7651 = vmatmul.mubr.bf16.gmra.mxu0 %v6097
        %v7652 = vpop.f32.mrf.mxu0
        %v7653 = vadd.f32 %v7460, %v7652
        %v7654 = vpop.f32.mrf.mxu0
        %v7655 = vadd.f32 %v7462, %v7654
        %v7656 = vpop.f32.mrf.mxu0
        %v7657 = vadd.f32 %v7464, %v7656
        %v7658 = vpop.f32.mrf.mxu0
        %v7659 = vadd.f32 %v7466, %v7658
        %7660 = vdwg.mxu0
        %7661 = vst [vmem:[%s274] sm:$0xff] %v7117
        %7662 = vst [vmem:[%s274 + $0x8] sm:$0xff] %v7119
        %7663 = vst [vmem:[%s274 + $0x10] sm:$0xff] %v7503
        %7664 = vst [vmem:[%s274 + $0x18] sm:$0xff] %v7505
        %7665 = vst [vmem:[%s274 + $0x20] sm:$0xff] %v7121
        %7666 = vst [vmem:[%s274 + $0x28] sm:$0xff] %v7123
        %7667 = vst [vmem:[%s274 + $0x30] sm:$0xff] %v7507
        %7668 = vst [vmem:[%s274 + $0x38] sm:$0xff] %v7509
        %7669 = vst [vmem:[%s274 + $0x40] sm:$0xff] %v7127
        %7670 = vst [vmem:[%s274 + $0x48] sm:$0xff] %v7129
        %7671 = vst [vmem:[%s274 + $0x50] sm:$0xff] %v7513
        %7672 = vst [vmem:[%s274 + $0x58] sm:$0xff] %v7515
        %7673 = vst [vmem:[%s274 + $0x60] sm:$0xff] %v7131
        %7674 = vst [vmem:[%s274 + $0x68] sm:$0xff] %v7133
        %7675 = vst [vmem:[%s274 + $0x70] sm:$0xff] %v7517
        %7676 = vst [vmem:[%s274 + $0x78] sm:$0xff] %v7519
        %7677 = vst [vmem:[%s274 + $0x80] sm:$0xff] %v7137
        %7678 = vst [vmem:[%s274 + $0x88] sm:$0xff] %v7139
        %7679 = vst [vmem:[%s274 + $0x90] sm:$0xff] %v7523
        %7680 = vst [vmem:[%s274 + $0x98] sm:$0xff] %v7525
        %7681 = vst [vmem:[%s274 + $0xa0] sm:$0xff] %v7141
        %7682 = vst [vmem:[%s274 + $0xa8] sm:$0xff] %v7143
        %7683 = vst [vmem:[%s274 + $0xb0] sm:$0xff] %v7527
        %7684 = vst [vmem:[%s274 + $0xb8] sm:$0xff] %v7529
        %7685 = vst [vmem:[%s274 + $0xc0] sm:$0xff] %v7147
        %7686 = vst [vmem:[%s274 + $0xc8] sm:$0xff] %v7149
        %7687 = vst [vmem:[%s274 + $0xd0] sm:$0xff] %v7533
        %7688 = vst [vmem:[%s274 + $0xd8] sm:$0xff] %v7535
        %7689 = vst [vmem:[%s274 + $0xe0] sm:$0xff] %v7151
        %7690 = vst [vmem:[%s274 + $0xe8] sm:$0xff] %v7153
        %7691 = vst [vmem:[%s274 + $0xf0] sm:$0xff] %v7537
        %7692 = vst [vmem:[%s274 + $0xf8] sm:$0xff] %v7539
        %7693 = vst [vmem:[%s274 + $0x100] sm:$0xff] %v7157
        %7694 = vst [vmem:[%s274 + $0x108] sm:$0xff] %v7159
        %7695 = vst [vmem:[%s274 + $0x110] sm:$0xff] %v7543
        %7696 = vst [vmem:[%s274 + $0x118] sm:$0xff] %v7545
        %7697 = vst [vmem:[%s274 + $0x120] sm:$0xff] %v7161
        %7698 = vst [vmem:[%s274 + $0x128] sm:$0xff] %v7163
        %7699 = vst [vmem:[%s274 + $0x130] sm:$0xff] %v7547
        %7700 = vst [vmem:[%s274 + $0x138] sm:$0xff] %v7549
        %7701 = vst [vmem:[%s274 + $0x140] sm:$0xff] %v7167
        %7702 = vst [vmem:[%s274 + $0x148] sm:$0xff] %v7169
        %7703 = vst [vmem:[%s274 + $0x150] sm:$0xff] %v7553
        %7704 = vst [vmem:[%s274 + $0x158] sm:$0xff] %v7555
        %7705 = vst [vmem:[%s274 + $0x160] sm:$0xff] %v7171
        %7706 = vst [vmem:[%s274 + $0x168] sm:$0xff] %v7173
        %7707 = vst [vmem:[%s274 + $0x170] sm:$0xff] %v7557
        %7708 = vst [vmem:[%s274 + $0x178] sm:$0xff] %v7559
        %7709 = vst [vmem:[%s274 + $0x180] sm:$0xff] %v7177
        %7710 = vst [vmem:[%s274 + $0x188] sm:$0xff] %v7179
        %7711 = vst [vmem:[%s274 + $0x190] sm:$0xff] %v7563
        %7712 = vst [vmem:[%s274 + $0x198] sm:$0xff] %v7565
        %7713 = vst [vmem:[%s274 + $0x1a0] sm:$0xff] %v7181
        %7714 = vst [vmem:[%s274 + $0x1a8] sm:$0xff] %v7183
        %7715 = vst [vmem:[%s274 + $0x1b0] sm:$0xff] %v7567
        %7716 = vst [vmem:[%s274 + $0x1b8] sm:$0xff] %v7569
        %7717 = vst [vmem:[%s274 + $0x1c0] sm:$0xff] %v7187
        %7718 = vst [vmem:[%s274 + $0x1c8] sm:$0xff] %v7189
        %7719 = vst [vmem:[%s274 + $0x1d0] sm:$0xff] %v7573
        %7720 = vst [vmem:[%s274 + $0x1d8] sm:$0xff] %v7575
        %7721 = vst [vmem:[%s274 + $0x1e0] sm:$0xff] %v7191
        %7722 = vst [vmem:[%s274 + $0x1e8] sm:$0xff] %v7193
        %7723 = vst [vmem:[%s274 + $0x1f0] sm:$0xff] %v7577
        %7724 = vst [vmem:[%s274 + $0x1f8] sm:$0xff] %v7579
        %7725 = vst [vmem:[%s274 + $0x200] sm:$0xff] %v7197
        %7726 = vst [vmem:[%s274 + $0x208] sm:$0xff] %v7199
        %7727 = vst [vmem:[%s274 + $0x210] sm:$0xff] %v7583
        %7728 = vst [vmem:[%s274 + $0x218] sm:$0xff] %v7585
        %7729 = vst [vmem:[%s274 + $0x220] sm:$0xff] %v7201
        %7730 = vst [vmem:[%s274 + $0x228] sm:$0xff] %v7203
        %7731 = vst [vmem:[%s274 + $0x230] sm:$0xff] %v7587
        %7732 = vst [vmem:[%s274 + $0x238] sm:$0xff] %v7589
        %7733 = vst [vmem:[%s274 + $0x240] sm:$0xff] %v7207
        %7734 = vst [vmem:[%s274 + $0x248] sm:$0xff] %v7209
        %7735 = vst [vmem:[%s274 + $0x250] sm:$0xff] %v7593
        %7736 = vst [vmem:[%s274 + $0x258] sm:$0xff] %v7595
        %7737 = vst [vmem:[%s274 + $0x260] sm:$0xff] %v7211
        %7738 = vst [vmem:[%s274 + $0x268] sm:$0xff] %v7213
        %7739 = vst [vmem:[%s274 + $0x270] sm:$0xff] %v7597
        %7740 = vst [vmem:[%s274 + $0x278] sm:$0xff] %v7599
        %7741 = vst [vmem:[%s274 + $0x280] sm:$0xff] %v7217
        %7742 = vst [vmem:[%s274 + $0x288] sm:$0xff] %v7219
        %7743 = vst [vmem:[%s274 + $0x290] sm:$0xff] %v7603
        %7744 = vst [vmem:[%s274 + $0x298] sm:$0xff] %v7605
        %7745 = vst [vmem:[%s274 + $0x2a0] sm:$0xff] %v7221
        %7746 = vst [vmem:[%s274 + $0x2a8] sm:$0xff] %v7223
        %7747 = vst [vmem:[%s274 + $0x2b0] sm:$0xff] %v7607
        %7748 = vst [vmem:[%s274 + $0x2b8] sm:$0xff] %v7609
        %7749 = vst [vmem:[%s274 + $0x2c0] sm:$0xff] %v7227
        %7750 = vst [vmem:[%s274 + $0x2c8] sm:$0xff] %v7229
        %7751 = vst [vmem:[%s274 + $0x2d0] sm:$0xff] %v7613
        %7752 = vst [vmem:[%s274 + $0x2d8] sm:$0xff] %v7615
        %7753 = vst [vmem:[%s274 + $0x2e0] sm:$0xff] %v7231
        %7754 = vst [vmem:[%s274 + $0x2e8] sm:$0xff] %v7233
        %7755 = vst [vmem:[%s274 + $0x2f0] sm:$0xff] %v7617
        %7756 = vst [vmem:[%s274 + $0x2f8] sm:$0xff] %v7619
        %7757 = vst [vmem:[%s274 + $0x300] sm:$0xff] %v7237
        %7758 = vst [vmem:[%s274 + $0x308] sm:$0xff] %v7239
        %7759 = vst [vmem:[%s274 + $0x310] sm:$0xff] %v7623
        %7760 = vst [vmem:[%s274 + $0x318] sm:$0xff] %v7625
        %7761 = vst [vmem:[%s274 + $0x320] sm:$0xff] %v7241
        %7762 = vst [vmem:[%s274 + $0x328] sm:$0xff] %v7243
        %7763 = vst [vmem:[%s274 + $0x330] sm:$0xff] %v7627
        %7764 = vst [vmem:[%s274 + $0x338] sm:$0xff] %v7629
        %7765 = vst [vmem:[%s274 + $0x340] sm:$0xff] %v7247
        %7766 = vst [vmem:[%s274 + $0x348] sm:$0xff] %v7249
        %7767 = vst [vmem:[%s274 + $0x350] sm:$0xff] %v7633
        %7768 = vst [vmem:[%s274 + $0x358] sm:$0xff] %v7635
        %7769 = vst [vmem:[%s274 + $0x360] sm:$0xff] %v7251
        %7770 = vst [vmem:[%s274 + $0x368] sm:$0xff] %v7253
        %7771 = vst [vmem:[%s274 + $0x370] sm:$0xff] %v7637
        %7772 = vst [vmem:[%s274 + $0x378] sm:$0xff] %v7639
        %7773 = vst [vmem:[%s274 + $0x380] sm:$0xff] %v7257
        %7774 = vst [vmem:[%s274 + $0x388] sm:$0xff] %v7259
        %7775 = vst [vmem:[%s274 + $0x390] sm:$0xff] %v7643
        %7776 = vst [vmem:[%s274 + $0x398] sm:$0xff] %v7645
        %7777 = vst [vmem:[%s274 + $0x3a0] sm:$0xff] %v7261
        %7778 = vst [vmem:[%s274 + $0x3a8] sm:$0xff] %v7263
        %7779 = vst [vmem:[%s274 + $0x3b0] sm:$0xff] %v7647
        %7780 = vst [vmem:[%s274 + $0x3b8] sm:$0xff] %v7649
        %7781 = vst [vmem:[%s274 + $0x3c0] sm:$0xff] %v7267
        %7782 = vst [vmem:[%s274 + $0x3c8] sm:$0xff] %v7269
        %7783 = vst [vmem:[%s274 + $0x3d0] sm:$0xff] %v7653
        %7784 = vst [vmem:[%s274 + $0x3d8] sm:$0xff] %v7655
        %7785 = vst [vmem:[%s274 + $0x3e0] sm:$0xff] %v7271
        %7786 = vst [vmem:[%s274 + $0x3e8] sm:$0xff] %v7273
        %7787 = vst [vmem:[%s274 + $0x3f0] sm:$0xff] %v7657
        %7788 = vst [vmem:[%s274 + $0x3f8] sm:$0xff] %v7659
        %s7789 = sand.u32 %s181, 1
        %s7790 = scalar_lea.sflag [#allocation3], %s7789
        %s7791 = sand.u32 %s181, 1
        %s7792 = smul.addr %s7791, 1024
        %s7793 = scalar_lea.vmem [#allocation2], %s7792
        // Predicated region
        $region49: #{embednet_forward.1} parent=47 // pred_check
          %p7794 = pneg %p191
        $region50: #{embednet_forward.1} parent=47 // pred_check_branch
          %7796 = sbr.rel (%p7794) target = $region52
        $region51: #{embednet_forward.1} parent=47 // pred_region
          %s7797 = smul.u32 32, %s21
          %s7799 = ssub.s32 16384, 16384
          %7800 = vsyncadd %s7790, %s7799
          %s7801 = smul.addr %s7797, 4
          %s7802 = smul.addr %s7801, 128
          %s7803 = scalar_lea.hbm %s7, %s7802
          %s7804 = sshll.u32 %s7793, 4
          %s7805 = int_to_ptr.vmem [resolvable:$true] %s7804
          %7810 = dma.vmem_to_hbm [thread:$0]  %s7805, 16384, %s7803, %s7790, 512, 512, 32
        $region52: #{embednet_forward.1} parent=47 // pred_fallthru
          _
      $region48: #{embednet_forward.1} parent=5 // pred_fallthru
        _
      %p7811 = scmp.le.s32.totalorder 2, %s16
      // Predicated region
      $region53: #{embednet_forward.1} parent=5 // pred_check
        %p7812 = pneg %p7811
      $region54: #{embednet_forward.1} parent=5 // pred_check_branch
        %7814 = sbr.rel (%p7812) target = $region56
      $region55: #{embednet_forward.1} parent=5 // pred_region
        %s7815 = ssub.s32 %s16, 2
        // Predicated region
        $region57: #{embednet_forward.1} parent=55 // pred_check
          %p7816 = pneg %p197
        $region58: #{embednet_forward.1} parent=55 // pred_check_branch
          %7818 = sbr.rel (%p7816) target = $region60
        $region59: #{embednet_forward.1} parent=55 // pred_region
          %s7819 = sand.u32 %s182, 1
          %s7820 = scalar_lea.sflag [#allocation3], %s7819
          %s7821 = sand.u32 %s182, 1
          %s7822 = smul.addr %s7821, 1024
          %s7823 = scalar_lea.vmem [#allocation2], %s7822
          %7824 = dma.done %s7820, 16384
        $region60: #{embednet_forward.1} parent=55 // pred_fallthru
          _
      $region56: #{embednet_forward.1} parent=5 // pred_fallthru
        _
    $region6: #{embednet_forward.1} parent=1 // loop_footer
      %s20 = sadd.s32 1, %s16
    $region7: #{embednet_forward.1} parent=1 // loop_footer_branch
      %15 = sbr.rel target = $region3
    $region8: #{embednet_forward.1} parent=1 // loop_exit
      _
    %7825 = vsyncpa [#allocation3], 1
    %s7826 = scalar_lea.sflag [#allocation3], 1
    %7827 = vsyncpa %s7826, 1

</llo_original>
